<compile_context>
chip_gen: v6e
topology: v6e:2x2x1
jax: 0.10.0
libtpu: 0.0.40
codegen_flags: <defaults>
</compile_context>

<pallas_src>
import jax
import jax.numpy as jnp
from jax.experimental import pallas as pl
from jax.experimental.pallas import tpu as pltpu

# ----------------------------- problem sizes --------------------------------
B = 2                 # batch
H = W = 7             # spatial (dense_1 in_features = 128*7*7 = 6272)
HW = H * W            # 49 pixels
CIN = 512             # conv1 input channels
COUT = 126            # conv1 output channels (PyTorch)
CPAD = 128            # conv channels padded to lane width (126 real + 2 zero)
P_PAD = 50            # pixels padded 49 -> 50 so the grid splits evenly
NSTEP = 5             # grid steps over the dense_1 reduction (sweep {2,5,10})
PP = P_PAD // NSTEP   # 10 pixels per grid step (K tile = 10*128 = 1280)
D1 = 1024
D2 = 1024
D3 = 64
D3P = 128             # dense_3 width padded to lane width (exact, zero-padded)
D4 = 1


# --------------------------- fused Pallas kernel ------------------------------
def decoder_kernel(img_ref, wc_ref, scale_ref, shift_ref, w1_ref,
                   aux_ref, waux_ref, b1_ref, w2_hbm, b2_ref,
                   w3_hbm, b3_ref, w4_ref, b4_ref, o_ref,
                   acc_ref, w2_vmem, w3_vmem, dma_sem):
    k = pl.program_id(0)

    @pl.when(k == 0)
    def _():
        acc_ref[...] = jnp.zeros_like(acc_ref)
        # Defer the epilogue-only weights: start their DMA now, wait in the
        # epilogue, so they hide behind the w1-stream compute.
        pltpu.make_async_copy(w2_hbm, w2_vmem, dma_sem.at[0]).start()
        pltpu.make_async_copy(w3_hbm, w3_vmem, dma_sem.at[1]).start()

    # 1x1 conv + folded BN + ReLU for this pixel group.
    # img rows are pixel-major: row p*B + b holds image[b, :, pixel].
    x = img_ref[...]                                                   # (PP*B, CIN) bf16
    h = jnp.dot(x, wc_ref[...], preferred_element_type=jnp.float32)    # (PP*B, CPAD) f32
    h = jnp.maximum(h * scale_ref[...] + shift_ref[...], 0.0)
    h = h.astype(jnp.bfloat16)

    # Rearrange to (B, PP*CPAD) with lane-aligned 128-wide chunks, then ONE
    # MXU matmul against the flat (PP*CPAD, D1) w1 tile (K-sum done by MXU).
    hflat = jnp.concatenate([h[p * B:(p + 1) * B, :] for p in range(PP)],
                            axis=1)                                    # (B, PP*CPAD)
    acc_ref[...] += jnp.dot(hflat, w1_ref[...],
                            preferred_element_type=jnp.float32)        # (B, D1) f32

    @pl.when(k == NSTEP - 1)
    def _():
        pltpu.make_async_copy(w2_hbm, w2_vmem, dma_sem.at[0]).wait()
        pltpu.make_async_copy(w3_hbm, w3_vmem, dma_sem.at[1]).wait()
        # Collapsed TBV / entropy contribution (exactly sum_s w1[tbv/ent rows]).
        extra = (aux_ref[:, 0:1] * waux_ref[0:1, :]
                 + aux_ref[:, 1:2] * waux_ref[1:2, :])
        h1 = jnp.maximum(acc_ref[...] + extra + b1_ref[...], 0.0)           # dense_1
        h2 = jnp.maximum(jnp.dot(h1.astype(jnp.bfloat16), w2_vmem[...],
                                 preferred_element_type=jnp.float32)
                         + b2_ref[...], 0.0)                                # dense_2
        h3 = jnp.maximum(jnp.dot(h2, w3_vmem[...],
                                 preferred_element_type=jnp.float32)
                         + b3_ref[...], 0.0)                                # dense_3 (padded to 128)
        h4 = jnp.maximum(jnp.dot(h3, w4_ref[...],
                                 preferred_element_type=jnp.float32)
                         + b4_ref[...], 0.0)                                # dense_4
        o_ref[...] = h4.astype(o_ref.dtype)


def fused_decoder_call(img_g, aux, p):
    return pl.pallas_call(
        decoder_kernel,
        out_shape=jax.ShapeDtypeStruct((B, D4), jnp.float32),
        grid_spec=pltpu.PrefetchScalarGridSpec(
            num_scalar_prefetch=0,
            grid=(NSTEP,),
            in_specs=[
                pl.BlockSpec((None, PP * B, CIN), lambda k: (k, 0, 0)),  # image rows (bf16)
                pl.BlockSpec((CIN, CPAD), lambda k: (0, 0)),             # conv weight (bf16)
                pl.BlockSpec((1, CPAD), lambda k: (0, 0)),               # bn scale
                pl.BlockSpec((1, CPAD), lambda k: (0, 0)),               # bn shift
                pl.BlockSpec((PP * CPAD, D1), lambda k: (k, 0)),         # w1 flat (bf16)
                pl.BlockSpec((B, 2), lambda k: (0, 0)),                  # [TBV, entropy]
                pl.BlockSpec((2, D1), lambda k: (0, 0)),                 # collapsed w1 rows
                pl.BlockSpec((1, D1), lambda k: (0, 0)),                 # b1
                pl.BlockSpec(memory_space=pl.ANY),                       # w2 (HBM, manual DMA)
                pl.BlockSpec((1, D2), lambda k: (0, 0)),                 # b2
                pl.BlockSpec(memory_space=pl.ANY),                       # w3 (HBM, manual DMA)
                pl.BlockSpec((1, D3P), lambda k: (0, 0)),                # b3 (padded)
                pl.BlockSpec((D3P, D4), lambda k: (0, 0)),               # w4 (padded rows)
                pl.BlockSpec((1, D4), lambda k: (0, 0)),                 # b4
            ],
            out_specs=pl.BlockSpec((B, D4), lambda k: (0, 0)),
            scratch_shapes=[
                pltpu.VMEM((B, D1), jnp.float32),        # dense_1 accumulator
                pltpu.VMEM((D1, D2), jnp.bfloat16),      # w2 landing buffer
                pltpu.VMEM((D2, D3P), jnp.float32),      # w3 landing buffer
                pltpu.SemaphoreType.DMA((2,)),
            ],
        ),
        compiler_params=pltpu.CompilerParams(
            dimension_semantics=("arbitrary",),
            vmem_limit_bytes=32 << 20,   # ~9 MiB actual; safe on v7x's 64 MiB VMEM
        ),
    )(img_g, p["w_conv_p"], p["scale_p"], p["shift_p"], p["w1_2d"],
      aux, p["w_aux"], p["b1"], p["w2"], p["b2"], p["w3_p"], p["b3_p"],
      p["w4_p"], p["b4"])


# ----------------------------- forward wrapper --------------------------------
@jax.jit
def decoder_forward(kparams, image, TBV, entropy):
    """image: (B, 512, 7, 7) NCHW f32; TBV/entropy: (B, 1, 1, 1)."""
    b = image.shape[0]
    # NCHW -> pixel-major rows (row = pixel*B + batch), channels last. Tiny op.
    img_rows = jnp.transpose(image.reshape(b, CIN, HW), (2, 0, 1)).reshape(HW * b, CIN)
    img_rows = jnp.pad(img_rows, ((0, (P_PAD - HW) * b), (0, 0)))     # 98 -> 100 rows
    img_g = img_rows.reshape(NSTEP, PP * b, CIN).astype(jnp.bfloat16)
    aux = jnp.concatenate([TBV.reshape(b, 1), entropy.reshape(b, 1)], axis=1)
    # Dropout layers are eval-mode identities.
    # NOTE: per-call cost is dominated by the ~14.3 MiB w1/w2 stream; larger
    # batches amortize it almost linearly (layout supports B up to ~64-128).
    return fused_decoder_call(img_g, aux, kparams)


# --------------------------- pure-JAX reference -------------------------------
def decoder_ref(p, image, TBV, entropy):
    """f32 reference of the PyTorch module (kernel uses bf16 activations /
    bf16-rounded weights; covered by the 2e-2 tolerance below)."""
    b = image.shape[0]
    x2d = jnp.transpose(image, (0, 2, 3, 1)).reshape(b * HW, CIN)
    y = jnp.maximum(x2d @ p["w_conv"] * p["bn_scale"] + p["bn_shift"], 0.0)
    img_flat = y.reshape(b, HW, COUT).transpose(0, 2, 1).reshape(b, COUT * HW)
    tbv_flat = jnp.broadcast_to(TBV.reshape(b, 1), (b, HW))
    ent_flat = jnp.broadcast_to(entropy.reshape(b, 1), (b, HW))
    x = jnp.concatenate([img_flat, tbv_flat, ent_flat], axis=1)       # (B, 6272)
    x = jnp.maximum(x @ p["w1"] + p["b1"], 0.0)
    x = jnp.maximum(x @ p["w2"] + p["b2"], 0.0)
    x = jnp.maximum(x @ p["w3"] + p["b3"], 0.0)
    x = jnp.maximum(x @ p["w4"] + p["b4"], 0.0)
    return x


# ------------------------------ params ---------------------------------------
def init_params(key):
    ks = jax.random.split(key, 12)

    def bf16_round(x):
        # w_conv/w1/w2 are streamed in bf16 by the kernel; round once so the
        # kernel and the reference use identical weight values.
        return x.astype(jnp.bfloat16).astype(jnp.float32)

    w_conv = bf16_round(0.02 * jax.random.normal(ks[0], (CIN, COUT), jnp.float32))
    # BatchNorm (eval) folded: scale = gamma/sqrt(var+eps), shift = beta - mean*scale
    gamma = 1.0 + 0.1 * jax.random.normal(ks[1], (COUT,), jnp.float32)
    beta = 0.1 * jax.random.normal(ks[2], (COUT,), jnp.float32)
    rmean = 0.1 * jax.random.normal(ks[3], (COUT,), jnp.float32)
    rvar = jax.random.uniform(ks[4], (COUT,), jnp.float32, 0.5, 1.5)
    eps = 1e-5
    scale = gamma / jnp.sqrt(rvar + eps)
    shift = beta - rmean * scale

    D0 = CPAD * HW   # 6272
    return {
        "w_conv": w_conv,
        "bn_scale": scale.reshape(1, COUT),
        "bn_shift": shift.reshape(1, COUT),
        "w1": bf16_round(0.02 * jax.random.normal(ks[5], (D0, D1), jnp.float32)),
        "b1": 0.02 * jax.random.normal(ks[6], (1, D1), jnp.float32),
        "w2": bf16_round(0.02 * jax.random.normal(ks[7], (D1, D2), jnp.float32)),
        "b2": 0.02 * jax.random.normal(ks[8], (1, D2), jnp.float32),
        "w3": 0.02 * jax.random.normal(ks[9], (D2, D3), jnp.float32),
        "b3": 0.02 * jax.random.normal(ks[10], (1, D3), jnp.float32),
        "w4": 0.02 * jax.random.normal(ks[11], (D3, D4), jnp.float32),
        "b4": jnp.full((1, D4), 0.01, jnp.float32),
    }


def prepare_kernel_params(p):
    """One-time offline repack: pad conv to 128 channels, permute+flatten w1 to
    (pixel*channel, 1024) pixel-major, collapse TBV/entropy rows, pad dense_3
    to 128 lanes, and cast streamed weights to bf16."""
    w_conv_p = jnp.pad(p["w_conv"], ((0, 0), (0, CPAD - COUT))).astype(jnp.bfloat16)
    scale_p = jnp.pad(p["bn_scale"], ((0, 0), (0, CPAD - COUT)))
    shift_p = jnp.pad(p["bn_shift"], ((0, 0), (0, CPAD - COUT)))

    w1 = p["w1"]                                                      # (6272, 1024)
    w1_img = w1[:COUT * HW].reshape(COUT, HW, D1).transpose(1, 0, 2)  # (49,126,D1)
    w1_img = jnp.pad(w1_img, ((0, P_PAD - HW), (0, CPAD - COUT), (0, 0)))  # (50,128,D1)
    # Correctness guard: conv output of padded pixel rows is relu(bn_shift)!=0
    # and padded channels are nonzero-capable; their w1 rows MUST be zero.
    assert float(jnp.abs(w1_img[HW:]).max()) == 0.0
    assert float(jnp.abs(w1_img[:, COUT:]).max()) == 0.0
    w1_2d = w1_img.reshape(P_PAD * CPAD, D1).astype(jnp.bfloat16)     # (6400, D1)

    w_tbv = jnp.sum(w1[COUT * HW:(COUT + 1) * HW], axis=0)            # TBV channel rows
    w_ent = jnp.sum(w1[(COUT + 1) * HW:(COUT + 2) * HW], axis=0)      # entropy channel rows
    w_aux = jnp.stack([w_tbv, w_ent], axis=0)                         # (2, D1) f32

    w3_p = jnp.pad(p["w3"], ((0, 0), (0, D3P - D3)))                  # (1024, 128)
    b3_p = jnp.pad(p["b3"], ((0, 0), (0, D3P - D3)))                  # (1, 128)
    w4_p = jnp.pad(p["w4"], ((0, D3P - D3), (0, 0)))                  # (128, 1)

    return {
        "w_conv_p": w_conv_p, "scale_p": scale_p, "shift_p": shift_p,
        "w1_2d": w1_2d, "w_aux": w_aux,
        "b1": p["b1"],
        "w2": p["w2"].astype(jnp.bfloat16), "b2": p["b2"],
        "w3_p": w3_p, "b3_p": b3_p,
        "w4_p": w4_p, "b4": p["b4"],
    }


# ---------------------------------- main --------------------------------------
if __name__ == "__main__":
    key = jax.random.PRNGKey(0)
    k_img, k_tbv, k_ent = jax.random.split(key, 3)
    image = jax.random.normal(k_img, (B, CIN, H, W), jnp.float32)
    TBV = jax.random.normal(k_tbv, (B, 1, 1, 1), jnp.float32)
    entropy = jax.random.normal(k_ent, (B, 1, 1, 1), jnp.float32)

    params = init_params(jax.random.PRNGKey(42))
    kparams = jax.tree_util.tree_map(jax.block_until_ready,
                                     prepare_kernel_params(params))

    out = decoder_forward(kparams, image, TBV, entropy)
    out = jax.block_until_ready(out)

    ref = decoder_ref(params, image, TBV, entropy)
    assert out.shape == (B, 1), out.shape
    assert jnp.allclose(out, ref, rtol=2e-2, atol=2e-2), (out, ref)

    print("KERNEL_OK")
</pallas_src>

<mosaic_0001>
module attributes {stable_mosaic.version = 11 : i64} {
  func.func @decoder_kernel(%arg0: i32, %arg1: memref<1x20x512xbf16, #tpu.memory_space<vmem>>, %arg2: memref<512x128xbf16, #tpu.memory_space<vmem>>, %arg3: memref<1x128xf32, #tpu.memory_space<vmem>>, %arg4: memref<1x128xf32, #tpu.memory_space<vmem>>, %arg5: memref<1280x1024xbf16, #tpu.memory_space<vmem>>, %arg6: memref<2x2xf32, #tpu.memory_space<vmem>>, %arg7: memref<2x1024xf32, #tpu.memory_space<vmem>>, %arg8: memref<1x1024xf32, #tpu.memory_space<vmem>>, %arg9: memref<1024x1024xbf16, #tpu.memory_space<any>>, %arg10: memref<1x1024xf32, #tpu.memory_space<vmem>>, %arg11: memref<1024x128xf32, #tpu.memory_space<any>>, %arg12: memref<1x128xf32, #tpu.memory_space<vmem>>, %arg13: memref<128x1xf32, #tpu.memory_space<vmem>>, %arg14: memref<1x1xf32, #tpu.memory_space<vmem>>, %arg15: memref<2x1xf32, #tpu.memory_space<vmem>>, %arg16: memref<2x1024xf32, #tpu.memory_space<vmem>>, %arg17: memref<1024x1024xbf16, #tpu.memory_space<vmem>>, %arg18: memref<1024x128xf32, #tpu.memory_space<vmem>>, %arg19: memref<2x!tpu.dma_semaphore, #tpu.memory_space<semaphore_mem>>) attributes {dimension_semantics = [#tpu.dimension_semantics<arbitrary>], iteration_bounds = array<i64: 5>, scalar_prefetch = 0 : i64, scratch_operands = 4 : i64, tpu.core_type = #tpu.core_type<tc>, window_params = [{transform_indices = @transform_0, window_bounds = array<i64: 1, 20, 512>}, {pipeline_mode = #tpu.pipeline_mode<synchronous>, transform_indices = @transform_1, window_bounds = array<i64: 512, 128>}, {pipeline_mode = #tpu.pipeline_mode<synchronous>, transform_indices = @transform_2, window_bounds = array<i64: 1, 128>}, {pipeline_mode = #tpu.pipeline_mode<synchronous>, transform_indices = @transform_3, window_bounds = array<i64: 1, 128>}, {transform_indices = @transform_4, window_bounds = array<i64: 1280, 1024>}, {pipeline_mode = #tpu.pipeline_mode<synchronous>, transform_indices = @transform_5, window_bounds = array<i64: 2, 2>}, {pipeline_mode = #tpu.pipeline_mode<synchronous>, transform_indices = @transform_6, window_bounds = array<i64: 2, 1024>}, {pipeline_mode = #tpu.pipeline_mode<synchronous>, transform_indices = @transform_7, window_bounds = array<i64: 1, 1024>}, {}, {pipeline_mode = #tpu.pipeline_mode<synchronous>, transform_indices = @transform_9, window_bounds = array<i64: 1, 1024>}, {}, {pipeline_mode = #tpu.pipeline_mode<synchronous>, transform_indices = @transform_11, window_bounds = array<i64: 1, 128>}, {pipeline_mode = #tpu.pipeline_mode<synchronous>, transform_indices = @transform_12, window_bounds = array<i64: 128, 1>}, {pipeline_mode = #tpu.pipeline_mode<synchronous>, transform_indices = @transform_13, window_bounds = array<i64: 1, 1>}, {pipeline_mode = #tpu.pipeline_mode<synchronous>, transform_indices = @transform_14, window_bounds = array<i64: 2, 1>}]} {
    %c0_i32 = arith.constant 0 : i32
    %0 = arith.cmpi eq, %arg0, %c0_i32 : i32
    %1 = arith.extui %0 : i1 to i32
    %c0_i32_0 = arith.constant 0 : i32
    %2 = arith.cmpi ne, %1, %c0_i32_0 : i32
    scf.if %2 {
      %cst_18 = arith.constant 0.000000e+00 : f32
      %35 = vector.broadcast %cst_18 : f32 to vector<2x1024xf32>
      %c0_19 = arith.constant 0 : index
      %c0_20 = arith.constant 0 : index
      %36 = vector.load %arg16[%c0_19, %c0_20] : memref<2x1024xf32, #tpu.memory_space<vmem>>, vector<2x1024xf32>
      tpu.vector_store %arg16[%c0_19, %c0_20], %35 {strides = array<i32>} : memref<2x1024xf32, #tpu.memory_space<vmem>>, vector<2x1024xf32>,
      %c0_i32_21 = arith.constant 0 : i32
      %37 = tpu.memref_slice %arg19[%c0_i32_21] : memref<2x!tpu.dma_semaphore, #tpu.memory_space<semaphore_mem>> -> memref<1x!tpu.dma_semaphore, #tpu.memory_space<semaphore_mem>>
      %38 = tpu.memref_squeeze %37 : memref<1x!tpu.dma_semaphore, #tpu.memory_space<semaphore_mem>> -> memref<!tpu.dma_semaphore, #tpu.memory_space<semaphore_mem>>
      tpu.enqueue_dma source(%arg9 : memref<1024x1024xbf16, #tpu.memory_space<any>>) target(%arg17 : memref<1024x1024xbf16, #tpu.memory_space<vmem>>) target_semaphore(%38 : memref<!tpu.dma_semaphore, #tpu.memory_space<semaphore_mem>>)
      %c1_i32 = arith.constant 1 : i32
      %39 = tpu.memref_slice %arg19[%c1_i32] : memref<2x!tpu.dma_semaphore, #tpu.memory_space<semaphore_mem>> -> memref<1x!tpu.dma_semaphore, #tpu.memory_space<semaphore_mem>>
      %40 = tpu.memref_squeeze %39 : memref<1x!tpu.dma_semaphore, #tpu.memory_space<semaphore_mem>> -> memref<!tpu.dma_semaphore, #tpu.memory_space<semaphore_mem>>
      tpu.enqueue_dma source(%arg11 : memref<1024x128xf32, #tpu.memory_space<any>>) target(%arg18 : memref<1024x128xf32, #tpu.memory_space<vmem>>) target_semaphore(%40 : memref<!tpu.dma_semaphore, #tpu.memory_space<semaphore_mem>>)
    } else {
    }
    %c0 = arith.constant 0 : index
    %c0_1 = arith.constant 0 : index
    %c0_2 = arith.constant 0 : index
    %3 = vector.load %arg1[%c0, %c0_1, %c0_2] : memref<1x20x512xbf16, #tpu.memory_space<vmem>>, vector<1x20x512xbf16>
    %4 = vector.shape_cast %3 : vector<1x20x512xbf16> to vector<20x512xbf16>
    %c0_3 = arith.constant 0 : index
    %c0_4 = arith.constant 0 : index
    %5 = vector.load %arg2[%c0_3, %c0_4] : memref<512x128xbf16, #tpu.memory_space<vmem>>, vector<512x128xbf16>
    %cst = arith.constant dense<0.000000e+00> : vector<20x128xf32>
    %6 = tpu.matmul %4, %5, %cst {dimension_numbers = #tpu.dot_dimension_numbers<[1], [0], [0], [1], [0, 0, 1, 1], [], []>} : vector<20x512xbf16>, vector<512x128xbf16>, vector<20x128xf32> -> vector<20x128xf32>
    %c0_5 = arith.constant 0 : index
    %c0_6 = arith.constant 0 : index
    %7 = vector.load %arg3[%c0_5, %c0_6] : memref<1x128xf32, #tpu.memory_space<vmem>>, vector<1x128xf32>
    %8 = vector.broadcast %7 : vector<1x128xf32> to vector<20x128xf32>
    %9 = arith.mulf %6, %8 : vector<20x128xf32>
    %c0_7 = arith.constant 0 : index
    %c0_8 = arith.constant 0 : index
    %10 = vector.load %arg4[%c0_7, %c0_8] : memref<1x128xf32, #tpu.memory_space<vmem>>, vector<1x128xf32>
    %11 = vector.broadcast %10 : vector<1x128xf32> to vector<20x128xf32>
    %12 = arith.addf %9, %11 : vector<20x128xf32>
    %cst_9 = arith.constant 0.000000e+00 : f32
    %13 = vector.broadcast %cst_9 : f32 to vector<20x128xf32>
    %14 = arith.maximumf %12, %13 : vector<20x128xf32>
    %15 = arith.truncf %14 : vector<20x128xf32> to vector<20x128xbf16>
    %16 = vector.extract_strided_slice %15 {offsets = [0, 0], sizes = [2, 128], strides = [1, 1]} : vector<20x128xbf16> to vector<2x128xbf16>
    %17 = vector.extract_strided_slice %15 {offsets = [2, 0], sizes = [2, 128], strides = [1, 1]} : vector<20x128xbf16> to vector<2x128xbf16>
    %18 = vector.extract_strided_slice %15 {offsets = [4, 0], sizes = [2, 128], strides = [1, 1]} : vector<20x128xbf16> to vector<2x128xbf16>
    %19 = vector.extract_strided_slice %15 {offsets = [6, 0], sizes = [2, 128], strides = [1, 1]} : vector<20x128xbf16> to vector<2x128xbf16>
    %20 = vector.extract_strided_slice %15 {offsets = [8, 0], sizes = [2, 128], strides = [1, 1]} : vector<20x128xbf16> to vector<2x128xbf16>
    %21 = vector.extract_strided_slice %15 {offsets = [10, 0], sizes = [2, 128], strides = [1, 1]} : vector<20x128xbf16> to vector<2x128xbf16>
    %22 = vector.extract_strided_slice %15 {offsets = [12, 0], sizes = [2, 128], strides = [1, 1]} : vector<20x128xbf16> to vector<2x128xbf16>
    %23 = vector.extract_strided_slice %15 {offsets = [14, 0], sizes = [2, 128], strides = [1, 1]} : vector<20x128xbf16> to vector<2x128xbf16>
    %24 = vector.extract_strided_slice %15 {offsets = [16, 0], sizes = [2, 128], strides = [1, 1]} : vector<20x128xbf16> to vector<2x128xbf16>
    %25 = vector.extract_strided_slice %15 {offsets = [18, 0], sizes = [2, 128], strides = [1, 1]} : vector<20x128xbf16> to vector<2x128xbf16>
    %26 = tpu.concatenate %16, %17, %18, %19, %20, %21, %22, %23, %24, %25 in 1 : vector<2x128xbf16>, vector<2x128xbf16>, vector<2x128xbf16>, vector<2x128xbf16>, vector<2x128xbf16>, vector<2x128xbf16>, vector<2x128xbf16>, vector<2x128xbf16>, vector<2x128xbf16>, vector<2x128xbf16> -> vector<2x1280xbf16>
    %c0_10 = arith.constant 0 : index
    %c0_11 = arith.constant 0 : index
    %27 = vector.load %arg16[%c0_10, %c0_11] : memref<2x1024xf32, #tpu.memory_space<vmem>>, vector<2x1024xf32>
    %c0_12 = arith.constant 0 : index
    %c0_13 = arith.constant 0 : index
    %28 = vector.load %arg5[%c0_12, %c0_13] : memref<1280x1024xbf16, #tpu.memory_space<vmem>>, vector<1280x1024xbf16>
    %cst_14 = arith.constant dense<0.000000e+00> : vector<2x1024xf32>
    %29 = tpu.matmul %26, %28, %cst_14 {dimension_numbers = #tpu.dot_dimension_numbers<[1], [0], [0], [1], [0, 0, 1, 1], [], []>} : vector<2x1280xbf16>, vector<1280x1024xbf16>, vector<2x1024xf32> -> vector<2x1024xf32>
    %30 = arith.addf %27, %29 : vector<2x1024xf32>
    %c0_15 = arith.constant 0 : index
    %c0_16 = arith.constant 0 : index
    %31 = vector.load %arg16[%c0_15, %c0_16] : memref<2x1024xf32, #tpu.memory_space<vmem>>, vector<2x1024xf32>
    tpu.vector_store %arg16[%c0_15, %c0_16], %30 {strides = array<i32>} : memref<2x1024xf32, #tpu.memory_space<vmem>>, vector<2x1024xf32>,
    %c4_i32 = arith.constant 4 : i32
    %32 = arith.cmpi eq, %arg0, %c4_i32 : i32
    %33 = arith.extui %32 : i1 to i32
    %c0_i32_17 = arith.constant 0 : i32
    %34 = arith.cmpi ne, %33, %c0_i32_17 : i32
    scf.if %34 {
      %c0_i32_18 = arith.constant 0 : i32
      %35 = tpu.memref_slice %arg19[%c0_i32_18] : memref<2x!tpu.dma_semaphore, #tpu.memory_space<semaphore_mem>> -> memref<1x!tpu.dma_semaphore, #tpu.memory_space<semaphore_mem>>
      %36 = tpu.memref_squeeze %35 : memref<1x!tpu.dma_semaphore, #tpu.memory_space<semaphore_mem>> -> memref<!tpu.dma_semaphore, #tpu.memory_space<semaphore_mem>>
      tpu.wait_dma2 semaphore(%36 : memref<!tpu.dma_semaphore, #tpu.memory_space<semaphore_mem>>) src(%arg9 : memref<1024x1024xbf16, #tpu.memory_space<any>>) dst(%arg17 : memref<1024x1024xbf16, #tpu.memory_space<vmem>>)
      %c1_i32 = arith.constant 1 : i32
      %37 = tpu.memref_slice %arg19[%c1_i32] : memref<2x!tpu.dma_semaphore, #tpu.memory_space<semaphore_mem>> -> memref<1x!tpu.dma_semaphore, #tpu.memory_space<semaphore_mem>>
      %38 = tpu.memref_squeeze %37 : memref<1x!tpu.dma_semaphore, #tpu.memory_space<semaphore_mem>> -> memref<!tpu.dma_semaphore, #tpu.memory_space<semaphore_mem>>
      tpu.wait_dma2 semaphore(%38 : memref<!tpu.dma_semaphore, #tpu.memory_space<semaphore_mem>>) src(%arg11 : memref<1024x128xf32, #tpu.memory_space<any>>) dst(%arg18 : memref<1024x128xf32, #tpu.memory_space<vmem>>)
      %c0_19 = arith.constant 0 : index
      %c0_20 = arith.constant 0 : index
      %39 = vector.load %arg6[%c0_19, %c0_20] : memref<2x2xf32, #tpu.memory_space<vmem>>, vector<2x1xf32>
      %c0_21 = arith.constant 0 : index
      %c0_22 = arith.constant 0 : index
      %40 = vector.load %arg7[%c0_21, %c0_22] : memref<2x1024xf32, #tpu.memory_space<vmem>>, vector<1x1024xf32>
      %41 = vector.broadcast %39 : vector<2x1xf32> to vector<2x1024xf32>
      %42 = vector.broadcast %40 : vector<1x1024xf32> to vector<2x1024xf32>
      %43 = arith.mulf %41, %42 : vector<2x1024xf32>
      %c0_23 = arith.constant 0 : index
      %c1 = arith.constant 1 : index
      %44 = vector.load %arg6[%c0_23, %c1] : memref<2x2xf32, #tpu.memory_space<vmem>>, vector<2x1xf32>
      %c1_24 = arith.constant 1 : index
      %c0_25 = arith.constant 0 : index
      %45 = vector.load %arg7[%c1_24, %c0_25] : memref<2x1024xf32, #tpu.memory_space<vmem>>, vector<1x1024xf32>
      %46 = vector.broadcast %44 : vector<2x1xf32> to vector<2x1024xf32>
      %47 = vector.broadcast %45 : vector<1x1024xf32> to vector<2x1024xf32>
      %48 = arith.mulf %46, %47 : vector<2x1024xf32>
      %49 = arith.addf %43, %48 : vector<2x1024xf32>
      %c0_26 = arith.constant 0 : index
      %c0_27 = arith.constant 0 : index
      %50 = vector.load %arg16[%c0_26, %c0_27] : memref<2x1024xf32, #tpu.memory_space<vmem>>, vector<2x1024xf32>
      %51 = arith.addf %50, %49 : vector<2x1024xf32>
      %c0_28 = arith.constant 0 : index
      %c0_29 = arith.constant 0 : index
      %52 = vector.load %arg8[%c0_28, %c0_29] : memref<1x1024xf32, #tpu.memory_space<vmem>>, vector<1x1024xf32>
      %53 = vector.broadcast %52 : vector<1x1024xf32> to vector<2x1024xf32>
      %54 = arith.addf %51, %53 : vector<2x1024xf32>
      %cst_30 = arith.constant 0.000000e+00 : f32
      %55 = vector.broadcast %cst_30 : f32 to vector<2x1024xf32>
      %56 = arith.maximumf %54, %55 : vector<2x1024xf32>
      %57 = arith.truncf %56 : vector<2x1024xf32> to vector<2x1024xbf16>
      %c0_31 = arith.constant 0 : index
      %c0_32 = arith.constant 0 : index
      %58 = vector.load %arg17[%c0_31, %c0_32] : memref<1024x1024xbf16, #tpu.memory_space<vmem>>, vector<1024x1024xbf16>
      %cst_33 = arith.constant dense<0.000000e+00> : vector<2x1024xf32>
      %59 = tpu.matmul %57, %58, %cst_33 {dimension_numbers = #tpu.dot_dimension_numbers<[1], [0], [0], [1], [0, 0, 1, 1], [], []>} : vector<2x1024xbf16>, vector<1024x1024xbf16>, vector<2x1024xf32> -> vector<2x1024xf32>
      %c0_34 = arith.constant 0 : index
      %c0_35 = arith.constant 0 : index
      %60 = vector.load %arg10[%c0_34, %c0_35] : memref<1x1024xf32, #tpu.memory_space<vmem>>, vector<1x1024xf32>
      %61 = vector.broadcast %60 : vector<1x1024xf32> to vector<2x1024xf32>
      %62 = arith.addf %59, %61 : vector<2x1024xf32>
      %cst_36 = arith.constant 0.000000e+00 : f32
      %63 = vector.broadcast %cst_36 : f32 to vector<2x1024xf32>
      %64 = arith.maximumf %62, %63 : vector<2x1024xf32>
      %c0_37 = arith.constant 0 : index
      %c0_38 = arith.constant 0 : index
      %65 = vector.load %arg18[%c0_37, %c0_38] : memref<1024x128xf32, #tpu.memory_space<vmem>>, vector<1024x128xf32>
      %cst_39 = arith.constant dense<0.000000e+00> : vector<2x128xf32>
      %66 = tpu.matmul %64, %65, %cst_39 {dimension_numbers = #tpu.dot_dimension_numbers<[1], [0], [0], [1], [0, 0, 1, 1], [], []>} : vector<2x1024xf32>, vector<1024x128xf32>, vector<2x128xf32> -> vector<2x128xf32>
      %c0_40 = arith.constant 0 : index
      %c0_41 = arith.constant 0 : index
      %67 = vector.load %arg12[%c0_40, %c0_41] : memref<1x128xf32, #tpu.memory_space<vmem>>, vector<1x128xf32>
      %68 = vector.broadcast %67 : vector<1x128xf32> to vector<2x128xf32>
      %69 = arith.addf %66, %68 : vector<2x128xf32>
      %cst_42 = arith.constant 0.000000e+00 : f32
      %70 = vector.broadcast %cst_42 : f32 to vector<2x128xf32>
      %71 = arith.maximumf %69, %70 : vector<2x128xf32>
      %c0_43 = arith.constant 0 : index
      %c0_44 = arith.constant 0 : index
      %72 = vector.load %arg13[%c0_43, %c0_44] : memref<128x1xf32, #tpu.memory_space<vmem>>, vector<128x1xf32>
      %cst_45 = arith.constant dense<0.000000e+00> : vector<2x1xf32>
      %73 = tpu.matmul %71, %72, %cst_45 {dimension_numbers = #tpu.dot_dimension_numbers<[1], [0], [0], [1], [0, 0, 1, 1], [], []>} : vector<2x128xf32>, vector<128x1xf32>, vector<2x1xf32> -> vector<2x1xf32>
      %c0_46 = arith.constant 0 : index
      %c0_47 = arith.constant 0 : index
      %74 = vector.load %arg14[%c0_46, %c0_47] : memref<1x1xf32, #tpu.memory_space<vmem>>, vector<1x1xf32>
      %75 = vector.broadcast %74 : vector<1x1xf32> to vector<2x1xf32>
      %76 = arith.addf %73, %75 : vector<2x1xf32>
      %cst_48 = arith.constant 0.000000e+00 : f32
      %77 = vector.broadcast %cst_48 : f32 to vector<2x1xf32>
      %78 = arith.maximumf %76, %77 : vector<2x1xf32>
      %c0_49 = arith.constant 0 : index
      %c0_50 = arith.constant 0 : index
      %79 = vector.load %arg15[%c0_49, %c0_50] : memref<2x1xf32, #tpu.memory_space<vmem>>, vector<2x1xf32>
      tpu.vector_store %arg15[%c0_49, %c0_50], %78 {strides = array<i32>} : memref<2x1xf32, #tpu.memory_space<vmem>>, vector<2x1xf32>,
    } else {
    }
    return
  }
  func.func @transform_0(%arg0: i32) -> (i32, i32, i32) {
    %c0_i32 = arith.constant 0 : i32
    %c0_i32_0 = arith.constant 0 : i32
    %c0_i32_1 = arith.constant 0 : i32
    return %arg0, %c0_i32, %c0_i32_0 : i32, i32, i32
  }
  func.func @transform_1(%arg0: i32) -> (i32, i32) {
    %c0_i32 = arith.constant 0 : i32
    %c0_i32_0 = arith.constant 0 : i32
    %c0_i32_1 = arith.constant 0 : i32
    return %c0_i32, %c0_i32_0 : i32, i32
  }
  func.func @transform_2(%arg0: i32) -> (i32, i32) {
    %c0_i32 = arith.constant 0 : i32
    %c0_i32_0 = arith.constant 0 : i32
    %c0_i32_1 = arith.constant 0 : i32
    return %c0_i32, %c0_i32_0 : i32, i32
  }
  func.func @transform_3(%arg0: i32) -> (i32, i32) {
    %c0_i32 = arith.constant 0 : i32
    %c0_i32_0 = arith.constant 0 : i32
    %c0_i32_1 = arith.constant 0 : i32
    return %c0_i32, %c0_i32_0 : i32, i32
  }
  func.func @transform_4(%arg0: i32) -> (i32, i32) {
    %c0_i32 = arith.constant 0 : i32
    %c0_i32_0 = arith.constant 0 : i32
    return %arg0, %c0_i32 : i32, i32
  }
  func.func @transform_5(%arg0: i32) -> (i32, i32) {
    %c0_i32 = arith.constant 0 : i32
    %c0_i32_0 = arith.constant 0 : i32
    %c0_i32_1 = arith.constant 0 : i32
    return %c0_i32, %c0_i32_0 : i32, i32
  }
  func.func @transform_6(%arg0: i32) -> (i32, i32) {
    %c0_i32 = arith.constant 0 : i32
    %c0_i32_0 = arith.constant 0 : i32
    %c0_i32_1 = arith.constant 0 : i32
    return %c0_i32, %c0_i32_0 : i32, i32
  }
  func.func @transform_7(%arg0: i32) -> (i32, i32) {
    %c0_i32 = arith.constant 0 : i32
    %c0_i32_0 = arith.constant 0 : i32
    %c0_i32_1 = arith.constant 0 : i32
    return %c0_i32, %c0_i32_0 : i32, i32
  }
  func.func @transform_9(%arg0: i32) -> (i32, i32) {
    %c0_i32 = arith.constant 0 : i32
    %c0_i32_0 = arith.constant 0 : i32
    %c0_i32_1 = arith.constant 0 : i32
    return %c0_i32, %c0_i32_0 : i32, i32
  }
  func.func @transform_11(%arg0: i32) -> (i32, i32) {
    %c0_i32 = arith.constant 0 : i32
    %c0_i32_0 = arith.constant 0 : i32
    %c0_i32_1 = arith.constant 0 : i32
    return %c0_i32, %c0_i32_0 : i32, i32
  }
  func.func @transform_12(%arg0: i32) -> (i32, i32) {
    %c0_i32 = arith.constant 0 : i32
    %c0_i32_0 = arith.constant 0 : i32
    %c0_i32_1 = arith.constant 0 : i32
    return %c0_i32, %c0_i32_0 : i32, i32
  }
  func.func @transform_13(%arg0: i32) -> (i32, i32) {
    %c0_i32 = arith.constant 0 : i32
    %c0_i32_0 = arith.constant 0 : i32
    %c0_i32_1 = arith.constant 0 : i32
    return %c0_i32, %c0_i32_0 : i32, i32
  }
  func.func @transform_14(%arg0: i32) -> (i32, i32) {
    %c0_i32 = arith.constant 0 : i32
    %c0_i32_0 = arith.constant 0 : i32
    %c0_i32_1 = arith.constant 0 : i32
    return %c0_i32, %c0_i32_0 : i32, i32
  }
}

</mosaic_0001>

<llo_original>
// kernel: decoder_forward.1
$region0: #{decoder_forward.1}
  #allocation0 [shape = 'u32[]', space=smem, size = 0x4, offset = 0x4, fixed_abs, tag = 'smem constant byte address 0x4 - core index']
  #allocation1 [shape = 'u32[144,128]{1,0:T(1,128)}', space=vmem, size = 0x12000, scoped, tag = 'internal scratch']
  #allocation2 [shape = 'f32[2,1024]{1,0:T(2,128)}', space=vmem, size = 0x2000, scoped, tag = 'scratch operand']
  #allocation3 [shape = 'bf16[1024,1024]{1,0:T(8,128)(2,1)}', space=vmem, size = 0x200000, scoped, tag = 'scratch operand']
  #allocation4 [shape = 'f32[1024,128]{1,0:T(8,128)}', space=vmem, size = 0x80000, scoped, tag = 'scratch operand']
  #allocation5 [shape = 's32[2]{0}', space=sflag, size = 0x8, scoped, tag = 'scratch operand']
  #allocation6 [shape = 'f32[1,1]{1,0:T(1,128)S(1)}', space=vmem, size = 0x200, scoped, tag = 'scoped memory for decoder_forward.1']
  #allocation20 [shape = 's32[]', space=sflag, size = 0x4, offset = 0, fixed_abs, tag = 'sflag constant byte address 0x0 - dummy sync flag']
  #allocation21 [shape = 's32[]', space=sflag, size = 0x4, offset = 0, fixed_abs, tag = 'sflag constant byte address 0x0 - dummy sync flag']
  #allocation22 [shape = 'u32[]', space=smem, size = 0x4, offset = 0x44, fixed_abs, tag = 'smem constant byte address 0x44 - assertion arg 0']
  #allocation23 [shape = 'u32[]', space=smem, size = 0x4, offset = 0x48, fixed_abs, tag = 'smem constant byte address 0x48 - assertion arg 1']
  #allocation24 [shape = 's32[]', space=sflag, size = 0x4, offset = 0, fixed_abs, tag = 'sflag constant byte address 0x0 - dummy sync flag']
  #allocation25 [shape = 's32[]', space=sflag, size = 0x4, offset = 0, fixed_abs, tag = 'sflag constant byte address 0x0 - dummy sync flag']
  %s0 = inlined_call_operand.vmem [shape: bf16[5,20,512], index: 0, kind: input, shape index: {}]
  %s1 = inlined_call_operand.hbm [shape: bf16[512,128], index: 1, kind: input, shape index: {}]
  %s2 = inlined_call_operand.hbm [shape: f32[1,128], index: 2, kind: input, shape index: {}]
  %s3 = inlined_call_operand.hbm [shape: f32[1,128], index: 3, kind: input, shape index: {}]
  %s4 = inlined_call_operand.hbm [shape: bf16[6400,1024], index: 4, kind: input, shape index: {}]
  %s5 = inlined_call_operand.vmem [shape: f32[2,2], index: 5, kind: input, shape index: {}]
  %s6 = inlined_call_operand.hbm [shape: f32[2,1024], index: 6, kind: input, shape index: {}]
  %s7 = inlined_call_operand.hbm [shape: f32[1,1024], index: 7, kind: input, shape index: {}]
  %s8 = inlined_call_operand.hbm [shape: bf16[1024,1024], index: 8, kind: input, shape index: {}]
  %s9 = inlined_call_operand.hbm [shape: f32[1,1024], index: 9, kind: input, shape index: {}]
  %s10 = inlined_call_operand.hbm [shape: f32[1024,128], index: 10, kind: input, shape index: {}]
  %s11 = inlined_call_operand.hbm [shape: f32[1,128], index: 11, kind: input, shape index: {}]
  %s12 = inlined_call_operand.vmem [shape: f32[128,1], index: 12, kind: input, shape index: {}]
  %s13 = inlined_call_operand.<no memory space> [shape: f32[1,1], index: 13, kind: input, shape index: {}]
  %s14 = inlined_call_operand.vmem [shape: f32[2,1], index: 14, kind: output, shape index: {}]
  %s15 = sld [smem:[#allocation0]]
  $region129: #{decoder_forward.1} parent=0
    _
  %s17 = ssub.s32 1, %s15
  %s18 = scalar_select 0, %s17, %s15
  %v19 = vstv %s13
  %20 = vst [vmem:[#allocation6] sm:$0x1] %v19
  $region1: #{decoder_forward.1} parent=0
    #allocation7 [shape = 'u8[131072]{0}', space=vmem, size = 0x20000, scoped, tag = 'input window, operand 1, single buffered']
    #allocation8 [shape = 's32[2]{0}', space=sflag, size = 0x8, scoped, tag = 'scoped memory for decoder_forward.1']
    #allocation9 [shape = 'u8[512]{0}', space=vmem, size = 0x400, scoped, tag = 'input window, operand 2, single buffered']
    #allocation10 [shape = 's32[1]{0}', space=sflag, size = 0x4, scoped, tag = 'scoped memory for decoder_forward.1']
    #allocation11 [shape = 'u8[512]{0}', space=vmem, size = 0x400, scoped, tag = 'input window, operand 3, single buffered']
    #allocation12 [shape = 'u8[5242880]{0}', space=vmem, size = 0x500000, scoped, tag = 'input window, operand 4']
    #allocation13 [shape = 's32[2]{0}', space=sflag, size = 0x8, scoped, tag = 'scoped memory for decoder_forward.1']
    #allocation14 [shape = 'u8[8192]{0}', space=vmem, size = 0x2000, scoped, tag = 'input window, operand 6, single buffered']
    #allocation15 [shape = 'u8[4096]{0}', space=vmem, size = 0x1000, scoped, tag = 'input window, operand 7, single buffered']
    #allocation16 [shape = 's32[1]{0}', space=sflag, size = 0x4, scoped, tag = 'scoped memory for decoder_forward.1']
    #allocation17 [shape = 'u8[4096]{0}', space=vmem, size = 0x1000, scoped, tag = 'input window, operand 9, single buffered']
    #allocation18 [shape = 'u8[512]{0}', space=vmem, size = 0x400, scoped, tag = 'input window, operand 11, single buffered']
    #allocation19 [shape = 's32[1]{0}', space=sflag, size = 0x4, scoped, tag = 'scoped memory for decoder_forward.1']
    %21 = vsyncpa [#allocation8], 0
    %22 = vsyncpa [#allocation10], 0
    %23 = vsyncpa [#allocation13], 0
    %s24 = scalar_lea.sflag [#allocation13], 1
    %25 = vsyncpa %s24, 0
    %26 = vsyncpa [#allocation16], 0
    %27 = vsyncpa [#allocation19], 0
    loop: start=0, step=1, limit=7
    $region2: #{decoder_forward.1} parent=1 // loop_pre_header
      _
    $region3: #{decoder_forward.1} parent=1 // loop_header
      %s29 = sphi 0, %s33
      %p30 = scmp.ge.s32.totalorder %s29, 7
      %s39 = sphi 0, %s41
      %s42 = sphi 0, %s39
      %s43 = sphi 0, %s42
      %s59 = sphi 0, %s43
      %s63 = sphi 0, %s63
      %s65 = sphi 0, %s63
      %s66 = sphi 0, %s65
      %s80 = sphi 0, %s66
      %s84 = sphi 0, %s84
      %s86 = sphi 0, %s84
      %s87 = sphi 0, %s86
      %s101 = sphi 0, %s87
      %s105 = sphi 0, %s105
      %s107 = sphi 0, %s105
      %s108 = sphi 0, %s107
      %s122 = sphi 0, %s108
      %s128 = sphi 0, %s130
      %s131 = sphi 0, %s128
      %s132 = sphi 0, %s131
      %s148 = sphi 0, %s132
      %s152 = sphi 0, %s152
      %s154 = sphi 0, %s152
      %s155 = sphi 0, %s154
      %s169 = sphi 0, %s155
      %s173 = sphi 0, %s173
      %s175 = sphi 0, %s173
      %s176 = sphi 0, %s175
      %s190 = sphi 0, %s176
      %s194 = sphi 0, %s194
      %s196 = sphi 0, %s194
      %s197 = sphi 0, %s196
      %s211 = sphi 0, %s197
      %s215 = sphi 0, %s215
      %s217 = sphi 0, %s215
      %s218 = sphi 0, %s217
      %s232 = sphi 0, %s218
      %s236 = sphi 0, %s236
      %s238 = sphi 0, %s236
      %s239 = sphi 0, %s238
      %s253 = sphi 0, %s239
      %s257 = sphi 0, %s257
      %s259 = sphi 0, %s257
      %s260 = sphi 0, %s259
      %s274 = sphi 0, %s260
      %s278 = sphi 0, %s278
      %s280 = sphi 0, %s278
      %s281 = sphi 0, %s280
      %s295 = sphi 0, %s281
      %s299 = sphi 0, %s299
      %s301 = sphi 0, %s299
      %s302 = sphi 0, %s301
      %s316 = sphi 0, %s302
    $region4: #{decoder_forward.1} parent=1 // loop_header_branch
      %32 = sbr.rel (%p30) target = $region8
    $region5: #{decoder_forward.1} parent=1 // loop_body
      %s34 = ssub.s32 %s29, 1
      %s35 = ssub.s32 %s29, 2
      %s36 = sadd.s32 %s29, 1
      %s37 = ssub.s32 %s29, %s36
      %p38 = scmp.eq.s32.totalorder %s37, 0
      %s40 = sadd.s32 %s39, 1
      %s41 = scalar_select %p38, %s39, %s40
      %p44 = pneg %p38
      %p45 = scmp.eq.s32.totalorder %s29, 4
      %p46 = por %p44, %p45
      %p47 = scmp.ne.s32.totalorder %s39, %s42
      %p48 = scmp.eq.s32.totalorder %s29, 0
      %p49 = por %p47, %p48
      %p50 = scmp.ne.s32.totalorder %s39, %s42
      %p51 = scmp.eq.s32.totalorder %s34, 4
      %p52 = por %p50, %p51
      %p53 = scmp.ne.s32.totalorder %s42, %s43
      %p54 = scmp.eq.s32.totalorder %s34, 0
      %p55 = por %p53, %p54
      %p56 = scmp.ne.s32.totalorder %s42, %s43
      %p57 = scmp.eq.s32.totalorder %s35, 4
      %p58 = por %p56, %p57
      %p60 = scmp.ne.s32.totalorder %s43, %s59
      %p61 = scmp.eq.s32.totalorder %s35, 0
      %p62 = por %p60, %p61
      %s64 = sadd.s32 %s63, 1
      %p67 = scmp.eq.s32.totalorder %s29, 4
      %p68 = scmp.ne.s32.totalorder %s63, %s65
      %p69 = scmp.eq.s32.totalorder %s29, 0
      %p70 = por %p68, %p69
      %p71 = scmp.ne.s32.totalorder %s63, %s65
      %p72 = scmp.eq.s32.totalorder %s34, 4
      %p73 = por %p71, %p72
      %p74 = scmp.ne.s32.totalorder %s65, %s66
      %p75 = scmp.eq.s32.totalorder %s34, 0
      %p76 = por %p74, %p75
      %p77 = scmp.ne.s32.totalorder %s65, %s66
      %p78 = scmp.eq.s32.totalorder %s35, 4
      %p79 = por %p77, %p78
      %p81 = scmp.ne.s32.totalorder %s66, %s80
      %p82 = scmp.eq.s32.totalorder %s35, 0
      %p83 = por %p81, %p82
      %s85 = sadd.s32 %s84, 1
      %p88 = scmp.eq.s32.totalorder %s29, 4
      %p89 = scmp.ne.s32.totalorder %s84, %s86
      %p90 = scmp.eq.s32.totalorder %s29, 0
      %p91 = por %p89, %p90
      %p92 = scmp.ne.s32.totalorder %s84, %s86
      %p93 = scmp.eq.s32.totalorder %s34, 4
      %p94 = por %p92, %p93
      %p95 = scmp.ne.s32.totalorder %s86, %s87
      %p96 = scmp.eq.s32.totalorder %s34, 0
      %p97 = por %p95, %p96
      %p98 = scmp.ne.s32.totalorder %s86, %s87
      %p99 = scmp.eq.s32.totalorder %s35, 4
      %p100 = por %p98, %p99
      %p102 = scmp.ne.s32.totalorder %s87, %s101
      %p103 = scmp.eq.s32.totalorder %s35, 0
      %p104 = por %p102, %p103
      %s106 = sadd.s32 %s105, 1
      %p109 = scmp.eq.s32.totalorder %s29, 4
      %p110 = scmp.ne.s32.totalorder %s105, %s107
      %p111 = scmp.eq.s32.totalorder %s29, 0
      %p112 = por %p110, %p111
      %p113 = scmp.ne.s32.totalorder %s105, %s107
      %p114 = scmp.eq.s32.totalorder %s34, 4
      %p115 = por %p113, %p114
      %p116 = scmp.ne.s32.totalorder %s107, %s108
      %p117 = scmp.eq.s32.totalorder %s34, 0
      %p118 = por %p116, %p117
      %p119 = scmp.ne.s32.totalorder %s107, %s108
      %p120 = scmp.eq.s32.totalorder %s35, 4
      %p121 = por %p119, %p120
      %p123 = scmp.ne.s32.totalorder %s108, %s122
      %p124 = scmp.eq.s32.totalorder %s35, 0
      %p125 = por %p123, %p124
      %s126 = ssub.s32 %s29, %s36
      %p127 = scmp.eq.s32.totalorder %s126, 0
      %s129 = sadd.s32 %s128, 1
      %s130 = scalar_select %p127, %s128, %s129
      %p133 = pneg %p127
      %p134 = scmp.eq.s32.totalorder %s29, 4
      %p135 = por %p133, %p134
      %p136 = scmp.ne.s32.totalorder %s128, %s131
      %p137 = scmp.eq.s32.totalorder %s29, 0
      %p138 = por %p136, %p137
      %p139 = scmp.ne.s32.totalorder %s128, %s131
      %p140 = scmp.eq.s32.totalorder %s34, 4
      %p141 = por %p139, %p140
      %p142 = scmp.ne.s32.totalorder %s131, %s132
      %p143 = scmp.eq.s32.totalorder %s34, 0
      %p144 = por %p142, %p143
      %p145 = scmp.ne.s32.totalorder %s131, %s132
      %p146 = scmp.eq.s32.totalorder %s35, 4
      %p147 = por %p145, %p146
      %p149 = scmp.ne.s32.totalorder %s132, %s148
      %p150 = scmp.eq.s32.totalorder %s35, 0
      %p151 = por %p149, %p150
      %s153 = sadd.s32 %s152, 1
      %p156 = scmp.eq.s32.totalorder %s29, 4
      %p157 = scmp.ne.s32.totalorder %s152, %s154
      %p158 = scmp.eq.s32.totalorder %s29, 0
      %p159 = por %p157, %p158
      %p160 = scmp.ne.s32.totalorder %s152, %s154
      %p161 = scmp.eq.s32.totalorder %s34, 4
      %p162 = por %p160, %p161
      %p163 = scmp.ne.s32.totalorder %s154, %s155
      %p164 = scmp.eq.s32.totalorder %s34, 0
      %p165 = por %p163, %p164
      %p166 = scmp.ne.s32.totalorder %s154, %s155
      %p167 = scmp.eq.s32.totalorder %s35, 4
      %p168 = por %p166, %p167
      %p170 = scmp.ne.s32.totalorder %s155, %s169
      %p171 = scmp.eq.s32.totalorder %s35, 0
      %p172 = por %p170, %p171
      %s174 = sadd.s32 %s173, 1
      %p177 = scmp.eq.s32.totalorder %s29, 4
      %p178 = scmp.ne.s32.totalorder %s173, %s175
      %p179 = scmp.eq.s32.totalorder %s29, 0
      %p180 = por %p178, %p179
      %p181 = scmp.ne.s32.totalorder %s173, %s175
      %p182 = scmp.eq.s32.totalorder %s34, 4
      %p183 = por %p181, %p182
      %p184 = scmp.ne.s32.totalorder %s175, %s176
      %p185 = scmp.eq.s32.totalorder %s34, 0
      %p186 = por %p184, %p185
      %p187 = scmp.ne.s32.totalorder %s175, %s176
      %p188 = scmp.eq.s32.totalorder %s35, 4
      %p189 = por %p187, %p188
      %p191 = scmp.ne.s32.totalorder %s176, %s190
      %p192 = scmp.eq.s32.totalorder %s35, 0
      %p193 = por %p191, %p192
      %s195 = sadd.s32 %s194, 1
      %p198 = scmp.eq.s32.totalorder %s29, 4
      %p199 = scmp.ne.s32.totalorder %s194, %s196
      %p200 = scmp.eq.s32.totalorder %s29, 0
      %p201 = por %p199, %p200
      %p202 = scmp.ne.s32.totalorder %s194, %s196
      %p203 = scmp.eq.s32.totalorder %s34, 4
      %p204 = por %p202, %p203
      %p205 = scmp.ne.s32.totalorder %s196, %s197
      %p206 = scmp.eq.s32.totalorder %s34, 0
      %p207 = por %p205, %p206
      %p208 = scmp.ne.s32.totalorder %s196, %s197
      %p209 = scmp.eq.s32.totalorder %s35, 4
      %p210 = por %p208, %p209
      %p212 = scmp.ne.s32.totalorder %s197, %s211
      %p213 = scmp.eq.s32.totalorder %s35, 0
      %p214 = por %p212, %p213
      %s216 = sadd.s32 %s215, 1
      %p219 = scmp.eq.s32.totalorder %s29, 4
      %p220 = scmp.ne.s32.totalorder %s215, %s217
      %p221 = scmp.eq.s32.totalorder %s29, 0
      %p222 = por %p220, %p221
      %p223 = scmp.ne.s32.totalorder %s215, %s217
      %p224 = scmp.eq.s32.totalorder %s34, 4
      %p225 = por %p223, %p224
      %p226 = scmp.ne.s32.totalorder %s217, %s218
      %p227 = scmp.eq.s32.totalorder %s34, 0
      %p228 = por %p226, %p227
      %p229 = scmp.ne.s32.totalorder %s217, %s218
      %p230 = scmp.eq.s32.totalorder %s35, 4
      %p231 = por %p229, %p230
      %p233 = scmp.ne.s32.totalorder %s218, %s232
      %p234 = scmp.eq.s32.totalorder %s35, 0
      %p235 = por %p233, %p234
      %s237 = sadd.s32 %s236, 1
      %p240 = scmp.eq.s32.totalorder %s29, 4
      %p241 = scmp.ne.s32.totalorder %s236, %s238
      %p242 = scmp.eq.s32.totalorder %s29, 0
      %p243 = por %p241, %p242
      %p244 = scmp.ne.s32.totalorder %s236, %s238
      %p245 = scmp.eq.s32.totalorder %s34, 4
      %p246 = por %p244, %p245
      %p247 = scmp.ne.s32.totalorder %s238, %s239
      %p248 = scmp.eq.s32.totalorder %s34, 0
      %p249 = por %p247, %p248
      %p250 = scmp.ne.s32.totalorder %s238, %s239
      %p251 = scmp.eq.s32.totalorder %s35, 4
      %p252 = por %p250, %p251
      %p254 = scmp.ne.s32.totalorder %s239, %s253
      %p255 = scmp.eq.s32.totalorder %s35, 0
      %p256 = por %p254, %p255
      %s258 = sadd.s32 %s257, 1
      %p261 = scmp.eq.s32.totalorder %s29, 4
      %p262 = scmp.ne.s32.totalorder %s257, %s259
      %p263 = scmp.eq.s32.totalorder %s29, 0
      %p264 = por %p262, %p263
      %p265 = scmp.ne.s32.totalorder %s257, %s259
      %p266 = scmp.eq.s32.totalorder %s34, 4
      %p267 = por %p265, %p266
      %p268 = scmp.ne.s32.totalorder %s259, %s260
      %p269 = scmp.eq.s32.totalorder %s34, 0
      %p270 = por %p268, %p269
      %p271 = scmp.ne.s32.totalorder %s259, %s260
      %p272 = scmp.eq.s32.totalorder %s35, 4
      %p273 = por %p271, %p272
      %p275 = scmp.ne.s32.totalorder %s260, %s274
      %p276 = scmp.eq.s32.totalorder %s35, 0
      %p277 = por %p275, %p276
      %s279 = sadd.s32 %s278, 1
      %p282 = scmp.eq.s32.totalorder %s29, 4
      %p283 = scmp.ne.s32.totalorder %s278, %s280
      %p284 = scmp.eq.s32.totalorder %s29, 0
      %p285 = por %p283, %p284
      %p286 = scmp.ne.s32.totalorder %s278, %s280
      %p287 = scmp.eq.s32.totalorder %s34, 4
      %p288 = por %p286, %p287
      %p289 = scmp.ne.s32.totalorder %s280, %s281
      %p290 = scmp.eq.s32.totalorder %s34, 0
      %p291 = por %p289, %p290
      %p292 = scmp.ne.s32.totalorder %s280, %s281
      %p293 = scmp.eq.s32.totalorder %s35, 4
      %p294 = por %p292, %p293
      %p296 = scmp.ne.s32.totalorder %s281, %s295
      %p297 = scmp.eq.s32.totalorder %s35, 0
      %p298 = por %p296, %p297
      %s300 = sadd.s32 %s299, 1
      %p303 = scmp.eq.s32.totalorder %s29, 4
      %p304 = scmp.ne.s32.totalorder %s299, %s301
      %p305 = scmp.eq.s32.totalorder %s29, 0
      %p306 = por %p304, %p305
      %p307 = scmp.ne.s32.totalorder %s299, %s301
      %p308 = scmp.eq.s32.totalorder %s34, 4
      %p309 = por %p307, %p308
      %p310 = scmp.ne.s32.totalorder %s301, %s302
      %p311 = scmp.eq.s32.totalorder %s34, 0
      %p312 = por %p310, %p311
      %p313 = scmp.ne.s32.totalorder %s301, %s302
      %p314 = scmp.eq.s32.totalorder %s35, 4
      %p315 = por %p313, %p314
      %p317 = scmp.ne.s32.totalorder %s302, %s316
      %p318 = scmp.eq.s32.totalorder %s35, 0
      %p319 = por %p317, %p318
      %p320 = scmp.le.s32.totalorder 1, %s29
      %p321 = scmp.lt.s32.totalorder %s29, 6
      %p322 = pnand %p320, %p321
      %p323 = pneg %p322
      // Predicated region
      $region9: #{decoder_forward.1} parent=5 // pred_check
        _
      $region10: #{decoder_forward.1} parent=5 // pred_check_branch
        %325 = sbr.rel (%p322) target = $region12
      $region11: #{decoder_forward.1} parent=5 // pred_region
        %s326 = ssub.s32 %s29, 1
        // Predicated region
        $region13: #{decoder_forward.1} parent=11 // pred_check
          %p327 = pneg %p76
        $region14: #{decoder_forward.1} parent=11 // pred_check_branch
          %329 = sbr.rel (%p327) target = $region16
        $region15: #{decoder_forward.1} parent=11 // pred_region
          %s331 = ssub.s32 4096, 4096
          %332 = vsyncadd [#allocation8], %s331
          %s333 = sshll.u32 [#allocation7], 4
          %s334 = int_to_ptr.vmem [resolvable:$true] %s333
          %339 = dma.hbm_to_vmem [thread:$0]  %s1, 4096, %s334, [#allocation8], 64, 64, 4
        $region16: #{decoder_forward.1} parent=11 // pred_fallthru
          _
        // Predicated region
        $region17: #{decoder_forward.1} parent=11 // pred_check
          %p340 = pneg %p97
        $region18: #{decoder_forward.1} parent=11 // pred_check_branch
          %342 = sbr.rel (%p340) target = $region20
        $region19: #{decoder_forward.1} parent=11 // pred_region
          %s344 = ssub.s32 16, 16
          %345 = vsyncadd [#allocation10], %s344
          %s347 = sshll.u32 [#allocation9], 4
          %s348 = int_to_ptr.vmem [resolvable:$true] %s347
          %350 = dma.hbm_to_vmem [thread:$0]  %s2, 16, %s348, [#allocation10]
        $region20: #{decoder_forward.1} parent=11 // pred_fallthru
          _
        // Predicated region
        $region21: #{decoder_forward.1} parent=11 // pred_check
          %p351 = pneg %p118
        $region22: #{decoder_forward.1} parent=11 // pred_check_branch
          %353 = sbr.rel (%p351) target = $region24
        $region23: #{decoder_forward.1} parent=11 // pred_region
          %s355 = ssub.s32 16, 16
          %356 = vsyncadd [#allocation10], %s355
          %s358 = sshll.u32 [#allocation11], 4
          %s359 = int_to_ptr.vmem [resolvable:$true] %s358
          %361 = dma.hbm_to_vmem [thread:$0]  %s3, 16, %s359, [#allocation10]
        $region24: #{decoder_forward.1} parent=11 // pred_fallthru
          _
        // Predicated region
        $region25: #{decoder_forward.1} parent=11 // pred_check
          %p362 = pneg %p165
        $region26: #{decoder_forward.1} parent=11 // pred_check_branch
          %364 = sbr.rel (%p362) target = $region28
        $region27: #{decoder_forward.1} parent=11 // pred_region
          _
        $region28: #{decoder_forward.1} parent=11 // pred_fallthru
          _
        // Predicated region
        $region29: #{decoder_forward.1} parent=11 // pred_check
          %p365 = pneg %p186
        $region30: #{decoder_forward.1} parent=11 // pred_check_branch
          %367 = sbr.rel (%p365) target = $region32
        $region31: #{decoder_forward.1} parent=11 // pred_region
          %s369 = ssub.s32 256, 256
          %370 = vsyncadd [#allocation13], %s369
          %s372 = sshll.u32 [#allocation14], 4
          %s373 = int_to_ptr.vmem [resolvable:$true] %s372
          %375 = dma.hbm_to_vmem [thread:$0]  %s6, 256, %s373, [#allocation13]
        $region32: #{decoder_forward.1} parent=11 // pred_fallthru
          _
        // Predicated region
        $region33: #{decoder_forward.1} parent=11 // pred_check
          %p376 = pneg %p207
        $region34: #{decoder_forward.1} parent=11 // pred_check_branch
          %378 = sbr.rel (%p376) target = $region36
        $region35: #{decoder_forward.1} parent=11 // pred_region
          %s380 = ssub.s32 128, 128
          %381 = vsyncadd [#allocation16], %s380
          %s383 = sshll.u32 [#allocation15], 4
          %s384 = int_to_ptr.vmem [resolvable:$true] %s383
          %386 = dma.hbm_to_vmem [thread:$0]  %s7, 128, %s384, [#allocation16]
        $region36: #{decoder_forward.1} parent=11 // pred_fallthru
          _
        // Predicated region
        $region37: #{decoder_forward.1} parent=11 // pred_check
          %p387 = pneg %p228
        $region38: #{decoder_forward.1} parent=11 // pred_check_branch
          %389 = sbr.rel (%p387) target = $region40
        $region39: #{decoder_forward.1} parent=11 // pred_region
          %s391 = ssub.s32 128, 128
          %392 = vsyncadd [#allocation16], %s391
          %s394 = sshll.u32 [#allocation17], 4
          %s395 = int_to_ptr.vmem [resolvable:$true] %s394
          %397 = dma.hbm_to_vmem [thread:$0]  %s9, 128, %s395, [#allocation16]
        $region40: #{decoder_forward.1} parent=11 // pred_fallthru
          _
        // Predicated region
        $region41: #{decoder_forward.1} parent=11 // pred_check
          %p398 = pneg %p249
        $region42: #{decoder_forward.1} parent=11 // pred_check_branch
          %400 = sbr.rel (%p398) target = $region44
        $region43: #{decoder_forward.1} parent=11 // pred_region
          %s402 = ssub.s32 16, 16
          %403 = vsyncadd [#allocation19], %s402
          %s405 = sshll.u32 [#allocation18], 4
          %s406 = int_to_ptr.vmem [resolvable:$true] %s405
          %408 = dma.hbm_to_vmem [thread:$0]  %s11, 16, %s406, [#allocation19]
        $region44: #{decoder_forward.1} parent=11 // pred_fallthru
          _
        // Predicated region
        $region45: #{decoder_forward.1} parent=11 // pred_check
          %p409 = pneg %p270
        $region46: #{decoder_forward.1} parent=11 // pred_check_branch
          %411 = sbr.rel (%p409) target = $region48
        $region47: #{decoder_forward.1} parent=11 // pred_region
          _
        $region48: #{decoder_forward.1} parent=11 // pred_fallthru
          _
        // Predicated region
        $region49: #{decoder_forward.1} parent=11 // pred_check
          %p412 = pneg %p291
        $region50: #{decoder_forward.1} parent=11 // pred_check_branch
          %414 = sbr.rel (%p412) target = $region52
        $region51: #{decoder_forward.1} parent=11 // pred_region
          _
        $region52: #{decoder_forward.1} parent=11 // pred_fallthru
          _
      $region12: #{decoder_forward.1} parent=5 // pred_fallthru
        _
      %p415 = scmp.lt.s32.totalorder %s29, 5
      // Predicated region
      $region53: #{decoder_forward.1} parent=5 // pred_check
        %p416 = pneg %p415
      $region54: #{decoder_forward.1} parent=5 // pred_check_branch
        %418 = sbr.rel (%p416) target = $region56
      $region55: #{decoder_forward.1} parent=5 // pred_region
        // Predicated region
        $region57: #{decoder_forward.1} parent=55 // pred_check
          %p419 = pneg %p49
        $region58: #{decoder_forward.1} parent=55 // pred_check_branch
          %421 = sbr.rel (%p419) target = $region60
        $region59: #{decoder_forward.1} parent=55 // pred_region
          %p422 = scmp.lt.s32.totalorder %s29, 4
          %s423 = scalar_select %p422, %s29, 4
          %s424 = smul.addr %s423, 12
          %s425 = smul.addr %s424, 4
          %s426 = scalar_lea.vmem %s0, %s425
        $region60: #{decoder_forward.1} parent=55 // pred_fallthru
          _
        // Predicated region
        $region61: #{decoder_forward.1} parent=55 // pred_check
          %p427 = pneg %p138
        $region62: #{decoder_forward.1} parent=55 // pred_check_branch
          %429 = sbr.rel (%p427) target = $region64
        $region63: #{decoder_forward.1} parent=55 // pred_region
          %s430 = sand.u32 %s29, 1
          %s431 = scalar_lea.sflag [#allocation13], %s430
          %s432 = sand.u32 %s128, 1
          %s433 = smul.addr %s432, 5120
          %s434 = scalar_lea.vmem [#allocation12], %s433
          %s435 = smul.u32 160, %s29
          %s437 = ssub.s32 81920, 81920
          %438 = vsyncadd %s431, %s437
          %s439 = smul.addr %s435, 8
          %s440 = smul.addr %s439, 64
          %s441 = scalar_lea.hbm %s4, %s440
          %s442 = sshll.u32 %s434, 4
          %s443 = int_to_ptr.vmem [resolvable:$true] %s442
          %448 = dma.hbm_to_vmem [thread:$0]  %s441, 81920, %s443, %s431, 512, 512, 32
        $region64: #{decoder_forward.1} parent=55 // pred_fallthru
          _
      $region56: #{decoder_forward.1} parent=5 // pred_fallthru
        _
      %p449 = scmp.le.s32.totalorder 1, %s29
      %p450 = scmp.lt.s32.totalorder %s29, 6
      %p451 = pnand %p449, %p450
      %p452 = pneg %p451
      // Predicated region
      $region65: #{decoder_forward.1} parent=5 // pred_check
        _
      $region66: #{decoder_forward.1} parent=5 // pred_check_branch
        %454 = sbr.rel (%p451) target = $region68
      $region67: #{decoder_forward.1} parent=5 // pred_region
        %s455 = ssub.s32 %s29, 1
        // Predicated region
        $region69: #{decoder_forward.1} parent=67 // pred_check
          %p456 = pneg %p76
        $region70: #{decoder_forward.1} parent=67 // pred_check_branch
          %458 = sbr.rel (%p456) target = $region72
        $region71: #{decoder_forward.1} parent=67 // pred_region
          %459 = dma.done [#allocation8], 4096
        $region72: #{decoder_forward.1} parent=67 // pred_fallthru
          _
        // Predicated region
        $region73: #{decoder_forward.1} parent=67 // pred_check
          %p460 = pneg %p97
        $region74: #{decoder_forward.1} parent=67 // pred_check_branch
          %462 = sbr.rel (%p460) target = $region76
        $region75: #{decoder_forward.1} parent=67 // pred_region
          %463 = dma.done [#allocation10], 16
        $region76: #{decoder_forward.1} parent=67 // pred_fallthru
          _
        // Predicated region
        $region77: #{decoder_forward.1} parent=67 // pred_check
          %p464 = pneg %p118
        $region78: #{decoder_forward.1} parent=67 // pred_check_branch
          %466 = sbr.rel (%p464) target = $region80
        $region79: #{decoder_forward.1} parent=67 // pred_region
          %467 = dma.done [#allocation10], 16
        $region80: #{decoder_forward.1} parent=67 // pred_fallthru
          _
        %s468 = sand.u32 %s34, 1
        %s469 = scalar_lea.sflag [#allocation13], %s468
        %s470 = sand.u32 %s131, 1
        %s471 = smul.addr %s470, 5120
        %s472 = scalar_lea.vmem [#allocation12], %s471
        // Predicated region
        $region81: #{decoder_forward.1} parent=67 // pred_check
          %p473 = pneg %p144
        $region82: #{decoder_forward.1} parent=67 // pred_check_branch
          %475 = sbr.rel (%p473) target = $region84
        $region83: #{decoder_forward.1} parent=67 // pred_region
          %476 = dma.done %s469, 81920
        $region84: #{decoder_forward.1} parent=67 // pred_fallthru
          _
        // Predicated region
        $region85: #{decoder_forward.1} parent=67 // pred_check
          %p477 = pneg %p186
        $region86: #{decoder_forward.1} parent=67 // pred_check_branch
          %479 = sbr.rel (%p477) target = $region88
        $region87: #{decoder_forward.1} parent=67 // pred_region
          %480 = dma.done [#allocation13], 256
        $region88: #{decoder_forward.1} parent=67 // pred_fallthru
          _
        // Predicated region
        $region89: #{decoder_forward.1} parent=67 // pred_check
          %p481 = pneg %p207
        $region90: #{decoder_forward.1} parent=67 // pred_check_branch
          %483 = sbr.rel (%p481) target = $region92
        $region91: #{decoder_forward.1} parent=67 // pred_region
          %484 = dma.done [#allocation16], 128
        $region92: #{decoder_forward.1} parent=67 // pred_fallthru
          _
        // Predicated region
        $region93: #{decoder_forward.1} parent=67 // pred_check
          %p485 = pneg %p228
        $region94: #{decoder_forward.1} parent=67 // pred_check_branch
          %487 = sbr.rel (%p485) target = $region96
        $region95: #{decoder_forward.1} parent=67 // pred_region
          %488 = dma.done [#allocation16], 128
        $region96: #{decoder_forward.1} parent=67 // pred_fallthru
          _
        // Predicated region
        $region97: #{decoder_forward.1} parent=67 // pred_check
          %p489 = pneg %p249
        $region98: #{decoder_forward.1} parent=67 // pred_check_branch
          %491 = sbr.rel (%p489) target = $region100
        $region99: #{decoder_forward.1} parent=67 // pred_region
          %492 = dma.done [#allocation19], 16
        $region100: #{decoder_forward.1} parent=67 // pred_fallthru
          _
        %p493 = scmp.lt.s32.totalorder %s34, 4
        %s494 = scalar_select %p493, %s34, 4
        %s495 = smul.addr %s494, 12
        %s496 = smul.addr %s495, 4
        %s497 = scalar_lea.vmem %s0, %s496
        %p498 = pneg %p55
        %p499 = pneg %p52
        %p500 = pneg %p76
        %p501 = pneg %p73
        %p502 = pneg %p97
        %p503 = pneg %p94
        %p504 = pneg %p118
        %p505 = pneg %p115
        %s506 = sand.u32 %s34, 1
        %s507 = scalar_lea.sflag [#allocation13], %s506
        %s508 = sand.u32 %s131, 1
        %s509 = smul.addr %s508, 5120
        %s510 = scalar_lea.vmem [#allocation12], %s509
        %p511 = pneg %p144
        %p512 = pneg %p141
        %p513 = pneg %p165
        %p514 = pneg %p162
        %p515 = pneg %p186
        %p516 = pneg %p183
        %p517 = pneg %p207
        %p518 = pneg %p204
        %p519 = pneg %p228
        %p520 = pneg %p225
        %p521 = pneg %p249
        %p522 = pneg %p246
        %p523 = pneg %p270
        %p524 = pneg %p267
        %p525 = pneg %p291
        %p526 = pneg %p288
        %p527 = pneg %p312
        %p528 = pneg %p309
        %p529 = scmp.lt.s32.totalorder %s34, 4
        %s530 = scalar_select %p529, %s34, 4
        %s531 = smul.addr %s530, 12
        %s532 = smul.addr %s531, 4
        %s533 = scalar_lea.vmem %s0, %s532
        %s534 = smul.u32 160, %s34
        %p536 = scmp.eq.s32.totalorder %s34, 0
        // Predicated region
        $region101: #{decoder_forward.1} parent=67 // pred_check
          %p537 = pneg %p536
        $region102: #{decoder_forward.1} parent=67 // pred_check_branch
          %539 = sbr.rel (%p537) target = $region104
        $region103: #{decoder_forward.1} parent=67 // pred_region
          %540 = vst [vmem:[#allocation2] sm:$0xff] 0.0
          %541 = vst [vmem:[#allocation2 + $0x8] sm:$0xff] 0.0
          // Predicated region
          $region105: #{decoder_forward.1} parent=103 // pred_check
            _
          $region106: #{decoder_forward.1} parent=103 // pred_check_branch
            %543 = sbr.rel target = $region108
          $region107: #{decoder_forward.1} parent=103 // pred_region
            %544 = sst [smem:[#allocation22]] [#allocation21]
            %545 = sst [smem:[#allocation23]] [#allocation20]
          $region108: #{decoder_forward.1} parent=103 // pred_fallthru
            _
          %547 = shalt.err (0)
          %s549 = sshll.u32 [#allocation3], 4
          %s550 = int_to_ptr.vmem [resolvable:$true] %s549
          %552 = dma.hbm_to_vmem [thread:$0]  %s8, 65536, %s550, [#allocation5]
          %s553 = scalar_lea.sflag [#allocation5], 1
          // Predicated region
          $region109: #{decoder_forward.1} parent=103 // pred_check
            _
          $region110: #{decoder_forward.1} parent=103 // pred_check_branch
            %555 = sbr.rel target = $region112
          $region111: #{decoder_forward.1} parent=103 // pred_region
            %556 = sst [smem:[#allocation22]] [#allocation25]
            %557 = sst [smem:[#allocation23]] [#allocation24]
          $region112: #{decoder_forward.1} parent=103 // pred_fallthru
            _
          %559 = shalt.err (0)
          %s561 = sshll.u32 [#allocation4], 4
          %s562 = int_to_ptr.vmem [resolvable:$true] %s561
          %564 = dma.hbm_to_vmem [thread:$0]  %s10, 16384, %s562, %s553
        $region104: #{decoder_forward.1} parent=67 // pred_fallthru
          _
        %v565 = vld [vmem:[%s533] sm:$0xff]
        %v566 = vld [vmem:[%s533 + $0x8] sm:$0xff]
        %v567 = vld [vmem:[%s533 + $0x10] sm:$0xff]
        %v568 = vld [vmem:[%s533 + $0x18] sm:$0xff]
        %v569 = vld [vmem:[%s533 + $0x20] sm:$0x33]
        %v570 = vld [vmem:[%s533 + $0x28] sm:$0x33]
        %v571 = vld [vmem:[#allocation7] sm:$0xf]
        %v572 = vld [vmem:[#allocation7 + $0x4] sm:$0xf]
        %v573 = vld [vmem:[#allocation7 + $0x8] sm:$0xf]
        %v574 = vld [vmem:[#allocation7 + $0xc] sm:$0xf]
        %v575 = vld [vmem:[#allocation7 + $0x10] sm:$0xf]
        %v576 = vld [vmem:[#allocation7 + $0x14] sm:$0xf]
        %v577 = vld [vmem:[#allocation7 + $0x18] sm:$0xf]
        %v578 = vld [vmem:[#allocation7 + $0x1c] sm:$0xf]
        %v579 = vld [vmem:[#allocation7 + $0x20] sm:$0xf]
        %v580 = vld [vmem:[#allocation7 + $0x24] sm:$0xf]
        %v581 = vld [vmem:[#allocation7 + $0x28] sm:$0xf]
        %v582 = vld [vmem:[#allocation7 + $0x2c] sm:$0xf]
        %v583 = vld [vmem:[#allocation7 + $0x30] sm:$0xf]
        %v584 = vld [vmem:[#allocation7 + $0x34] sm:$0xf]
        %v585 = vld [vmem:[#allocation7 + $0x38] sm:$0xf]
        %v586 = vld [vmem:[#allocation7 + $0x3c] sm:$0xf]
        %v587 = vld [vmem:[#allocation7 + $0x40] sm:$0xf]
        %v588 = vld [vmem:[#allocation7 + $0x44] sm:$0xf]
        %v589 = vld [vmem:[#allocation7 + $0x48] sm:$0xf]
        %v590 = vld [vmem:[#allocation7 + $0x4c] sm:$0xf]
        %v591 = vld [vmem:[#allocation7 + $0x50] sm:$0xf]
        %v592 = vld [vmem:[#allocation7 + $0x54] sm:$0xf]
        %v593 = vld [vmem:[#allocation7 + $0x58] sm:$0xf]
        %v594 = vld [vmem:[#allocation7 + $0x5c] sm:$0xf]
        %v595 = vld [vmem:[#allocation7 + $0x60] sm:$0xf]
        %v596 = vld [vmem:[#allocation7 + $0x64] sm:$0xf]
        %v597 = vld [vmem:[#allocation7 + $0x68] sm:$0xf]
        %v598 = vld [vmem:[#allocation7 + $0x6c] sm:$0xf]
        %v599 = vld [vmem:[#allocation7 + $0x70] sm:$0xf]
        %v600 = vld [vmem:[#allocation7 + $0x74] sm:$0xf]
        %v601 = vld [vmem:[#allocation7 + $0x78] sm:$0xf]
        %v602 = vld [vmem:[#allocation7 + $0x7c] sm:$0xf]
        %v603 = vld [vmem:[#allocation7 + $0x80] sm:$0xf]
        %v604 = vld [vmem:[#allocation7 + $0x84] sm:$0xf]
        %v605 = vld [vmem:[#allocation7 + $0x88] sm:$0xf]
        %v606 = vld [vmem:[#allocation7 + $0x8c] sm:$0xf]
        %v607 = vld [vmem:[#allocation7 + $0x90] sm:$0xf]
        %v608 = vld [vmem:[#allocation7 + $0x94] sm:$0xf]
        %v609 = vld [vmem:[#allocation7 + $0x98] sm:$0xf]
        %v610 = vld [vmem:[#allocation7 + $0x9c] sm:$0xf]
        %v611 = vld [vmem:[#allocation7 + $0xa0] sm:$0xf]
        %v612 = vld [vmem:[#allocation7 + $0xa4] sm:$0xf]
        %v613 = vld [vmem:[#allocation7 + $0xa8] sm:$0xf]
        %v614 = vld [vmem:[#allocation7 + $0xac] sm:$0xf]
        %v615 = vld [vmem:[#allocation7 + $0xb0] sm:$0xf]
        %v616 = vld [vmem:[#allocation7 + $0xb4] sm:$0xf]
        %v617 = vld [vmem:[#allocation7 + $0xb8] sm:$0xf]
        %v618 = vld [vmem:[#allocation7 + $0xbc] sm:$0xf]
        %v619 = vld [vmem:[#allocation7 + $0xc0] sm:$0xf]
        %v620 = vld [vmem:[#allocation7 + $0xc4] sm:$0xf]
        %v621 = vld [vmem:[#allocation7 + $0xc8] sm:$0xf]
        %v622 = vld [vmem:[#allocation7 + $0xcc] sm:$0xf]
        %v623 = vld [vmem:[#allocation7 + $0xd0] sm:$0xf]
        %v624 = vld [vmem:[#allocation7 + $0xd4] sm:$0xf]
        %v625 = vld [vmem:[#allocation7 + $0xd8] sm:$0xf]
        %v626 = vld [vmem:[#allocation7 + $0xdc] sm:$0xf]
        %v627 = vld [vmem:[#allocation7 + $0xe0] sm:$0xf]
        %v628 = vld [vmem:[#allocation7 + $0xe4] sm:$0xf]
        %v629 = vld [vmem:[#allocation7 + $0xe8] sm:$0xf]
        %v630 = vld [vmem:[#allocation7 + $0xec] sm:$0xf]
        %v631 = vld [vmem:[#allocation7 + $0xf0] sm:$0xf]
        %v632 = vld [vmem:[#allocation7 + $0xf4] sm:$0xf]
        %v633 = vld [vmem:[#allocation7 + $0xf8] sm:$0xf]
        %v634 = vld [vmem:[#allocation7 + $0xfc] sm:$0xf]
        %v641 = vunpack.c.l.b16 %v565
        %v642 = vunpack.c.h.b16 %v565
        %v643 = vunpack.c.l.b16 %v566
        %v644 = vunpack.c.h.b16 %v566
        %v645 = vunpack.c.l.b16 %v567
        %v646 = vunpack.c.h.b16 %v567
        %v647 = vunpack.c.l.b16 %v568
        %v648 = vunpack.c.h.b16 %v568
        %v649 = vunpack.c.l.b16 %v569
        %v650 = vunpack.c.h.b16 %v569
        %v651 = vunpack.c.l.b16 %v570
        %v652 = vunpack.c.h.b16 %v570
        %v653 = vpack.c.b16 %v645, %v641
        %v654 = vpack.c.b16 %v646, %v642
        %v655 = vpack.c.b16 %v647, %v643
        %v656 = vpack.c.b16 %v648, %v644
        %v657 = vpack.c.b16 %v649, %v649
        %v658 = vpack.c.b16 %v650, %v650
        %v659 = vpack.c.b16 %v651, %v651
        %v660 = vpack.c.b16 %v652, %v652
        %v733 = vunpack.c.l.b16 %v571
        %v734 = vunpack.c.l.b16 %v572
        %v735 = vunpack.c.l.b16 %v573
        %v736 = vunpack.c.l.b16 %v574
        %v737 = vunpack.c.l.b16 %v575
        %v738 = vunpack.c.l.b16 %v576
        %v739 = vunpack.c.l.b16 %v577
        %v740 = vunpack.c.l.b16 %v578
        %v741 = vunpack.c.l.b16 %v579
        %v742 = vunpack.c.l.b16 %v580
        %v743 = vunpack.c.l.b16 %v581
        %v744 = vunpack.c.l.b16 %v582
        %v745 = vunpack.c.l.b16 %v583
        %v746 = vunpack.c.l.b16 %v584
        %v747 = vunpack.c.l.b16 %v585
        %v748 = vunpack.c.l.b16 %v586
        %v749 = vunpack.c.l.b16 %v587
        %v750 = vunpack.c.l.b16 %v588
        %v751 = vunpack.c.l.b16 %v589
        %v752 = vunpack.c.l.b16 %v590
        %v753 = vunpack.c.l.b16 %v591
        %v754 = vunpack.c.l.b16 %v592
        %v755 = vunpack.c.l.b16 %v593
        %v756 = vunpack.c.l.b16 %v594
        %v757 = vunpack.c.l.b16 %v595
        %v758 = vunpack.c.l.b16 %v596
        %v759 = vunpack.c.l.b16 %v597
        %v760 = vunpack.c.l.b16 %v598
        %v761 = vunpack.c.l.b16 %v599
        %v762 = vunpack.c.l.b16 %v600
        %v763 = vunpack.c.l.b16 %v601
        %v764 = vunpack.c.l.b16 %v602
        %v765 = vunpack.c.l.b16 %v603
        %v766 = vunpack.c.l.b16 %v604
        %v767 = vunpack.c.l.b16 %v605
        %v768 = vunpack.c.l.b16 %v606
        %v769 = vunpack.c.l.b16 %v607
        %v770 = vunpack.c.l.b16 %v608
        %v771 = vunpack.c.l.b16 %v609
        %v772 = vunpack.c.l.b16 %v610
        %v773 = vunpack.c.l.b16 %v611
        %v774 = vunpack.c.l.b16 %v612
        %v775 = vunpack.c.l.b16 %v613
        %v776 = vunpack.c.l.b16 %v614
        %v777 = vunpack.c.l.b16 %v615
        %v778 = vunpack.c.l.b16 %v616
        %v779 = vunpack.c.l.b16 %v617
        %v780 = vunpack.c.l.b16 %v618
        %v781 = vunpack.c.l.b16 %v619
        %v782 = vunpack.c.l.b16 %v620
        %v783 = vunpack.c.l.b16 %v621
        %v784 = vunpack.c.l.b16 %v622
        %v785 = vunpack.c.l.b16 %v623
        %v786 = vunpack.c.l.b16 %v624
        %v787 = vunpack.c.l.b16 %v625
        %v788 = vunpack.c.l.b16 %v626
        %v789 = vunpack.c.l.b16 %v627
        %v790 = vunpack.c.l.b16 %v628
        %v791 = vunpack.c.l.b16 %v629
        %v792 = vunpack.c.l.b16 %v630
        %v793 = vunpack.c.l.b16 %v631
        %v794 = vunpack.c.l.b16 %v632
        %v795 = vunpack.c.l.b16 %v633
        %v796 = vunpack.c.l.b16 %v634
        %v797 = vpack.c.b16 %v734, %v733
        %v798 = vpack.c.b16 %v736, %v735
        %v799 = vpack.c.b16 %v738, %v737
        %v800 = vpack.c.b16 %v740, %v739
        %v801 = vpack.c.b16 %v742, %v741
        %v802 = vpack.c.b16 %v744, %v743
        %v803 = vpack.c.b16 %v746, %v745
        %v804 = vpack.c.b16 %v748, %v747
        %v805 = vpack.c.b16 %v750, %v749
        %v806 = vpack.c.b16 %v752, %v751
        %v807 = vpack.c.b16 %v754, %v753
        %v808 = vpack.c.b16 %v756, %v755
        %v809 = vpack.c.b16 %v758, %v757
        %v810 = vpack.c.b16 %v760, %v759
        %v811 = vpack.c.b16 %v762, %v761
        %v812 = vpack.c.b16 %v764, %v763
        %v813 = vpack.c.b16 %v766, %v765
        %v814 = vpack.c.b16 %v768, %v767
        %v815 = vpack.c.b16 %v770, %v769
        %v816 = vpack.c.b16 %v772, %v771
        %v817 = vpack.c.b16 %v774, %v773
        %v818 = vpack.c.b16 %v776, %v775
        %v819 = vpack.c.b16 %v778, %v777
        %v820 = vpack.c.b16 %v780, %v779
        %v821 = vpack.c.b16 %v782, %v781
        %v822 = vpack.c.b16 %v784, %v783
        %v823 = vpack.c.b16 %v786, %v785
        %v824 = vpack.c.b16 %v788, %v787
        %v825 = vpack.c.b16 %v790, %v789
        %v826 = vpack.c.b16 %v792, %v791
        %v827 = vpack.c.b16 %v794, %v793
        %v828 = vpack.c.b16 %v796, %v795
        %861 = vmatprep.subr.bf16.mxu0 0
        %862 = vmatpush1.bf16.msra.mxu0 %v804
        %863 = vmatprep.subr.bf16.mxu0 0
        %864 = vmatpush1.bf16.msra.mxu0 %v803
        %865 = vmatprep.subr.bf16.mxu0 0
        %866 = vmatpush1.bf16.msra.mxu0 %v802
        %867 = vmatprep.subr.bf16.mxu0 0
        %868 = vmatpush1.bf16.msra.mxu0 %v801
        %869 = vmatprep.subr.bf16.mxu0 0
        %870 = vmatpush1.bf16.msra.mxu0 %v800
        %871 = vmatprep.subr.bf16.mxu0 0
        %872 = vmatpush1.bf16.msra.mxu0 %v799
        %873 = vmatprep.subr.bf16.mxu0 0
        %874 = vmatpush1.bf16.msra.mxu0 %v798
        %875 = vmatprep.subr.bf16.mxu0 0
        %876 = vmatpush1.bf16.msra.mxu0 %v797
        %877 = vmatprep.subr.bf16.mxu0 0
        %878 = vmatpush2.bf16.msra.mxu0 %v812
        %879 = vmatprep.subr.bf16.mxu0 0
        %880 = vmatpush2.bf16.msra.mxu0 %v811
        %881 = vmatprep.subr.bf16.mxu0 0
        %882 = vmatpush2.bf16.msra.mxu0 %v810
        %883 = vmatprep.subr.bf16.mxu0 0
        %884 = vmatpush2.bf16.msra.mxu0 %v809
        %885 = vmatprep.subr.bf16.mxu0 0
        %886 = vmatpush2.bf16.msra.mxu0 %v808
        %887 = vmatprep.subr.bf16.mxu0 0
        %888 = vmatpush2.bf16.msra.mxu0 %v807
        %889 = vmatprep.subr.bf16.mxu0 0
        %890 = vmatpush2.bf16.msra.mxu0 %v806
        %891 = vmatprep.subr.bf16.mxu0 0
        %892 = vmatpush2.bf16.msra.mxu0 %v805
        %893 = vmatprep.mubr.bf16.mxu0 %v654
        %894 = vmatmul.mubr.bf16.gmra.mxu0 %v653
        %v895 = vpop.f32.mrf.mxu0
        %v896 = vadd.f32 0.0, %v895
        %v897 = vpop.f32.mrf.mxu0
        %v898 = vpop.f32.mrf.mxu0
        %v899 = vadd.f32 0.0, %v898
        %v900 = vpop.f32.mrf.mxu0
        %901 = vmatprep.mubr.bf16.mxu0 %v658
        %902 = vmatmul.mubr.bf16.gmra.mxu0 %v657
        %v903 = vpop.f32.mrf.mxu0
        %v904 = vadd.f32 0.0, %v903
        %v905 = vpop.f32.mrf.mxu0
        %v906 = vpop.f32.mrf.mxu0
        %v907 = vpop.f32.mrf.mxu0
        %908 = vdwg.mxu0
        %909 = vmatprep.subr.bf16.mxu0 0
        %910 = vmatpush1.bf16.msra.mxu0 %v820
        %911 = vmatprep.subr.bf16.mxu0 0
        %912 = vmatpush1.bf16.msra.mxu0 %v819
        %913 = vmatprep.subr.bf16.mxu0 0
        %914 = vmatpush1.bf16.msra.mxu0 %v818
        %915 = vmatprep.subr.bf16.mxu0 0
        %916 = vmatpush1.bf16.msra.mxu0 %v817
        %917 = vmatprep.subr.bf16.mxu0 0
        %918 = vmatpush1.bf16.msra.mxu0 %v816
        %919 = vmatprep.subr.bf16.mxu0 0
        %920 = vmatpush1.bf16.msra.mxu0 %v815
        %921 = vmatprep.subr.bf16.mxu0 0
        %922 = vmatpush1.bf16.msra.mxu0 %v814
        %923 = vmatprep.subr.bf16.mxu0 0
        %924 = vmatpush1.bf16.msra.mxu0 %v813
        %925 = vmatprep.subr.bf16.mxu0 0
        %926 = vmatpush2.bf16.msra.mxu0 %v828
        %927 = vmatprep.subr.bf16.mxu0 0
        %928 = vmatpush2.bf16.msra.mxu0 %v827
        %929 = vmatprep.subr.bf16.mxu0 0
        %930 = vmatpush2.bf16.msra.mxu0 %v826
        %931 = vmatprep.subr.bf16.mxu0 0
        %932 = vmatpush2.bf16.msra.mxu0 %v825
        %933 = vmatprep.subr.bf16.mxu0 0
        %934 = vmatpush2.bf16.msra.mxu0 %v824
        %935 = vmatprep.subr.bf16.mxu0 0
        %936 = vmatpush2.bf16.msra.mxu0 %v823
        %937 = vmatprep.subr.bf16.mxu0 0
        %938 = vmatpush2.bf16.msra.mxu0 %v822
        %939 = vmatprep.subr.bf16.mxu0 0
        %940 = vmatpush2.bf16.msra.mxu0 %v821
        %941 = vmatprep.mubr.bf16.mxu0 %v656
        %942 = vmatmul.mubr.bf16.gmra.mxu0 %v655
        %v943 = vpop.f32.mrf.mxu0
        %v944 = vadd.f32 %v896, %v943
        %v945 = vpop.f32.mrf.mxu0
        %v946 = vpop.f32.mrf.mxu0
        %v947 = vadd.f32 %v899, %v946
        %v948 = vpop.f32.mrf.mxu0
        %949 = vmatprep.mubr.bf16.mxu0 %v660
        %950 = vmatmul.mubr.bf16.gmra.mxu0 %v659
        %v951 = vpop.f32.mrf.mxu0
        %v952 = vadd.f32 %v904, %v951
        %v953 = vpop.f32.mrf.mxu0
        %v954 = vpop.f32.mrf.mxu0
        %v955 = vpop.f32.mrf.mxu0
        %956 = vdwg.mxu0
        %v957 = vld [vmem:[#allocation9] sm:$0x1]
        %v959 = vlaneseq
        %v960 = vshrl.u32 %v959, 7
        %v961 = vsub.s32 0, %v960
        %v962 = vrot.slane %v957, %v961
        %v964 = vmul.f32 %v944, %v962
        %v965 = vmul.f32 %v947, %v962
        %v966 = vmul.f32 %v952, %v962
        %v967 = vld [vmem:[#allocation11] sm:$0x1]
        %v969 = vlaneseq
        %v970 = vshrl.u32 %v969, 7
        %v971 = vsub.s32 0, %v970
        %v972 = vrot.slane %v967, %v971
        %v974 = vadd.f32 %v964, %v972
        %v975 = vadd.f32 %v965, %v972
        %v976 = vadd.f32 %v966, %v972
        %v977 = vmax.f32 %v974, 0.0
        %v978 = vmax.f32 %v975, 0.0
        %v979 = vmax.f32 %v976, 0.0
        %v980 = vpack.c.bf16 %v978, %v977
        %v981 = vpack.c.bf16 %v979, %v979
        %v983 = vrot.slane %v980, 1
        %v985 = vrot.slane %v980, 2
        %v987 = vrot.slane %v980, 3
        %v989 = vrot.slane %v980, 4
        %v991 = vrot.slane %v980, 5
        %v993 = vrot.slane %v980, 6
        %v995 = vrot.slane %v980, 7
        %v998 = vrot.slane %v981, 1
        %v1000 = vld [vmem:[#allocation2] sm:$0xff]
        %v1001 = vld [vmem:[#allocation2 + $0x8] sm:$0xff]
        %v1002 = vld [vmem:[%s472] sm:$0xff]
        %v1003 = vld [vmem:[%s472 + $0x8] sm:$0xff]
        %v1004 = vld [vmem:[%s472 + $0x10] sm:$0xff]
        %v1005 = vld [vmem:[%s472 + $0x18] sm:$0xff]
        %v1006 = vld [vmem:[%s472 + $0x20] sm:$0xff]
        %v1007 = vld [vmem:[%s472 + $0x28] sm:$0xff]
        %v1008 = vld [vmem:[%s472 + $0x30] sm:$0xff]
        %v1009 = vld [vmem:[%s472 + $0x38] sm:$0xff]
        %v1010 = vld [vmem:[%s472 + $0x40] sm:$0xff]
        %v1011 = vld [vmem:[%s472 + $0x48] sm:$0xff]
        %v1012 = vld [vmem:[%s472 + $0x50] sm:$0xff]
        %v1013 = vld [vmem:[%s472 + $0x58] sm:$0xff]
        %v1014 = vld [vmem:[%s472 + $0x60] sm:$0xff]
        %v1015 = vld [vmem:[%s472 + $0x68] sm:$0xff]
        %v1016 = vld [vmem:[%s472 + $0x70] sm:$0xff]
        %v1017 = vld [vmem:[%s472 + $0x78] sm:$0xff]
        %v1018 = vld [vmem:[%s472 + $0x80] sm:$0xff]
        %v1019 = vld [vmem:[%s472 + $0x88] sm:$0xff]
        %v1020 = vld [vmem:[%s472 + $0x90] sm:$0xff]
        %v1021 = vld [vmem:[%s472 + $0x98] sm:$0xff]
        %v1022 = vld [vmem:[%s472 + $0xa0] sm:$0xff]
        %v1023 = vld [vmem:[%s472 + $0xa8] sm:$0xff]
        %v1024 = vld [vmem:[%s472 + $0xb0] sm:$0xff]
        %v1025 = vld [vmem:[%s472 + $0xb8] sm:$0xff]
        %v1026 = vld [vmem:[%s472 + $0xc0] sm:$0xff]
        %v1027 = vld [vmem:[%s472 + $0xc8] sm:$0xff]
        %v1028 = vld [vmem:[%s472 + $0xd0] sm:$0xff]
        %v1029 = vld [vmem:[%s472 + $0xd8] sm:$0xff]
        %v1030 = vld [vmem:[%s472 + $0xe0] sm:$0xff]
        %v1031 = vld [vmem:[%s472 + $0xe8] sm:$0xff]
        %v1032 = vld [vmem:[%s472 + $0xf0] sm:$0xff]
        %v1033 = vld [vmem:[%s472 + $0xf8] sm:$0xff]
        %v1034 = vld [vmem:[%s472 + $0x100] sm:$0xff]
        %v1035 = vld [vmem:[%s472 + $0x108] sm:$0xff]
        %v1036 = vld [vmem:[%s472 + $0x110] sm:$0xff]
        %v1037 = vld [vmem:[%s472 + $0x118] sm:$0xff]
        %v1038 = vld [vmem:[%s472 + $0x120] sm:$0xff]
        %v1039 = vld [vmem:[%s472 + $0x128] sm:$0xff]
        %v1040 = vld [vmem:[%s472 + $0x130] sm:$0xff]
        %v1041 = vld [vmem:[%s472 + $0x138] sm:$0xff]
        %v1042 = vld [vmem:[%s472 + $0x140] sm:$0xff]
        %v1043 = vld [vmem:[%s472 + $0x148] sm:$0xff]
        %v1044 = vld [vmem:[%s472 + $0x150] sm:$0xff]
        %v1045 = vld [vmem:[%s472 + $0x158] sm:$0xff]
        %v1046 = vld [vmem:[%s472 + $0x160] sm:$0xff]
        %v1047 = vld [vmem:[%s472 + $0x168] sm:$0xff]
        %v1048 = vld [vmem:[%s472 + $0x170] sm:$0xff]
        %v1049 = vld [vmem:[%s472 + $0x178] sm:$0xff]
        %v1050 = vld [vmem:[%s472 + $0x180] sm:$0xff]
        %v1051 = vld [vmem:[%s472 + $0x188] sm:$0xff]
        %v1052 = vld [vmem:[%s472 + $0x190] sm:$0xff]
        %v1053 = vld [vmem:[%s472 + $0x198] sm:$0xff]
        %v1054 = vld [vmem:[%s472 + $0x1a0] sm:$0xff]
        %v1055 = vld [vmem:[%s472 + $0x1a8] sm:$0xff]
        %v1056 = vld [vmem:[%s472 + $0x1b0] sm:$0xff]
        %v1057 = vld [vmem:[%s472 + $0x1b8] sm:$0xff]
        %v1058 = vld [vmem:[%s472 + $0x1c0] sm:$0xff]
        %v1059 = vld [vmem:[%s472 + $0x1c8] sm:$0xff]
        %v1060 = vld [vmem:[%s472 + $0x1d0] sm:$0xff]
        %v1061 = vld [vmem:[%s472 + $0x1d8] sm:$0xff]
        %v1062 = vld [vmem:[%s472 + $0x1e0] sm:$0xff]
        %v1063 = vld [vmem:[%s472 + $0x1e8] sm:$0xff]
        %v1064 = vld [vmem:[%s472 + $0x1f0] sm:$0xff]
        %v1065 = vld [vmem:[%s472 + $0x1f8] sm:$0xff]
        %v1066 = vld [vmem:[%s472 + $0x200] sm:$0xff]
        %v1067 = vld [vmem:[%s472 + $0x208] sm:$0xff]
        %v1068 = vld [vmem:[%s472 + $0x210] sm:$0xff]
        %v1069 = vld [vmem:[%s472 + $0x218] sm:$0xff]
        %v1070 = vld [vmem:[%s472 + $0x220] sm:$0xff]
        %v1071 = vld [vmem:[%s472 + $0x228] sm:$0xff]
        %v1072 = vld [vmem:[%s472 + $0x230] sm:$0xff]
        %v1073 = vld [vmem:[%s472 + $0x238] sm:$0xff]
        %v1074 = vld [vmem:[%s472 + $0x240] sm:$0xff]
        %v1075 = vld [vmem:[%s472 + $0x248] sm:$0xff]
        %v1076 = vld [vmem:[%s472 + $0x250] sm:$0xff]
        %v1077 = vld [vmem:[%s472 + $0x258] sm:$0xff]
        %v1078 = vld [vmem:[%s472 + $0x260] sm:$0xff]
        %v1079 = vld [vmem:[%s472 + $0x268] sm:$0xff]
        %v1080 = vld [vmem:[%s472 + $0x270] sm:$0xff]
        %v1081 = vld [vmem:[%s472 + $0x278] sm:$0xff]
        %v1082 = vld [vmem:[%s472 + $0x280] sm:$0xff]
        %v1083 = vld [vmem:[%s472 + $0x288] sm:$0xff]
        %v1084 = vld [vmem:[%s472 + $0x290] sm:$0xff]
        %v1085 = vld [vmem:[%s472 + $0x298] sm:$0xff]
        %v1086 = vld [vmem:[%s472 + $0x2a0] sm:$0xff]
        %v1087 = vld [vmem:[%s472 + $0x2a8] sm:$0xff]
        %v1088 = vld [vmem:[%s472 + $0x2b0] sm:$0xff]
        %v1089 = vld [vmem:[%s472 + $0x2b8] sm:$0xff]
        %v1090 = vld [vmem:[%s472 + $0x2c0] sm:$0xff]
        %v1091 = vld [vmem:[%s472 + $0x2c8] sm:$0xff]
        %v1092 = vld [vmem:[%s472 + $0x2d0] sm:$0xff]
        %v1093 = vld [vmem:[%s472 + $0x2d8] sm:$0xff]
        %v1094 = vld [vmem:[%s472 + $0x2e0] sm:$0xff]
        %v1095 = vld [vmem:[%s472 + $0x2e8] sm:$0xff]
        %v1096 = vld [vmem:[%s472 + $0x2f0] sm:$0xff]
        %v1097 = vld [vmem:[%s472 + $0x2f8] sm:$0xff]
        %v1098 = vld [vmem:[%s472 + $0x300] sm:$0xff]
        %v1099 = vld [vmem:[%s472 + $0x308] sm:$0xff]
        %v1100 = vld [vmem:[%s472 + $0x310] sm:$0xff]
        %v1101 = vld [vmem:[%s472 + $0x318] sm:$0xff]
        %v1102 = vld [vmem:[%s472 + $0x320] sm:$0xff]
        %v1103 = vld [vmem:[%s472 + $0x328] sm:$0xff]
        %v1104 = vld [vmem:[%s472 + $0x330] sm:$0xff]
        %v1105 = vld [vmem:[%s472 + $0x338] sm:$0xff]
        %v1106 = vld [vmem:[%s472 + $0x340] sm:$0xff]
        %v1107 = vld [vmem:[%s472 + $0x348] sm:$0xff]
        %v1108 = vld [vmem:[%s472 + $0x350] sm:$0xff]
        %v1109 = vld [vmem:[%s472 + $0x358] sm:$0xff]
        %v1110 = vld [vmem:[%s472 + $0x360] sm:$0xff]
        %v1111 = vld [vmem:[%s472 + $0x368] sm:$0xff]
        %v1112 = vld [vmem:[%s472 + $0x370] sm:$0xff]
        %v1113 = vld [vmem:[%s472 + $0x378] sm:$0xff]
        %v1114 = vld [vmem:[%s472 + $0x380] sm:$0xff]
        %v1115 = vld [vmem:[%s472 + $0x388] sm:$0xff]
        %v1116 = vld [vmem:[%s472 + $0x390] sm:$0xff]
        %v1117 = vld [vmem:[%s472 + $0x398] sm:$0xff]
        %v1118 = vld [vmem:[%s472 + $0x3a0] sm:$0xff]
        %v1119 = vld [vmem:[%s472 + $0x3a8] sm:$0xff]
        %v1120 = vld [vmem:[%s472 + $0x3b0] sm:$0xff]
        %v1121 = vld [vmem:[%s472 + $0x3b8] sm:$0xff]
        %v1122 = vld [vmem:[%s472 + $0x3c0] sm:$0xff]
        %v1123 = vld [vmem:[%s472 + $0x3c8] sm:$0xff]
        %v1124 = vld [vmem:[%s472 + $0x3d0] sm:$0xff]
        %v1125 = vld [vmem:[%s472 + $0x3d8] sm:$0xff]
        %v1126 = vld [vmem:[%s472 + $0x3e0] sm:$0xff]
        %v1127 = vld [vmem:[%s472 + $0x3e8] sm:$0xff]
        %v1128 = vld [vmem:[%s472 + $0x3f0] sm:$0xff]
        %v1129 = vld [vmem:[%s472 + $0x3f8] sm:$0xff]
        %v1130 = vld [vmem:[%s472 + $0x400] sm:$0xff]
        %v1131 = vld [vmem:[%s472 + $0x408] sm:$0xff]
        %v1132 = vld [vmem:[%s472 + $0x410] sm:$0xff]
        %v1133 = vld [vmem:[%s472 + $0x418] sm:$0xff]
        %v1134 = vld [vmem:[%s472 + $0x420] sm:$0xff]
        %v1135 = vld [vmem:[%s472 + $0x428] sm:$0xff]
        %v1136 = vld [vmem:[%s472 + $0x430] sm:$0xff]
        %v1137 = vld [vmem:[%s472 + $0x438] sm:$0xff]
        %v1138 = vld [vmem:[%s472 + $0x440] sm:$0xff]
        %v1139 = vld [vmem:[%s472 + $0x448] sm:$0xff]
        %v1140 = vld [vmem:[%s472 + $0x450] sm:$0xff]
        %v1141 = vld [vmem:[%s472 + $0x458] sm:$0xff]
        %v1142 = vld [vmem:[%s472 + $0x460] sm:$0xff]
        %v1143 = vld [vmem:[%s472 + $0x468] sm:$0xff]
        %v1144 = vld [vmem:[%s472 + $0x470] sm:$0xff]
        %v1145 = vld [vmem:[%s472 + $0x478] sm:$0xff]
        %v1146 = vld [vmem:[%s472 + $0x480] sm:$0xff]
        %v1147 = vld [vmem:[%s472 + $0x488] sm:$0xff]
        %v1148 = vld [vmem:[%s472 + $0x490] sm:$0xff]
        %v1149 = vld [vmem:[%s472 + $0x498] sm:$0xff]
        %v1150 = vld [vmem:[%s472 + $0x4a0] sm:$0xff]
        %v1151 = vld [vmem:[%s472 + $0x4a8] sm:$0xff]
        %v1152 = vld [vmem:[%s472 + $0x4b0] sm:$0xff]
        %v1153 = vld [vmem:[%s472 + $0x4b8] sm:$0xff]
        %v1154 = vld [vmem:[%s472 + $0x4c0] sm:$0xff]
        %v1155 = vld [vmem:[%s472 + $0x4c8] sm:$0xff]
        %v1156 = vld [vmem:[%s472 + $0x4d0] sm:$0xff]
        %v1157 = vld [vmem:[%s472 + $0x4d8] sm:$0xff]
        %v1158 = vld [vmem:[%s472 + $0x4e0] sm:$0xff]
        %v1159 = vld [vmem:[%s472 + $0x4e8] sm:$0xff]
        %v1160 = vld [vmem:[%s472 + $0x4f0] sm:$0xff]
        %v1161 = vld [vmem:[%s472 + $0x4f8] sm:$0xff]
        %v1162 = vld [vmem:[%s472 + $0x500] sm:$0xff]
        %v1163 = vld [vmem:[%s472 + $0x508] sm:$0xff]
        %v1164 = vld [vmem:[%s472 + $0x510] sm:$0xff]
        %v1165 = vld [vmem:[%s472 + $0x518] sm:$0xff]
        %v1166 = vld [vmem:[%s472 + $0x520] sm:$0xff]
        %v1167 = vld [vmem:[%s472 + $0x528] sm:$0xff]
        %v1168 = vld [vmem:[%s472 + $0x530] sm:$0xff]
        %v1169 = vld [vmem:[%s472 + $0x538] sm:$0xff]
        %v1170 = vld [vmem:[%s472 + $0x540] sm:$0xff]
        %v1171 = vld [vmem:[%s472 + $0x548] sm:$0xff]
        %v1172 = vld [vmem:[%s472 + $0x550] sm:$0xff]
        %v1173 = vld [vmem:[%s472 + $0x558] sm:$0xff]
        %v1174 = vld [vmem:[%s472 + $0x560] sm:$0xff]
        %v1175 = vld [vmem:[%s472 + $0x568] sm:$0xff]
        %v1176 = vld [vmem:[%s472 + $0x570] sm:$0xff]
        %v1177 = vld [vmem:[%s472 + $0x578] sm:$0xff]
        %v1178 = vld [vmem:[%s472 + $0x580] sm:$0xff]
        %v1179 = vld [vmem:[%s472 + $0x588] sm:$0xff]
        %v1180 = vld [vmem:[%s472 + $0x590] sm:$0xff]
        %v1181 = vld [vmem:[%s472 + $0x598] sm:$0xff]
        %v1182 = vld [vmem:[%s472 + $0x5a0] sm:$0xff]
        %v1183 = vld [vmem:[%s472 + $0x5a8] sm:$0xff]
        %v1184 = vld [vmem:[%s472 + $0x5b0] sm:$0xff]
        %v1185 = vld [vmem:[%s472 + $0x5b8] sm:$0xff]
        %v1186 = vld [vmem:[%s472 + $0x5c0] sm:$0xff]
        %v1187 = vld [vmem:[%s472 + $0x5c8] sm:$0xff]
        %v1188 = vld [vmem:[%s472 + $0x5d0] sm:$0xff]
        %v1189 = vld [vmem:[%s472 + $0x5d8] sm:$0xff]
        %v1190 = vld [vmem:[%s472 + $0x5e0] sm:$0xff]
        %v1191 = vld [vmem:[%s472 + $0x5e8] sm:$0xff]
        %v1192 = vld [vmem:[%s472 + $0x5f0] sm:$0xff]
        %v1193 = vld [vmem:[%s472 + $0x5f8] sm:$0xff]
        %v1194 = vld [vmem:[%s472 + $0x600] sm:$0xff]
        %v1195 = vld [vmem:[%s472 + $0x608] sm:$0xff]
        %v1196 = vld [vmem:[%s472 + $0x610] sm:$0xff]
        %v1197 = vld [vmem:[%s472 + $0x618] sm:$0xff]
        %v1198 = vld [vmem:[%s472 + $0x620] sm:$0xff]
        %v1199 = vld [vmem:[%s472 + $0x628] sm:$0xff]
        %v1200 = vld [vmem:[%s472 + $0x630] sm:$0xff]
        %v1201 = vld [vmem:[%s472 + $0x638] sm:$0xff]
        %v1202 = vld [vmem:[%s472 + $0x640] sm:$0xff]
        %v1203 = vld [vmem:[%s472 + $0x648] sm:$0xff]
        %v1204 = vld [vmem:[%s472 + $0x650] sm:$0xff]
        %v1205 = vld [vmem:[%s472 + $0x658] sm:$0xff]
        %v1206 = vld [vmem:[%s472 + $0x660] sm:$0xff]
        %v1207 = vld [vmem:[%s472 + $0x668] sm:$0xff]
        %v1208 = vld [vmem:[%s472 + $0x670] sm:$0xff]
        %v1209 = vld [vmem:[%s472 + $0x678] sm:$0xff]
        %v1210 = vld [vmem:[%s472 + $0x680] sm:$0xff]
        %v1211 = vld [vmem:[%s472 + $0x688] sm:$0xff]
        %v1212 = vld [vmem:[%s472 + $0x690] sm:$0xff]
        %v1213 = vld [vmem:[%s472 + $0x698] sm:$0xff]
        %v1214 = vld [vmem:[%s472 + $0x6a0] sm:$0xff]
        %v1215 = vld [vmem:[%s472 + $0x6a8] sm:$0xff]
        %v1216 = vld [vmem:[%s472 + $0x6b0] sm:$0xff]
        %v1217 = vld [vmem:[%s472 + $0x6b8] sm:$0xff]
        %v1218 = vld [vmem:[%s472 + $0x6c0] sm:$0xff]
        %v1219 = vld [vmem:[%s472 + $0x6c8] sm:$0xff]
        %v1220 = vld [vmem:[%s472 + $0x6d0] sm:$0xff]
        %v1221 = vld [vmem:[%s472 + $0x6d8] sm:$0xff]
        %v1222 = vld [vmem:[%s472 + $0x6e0] sm:$0xff]
        %v1223 = vld [vmem:[%s472 + $0x6e8] sm:$0xff]
        %v1224 = vld [vmem:[%s472 + $0x6f0] sm:$0xff]
        %v1225 = vld [vmem:[%s472 + $0x6f8] sm:$0xff]
        %v1226 = vld [vmem:[%s472 + $0x700] sm:$0xff]
        %v1227 = vld [vmem:[%s472 + $0x708] sm:$0xff]
        %v1228 = vld [vmem:[%s472 + $0x710] sm:$0xff]
        %v1229 = vld [vmem:[%s472 + $0x718] sm:$0xff]
        %v1230 = vld [vmem:[%s472 + $0x720] sm:$0xff]
        %v1231 = vld [vmem:[%s472 + $0x728] sm:$0xff]
        %v1232 = vld [vmem:[%s472 + $0x730] sm:$0xff]
        %v1233 = vld [vmem:[%s472 + $0x738] sm:$0xff]
        %v1234 = vld [vmem:[%s472 + $0x740] sm:$0xff]
        %v1235 = vld [vmem:[%s472 + $0x748] sm:$0xff]
        %v1236 = vld [vmem:[%s472 + $0x750] sm:$0xff]
        %v1237 = vld [vmem:[%s472 + $0x758] sm:$0xff]
        %v1238 = vld [vmem:[%s472 + $0x760] sm:$0xff]
        %v1239 = vld [vmem:[%s472 + $0x768] sm:$0xff]
        %v1240 = vld [vmem:[%s472 + $0x770] sm:$0xff]
        %v1241 = vld [vmem:[%s472 + $0x778] sm:$0xff]
        %v1242 = vld [vmem:[%s472 + $0x780] sm:$0xff]
        %v1243 = vld [vmem:[%s472 + $0x788] sm:$0xff]
        %v1244 = vld [vmem:[%s472 + $0x790] sm:$0xff]
        %v1245 = vld [vmem:[%s472 + $0x798] sm:$0xff]
        %v1246 = vld [vmem:[%s472 + $0x7a0] sm:$0xff]
        %v1247 = vld [vmem:[%s472 + $0x7a8] sm:$0xff]
        %v1248 = vld [vmem:[%s472 + $0x7b0] sm:$0xff]
        %v1249 = vld [vmem:[%s472 + $0x7b8] sm:$0xff]
        %v1250 = vld [vmem:[%s472 + $0x7c0] sm:$0xff]
        %v1251 = vld [vmem:[%s472 + $0x7c8] sm:$0xff]
        %v1252 = vld [vmem:[%s472 + $0x7d0] sm:$0xff]
        %v1253 = vld [vmem:[%s472 + $0x7d8] sm:$0xff]
        %v1254 = vld [vmem:[%s472 + $0x7e0] sm:$0xff]
        %v1255 = vld [vmem:[%s472 + $0x7e8] sm:$0xff]
        %v1256 = vld [vmem:[%s472 + $0x7f0] sm:$0xff]
        %v1257 = vld [vmem:[%s472 + $0x7f8] sm:$0xff]
        %v1258 = vld [vmem:[%s472 + $0x800] sm:$0xff]
        %v1259 = vld [vmem:[%s472 + $0x808] sm:$0xff]
        %v1260 = vld [vmem:[%s472 + $0x810] sm:$0xff]
        %v1261 = vld [vmem:[%s472 + $0x818] sm:$0xff]
        %v1262 = vld [vmem:[%s472 + $0x820] sm:$0xff]
        %v1263 = vld [vmem:[%s472 + $0x828] sm:$0xff]
        %v1264 = vld [vmem:[%s472 + $0x830] sm:$0xff]
        %v1265 = vld [vmem:[%s472 + $0x838] sm:$0xff]
        %v1266 = vld [vmem:[%s472 + $0x840] sm:$0xff]
        %v1267 = vld [vmem:[%s472 + $0x848] sm:$0xff]
        %v1268 = vld [vmem:[%s472 + $0x850] sm:$0xff]
        %v1269 = vld [vmem:[%s472 + $0x858] sm:$0xff]
        %v1270 = vld [vmem:[%s472 + $0x860] sm:$0xff]
        %v1271 = vld [vmem:[%s472 + $0x868] sm:$0xff]
        %v1272 = vld [vmem:[%s472 + $0x870] sm:$0xff]
        %v1273 = vld [vmem:[%s472 + $0x878] sm:$0xff]
        %v1274 = vld [vmem:[%s472 + $0x880] sm:$0xff]
        %v1275 = vld [vmem:[%s472 + $0x888] sm:$0xff]
        %v1276 = vld [vmem:[%s472 + $0x890] sm:$0xff]
        %v1277 = vld [vmem:[%s472 + $0x898] sm:$0xff]
        %v1278 = vld [vmem:[%s472 + $0x8a0] sm:$0xff]
        %v1279 = vld [vmem:[%s472 + $0x8a8] sm:$0xff]
        %v1280 = vld [vmem:[%s472 + $0x8b0] sm:$0xff]
        %v1281 = vld [vmem:[%s472 + $0x8b8] sm:$0xff]
        %v1282 = vld [vmem:[%s472 + $0x8c0] sm:$0xff]
        %v1283 = vld [vmem:[%s472 + $0x8c8] sm:$0xff]
        %v1284 = vld [vmem:[%s472 + $0x8d0] sm:$0xff]
        %v1285 = vld [vmem:[%s472 + $0x8d8] sm:$0xff]
        %v1286 = vld [vmem:[%s472 + $0x8e0] sm:$0xff]
        %v1287 = vld [vmem:[%s472 + $0x8e8] sm:$0xff]
        %v1288 = vld [vmem:[%s472 + $0x8f0] sm:$0xff]
        %v1289 = vld [vmem:[%s472 + $0x8f8] sm:$0xff]
        %v1290 = vld [vmem:[%s472 + $0x900] sm:$0xff]
        %v1291 = vld [vmem:[%s472 + $0x908] sm:$0xff]
        %v1292 = vld [vmem:[%s472 + $0x910] sm:$0xff]
        %v1293 = vld [vmem:[%s472 + $0x918] sm:$0xff]
        %v1294 = vld [vmem:[%s472 + $0x920] sm:$0xff]
        %v1295 = vld [vmem:[%s472 + $0x928] sm:$0xff]
        %v1296 = vld [vmem:[%s472 + $0x930] sm:$0xff]
        %v1297 = vld [vmem:[%s472 + $0x938] sm:$0xff]
        %v1298 = vld [vmem:[%s472 + $0x940] sm:$0xff]
        %v1299 = vld [vmem:[%s472 + $0x948] sm:$0xff]
        %v1300 = vld [vmem:[%s472 + $0x950] sm:$0xff]
        %v1301 = vld [vmem:[%s472 + $0x958] sm:$0xff]
        %v1302 = vld [vmem:[%s472 + $0x960] sm:$0xff]
        %v1303 = vld [vmem:[%s472 + $0x968] sm:$0xff]
        %v1304 = vld [vmem:[%s472 + $0x970] sm:$0xff]
        %v1305 = vld [vmem:[%s472 + $0x978] sm:$0xff]
        %v1306 = vld [vmem:[%s472 + $0x980] sm:$0xff]
        %v1307 = vld [vmem:[%s472 + $0x988] sm:$0xff]
        %v1308 = vld [vmem:[%s472 + $0x990] sm:$0xff]
        %v1309 = vld [vmem:[%s472 + $0x998] sm:$0xff]
        %v1310 = vld [vmem:[%s472 + $0x9a0] sm:$0xff]
        %v1311 = vld [vmem:[%s472 + $0x9a8] sm:$0xff]
        %v1312 = vld [vmem:[%s472 + $0x9b0] sm:$0xff]
        %v1313 = vld [vmem:[%s472 + $0x9b8] sm:$0xff]
        %v1314 = vld [vmem:[%s472 + $0x9c0] sm:$0xff]
        %v1315 = vld [vmem:[%s472 + $0x9c8] sm:$0xff]
        %v1316 = vld [vmem:[%s472 + $0x9d0] sm:$0xff]
        %v1317 = vld [vmem:[%s472 + $0x9d8] sm:$0xff]
        %v1318 = vld [vmem:[%s472 + $0x9e0] sm:$0xff]
        %v1319 = vld [vmem:[%s472 + $0x9e8] sm:$0xff]
        %v1320 = vld [vmem:[%s472 + $0x9f0] sm:$0xff]
        %v1321 = vld [vmem:[%s472 + $0x9f8] sm:$0xff]
        %v1322 = vld [vmem:[%s472 + $0xa00] sm:$0xff]
        %v1323 = vld [vmem:[%s472 + $0xa08] sm:$0xff]
        %v1324 = vld [vmem:[%s472 + $0xa10] sm:$0xff]
        %v1325 = vld [vmem:[%s472 + $0xa18] sm:$0xff]
        %v1326 = vld [vmem:[%s472 + $0xa20] sm:$0xff]
        %v1327 = vld [vmem:[%s472 + $0xa28] sm:$0xff]
        %v1328 = vld [vmem:[%s472 + $0xa30] sm:$0xff]
        %v1329 = vld [vmem:[%s472 + $0xa38] sm:$0xff]
        %v1330 = vld [vmem:[%s472 + $0xa40] sm:$0xff]
        %v1331 = vld [vmem:[%s472 + $0xa48] sm:$0xff]
        %v1332 = vld [vmem:[%s472 + $0xa50] sm:$0xff]
        %v1333 = vld [vmem:[%s472 + $0xa58] sm:$0xff]
        %v1334 = vld [vmem:[%s472 + $0xa60] sm:$0xff]
        %v1335 = vld [vmem:[%s472 + $0xa68] sm:$0xff]
        %v1336 = vld [vmem:[%s472 + $0xa70] sm:$0xff]
        %v1337 = vld [vmem:[%s472 + $0xa78] sm:$0xff]
        %v1338 = vld [vmem:[%s472 + $0xa80] sm:$0xff]
        %v1339 = vld [vmem:[%s472 + $0xa88] sm:$0xff]
        %v1340 = vld [vmem:[%s472 + $0xa90] sm:$0xff]
        %v1341 = vld [vmem:[%s472 + $0xa98] sm:$0xff]
        %v1342 = vld [vmem:[%s472 + $0xaa0] sm:$0xff]
        %v1343 = vld [vmem:[%s472 + $0xaa8] sm:$0xff]
        %v1344 = vld [vmem:[%s472 + $0xab0] sm:$0xff]
        %v1345 = vld [vmem:[%s472 + $0xab8] sm:$0xff]
        %v1346 = vld [vmem:[%s472 + $0xac0] sm:$0xff]
        %v1347 = vld [vmem:[%s472 + $0xac8] sm:$0xff]
        %v1348 = vld [vmem:[%s472 + $0xad0] sm:$0xff]
        %v1349 = vld [vmem:[%s472 + $0xad8] sm:$0xff]
        %v1350 = vld [vmem:[%s472 + $0xae0] sm:$0xff]
        %v1351 = vld [vmem:[%s472 + $0xae8] sm:$0xff]
        %v1352 = vld [vmem:[%s472 + $0xaf0] sm:$0xff]
        %v1353 = vld [vmem:[%s472 + $0xaf8] sm:$0xff]
        %v1354 = vld [vmem:[%s472 + $0xb00] sm:$0xff]
        %v1355 = vld [vmem:[%s472 + $0xb08] sm:$0xff]
        %v1356 = vld [vmem:[%s472 + $0xb10] sm:$0xff]
        %v1357 = vld [vmem:[%s472 + $0xb18] sm:$0xff]
        %v1358 = vld [vmem:[%s472 + $0xb20] sm:$0xff]
        %v1359 = vld [vmem:[%s472 + $0xb28] sm:$0xff]
        %v1360 = vld [vmem:[%s472 + $0xb30] sm:$0xff]
        %v1361 = vld [vmem:[%s472 + $0xb38] sm:$0xff]
        %v1362 = vld [vmem:[%s472 + $0xb40] sm:$0xff]
        %v1363 = vld [vmem:[%s472 + $0xb48] sm:$0xff]
        %v1364 = vld [vmem:[%s472 + $0xb50] sm:$0xff]
        %v1365 = vld [vmem:[%s472 + $0xb58] sm:$0xff]
        %v1366 = vld [vmem:[%s472 + $0xb60] sm:$0xff]
        %v1367 = vld [vmem:[%s472 + $0xb68] sm:$0xff]
        %v1368 = vld [vmem:[%s472 + $0xb70] sm:$0xff]
        %v1369 = vld [vmem:[%s472 + $0xb78] sm:$0xff]
        %v1370 = vld [vmem:[%s472 + $0xb80] sm:$0xff]
        %v1371 = vld [vmem:[%s472 + $0xb88] sm:$0xff]
        %v1372 = vld [vmem:[%s472 + $0xb90] sm:$0xff]
        %v1373 = vld [vmem:[%s472 + $0xb98] sm:$0xff]
        %v1374 = vld [vmem:[%s472 + $0xba0] sm:$0xff]
        %v1375 = vld [vmem:[%s472 + $0xba8] sm:$0xff]
        %v1376 = vld [vmem:[%s472 + $0xbb0] sm:$0xff]
        %v1377 = vld [vmem:[%s472 + $0xbb8] sm:$0xff]
        %v1378 = vld [vmem:[%s472 + $0xbc0] sm:$0xff]
        %v1379 = vld [vmem:[%s472 + $0xbc8] sm:$0xff]
        %v1380 = vld [vmem:[%s472 + $0xbd0] sm:$0xff]
        %v1381 = vld [vmem:[%s472 + $0xbd8] sm:$0xff]
        %v1382 = vld [vmem:[%s472 + $0xbe0] sm:$0xff]
        %v1383 = vld [vmem:[%s472 + $0xbe8] sm:$0xff]
        %v1384 = vld [vmem:[%s472 + $0xbf0] sm:$0xff]
        %v1385 = vld [vmem:[%s472 + $0xbf8] sm:$0xff]
        %v1386 = vld [vmem:[%s472 + $0xc00] sm:$0xff]
        %v1387 = vld [vmem:[%s472 + $0xc08] sm:$0xff]
        %v1388 = vld [vmem:[%s472 + $0xc10] sm:$0xff]
        %v1389 = vld [vmem:[%s472 + $0xc18] sm:$0xff]
        %v1390 = vld [vmem:[%s472 + $0xc20] sm:$0xff]
        %v1391 = vld [vmem:[%s472 + $0xc28] sm:$0xff]
        %v1392 = vld [vmem:[%s472 + $0xc30] sm:$0xff]
        %v1393 = vld [vmem:[%s472 + $0xc38] sm:$0xff]
        %v1394 = vld [vmem:[%s472 + $0xc40] sm:$0xff]
        %v1395 = vld [vmem:[%s472 + $0xc48] sm:$0xff]
        %v1396 = vld [vmem:[%s472 + $0xc50] sm:$0xff]
        %v1397 = vld [vmem:[%s472 + $0xc58] sm:$0xff]
        %v1398 = vld [vmem:[%s472 + $0xc60] sm:$0xff]
        %v1399 = vld [vmem:[%s472 + $0xc68] sm:$0xff]
        %v1400 = vld [vmem:[%s472 + $0xc70] sm:$0xff]
        %v1401 = vld [vmem:[%s472 + $0xc78] sm:$0xff]
        %v1402 = vld [vmem:[%s472 + $0xc80] sm:$0xff]
        %v1403 = vld [vmem:[%s472 + $0xc88] sm:$0xff]
        %v1404 = vld [vmem:[%s472 + $0xc90] sm:$0xff]
        %v1405 = vld [vmem:[%s472 + $0xc98] sm:$0xff]
        %v1406 = vld [vmem:[%s472 + $0xca0] sm:$0xff]
        %v1407 = vld [vmem:[%s472 + $0xca8] sm:$0xff]
        %v1408 = vld [vmem:[%s472 + $0xcb0] sm:$0xff]
        %v1409 = vld [vmem:[%s472 + $0xcb8] sm:$0xff]
        %v1410 = vld [vmem:[%s472 + $0xcc0] sm:$0xff]
        %v1411 = vld [vmem:[%s472 + $0xcc8] sm:$0xff]
        %v1412 = vld [vmem:[%s472 + $0xcd0] sm:$0xff]
        %v1413 = vld [vmem:[%s472 + $0xcd8] sm:$0xff]
        %v1414 = vld [vmem:[%s472 + $0xce0] sm:$0xff]
        %v1415 = vld [vmem:[%s472 + $0xce8] sm:$0xff]
        %v1416 = vld [vmem:[%s472 + $0xcf0] sm:$0xff]
        %v1417 = vld [vmem:[%s472 + $0xcf8] sm:$0xff]
        %v1418 = vld [vmem:[%s472 + $0xd00] sm:$0xff]
        %v1419 = vld [vmem:[%s472 + $0xd08] sm:$0xff]
        %v1420 = vld [vmem:[%s472 + $0xd10] sm:$0xff]
        %v1421 = vld [vmem:[%s472 + $0xd18] sm:$0xff]
        %v1422 = vld [vmem:[%s472 + $0xd20] sm:$0xff]
        %v1423 = vld [vmem:[%s472 + $0xd28] sm:$0xff]
        %v1424 = vld [vmem:[%s472 + $0xd30] sm:$0xff]
        %v1425 = vld [vmem:[%s472 + $0xd38] sm:$0xff]
        %v1426 = vld [vmem:[%s472 + $0xd40] sm:$0xff]
        %v1427 = vld [vmem:[%s472 + $0xd48] sm:$0xff]
        %v1428 = vld [vmem:[%s472 + $0xd50] sm:$0xff]
        %v1429 = vld [vmem:[%s472 + $0xd58] sm:$0xff]
        %v1430 = vld [vmem:[%s472 + $0xd60] sm:$0xff]
        %v1431 = vld [vmem:[%s472 + $0xd68] sm:$0xff]
        %v1432 = vld [vmem:[%s472 + $0xd70] sm:$0xff]
        %v1433 = vld [vmem:[%s472 + $0xd78] sm:$0xff]
        %v1434 = vld [vmem:[%s472 + $0xd80] sm:$0xff]
        %v1435 = vld [vmem:[%s472 + $0xd88] sm:$0xff]
        %v1436 = vld [vmem:[%s472 + $0xd90] sm:$0xff]
        %v1437 = vld [vmem:[%s472 + $0xd98] sm:$0xff]
        %v1438 = vld [vmem:[%s472 + $0xda0] sm:$0xff]
        %v1439 = vld [vmem:[%s472 + $0xda8] sm:$0xff]
        %v1440 = vld [vmem:[%s472 + $0xdb0] sm:$0xff]
        %v1441 = vld [vmem:[%s472 + $0xdb8] sm:$0xff]
        %v1442 = vld [vmem:[%s472 + $0xdc0] sm:$0xff]
        %v1443 = vld [vmem:[%s472 + $0xdc8] sm:$0xff]
        %v1444 = vld [vmem:[%s472 + $0xdd0] sm:$0xff]
        %v1445 = vld [vmem:[%s472 + $0xdd8] sm:$0xff]
        %v1446 = vld [vmem:[%s472 + $0xde0] sm:$0xff]
        %v1447 = vld [vmem:[%s472 + $0xde8] sm:$0xff]
        %v1448 = vld [vmem:[%s472 + $0xdf0] sm:$0xff]
        %v1449 = vld [vmem:[%s472 + $0xdf8] sm:$0xff]
        %v1450 = vld [vmem:[%s472 + $0xe00] sm:$0xff]
        %v1451 = vld [vmem:[%s472 + $0xe08] sm:$0xff]
        %v1452 = vld [vmem:[%s472 + $0xe10] sm:$0xff]
        %v1453 = vld [vmem:[%s472 + $0xe18] sm:$0xff]
        %v1454 = vld [vmem:[%s472 + $0xe20] sm:$0xff]
        %v1455 = vld [vmem:[%s472 + $0xe28] sm:$0xff]
        %v1456 = vld [vmem:[%s472 + $0xe30] sm:$0xff]
        %v1457 = vld [vmem:[%s472 + $0xe38] sm:$0xff]
        %v1458 = vld [vmem:[%s472 + $0xe40] sm:$0xff]
        %v1459 = vld [vmem:[%s472 + $0xe48] sm:$0xff]
        %v1460 = vld [vmem:[%s472 + $0xe50] sm:$0xff]
        %v1461 = vld [vmem:[%s472 + $0xe58] sm:$0xff]
        %v1462 = vld [vmem:[%s472 + $0xe60] sm:$0xff]
        %v1463 = vld [vmem:[%s472 + $0xe68] sm:$0xff]
        %v1464 = vld [vmem:[%s472 + $0xe70] sm:$0xff]
        %v1465 = vld [vmem:[%s472 + $0xe78] sm:$0xff]
        %v1466 = vld [vmem:[%s472 + $0xe80] sm:$0xff]
        %v1467 = vld [vmem:[%s472 + $0xe88] sm:$0xff]
        %v1468 = vld [vmem:[%s472 + $0xe90] sm:$0xff]
        %v1469 = vld [vmem:[%s472 + $0xe98] sm:$0xff]
        %v1470 = vld [vmem:[%s472 + $0xea0] sm:$0xff]
        %v1471 = vld [vmem:[%s472 + $0xea8] sm:$0xff]
        %v1472 = vld [vmem:[%s472 + $0xeb0] sm:$0xff]
        %v1473 = vld [vmem:[%s472 + $0xeb8] sm:$0xff]
        %v1474 = vld [vmem:[%s472 + $0xec0] sm:$0xff]
        %v1475 = vld [vmem:[%s472 + $0xec8] sm:$0xff]
        %v1476 = vld [vmem:[%s472 + $0xed0] sm:$0xff]
        %v1477 = vld [vmem:[%s472 + $0xed8] sm:$0xff]
        %v1478 = vld [vmem:[%s472 + $0xee0] sm:$0xff]
        %v1479 = vld [vmem:[%s472 + $0xee8] sm:$0xff]
        %v1480 = vld [vmem:[%s472 + $0xef0] sm:$0xff]
        %v1481 = vld [vmem:[%s472 + $0xef8] sm:$0xff]
        %v1482 = vld [vmem:[%s472 + $0xf00] sm:$0xff]
        %v1483 = vld [vmem:[%s472 + $0xf08] sm:$0xff]
        %v1484 = vld [vmem:[%s472 + $0xf10] sm:$0xff]
        %v1485 = vld [vmem:[%s472 + $0xf18] sm:$0xff]
        %v1486 = vld [vmem:[%s472 + $0xf20] sm:$0xff]
        %v1487 = vld [vmem:[%s472 + $0xf28] sm:$0xff]
        %v1488 = vld [vmem:[%s472 + $0xf30] sm:$0xff]
        %v1489 = vld [vmem:[%s472 + $0xf38] sm:$0xff]
        %v1490 = vld [vmem:[%s472 + $0xf40] sm:$0xff]
        %v1491 = vld [vmem:[%s472 + $0xf48] sm:$0xff]
        %v1492 = vld [vmem:[%s472 + $0xf50] sm:$0xff]
        %v1493 = vld [vmem:[%s472 + $0xf58] sm:$0xff]
        %v1494 = vld [vmem:[%s472 + $0xf60] sm:$0xff]
        %v1495 = vld [vmem:[%s472 + $0xf68] sm:$0xff]
        %v1496 = vld [vmem:[%s472 + $0xf70] sm:$0xff]
        %v1497 = vld [vmem:[%s472 + $0xf78] sm:$0xff]
        %v1498 = vld [vmem:[%s472 + $0xf80] sm:$0xff]
        %v1499 = vld [vmem:[%s472 + $0xf88] sm:$0xff]
        %v1500 = vld [vmem:[%s472 + $0xf90] sm:$0xff]
        %v1501 = vld [vmem:[%s472 + $0xf98] sm:$0xff]
        %v1502 = vld [vmem:[%s472 + $0xfa0] sm:$0xff]
        %v1503 = vld [vmem:[%s472 + $0xfa8] sm:$0xff]
        %v1504 = vld [vmem:[%s472 + $0xfb0] sm:$0xff]
        %v1505 = vld [vmem:[%s472 + $0xfb8] sm:$0xff]
        %v1506 = vld [vmem:[%s472 + $0xfc0] sm:$0xff]
        %v1507 = vld [vmem:[%s472 + $0xfc8] sm:$0xff]
        %v1508 = vld [vmem:[%s472 + $0xfd0] sm:$0xff]
        %v1509 = vld [vmem:[%s472 + $0xfd8] sm:$0xff]
        %v1510 = vld [vmem:[%s472 + $0xfe0] sm:$0xff]
        %v1511 = vld [vmem:[%s472 + $0xfe8] sm:$0xff]
        %v1512 = vld [vmem:[%s472 + $0xff0] sm:$0xff]
        %v1513 = vld [vmem:[%s472 + $0xff8] sm:$0xff]
        %v1514 = vld [vmem:[%s472 + $0x1000] sm:$0xff]
        %v1515 = vld [vmem:[%s472 + $0x1008] sm:$0xff]
        %v1516 = vld [vmem:[%s472 + $0x1010] sm:$0xff]
        %v1517 = vld [vmem:[%s472 + $0x1018] sm:$0xff]
        %v1518 = vld [vmem:[%s472 + $0x1020] sm:$0xff]
        %v1519 = vld [vmem:[%s472 + $0x1028] sm:$0xff]
        %v1520 = vld [vmem:[%s472 + $0x1030] sm:$0xff]
        %v1521 = vld [vmem:[%s472 + $0x1038] sm:$0xff]
        %v1522 = vld [vmem:[%s472 + $0x1040] sm:$0xff]
        %v1523 = vld [vmem:[%s472 + $0x1048] sm:$0xff]
        %v1524 = vld [vmem:[%s472 + $0x1050] sm:$0xff]
        %v1525 = vld [vmem:[%s472 + $0x1058] sm:$0xff]
        %v1526 = vld [vmem:[%s472 + $0x1060] sm:$0xff]
        %v1527 = vld [vmem:[%s472 + $0x1068] sm:$0xff]
        %v1528 = vld [vmem:[%s472 + $0x1070] sm:$0xff]
        %v1529 = vld [vmem:[%s472 + $0x1078] sm:$0xff]
        %v1530 = vld [vmem:[%s472 + $0x1080] sm:$0xff]
        %v1531 = vld [vmem:[%s472 + $0x1088] sm:$0xff]
        %v1532 = vld [vmem:[%s472 + $0x1090] sm:$0xff]
        %v1533 = vld [vmem:[%s472 + $0x1098] sm:$0xff]
        %v1534 = vld [vmem:[%s472 + $0x10a0] sm:$0xff]
        %v1535 = vld [vmem:[%s472 + $0x10a8] sm:$0xff]
        %v1536 = vld [vmem:[%s472 + $0x10b0] sm:$0xff]
        %v1537 = vld [vmem:[%s472 + $0x10b8] sm:$0xff]
        %v1538 = vld [vmem:[%s472 + $0x10c0] sm:$0xff]
        %v1539 = vld [vmem:[%s472 + $0x10c8] sm:$0xff]
        %v1540 = vld [vmem:[%s472 + $0x10d0] sm:$0xff]
        %v1541 = vld [vmem:[%s472 + $0x10d8] sm:$0xff]
        %v1542 = vld [vmem:[%s472 + $0x10e0] sm:$0xff]
        %v1543 = vld [vmem:[%s472 + $0x10e8] sm:$0xff]
        %v1544 = vld [vmem:[%s472 + $0x10f0] sm:$0xff]
        %v1545 = vld [vmem:[%s472 + $0x10f8] sm:$0xff]
        %v1546 = vld [vmem:[%s472 + $0x1100] sm:$0xff]
        %v1547 = vld [vmem:[%s472 + $0x1108] sm:$0xff]
        %v1548 = vld [vmem:[%s472 + $0x1110] sm:$0xff]
        %v1549 = vld [vmem:[%s472 + $0x1118] sm:$0xff]
        %v1550 = vld [vmem:[%s472 + $0x1120] sm:$0xff]
        %v1551 = vld [vmem:[%s472 + $0x1128] sm:$0xff]
        %v1552 = vld [vmem:[%s472 + $0x1130] sm:$0xff]
        %v1553 = vld [vmem:[%s472 + $0x1138] sm:$0xff]
        %v1554 = vld [vmem:[%s472 + $0x1140] sm:$0xff]
        %v1555 = vld [vmem:[%s472 + $0x1148] sm:$0xff]
        %v1556 = vld [vmem:[%s472 + $0x1150] sm:$0xff]
        %v1557 = vld [vmem:[%s472 + $0x1158] sm:$0xff]
        %v1558 = vld [vmem:[%s472 + $0x1160] sm:$0xff]
        %v1559 = vld [vmem:[%s472 + $0x1168] sm:$0xff]
        %v1560 = vld [vmem:[%s472 + $0x1170] sm:$0xff]
        %v1561 = vld [vmem:[%s472 + $0x1178] sm:$0xff]
        %v1562 = vld [vmem:[%s472 + $0x1180] sm:$0xff]
        %v1563 = vld [vmem:[%s472 + $0x1188] sm:$0xff]
        %v1564 = vld [vmem:[%s472 + $0x1190] sm:$0xff]
        %v1565 = vld [vmem:[%s472 + $0x1198] sm:$0xff]
        %v1566 = vld [vmem:[%s472 + $0x11a0] sm:$0xff]
        %v1567 = vld [vmem:[%s472 + $0x11a8] sm:$0xff]
        %v1568 = vld [vmem:[%s472 + $0x11b0] sm:$0xff]
        %v1569 = vld [vmem:[%s472 + $0x11b8] sm:$0xff]
        %v1570 = vld [vmem:[%s472 + $0x11c0] sm:$0xff]
        %v1571 = vld [vmem:[%s472 + $0x11c8] sm:$0xff]
        %v1572 = vld [vmem:[%s472 + $0x11d0] sm:$0xff]
        %v1573 = vld [vmem:[%s472 + $0x11d8] sm:$0xff]
        %v1574 = vld [vmem:[%s472 + $0x11e0] sm:$0xff]
        %v1575 = vld [vmem:[%s472 + $0x11e8] sm:$0xff]
        %v1576 = vld [vmem:[%s472 + $0x11f0] sm:$0xff]
        %v1577 = vld [vmem:[%s472 + $0x11f8] sm:$0xff]
        %v1578 = vld [vmem:[%s472 + $0x1200] sm:$0xff]
        %v1579 = vld [vmem:[%s472 + $0x1208] sm:$0xff]
        %v1580 = vld [vmem:[%s472 + $0x1210] sm:$0xff]
        %v1581 = vld [vmem:[%s472 + $0x1218] sm:$0xff]
        %v1582 = vld [vmem:[%s472 + $0x1220] sm:$0xff]
        %v1583 = vld [vmem:[%s472 + $0x1228] sm:$0xff]
        %v1584 = vld [vmem:[%s472 + $0x1230] sm:$0xff]
        %v1585 = vld [vmem:[%s472 + $0x1238] sm:$0xff]
        %v1586 = vld [vmem:[%s472 + $0x1240] sm:$0xff]
        %v1587 = vld [vmem:[%s472 + $0x1248] sm:$0xff]
        %v1588 = vld [vmem:[%s472 + $0x1250] sm:$0xff]
        %v1589 = vld [vmem:[%s472 + $0x1258] sm:$0xff]
        %v1590 = vld [vmem:[%s472 + $0x1260] sm:$0xff]
        %v1591 = vld [vmem:[%s472 + $0x1268] sm:$0xff]
        %v1592 = vld [vmem:[%s472 + $0x1270] sm:$0xff]
        %v1593 = vld [vmem:[%s472 + $0x1278] sm:$0xff]
        %v1594 = vld [vmem:[%s472 + $0x1280] sm:$0xff]
        %v1595 = vld [vmem:[%s472 + $0x1288] sm:$0xff]
        %v1596 = vld [vmem:[%s472 + $0x1290] sm:$0xff]
        %v1597 = vld [vmem:[%s472 + $0x1298] sm:$0xff]
        %v1598 = vld [vmem:[%s472 + $0x12a0] sm:$0xff]
        %v1599 = vld [vmem:[%s472 + $0x12a8] sm:$0xff]
        %v1600 = vld [vmem:[%s472 + $0x12b0] sm:$0xff]
        %v1601 = vld [vmem:[%s472 + $0x12b8] sm:$0xff]
        %v1602 = vld [vmem:[%s472 + $0x12c0] sm:$0xff]
        %v1603 = vld [vmem:[%s472 + $0x12c8] sm:$0xff]
        %v1604 = vld [vmem:[%s472 + $0x12d0] sm:$0xff]
        %v1605 = vld [vmem:[%s472 + $0x12d8] sm:$0xff]
        %v1606 = vld [vmem:[%s472 + $0x12e0] sm:$0xff]
        %v1607 = vld [vmem:[%s472 + $0x12e8] sm:$0xff]
        %v1608 = vld [vmem:[%s472 + $0x12f0] sm:$0xff]
        %v1609 = vld [vmem:[%s472 + $0x12f8] sm:$0xff]
        %v1610 = vld [vmem:[%s472 + $0x1300] sm:$0xff]
        %v1611 = vld [vmem:[%s472 + $0x1308] sm:$0xff]
        %v1612 = vld [vmem:[%s472 + $0x1310] sm:$0xff]
        %v1613 = vld [vmem:[%s472 + $0x1318] sm:$0xff]
        %v1614 = vld [vmem:[%s472 + $0x1320] sm:$0xff]
        %v1615 = vld [vmem:[%s472 + $0x1328] sm:$0xff]
        %v1616 = vld [vmem:[%s472 + $0x1330] sm:$0xff]
        %v1617 = vld [vmem:[%s472 + $0x1338] sm:$0xff]
        %v1618 = vld [vmem:[%s472 + $0x1340] sm:$0xff]
        %v1619 = vld [vmem:[%s472 + $0x1348] sm:$0xff]
        %v1620 = vld [vmem:[%s472 + $0x1350] sm:$0xff]
        %v1621 = vld [vmem:[%s472 + $0x1358] sm:$0xff]
        %v1622 = vld [vmem:[%s472 + $0x1360] sm:$0xff]
        %v1623 = vld [vmem:[%s472 + $0x1368] sm:$0xff]
        %v1624 = vld [vmem:[%s472 + $0x1370] sm:$0xff]
        %v1625 = vld [vmem:[%s472 + $0x1378] sm:$0xff]
        %v1626 = vld [vmem:[%s472 + $0x1380] sm:$0xff]
        %v1627 = vld [vmem:[%s472 + $0x1388] sm:$0xff]
        %v1628 = vld [vmem:[%s472 + $0x1390] sm:$0xff]
        %v1629 = vld [vmem:[%s472 + $0x1398] sm:$0xff]
        %v1630 = vld [vmem:[%s472 + $0x13a0] sm:$0xff]
        %v1631 = vld [vmem:[%s472 + $0x13a8] sm:$0xff]
        %v1632 = vld [vmem:[%s472 + $0x13b0] sm:$0xff]
        %v1633 = vld [vmem:[%s472 + $0x13b8] sm:$0xff]
        %v1634 = vld [vmem:[%s472 + $0x13c0] sm:$0xff]
        %v1635 = vld [vmem:[%s472 + $0x13c8] sm:$0xff]
        %v1636 = vld [vmem:[%s472 + $0x13d0] sm:$0xff]
        %v1637 = vld [vmem:[%s472 + $0x13d8] sm:$0xff]
        %v1638 = vld [vmem:[%s472 + $0x13e0] sm:$0xff]
        %v1639 = vld [vmem:[%s472 + $0x13e8] sm:$0xff]
        %v1640 = vld [vmem:[%s472 + $0x13f0] sm:$0xff]
        %v1641 = vld [vmem:[%s472 + $0x13f8] sm:$0xff]
        %v2282 = vunpack.c.l.b16 %v1002
        %v2283 = vunpack.c.h.b16 %v1002
        %v2284 = vunpack.c.l.b16 %v1003
        %v2285 = vunpack.c.h.b16 %v1003
        %v2286 = vunpack.c.l.b16 %v1004
        %v2287 = vunpack.c.h.b16 %v1004
        %v2288 = vunpack.c.l.b16 %v1005
        %v2289 = vunpack.c.h.b16 %v1005
        %v2290 = vunpack.c.l.b16 %v1006
        %v2291 = vunpack.c.h.b16 %v1006
        %v2292 = vunpack.c.l.b16 %v1007
        %v2293 = vunpack.c.h.b16 %v1007
        %v2294 = vunpack.c.l.b16 %v1008
        %v2295 = vunpack.c.h.b16 %v1008
        %v2296 = vunpack.c.l.b16 %v1009
        %v2297 = vunpack.c.h.b16 %v1009
        %v2298 = vunpack.c.l.b16 %v1010
        %v2299 = vunpack.c.h.b16 %v1010
        %v2300 = vunpack.c.l.b16 %v1011
        %v2301 = vunpack.c.h.b16 %v1011
        %v2302 = vunpack.c.l.b16 %v1012
        %v2303 = vunpack.c.h.b16 %v1012
        %v2304 = vunpack.c.l.b16 %v1013
        %v2305 = vunpack.c.h.b16 %v1013
        %v2306 = vunpack.c.l.b16 %v1014
        %v2307 = vunpack.c.h.b16 %v1014
        %v2308 = vunpack.c.l.b16 %v1015
        %v2309 = vunpack.c.h.b16 %v1015
        %v2310 = vunpack.c.l.b16 %v1016
        %v2311 = vunpack.c.h.b16 %v1016
        %v2312 = vunpack.c.l.b16 %v1017
        %v2313 = vunpack.c.h.b16 %v1017
        %v2314 = vunpack.c.l.b16 %v1018
        %v2315 = vunpack.c.h.b16 %v1018
        %v2316 = vunpack.c.l.b16 %v1019
        %v2317 = vunpack.c.h.b16 %v1019
        %v2318 = vunpack.c.l.b16 %v1020
        %v2319 = vunpack.c.h.b16 %v1020
        %v2320 = vunpack.c.l.b16 %v1021
        %v2321 = vunpack.c.h.b16 %v1021
        %v2322 = vunpack.c.l.b16 %v1022
        %v2323 = vunpack.c.h.b16 %v1022
        %v2324 = vunpack.c.l.b16 %v1023
        %v2325 = vunpack.c.h.b16 %v1023
        %v2326 = vunpack.c.l.b16 %v1024
        %v2327 = vunpack.c.h.b16 %v1024
        %v2328 = vunpack.c.l.b16 %v1025
        %v2329 = vunpack.c.h.b16 %v1025
        %v2330 = vunpack.c.l.b16 %v1026
        %v2331 = vunpack.c.h.b16 %v1026
        %v2332 = vunpack.c.l.b16 %v1027
        %v2333 = vunpack.c.h.b16 %v1027
        %v2334 = vunpack.c.l.b16 %v1028
        %v2335 = vunpack.c.h.b16 %v1028
        %v2336 = vunpack.c.l.b16 %v1029
        %v2337 = vunpack.c.h.b16 %v1029
        %v2338 = vunpack.c.l.b16 %v1030
        %v2339 = vunpack.c.h.b16 %v1030
        %v2340 = vunpack.c.l.b16 %v1031
        %v2341 = vunpack.c.h.b16 %v1031
        %v2342 = vunpack.c.l.b16 %v1032
        %v2343 = vunpack.c.h.b16 %v1032
        %v2344 = vunpack.c.l.b16 %v1033
        %v2345 = vunpack.c.h.b16 %v1033
        %v2346 = vunpack.c.l.b16 %v1034
        %v2347 = vunpack.c.h.b16 %v1034
        %v2348 = vunpack.c.l.b16 %v1035
        %v2349 = vunpack.c.h.b16 %v1035
        %v2350 = vunpack.c.l.b16 %v1036
        %v2351 = vunpack.c.h.b16 %v1036
        %v2352 = vunpack.c.l.b16 %v1037
        %v2353 = vunpack.c.h.b16 %v1037
        %v2354 = vunpack.c.l.b16 %v1038
        %v2355 = vunpack.c.h.b16 %v1038
        %v2356 = vunpack.c.l.b16 %v1039
        %v2357 = vunpack.c.h.b16 %v1039
        %v2358 = vunpack.c.l.b16 %v1040
        %v2359 = vunpack.c.h.b16 %v1040
        %v2360 = vunpack.c.l.b16 %v1041
        %v2361 = vunpack.c.h.b16 %v1041
        %v2362 = vunpack.c.l.b16 %v1042
        %v2363 = vunpack.c.h.b16 %v1042
        %v2364 = vunpack.c.l.b16 %v1043
        %v2365 = vunpack.c.h.b16 %v1043
        %v2366 = vunpack.c.l.b16 %v1044
        %v2367 = vunpack.c.h.b16 %v1044
        %v2368 = vunpack.c.l.b16 %v1045
        %v2369 = vunpack.c.h.b16 %v1045
        %v2370 = vunpack.c.l.b16 %v1046
        %v2371 = vunpack.c.h.b16 %v1046
        %v2372 = vunpack.c.l.b16 %v1047
        %v2373 = vunpack.c.h.b16 %v1047
        %v2374 = vunpack.c.l.b16 %v1048
        %v2375 = vunpack.c.h.b16 %v1048
        %v2376 = vunpack.c.l.b16 %v1049
        %v2377 = vunpack.c.h.b16 %v1049
        %v2378 = vunpack.c.l.b16 %v1050
        %v2379 = vunpack.c.h.b16 %v1050
        %v2380 = vunpack.c.l.b16 %v1051
        %v2381 = vunpack.c.h.b16 %v1051
        %v2382 = vunpack.c.l.b16 %v1052
        %v2383 = vunpack.c.h.b16 %v1052
        %v2384 = vunpack.c.l.b16 %v1053
        %v2385 = vunpack.c.h.b16 %v1053
        %v2386 = vunpack.c.l.b16 %v1054
        %v2387 = vunpack.c.h.b16 %v1054
        %v2388 = vunpack.c.l.b16 %v1055
        %v2389 = vunpack.c.h.b16 %v1055
        %v2390 = vunpack.c.l.b16 %v1056
        %v2391 = vunpack.c.h.b16 %v1056
        %v2392 = vunpack.c.l.b16 %v1057
        %v2393 = vunpack.c.h.b16 %v1057
        %v2394 = vunpack.c.l.b16 %v1058
        %v2395 = vunpack.c.h.b16 %v1058
        %v2396 = vunpack.c.l.b16 %v1059
        %v2397 = vunpack.c.h.b16 %v1059
        %v2398 = vunpack.c.l.b16 %v1060
        %v2399 = vunpack.c.h.b16 %v1060
        %v2400 = vunpack.c.l.b16 %v1061
        %v2401 = vunpack.c.h.b16 %v1061
        %v2402 = vunpack.c.l.b16 %v1062
        %v2403 = vunpack.c.h.b16 %v1062
        %v2404 = vunpack.c.l.b16 %v1063
        %v2405 = vunpack.c.h.b16 %v1063
        %v2406 = vunpack.c.l.b16 %v1064
        %v2407 = vunpack.c.h.b16 %v1064
        %v2408 = vunpack.c.l.b16 %v1065
        %v2409 = vunpack.c.h.b16 %v1065
        %v2410 = vunpack.c.l.b16 %v1066
        %v2411 = vunpack.c.h.b16 %v1066
        %v2412 = vunpack.c.l.b16 %v1067
        %v2413 = vunpack.c.h.b16 %v1067
        %v2414 = vunpack.c.l.b16 %v1068
        %v2415 = vunpack.c.h.b16 %v1068
        %v2416 = vunpack.c.l.b16 %v1069
        %v2417 = vunpack.c.h.b16 %v1069
        %v2418 = vunpack.c.l.b16 %v1070
        %v2419 = vunpack.c.h.b16 %v1070
        %v2420 = vunpack.c.l.b16 %v1071
        %v2421 = vunpack.c.h.b16 %v1071
        %v2422 = vunpack.c.l.b16 %v1072
        %v2423 = vunpack.c.h.b16 %v1072
        %v2424 = vunpack.c.l.b16 %v1073
        %v2425 = vunpack.c.h.b16 %v1073
        %v2426 = vunpack.c.l.b16 %v1074
        %v2427 = vunpack.c.h.b16 %v1074
        %v2428 = vunpack.c.l.b16 %v1075
        %v2429 = vunpack.c.h.b16 %v1075
        %v2430 = vunpack.c.l.b16 %v1076
        %v2431 = vunpack.c.h.b16 %v1076
        %v2432 = vunpack.c.l.b16 %v1077
        %v2433 = vunpack.c.h.b16 %v1077
        %v2434 = vunpack.c.l.b16 %v1078
        %v2435 = vunpack.c.h.b16 %v1078
        %v2436 = vunpack.c.l.b16 %v1079
        %v2437 = vunpack.c.h.b16 %v1079
        %v2438 = vunpack.c.l.b16 %v1080
        %v2439 = vunpack.c.h.b16 %v1080
        %v2440 = vunpack.c.l.b16 %v1081
        %v2441 = vunpack.c.h.b16 %v1081
        %v2442 = vunpack.c.l.b16 %v1082
        %v2443 = vunpack.c.h.b16 %v1082
        %v2444 = vunpack.c.l.b16 %v1083
        %v2445 = vunpack.c.h.b16 %v1083
        %v2446 = vunpack.c.l.b16 %v1084
        %v2447 = vunpack.c.h.b16 %v1084
        %v2448 = vunpack.c.l.b16 %v1085
        %v2449 = vunpack.c.h.b16 %v1085
        %v2450 = vunpack.c.l.b16 %v1086
        %v2451 = vunpack.c.h.b16 %v1086
        %v2452 = vunpack.c.l.b16 %v1087
        %v2453 = vunpack.c.h.b16 %v1087
        %v2454 = vunpack.c.l.b16 %v1088
        %v2455 = vunpack.c.h.b16 %v1088
        %v2456 = vunpack.c.l.b16 %v1089
        %v2457 = vunpack.c.h.b16 %v1089
        %v2458 = vunpack.c.l.b16 %v1090
        %v2459 = vunpack.c.h.b16 %v1090
        %v2460 = vunpack.c.l.b16 %v1091
        %v2461 = vunpack.c.h.b16 %v1091
        %v2462 = vunpack.c.l.b16 %v1092
        %v2463 = vunpack.c.h.b16 %v1092
        %v2464 = vunpack.c.l.b16 %v1093
        %v2465 = vunpack.c.h.b16 %v1093
        %v2466 = vunpack.c.l.b16 %v1094
        %v2467 = vunpack.c.h.b16 %v1094
        %v2468 = vunpack.c.l.b16 %v1095
        %v2469 = vunpack.c.h.b16 %v1095
        %v2470 = vunpack.c.l.b16 %v1096
        %v2471 = vunpack.c.h.b16 %v1096
        %v2472 = vunpack.c.l.b16 %v1097
        %v2473 = vunpack.c.h.b16 %v1097
        %v2474 = vunpack.c.l.b16 %v1098
        %v2475 = vunpack.c.h.b16 %v1098
        %v2476 = vunpack.c.l.b16 %v1099
        %v2477 = vunpack.c.h.b16 %v1099
        %v2478 = vunpack.c.l.b16 %v1100
        %v2479 = vunpack.c.h.b16 %v1100
        %v2480 = vunpack.c.l.b16 %v1101
        %v2481 = vunpack.c.h.b16 %v1101
        %v2482 = vunpack.c.l.b16 %v1102
        %v2483 = vunpack.c.h.b16 %v1102
        %v2484 = vunpack.c.l.b16 %v1103
        %v2485 = vunpack.c.h.b16 %v1103
        %v2486 = vunpack.c.l.b16 %v1104
        %v2487 = vunpack.c.h.b16 %v1104
        %v2488 = vunpack.c.l.b16 %v1105
        %v2489 = vunpack.c.h.b16 %v1105
        %v2490 = vunpack.c.l.b16 %v1106
        %v2491 = vunpack.c.h.b16 %v1106
        %v2492 = vunpack.c.l.b16 %v1107
        %v2493 = vunpack.c.h.b16 %v1107
        %v2494 = vunpack.c.l.b16 %v1108
        %v2495 = vunpack.c.h.b16 %v1108
        %v2496 = vunpack.c.l.b16 %v1109
        %v2497 = vunpack.c.h.b16 %v1109
        %v2498 = vunpack.c.l.b16 %v1110
        %v2499 = vunpack.c.h.b16 %v1110
        %v2500 = vunpack.c.l.b16 %v1111
        %v2501 = vunpack.c.h.b16 %v1111
        %v2502 = vunpack.c.l.b16 %v1112
        %v2503 = vunpack.c.h.b16 %v1112
        %v2504 = vunpack.c.l.b16 %v1113
        %v2505 = vunpack.c.h.b16 %v1113
        %v2506 = vunpack.c.l.b16 %v1114
        %v2507 = vunpack.c.h.b16 %v1114
        %v2508 = vunpack.c.l.b16 %v1115
        %v2509 = vunpack.c.h.b16 %v1115
        %v2510 = vunpack.c.l.b16 %v1116
        %v2511 = vunpack.c.h.b16 %v1116
        %v2512 = vunpack.c.l.b16 %v1117
        %v2513 = vunpack.c.h.b16 %v1117
        %v2514 = vunpack.c.l.b16 %v1118
        %v2515 = vunpack.c.h.b16 %v1118
        %v2516 = vunpack.c.l.b16 %v1119
        %v2517 = vunpack.c.h.b16 %v1119
        %v2518 = vunpack.c.l.b16 %v1120
        %v2519 = vunpack.c.h.b16 %v1120
        %v2520 = vunpack.c.l.b16 %v1121
        %v2521 = vunpack.c.h.b16 %v1121
        %v2522 = vunpack.c.l.b16 %v1122
        %v2523 = vunpack.c.h.b16 %v1122
        %v2524 = vunpack.c.l.b16 %v1123
        %v2525 = vunpack.c.h.b16 %v1123
        %v2526 = vunpack.c.l.b16 %v1124
        %v2527 = vunpack.c.h.b16 %v1124
        %v2528 = vunpack.c.l.b16 %v1125
        %v2529 = vunpack.c.h.b16 %v1125
        %v2530 = vunpack.c.l.b16 %v1126
        %v2531 = vunpack.c.h.b16 %v1126
        %v2532 = vunpack.c.l.b16 %v1127
        %v2533 = vunpack.c.h.b16 %v1127
        %v2534 = vunpack.c.l.b16 %v1128
        %v2535 = vunpack.c.h.b16 %v1128
        %v2536 = vunpack.c.l.b16 %v1129
        %v2537 = vunpack.c.h.b16 %v1129
        %v2538 = vunpack.c.l.b16 %v1130
        %v2539 = vunpack.c.h.b16 %v1130
        %v2540 = vunpack.c.l.b16 %v1131
        %v2541 = vunpack.c.h.b16 %v1131
        %v2542 = vunpack.c.l.b16 %v1132
        %v2543 = vunpack.c.h.b16 %v1132
        %v2544 = vunpack.c.l.b16 %v1133
        %v2545 = vunpack.c.h.b16 %v1133
        %v2546 = vunpack.c.l.b16 %v1134
        %v2547 = vunpack.c.h.b16 %v1134
        %v2548 = vunpack.c.l.b16 %v1135
        %v2549 = vunpack.c.h.b16 %v1135
        %v2550 = vunpack.c.l.b16 %v1136
        %v2551 = vunpack.c.h.b16 %v1136
        %v2552 = vunpack.c.l.b16 %v1137
        %v2553 = vunpack.c.h.b16 %v1137
        %v2554 = vunpack.c.l.b16 %v1138
        %v2555 = vunpack.c.h.b16 %v1138
        %v2556 = vunpack.c.l.b16 %v1139
        %v2557 = vunpack.c.h.b16 %v1139
        %v2558 = vunpack.c.l.b16 %v1140
        %v2559 = vunpack.c.h.b16 %v1140
        %v2560 = vunpack.c.l.b16 %v1141
        %v2561 = vunpack.c.h.b16 %v1141
        %v2562 = vunpack.c.l.b16 %v1142
        %v2563 = vunpack.c.h.b16 %v1142
        %v2564 = vunpack.c.l.b16 %v1143
        %v2565 = vunpack.c.h.b16 %v1143
        %v2566 = vunpack.c.l.b16 %v1144
        %v2567 = vunpack.c.h.b16 %v1144
        %v2568 = vunpack.c.l.b16 %v1145
        %v2569 = vunpack.c.h.b16 %v1145
        %v2570 = vunpack.c.l.b16 %v1146
        %v2571 = vunpack.c.h.b16 %v1146
        %v2572 = vunpack.c.l.b16 %v1147
        %v2573 = vunpack.c.h.b16 %v1147
        %v2574 = vunpack.c.l.b16 %v1148
        %v2575 = vunpack.c.h.b16 %v1148
        %v2576 = vunpack.c.l.b16 %v1149
        %v2577 = vunpack.c.h.b16 %v1149
        %v2578 = vunpack.c.l.b16 %v1150
        %v2579 = vunpack.c.h.b16 %v1150
        %v2580 = vunpack.c.l.b16 %v1151
        %v2581 = vunpack.c.h.b16 %v1151
        %v2582 = vunpack.c.l.b16 %v1152
        %v2583 = vunpack.c.h.b16 %v1152
        %v2584 = vunpack.c.l.b16 %v1153
        %v2585 = vunpack.c.h.b16 %v1153
        %v2586 = vunpack.c.l.b16 %v1154
        %v2587 = vunpack.c.h.b16 %v1154
        %v2588 = vunpack.c.l.b16 %v1155
        %v2589 = vunpack.c.h.b16 %v1155
        %v2590 = vunpack.c.l.b16 %v1156
        %v2591 = vunpack.c.h.b16 %v1156
        %v2592 = vunpack.c.l.b16 %v1157
        %v2593 = vunpack.c.h.b16 %v1157
        %v2594 = vunpack.c.l.b16 %v1158
        %v2595 = vunpack.c.h.b16 %v1158
        %v2596 = vunpack.c.l.b16 %v1159
        %v2597 = vunpack.c.h.b16 %v1159
        %v2598 = vunpack.c.l.b16 %v1160
        %v2599 = vunpack.c.h.b16 %v1160
        %v2600 = vunpack.c.l.b16 %v1161
        %v2601 = vunpack.c.h.b16 %v1161
        %v2602 = vunpack.c.l.b16 %v1162
        %v2603 = vunpack.c.h.b16 %v1162
        %v2604 = vunpack.c.l.b16 %v1163
        %v2605 = vunpack.c.h.b16 %v1163
        %v2606 = vunpack.c.l.b16 %v1164
        %v2607 = vunpack.c.h.b16 %v1164
        %v2608 = vunpack.c.l.b16 %v1165
        %v2609 = vunpack.c.h.b16 %v1165
        %v2610 = vunpack.c.l.b16 %v1166
        %v2611 = vunpack.c.h.b16 %v1166
        %v2612 = vunpack.c.l.b16 %v1167
        %v2613 = vunpack.c.h.b16 %v1167
        %v2614 = vunpack.c.l.b16 %v1168
        %v2615 = vunpack.c.h.b16 %v1168
        %v2616 = vunpack.c.l.b16 %v1169
        %v2617 = vunpack.c.h.b16 %v1169
        %v2618 = vunpack.c.l.b16 %v1170
        %v2619 = vunpack.c.h.b16 %v1170
        %v2620 = vunpack.c.l.b16 %v1171
        %v2621 = vunpack.c.h.b16 %v1171
        %v2622 = vunpack.c.l.b16 %v1172
        %v2623 = vunpack.c.h.b16 %v1172
        %v2624 = vunpack.c.l.b16 %v1173
        %v2625 = vunpack.c.h.b16 %v1173
        %v2626 = vunpack.c.l.b16 %v1174
        %v2627 = vunpack.c.h.b16 %v1174
        %v2628 = vunpack.c.l.b16 %v1175
        %v2629 = vunpack.c.h.b16 %v1175
        %v2630 = vunpack.c.l.b16 %v1176
        %v2631 = vunpack.c.h.b16 %v1176
        %v2632 = vunpack.c.l.b16 %v1177
        %v2633 = vunpack.c.h.b16 %v1177
        %v2634 = vunpack.c.l.b16 %v1178
        %v2635 = vunpack.c.h.b16 %v1178
        %v2636 = vunpack.c.l.b16 %v1179
        %v2637 = vunpack.c.h.b16 %v1179
        %v2638 = vunpack.c.l.b16 %v1180
        %v2639 = vunpack.c.h.b16 %v1180
        %v2640 = vunpack.c.l.b16 %v1181
        %v2641 = vunpack.c.h.b16 %v1181
        %v2642 = vunpack.c.l.b16 %v1182
        %v2643 = vunpack.c.h.b16 %v1182
        %v2644 = vunpack.c.l.b16 %v1183
        %v2645 = vunpack.c.h.b16 %v1183
        %v2646 = vunpack.c.l.b16 %v1184
        %v2647 = vunpack.c.h.b16 %v1184
        %v2648 = vunpack.c.l.b16 %v1185
        %v2649 = vunpack.c.h.b16 %v1185
        %v2650 = vunpack.c.l.b16 %v1186
        %v2651 = vunpack.c.h.b16 %v1186
        %v2652 = vunpack.c.l.b16 %v1187
        %v2653 = vunpack.c.h.b16 %v1187
        %v2654 = vunpack.c.l.b16 %v1188
        %v2655 = vunpack.c.h.b16 %v1188
        %v2656 = vunpack.c.l.b16 %v1189
        %v2657 = vunpack.c.h.b16 %v1189
        %v2658 = vunpack.c.l.b16 %v1190
        %v2659 = vunpack.c.h.b16 %v1190
        %v2660 = vunpack.c.l.b16 %v1191
        %v2661 = vunpack.c.h.b16 %v1191
        %v2662 = vunpack.c.l.b16 %v1192
        %v2663 = vunpack.c.h.b16 %v1192
        %v2664 = vunpack.c.l.b16 %v1193
        %v2665 = vunpack.c.h.b16 %v1193
        %v2666 = vunpack.c.l.b16 %v1194
        %v2667 = vunpack.c.h.b16 %v1194
        %v2668 = vunpack.c.l.b16 %v1195
        %v2669 = vunpack.c.h.b16 %v1195
        %v2670 = vunpack.c.l.b16 %v1196
        %v2671 = vunpack.c.h.b16 %v1196
        %v2672 = vunpack.c.l.b16 %v1197
        %v2673 = vunpack.c.h.b16 %v1197
        %v2674 = vunpack.c.l.b16 %v1198
        %v2675 = vunpack.c.h.b16 %v1198
        %v2676 = vunpack.c.l.b16 %v1199
        %v2677 = vunpack.c.h.b16 %v1199
        %v2678 = vunpack.c.l.b16 %v1200
        %v2679 = vunpack.c.h.b16 %v1200
        %v2680 = vunpack.c.l.b16 %v1201
        %v2681 = vunpack.c.h.b16 %v1201
        %v2682 = vunpack.c.l.b16 %v1202
        %v2683 = vunpack.c.h.b16 %v1202
        %v2684 = vunpack.c.l.b16 %v1203
        %v2685 = vunpack.c.h.b16 %v1203
        %v2686 = vunpack.c.l.b16 %v1204
        %v2687 = vunpack.c.h.b16 %v1204
        %v2688 = vunpack.c.l.b16 %v1205
        %v2689 = vunpack.c.h.b16 %v1205
        %v2690 = vunpack.c.l.b16 %v1206
        %v2691 = vunpack.c.h.b16 %v1206
        %v2692 = vunpack.c.l.b16 %v1207
        %v2693 = vunpack.c.h.b16 %v1207
        %v2694 = vunpack.c.l.b16 %v1208
        %v2695 = vunpack.c.h.b16 %v1208
        %v2696 = vunpack.c.l.b16 %v1209
        %v2697 = vunpack.c.h.b16 %v1209
        %v2698 = vunpack.c.l.b16 %v1210
        %v2699 = vunpack.c.h.b16 %v1210
        %v2700 = vunpack.c.l.b16 %v1211
        %v2701 = vunpack.c.h.b16 %v1211
        %v2702 = vunpack.c.l.b16 %v1212
        %v2703 = vunpack.c.h.b16 %v1212
        %v2704 = vunpack.c.l.b16 %v1213
        %v2705 = vunpack.c.h.b16 %v1213
        %v2706 = vunpack.c.l.b16 %v1214
        %v2707 = vunpack.c.h.b16 %v1214
        %v2708 = vunpack.c.l.b16 %v1215
        %v2709 = vunpack.c.h.b16 %v1215
        %v2710 = vunpack.c.l.b16 %v1216
        %v2711 = vunpack.c.h.b16 %v1216
        %v2712 = vunpack.c.l.b16 %v1217
        %v2713 = vunpack.c.h.b16 %v1217
        %v2714 = vunpack.c.l.b16 %v1218
        %v2715 = vunpack.c.h.b16 %v1218
        %v2716 = vunpack.c.l.b16 %v1219
        %v2717 = vunpack.c.h.b16 %v1219
        %v2718 = vunpack.c.l.b16 %v1220
        %v2719 = vunpack.c.h.b16 %v1220
        %v2720 = vunpack.c.l.b16 %v1221
        %v2721 = vunpack.c.h.b16 %v1221
        %v2722 = vunpack.c.l.b16 %v1222
        %v2723 = vunpack.c.h.b16 %v1222
        %v2724 = vunpack.c.l.b16 %v1223
        %v2725 = vunpack.c.h.b16 %v1223
        %v2726 = vunpack.c.l.b16 %v1224
        %v2727 = vunpack.c.h.b16 %v1224
        %v2728 = vunpack.c.l.b16 %v1225
        %v2729 = vunpack.c.h.b16 %v1225
        %v2730 = vunpack.c.l.b16 %v1226
        %v2731 = vunpack.c.h.b16 %v1226
        %v2732 = vunpack.c.l.b16 %v1227
        %v2733 = vunpack.c.h.b16 %v1227
        %v2734 = vunpack.c.l.b16 %v1228
        %v2735 = vunpack.c.h.b16 %v1228
        %v2736 = vunpack.c.l.b16 %v1229
        %v2737 = vunpack.c.h.b16 %v1229
        %v2738 = vunpack.c.l.b16 %v1230
        %v2739 = vunpack.c.h.b16 %v1230
        %v2740 = vunpack.c.l.b16 %v1231
        %v2741 = vunpack.c.h.b16 %v1231
        %v2742 = vunpack.c.l.b16 %v1232
        %v2743 = vunpack.c.h.b16 %v1232
        %v2744 = vunpack.c.l.b16 %v1233
        %v2745 = vunpack.c.h.b16 %v1233
        %v2746 = vunpack.c.l.b16 %v1234
        %v2747 = vunpack.c.h.b16 %v1234
        %v2748 = vunpack.c.l.b16 %v1235
        %v2749 = vunpack.c.h.b16 %v1235
        %v2750 = vunpack.c.l.b16 %v1236
        %v2751 = vunpack.c.h.b16 %v1236
        %v2752 = vunpack.c.l.b16 %v1237
        %v2753 = vunpack.c.h.b16 %v1237
        %v2754 = vunpack.c.l.b16 %v1238
        %v2755 = vunpack.c.h.b16 %v1238
        %v2756 = vunpack.c.l.b16 %v1239
        %v2757 = vunpack.c.h.b16 %v1239
        %v2758 = vunpack.c.l.b16 %v1240
        %v2759 = vunpack.c.h.b16 %v1240
        %v2760 = vunpack.c.l.b16 %v1241
        %v2761 = vunpack.c.h.b16 %v1241
        %v2762 = vunpack.c.l.b16 %v1242
        %v2763 = vunpack.c.h.b16 %v1242
        %v2764 = vunpack.c.l.b16 %v1243
        %v2765 = vunpack.c.h.b16 %v1243
        %v2766 = vunpack.c.l.b16 %v1244
        %v2767 = vunpack.c.h.b16 %v1244
        %v2768 = vunpack.c.l.b16 %v1245
        %v2769 = vunpack.c.h.b16 %v1245
        %v2770 = vunpack.c.l.b16 %v1246
        %v2771 = vunpack.c.h.b16 %v1246
        %v2772 = vunpack.c.l.b16 %v1247
        %v2773 = vunpack.c.h.b16 %v1247
        %v2774 = vunpack.c.l.b16 %v1248
        %v2775 = vunpack.c.h.b16 %v1248
        %v2776 = vunpack.c.l.b16 %v1249
        %v2777 = vunpack.c.h.b16 %v1249
        %v2778 = vunpack.c.l.b16 %v1250
        %v2779 = vunpack.c.h.b16 %v1250
        %v2780 = vunpack.c.l.b16 %v1251
        %v2781 = vunpack.c.h.b16 %v1251
        %v2782 = vunpack.c.l.b16 %v1252
        %v2783 = vunpack.c.h.b16 %v1252
        %v2784 = vunpack.c.l.b16 %v1253
        %v2785 = vunpack.c.h.b16 %v1253
        %v2786 = vunpack.c.l.b16 %v1254
        %v2787 = vunpack.c.h.b16 %v1254
        %v2788 = vunpack.c.l.b16 %v1255
        %v2789 = vunpack.c.h.b16 %v1255
        %v2790 = vunpack.c.l.b16 %v1256
        %v2791 = vunpack.c.h.b16 %v1256
        %v2792 = vunpack.c.l.b16 %v1257
        %v2793 = vunpack.c.h.b16 %v1257
        %v2794 = vunpack.c.l.b16 %v1258
        %v2795 = vunpack.c.h.b16 %v1258
        %v2796 = vunpack.c.l.b16 %v1259
        %v2797 = vunpack.c.h.b16 %v1259
        %v2798 = vunpack.c.l.b16 %v1260
        %v2799 = vunpack.c.h.b16 %v1260
        %v2800 = vunpack.c.l.b16 %v1261
        %v2801 = vunpack.c.h.b16 %v1261
        %v2802 = vunpack.c.l.b16 %v1262
        %v2803 = vunpack.c.h.b16 %v1262
        %v2804 = vunpack.c.l.b16 %v1263
        %v2805 = vunpack.c.h.b16 %v1263
        %v2806 = vunpack.c.l.b16 %v1264
        %v2807 = vunpack.c.h.b16 %v1264
        %v2808 = vunpack.c.l.b16 %v1265
        %v2809 = vunpack.c.h.b16 %v1265
        %v2810 = vunpack.c.l.b16 %v1266
        %v2811 = vunpack.c.h.b16 %v1266
        %v2812 = vunpack.c.l.b16 %v1267
        %v2813 = vunpack.c.h.b16 %v1267
        %v2814 = vunpack.c.l.b16 %v1268
        %v2815 = vunpack.c.h.b16 %v1268
        %v2816 = vunpack.c.l.b16 %v1269
        %v2817 = vunpack.c.h.b16 %v1269
        %v2818 = vunpack.c.l.b16 %v1270
        %v2819 = vunpack.c.h.b16 %v1270
        %v2820 = vunpack.c.l.b16 %v1271
        %v2821 = vunpack.c.h.b16 %v1271
        %v2822 = vunpack.c.l.b16 %v1272
        %v2823 = vunpack.c.h.b16 %v1272
        %v2824 = vunpack.c.l.b16 %v1273
        %v2825 = vunpack.c.h.b16 %v1273
        %v2826 = vunpack.c.l.b16 %v1274
        %v2827 = vunpack.c.h.b16 %v1274
        %v2828 = vunpack.c.l.b16 %v1275
        %v2829 = vunpack.c.h.b16 %v1275
        %v2830 = vunpack.c.l.b16 %v1276
        %v2831 = vunpack.c.h.b16 %v1276
        %v2832 = vunpack.c.l.b16 %v1277
        %v2833 = vunpack.c.h.b16 %v1277
        %v2834 = vunpack.c.l.b16 %v1278
        %v2835 = vunpack.c.h.b16 %v1278
        %v2836 = vunpack.c.l.b16 %v1279
        %v2837 = vunpack.c.h.b16 %v1279
        %v2838 = vunpack.c.l.b16 %v1280
        %v2839 = vunpack.c.h.b16 %v1280
        %v2840 = vunpack.c.l.b16 %v1281
        %v2841 = vunpack.c.h.b16 %v1281
        %v2842 = vunpack.c.l.b16 %v1282
        %v2843 = vunpack.c.h.b16 %v1282
        %v2844 = vunpack.c.l.b16 %v1283
        %v2845 = vunpack.c.h.b16 %v1283
        %v2846 = vunpack.c.l.b16 %v1284
        %v2847 = vunpack.c.h.b16 %v1284
        %v2848 = vunpack.c.l.b16 %v1285
        %v2849 = vunpack.c.h.b16 %v1285
        %v2850 = vunpack.c.l.b16 %v1286
        %v2851 = vunpack.c.h.b16 %v1286
        %v2852 = vunpack.c.l.b16 %v1287
        %v2853 = vunpack.c.h.b16 %v1287
        %v2854 = vunpack.c.l.b16 %v1288
        %v2855 = vunpack.c.h.b16 %v1288
        %v2856 = vunpack.c.l.b16 %v1289
        %v2857 = vunpack.c.h.b16 %v1289
        %v2858 = vunpack.c.l.b16 %v1290
        %v2859 = vunpack.c.h.b16 %v1290
        %v2860 = vunpack.c.l.b16 %v1291
        %v2861 = vunpack.c.h.b16 %v1291
        %v2862 = vunpack.c.l.b16 %v1292
        %v2863 = vunpack.c.h.b16 %v1292
        %v2864 = vunpack.c.l.b16 %v1293
        %v2865 = vunpack.c.h.b16 %v1293
        %v2866 = vunpack.c.l.b16 %v1294
        %v2867 = vunpack.c.h.b16 %v1294
        %v2868 = vunpack.c.l.b16 %v1295
        %v2869 = vunpack.c.h.b16 %v1295
        %v2870 = vunpack.c.l.b16 %v1296
        %v2871 = vunpack.c.h.b16 %v1296
        %v2872 = vunpack.c.l.b16 %v1297
        %v2873 = vunpack.c.h.b16 %v1297
        %v2874 = vunpack.c.l.b16 %v1298
        %v2875 = vunpack.c.h.b16 %v1298
        %v2876 = vunpack.c.l.b16 %v1299
        %v2877 = vunpack.c.h.b16 %v1299
        %v2878 = vunpack.c.l.b16 %v1300
        %v2879 = vunpack.c.h.b16 %v1300
        %v2880 = vunpack.c.l.b16 %v1301
        %v2881 = vunpack.c.h.b16 %v1301
        %v2882 = vunpack.c.l.b16 %v1302
        %v2883 = vunpack.c.h.b16 %v1302
        %v2884 = vunpack.c.l.b16 %v1303
        %v2885 = vunpack.c.h.b16 %v1303
        %v2886 = vunpack.c.l.b16 %v1304
        %v2887 = vunpack.c.h.b16 %v1304
        %v2888 = vunpack.c.l.b16 %v1305
        %v2889 = vunpack.c.h.b16 %v1305
        %v2890 = vunpack.c.l.b16 %v1306
        %v2891 = vunpack.c.h.b16 %v1306
        %v2892 = vunpack.c.l.b16 %v1307
        %v2893 = vunpack.c.h.b16 %v1307
        %v2894 = vunpack.c.l.b16 %v1308
        %v2895 = vunpack.c.h.b16 %v1308
        %v2896 = vunpack.c.l.b16 %v1309
        %v2897 = vunpack.c.h.b16 %v1309
        %v2898 = vunpack.c.l.b16 %v1310
        %v2899 = vunpack.c.h.b16 %v1310
        %v2900 = vunpack.c.l.b16 %v1311
        %v2901 = vunpack.c.h.b16 %v1311
        %v2902 = vunpack.c.l.b16 %v1312
        %v2903 = vunpack.c.h.b16 %v1312
        %v2904 = vunpack.c.l.b16 %v1313
        %v2905 = vunpack.c.h.b16 %v1313
        %v2906 = vunpack.c.l.b16 %v1314
        %v2907 = vunpack.c.h.b16 %v1314
        %v2908 = vunpack.c.l.b16 %v1315
        %v2909 = vunpack.c.h.b16 %v1315
        %v2910 = vunpack.c.l.b16 %v1316
        %v2911 = vunpack.c.h.b16 %v1316
        %v2912 = vunpack.c.l.b16 %v1317
        %v2913 = vunpack.c.h.b16 %v1317
        %v2914 = vunpack.c.l.b16 %v1318
        %v2915 = vunpack.c.h.b16 %v1318
        %v2916 = vunpack.c.l.b16 %v1319
        %v2917 = vunpack.c.h.b16 %v1319
        %v2918 = vunpack.c.l.b16 %v1320
        %v2919 = vunpack.c.h.b16 %v1320
        %v2920 = vunpack.c.l.b16 %v1321
        %v2921 = vunpack.c.h.b16 %v1321
        %v2922 = vunpack.c.l.b16 %v1322
        %v2923 = vunpack.c.h.b16 %v1322
        %v2924 = vunpack.c.l.b16 %v1323
        %v2925 = vunpack.c.h.b16 %v1323
        %v2926 = vunpack.c.l.b16 %v1324
        %v2927 = vunpack.c.h.b16 %v1324
        %v2928 = vunpack.c.l.b16 %v1325
        %v2929 = vunpack.c.h.b16 %v1325
        %v2930 = vunpack.c.l.b16 %v1326
        %v2931 = vunpack.c.h.b16 %v1326
        %v2932 = vunpack.c.l.b16 %v1327
        %v2933 = vunpack.c.h.b16 %v1327
        %v2934 = vunpack.c.l.b16 %v1328
        %v2935 = vunpack.c.h.b16 %v1328
        %v2936 = vunpack.c.l.b16 %v1329
        %v2937 = vunpack.c.h.b16 %v1329
        %v2938 = vunpack.c.l.b16 %v1330
        %v2939 = vunpack.c.h.b16 %v1330
        %v2940 = vunpack.c.l.b16 %v1331
        %v2941 = vunpack.c.h.b16 %v1331
        %v2942 = vunpack.c.l.b16 %v1332
        %v2943 = vunpack.c.h.b16 %v1332
        %v2944 = vunpack.c.l.b16 %v1333
        %v2945 = vunpack.c.h.b16 %v1333
        %v2946 = vunpack.c.l.b16 %v1334
        %v2947 = vunpack.c.h.b16 %v1334
        %v2948 = vunpack.c.l.b16 %v1335
        %v2949 = vunpack.c.h.b16 %v1335
        %v2950 = vunpack.c.l.b16 %v1336
        %v2951 = vunpack.c.h.b16 %v1336
        %v2952 = vunpack.c.l.b16 %v1337
        %v2953 = vunpack.c.h.b16 %v1337
        %v2954 = vunpack.c.l.b16 %v1338
        %v2955 = vunpack.c.h.b16 %v1338
        %v2956 = vunpack.c.l.b16 %v1339
        %v2957 = vunpack.c.h.b16 %v1339
        %v2958 = vunpack.c.l.b16 %v1340
        %v2959 = vunpack.c.h.b16 %v1340
        %v2960 = vunpack.c.l.b16 %v1341
        %v2961 = vunpack.c.h.b16 %v1341
        %v2962 = vunpack.c.l.b16 %v1342
        %v2963 = vunpack.c.h.b16 %v1342
        %v2964 = vunpack.c.l.b16 %v1343
        %v2965 = vunpack.c.h.b16 %v1343
        %v2966 = vunpack.c.l.b16 %v1344
        %v2967 = vunpack.c.h.b16 %v1344
        %v2968 = vunpack.c.l.b16 %v1345
        %v2969 = vunpack.c.h.b16 %v1345
        %v2970 = vunpack.c.l.b16 %v1346
        %v2971 = vunpack.c.h.b16 %v1346
        %v2972 = vunpack.c.l.b16 %v1347
        %v2973 = vunpack.c.h.b16 %v1347
        %v2974 = vunpack.c.l.b16 %v1348
        %v2975 = vunpack.c.h.b16 %v1348
        %v2976 = vunpack.c.l.b16 %v1349
        %v2977 = vunpack.c.h.b16 %v1349
        %v2978 = vunpack.c.l.b16 %v1350
        %v2979 = vunpack.c.h.b16 %v1350
        %v2980 = vunpack.c.l.b16 %v1351
        %v2981 = vunpack.c.h.b16 %v1351
        %v2982 = vunpack.c.l.b16 %v1352
        %v2983 = vunpack.c.h.b16 %v1352
        %v2984 = vunpack.c.l.b16 %v1353
        %v2985 = vunpack.c.h.b16 %v1353
        %v2986 = vunpack.c.l.b16 %v1354
        %v2987 = vunpack.c.h.b16 %v1354
        %v2988 = vunpack.c.l.b16 %v1355
        %v2989 = vunpack.c.h.b16 %v1355
        %v2990 = vunpack.c.l.b16 %v1356
        %v2991 = vunpack.c.h.b16 %v1356
        %v2992 = vunpack.c.l.b16 %v1357
        %v2993 = vunpack.c.h.b16 %v1357
        %v2994 = vunpack.c.l.b16 %v1358
        %v2995 = vunpack.c.h.b16 %v1358
        %v2996 = vunpack.c.l.b16 %v1359
        %v2997 = vunpack.c.h.b16 %v1359
        %v2998 = vunpack.c.l.b16 %v1360
        %v2999 = vunpack.c.h.b16 %v1360
        %v3000 = vunpack.c.l.b16 %v1361
        %v3001 = vunpack.c.h.b16 %v1361
        %v3002 = vunpack.c.l.b16 %v1362
        %v3003 = vunpack.c.h.b16 %v1362
        %v3004 = vunpack.c.l.b16 %v1363
        %v3005 = vunpack.c.h.b16 %v1363
        %v3006 = vunpack.c.l.b16 %v1364
        %v3007 = vunpack.c.h.b16 %v1364
        %v3008 = vunpack.c.l.b16 %v1365
        %v3009 = vunpack.c.h.b16 %v1365
        %v3010 = vunpack.c.l.b16 %v1366
        %v3011 = vunpack.c.h.b16 %v1366
        %v3012 = vunpack.c.l.b16 %v1367
        %v3013 = vunpack.c.h.b16 %v1367
        %v3014 = vunpack.c.l.b16 %v1368
        %v3015 = vunpack.c.h.b16 %v1368
        %v3016 = vunpack.c.l.b16 %v1369
        %v3017 = vunpack.c.h.b16 %v1369
        %v3018 = vunpack.c.l.b16 %v1370
        %v3019 = vunpack.c.h.b16 %v1370
        %v3020 = vunpack.c.l.b16 %v1371
        %v3021 = vunpack.c.h.b16 %v1371
        %v3022 = vunpack.c.l.b16 %v1372
        %v3023 = vunpack.c.h.b16 %v1372
        %v3024 = vunpack.c.l.b16 %v1373
        %v3025 = vunpack.c.h.b16 %v1373
        %v3026 = vunpack.c.l.b16 %v1374
        %v3027 = vunpack.c.h.b16 %v1374
        %v3028 = vunpack.c.l.b16 %v1375
        %v3029 = vunpack.c.h.b16 %v1375
        %v3030 = vunpack.c.l.b16 %v1376
        %v3031 = vunpack.c.h.b16 %v1376
        %v3032 = vunpack.c.l.b16 %v1377
        %v3033 = vunpack.c.h.b16 %v1377
        %v3034 = vunpack.c.l.b16 %v1378
        %v3035 = vunpack.c.h.b16 %v1378
        %v3036 = vunpack.c.l.b16 %v1379
        %v3037 = vunpack.c.h.b16 %v1379
        %v3038 = vunpack.c.l.b16 %v1380
        %v3039 = vunpack.c.h.b16 %v1380
        %v3040 = vunpack.c.l.b16 %v1381
        %v3041 = vunpack.c.h.b16 %v1381
        %v3042 = vunpack.c.l.b16 %v1382
        %v3043 = vunpack.c.h.b16 %v1382
        %v3044 = vunpack.c.l.b16 %v1383
        %v3045 = vunpack.c.h.b16 %v1383
        %v3046 = vunpack.c.l.b16 %v1384
        %v3047 = vunpack.c.h.b16 %v1384
        %v3048 = vunpack.c.l.b16 %v1385
        %v3049 = vunpack.c.h.b16 %v1385
        %v3050 = vunpack.c.l.b16 %v1386
        %v3051 = vunpack.c.h.b16 %v1386
        %v3052 = vunpack.c.l.b16 %v1387
        %v3053 = vunpack.c.h.b16 %v1387
        %v3054 = vunpack.c.l.b16 %v1388
        %v3055 = vunpack.c.h.b16 %v1388
        %v3056 = vunpack.c.l.b16 %v1389
        %v3057 = vunpack.c.h.b16 %v1389
        %v3058 = vunpack.c.l.b16 %v1390
        %v3059 = vunpack.c.h.b16 %v1390
        %v3060 = vunpack.c.l.b16 %v1391
        %v3061 = vunpack.c.h.b16 %v1391
        %v3062 = vunpack.c.l.b16 %v1392
        %v3063 = vunpack.c.h.b16 %v1392
        %v3064 = vunpack.c.l.b16 %v1393
        %v3065 = vunpack.c.h.b16 %v1393
        %v3066 = vunpack.c.l.b16 %v1394
        %v3067 = vunpack.c.h.b16 %v1394
        %v3068 = vunpack.c.l.b16 %v1395
        %v3069 = vunpack.c.h.b16 %v1395
        %v3070 = vunpack.c.l.b16 %v1396
        %v3071 = vunpack.c.h.b16 %v1396
        %v3072 = vunpack.c.l.b16 %v1397
        %v3073 = vunpack.c.h.b16 %v1397
        %v3074 = vunpack.c.l.b16 %v1398
        %v3075 = vunpack.c.h.b16 %v1398
        %v3076 = vunpack.c.l.b16 %v1399
        %v3077 = vunpack.c.h.b16 %v1399
        %v3078 = vunpack.c.l.b16 %v1400
        %v3079 = vunpack.c.h.b16 %v1400
        %v3080 = vunpack.c.l.b16 %v1401
        %v3081 = vunpack.c.h.b16 %v1401
        %v3082 = vunpack.c.l.b16 %v1402
        %v3083 = vunpack.c.h.b16 %v1402
        %v3084 = vunpack.c.l.b16 %v1403
        %v3085 = vunpack.c.h.b16 %v1403
        %v3086 = vunpack.c.l.b16 %v1404
        %v3087 = vunpack.c.h.b16 %v1404
        %v3088 = vunpack.c.l.b16 %v1405
        %v3089 = vunpack.c.h.b16 %v1405
        %v3090 = vunpack.c.l.b16 %v1406
        %v3091 = vunpack.c.h.b16 %v1406
        %v3092 = vunpack.c.l.b16 %v1407
        %v3093 = vunpack.c.h.b16 %v1407
        %v3094 = vunpack.c.l.b16 %v1408
        %v3095 = vunpack.c.h.b16 %v1408
        %v3096 = vunpack.c.l.b16 %v1409
        %v3097 = vunpack.c.h.b16 %v1409
        %v3098 = vunpack.c.l.b16 %v1410
        %v3099 = vunpack.c.h.b16 %v1410
        %v3100 = vunpack.c.l.b16 %v1411
        %v3101 = vunpack.c.h.b16 %v1411
        %v3102 = vunpack.c.l.b16 %v1412
        %v3103 = vunpack.c.h.b16 %v1412
        %v3104 = vunpack.c.l.b16 %v1413
        %v3105 = vunpack.c.h.b16 %v1413
        %v3106 = vunpack.c.l.b16 %v1414
        %v3107 = vunpack.c.h.b16 %v1414
        %v3108 = vunpack.c.l.b16 %v1415
        %v3109 = vunpack.c.h.b16 %v1415
        %v3110 = vunpack.c.l.b16 %v1416
        %v3111 = vunpack.c.h.b16 %v1416
        %v3112 = vunpack.c.l.b16 %v1417
        %v3113 = vunpack.c.h.b16 %v1417
        %v3114 = vunpack.c.l.b16 %v1418
        %v3115 = vunpack.c.h.b16 %v1418
        %v3116 = vunpack.c.l.b16 %v1419
        %v3117 = vunpack.c.h.b16 %v1419
        %v3118 = vunpack.c.l.b16 %v1420
        %v3119 = vunpack.c.h.b16 %v1420
        %v3120 = vunpack.c.l.b16 %v1421
        %v3121 = vunpack.c.h.b16 %v1421
        %v3122 = vunpack.c.l.b16 %v1422
        %v3123 = vunpack.c.h.b16 %v1422
        %v3124 = vunpack.c.l.b16 %v1423
        %v3125 = vunpack.c.h.b16 %v1423
        %v3126 = vunpack.c.l.b16 %v1424
        %v3127 = vunpack.c.h.b16 %v1424
        %v3128 = vunpack.c.l.b16 %v1425
        %v3129 = vunpack.c.h.b16 %v1425
        %v3130 = vunpack.c.l.b16 %v1426
        %v3131 = vunpack.c.h.b16 %v1426
        %v3132 = vunpack.c.l.b16 %v1427
        %v3133 = vunpack.c.h.b16 %v1427
        %v3134 = vunpack.c.l.b16 %v1428
        %v3135 = vunpack.c.h.b16 %v1428
        %v3136 = vunpack.c.l.b16 %v1429
        %v3137 = vunpack.c.h.b16 %v1429
        %v3138 = vunpack.c.l.b16 %v1430
        %v3139 = vunpack.c.h.b16 %v1430
        %v3140 = vunpack.c.l.b16 %v1431
        %v3141 = vunpack.c.h.b16 %v1431
        %v3142 = vunpack.c.l.b16 %v1432
        %v3143 = vunpack.c.h.b16 %v1432
        %v3144 = vunpack.c.l.b16 %v1433
        %v3145 = vunpack.c.h.b16 %v1433
        %v3146 = vunpack.c.l.b16 %v1434
        %v3147 = vunpack.c.h.b16 %v1434
        %v3148 = vunpack.c.l.b16 %v1435
        %v3149 = vunpack.c.h.b16 %v1435
        %v3150 = vunpack.c.l.b16 %v1436
        %v3151 = vunpack.c.h.b16 %v1436
        %v3152 = vunpack.c.l.b16 %v1437
        %v3153 = vunpack.c.h.b16 %v1437
        %v3154 = vunpack.c.l.b16 %v1438
        %v3155 = vunpack.c.h.b16 %v1438
        %v3156 = vunpack.c.l.b16 %v1439
        %v3157 = vunpack.c.h.b16 %v1439
        %v3158 = vunpack.c.l.b16 %v1440
        %v3159 = vunpack.c.h.b16 %v1440
        %v3160 = vunpack.c.l.b16 %v1441
        %v3161 = vunpack.c.h.b16 %v1441
        %v3162 = vunpack.c.l.b16 %v1442
        %v3163 = vunpack.c.h.b16 %v1442
        %v3164 = vunpack.c.l.b16 %v1443
        %v3165 = vunpack.c.h.b16 %v1443
        %v3166 = vunpack.c.l.b16 %v1444
        %v3167 = vunpack.c.h.b16 %v1444
        %v3168 = vunpack.c.l.b16 %v1445
        %v3169 = vunpack.c.h.b16 %v1445
        %v3170 = vunpack.c.l.b16 %v1446
        %v3171 = vunpack.c.h.b16 %v1446
        %v3172 = vunpack.c.l.b16 %v1447
        %v3173 = vunpack.c.h.b16 %v1447
        %v3174 = vunpack.c.l.b16 %v1448
        %v3175 = vunpack.c.h.b16 %v1448
        %v3176 = vunpack.c.l.b16 %v1449
        %v3177 = vunpack.c.h.b16 %v1449
        %v3178 = vunpack.c.l.b16 %v1450
        %v3179 = vunpack.c.h.b16 %v1450
        %v3180 = vunpack.c.l.b16 %v1451
        %v3181 = vunpack.c.h.b16 %v1451
        %v3182 = vunpack.c.l.b16 %v1452
        %v3183 = vunpack.c.h.b16 %v1452
        %v3184 = vunpack.c.l.b16 %v1453
        %v3185 = vunpack.c.h.b16 %v1453
        %v3186 = vunpack.c.l.b16 %v1454
        %v3187 = vunpack.c.h.b16 %v1454
        %v3188 = vunpack.c.l.b16 %v1455
        %v3189 = vunpack.c.h.b16 %v1455
        %v3190 = vunpack.c.l.b16 %v1456
        %v3191 = vunpack.c.h.b16 %v1456
        %v3192 = vunpack.c.l.b16 %v1457
        %v3193 = vunpack.c.h.b16 %v1457
        %v3194 = vunpack.c.l.b16 %v1458
        %v3195 = vunpack.c.h.b16 %v1458
        %v3196 = vunpack.c.l.b16 %v1459
        %v3197 = vunpack.c.h.b16 %v1459
        %v3198 = vunpack.c.l.b16 %v1460
        %v3199 = vunpack.c.h.b16 %v1460
        %v3200 = vunpack.c.l.b16 %v1461
        %v3201 = vunpack.c.h.b16 %v1461
        %v3202 = vunpack.c.l.b16 %v1462
        %v3203 = vunpack.c.h.b16 %v1462
        %v3204 = vunpack.c.l.b16 %v1463
        %v3205 = vunpack.c.h.b16 %v1463
        %v3206 = vunpack.c.l.b16 %v1464
        %v3207 = vunpack.c.h.b16 %v1464
        %v3208 = vunpack.c.l.b16 %v1465
        %v3209 = vunpack.c.h.b16 %v1465
        %v3210 = vunpack.c.l.b16 %v1466
        %v3211 = vunpack.c.h.b16 %v1466
        %v3212 = vunpack.c.l.b16 %v1467
        %v3213 = vunpack.c.h.b16 %v1467
        %v3214 = vunpack.c.l.b16 %v1468
        %v3215 = vunpack.c.h.b16 %v1468
        %v3216 = vunpack.c.l.b16 %v1469
        %v3217 = vunpack.c.h.b16 %v1469
        %v3218 = vunpack.c.l.b16 %v1470
        %v3219 = vunpack.c.h.b16 %v1470
        %v3220 = vunpack.c.l.b16 %v1471
        %v3221 = vunpack.c.h.b16 %v1471
        %v3222 = vunpack.c.l.b16 %v1472
        %v3223 = vunpack.c.h.b16 %v1472
        %v3224 = vunpack.c.l.b16 %v1473
        %v3225 = vunpack.c.h.b16 %v1473
        %v3226 = vunpack.c.l.b16 %v1474
        %v3227 = vunpack.c.h.b16 %v1474
        %v3228 = vunpack.c.l.b16 %v1475
        %v3229 = vunpack.c.h.b16 %v1475
        %v3230 = vunpack.c.l.b16 %v1476
        %v3231 = vunpack.c.h.b16 %v1476
        %v3232 = vunpack.c.l.b16 %v1477
        %v3233 = vunpack.c.h.b16 %v1477
        %v3234 = vunpack.c.l.b16 %v1478
        %v3235 = vunpack.c.h.b16 %v1478
        %v3236 = vunpack.c.l.b16 %v1479
        %v3237 = vunpack.c.h.b16 %v1479
        %v3238 = vunpack.c.l.b16 %v1480
        %v3239 = vunpack.c.h.b16 %v1480
        %v3240 = vunpack.c.l.b16 %v1481
        %v3241 = vunpack.c.h.b16 %v1481
        %v3242 = vunpack.c.l.b16 %v1482
        %v3243 = vunpack.c.h.b16 %v1482
        %v3244 = vunpack.c.l.b16 %v1483
        %v3245 = vunpack.c.h.b16 %v1483
        %v3246 = vunpack.c.l.b16 %v1484
        %v3247 = vunpack.c.h.b16 %v1484
        %v3248 = vunpack.c.l.b16 %v1485
        %v3249 = vunpack.c.h.b16 %v1485
        %v3250 = vunpack.c.l.b16 %v1486
        %v3251 = vunpack.c.h.b16 %v1486
        %v3252 = vunpack.c.l.b16 %v1487
        %v3253 = vunpack.c.h.b16 %v1487
        %v3254 = vunpack.c.l.b16 %v1488
        %v3255 = vunpack.c.h.b16 %v1488
        %v3256 = vunpack.c.l.b16 %v1489
        %v3257 = vunpack.c.h.b16 %v1489
        %v3258 = vunpack.c.l.b16 %v1490
        %v3259 = vunpack.c.h.b16 %v1490
        %v3260 = vunpack.c.l.b16 %v1491
        %v3261 = vunpack.c.h.b16 %v1491
        %v3262 = vunpack.c.l.b16 %v1492
        %v3263 = vunpack.c.h.b16 %v1492
        %v3264 = vunpack.c.l.b16 %v1493
        %v3265 = vunpack.c.h.b16 %v1493
        %v3266 = vunpack.c.l.b16 %v1494
        %v3267 = vunpack.c.h.b16 %v1494
        %v3268 = vunpack.c.l.b16 %v1495
        %v3269 = vunpack.c.h.b16 %v1495
        %v3270 = vunpack.c.l.b16 %v1496
        %v3271 = vunpack.c.h.b16 %v1496
        %v3272 = vunpack.c.l.b16 %v1497
        %v3273 = vunpack.c.h.b16 %v1497
        %v3274 = vunpack.c.l.b16 %v1498
        %v3275 = vunpack.c.h.b16 %v1498
        %v3276 = vunpack.c.l.b16 %v1499
        %v3277 = vunpack.c.h.b16 %v1499
        %v3278 = vunpack.c.l.b16 %v1500
        %v3279 = vunpack.c.h.b16 %v1500
        %v3280 = vunpack.c.l.b16 %v1501
        %v3281 = vunpack.c.h.b16 %v1501
        %v3282 = vunpack.c.l.b16 %v1502
        %v3283 = vunpack.c.h.b16 %v1502
        %v3284 = vunpack.c.l.b16 %v1503
        %v3285 = vunpack.c.h.b16 %v1503
        %v3286 = vunpack.c.l.b16 %v1504
        %v3287 = vunpack.c.h.b16 %v1504
        %v3288 = vunpack.c.l.b16 %v1505
        %v3289 = vunpack.c.h.b16 %v1505
        %v3290 = vunpack.c.l.b16 %v1506
        %v3291 = vunpack.c.h.b16 %v1506
        %v3292 = vunpack.c.l.b16 %v1507
        %v3293 = vunpack.c.h.b16 %v1507
        %v3294 = vunpack.c.l.b16 %v1508
        %v3295 = vunpack.c.h.b16 %v1508
        %v3296 = vunpack.c.l.b16 %v1509
        %v3297 = vunpack.c.h.b16 %v1509
        %v3298 = vunpack.c.l.b16 %v1510
        %v3299 = vunpack.c.h.b16 %v1510
        %v3300 = vunpack.c.l.b16 %v1511
        %v3301 = vunpack.c.h.b16 %v1511
        %v3302 = vunpack.c.l.b16 %v1512
        %v3303 = vunpack.c.h.b16 %v1512
        %v3304 = vunpack.c.l.b16 %v1513
        %v3305 = vunpack.c.h.b16 %v1513
        %v3306 = vunpack.c.l.b16 %v1514
        %v3307 = vunpack.c.h.b16 %v1514
        %v3308 = vunpack.c.l.b16 %v1515
        %v3309 = vunpack.c.h.b16 %v1515
        %v3310 = vunpack.c.l.b16 %v1516
        %v3311 = vunpack.c.h.b16 %v1516
        %v3312 = vunpack.c.l.b16 %v1517
        %v3313 = vunpack.c.h.b16 %v1517
        %v3314 = vunpack.c.l.b16 %v1518
        %v3315 = vunpack.c.h.b16 %v1518
        %v3316 = vunpack.c.l.b16 %v1519
        %v3317 = vunpack.c.h.b16 %v1519
        %v3318 = vunpack.c.l.b16 %v1520
        %v3319 = vunpack.c.h.b16 %v1520
        %v3320 = vunpack.c.l.b16 %v1521
        %v3321 = vunpack.c.h.b16 %v1521
        %v3322 = vunpack.c.l.b16 %v1522
        %v3323 = vunpack.c.h.b16 %v1522
        %v3324 = vunpack.c.l.b16 %v1523
        %v3325 = vunpack.c.h.b16 %v1523
        %v3326 = vunpack.c.l.b16 %v1524
        %v3327 = vunpack.c.h.b16 %v1524
        %v3328 = vunpack.c.l.b16 %v1525
        %v3329 = vunpack.c.h.b16 %v1525
        %v3330 = vunpack.c.l.b16 %v1526
        %v3331 = vunpack.c.h.b16 %v1526
        %v3332 = vunpack.c.l.b16 %v1527
        %v3333 = vunpack.c.h.b16 %v1527
        %v3334 = vunpack.c.l.b16 %v1528
        %v3335 = vunpack.c.h.b16 %v1528
        %v3336 = vunpack.c.l.b16 %v1529
        %v3337 = vunpack.c.h.b16 %v1529
        %v3338 = vunpack.c.l.b16 %v1530
        %v3339 = vunpack.c.h.b16 %v1530
        %v3340 = vunpack.c.l.b16 %v1531
        %v3341 = vunpack.c.h.b16 %v1531
        %v3342 = vunpack.c.l.b16 %v1532
        %v3343 = vunpack.c.h.b16 %v1532
        %v3344 = vunpack.c.l.b16 %v1533
        %v3345 = vunpack.c.h.b16 %v1533
        %v3346 = vunpack.c.l.b16 %v1534
        %v3347 = vunpack.c.h.b16 %v1534
        %v3348 = vunpack.c.l.b16 %v1535
        %v3349 = vunpack.c.h.b16 %v1535
        %v3350 = vunpack.c.l.b16 %v1536
        %v3351 = vunpack.c.h.b16 %v1536
        %v3352 = vunpack.c.l.b16 %v1537
        %v3353 = vunpack.c.h.b16 %v1537
        %v3354 = vunpack.c.l.b16 %v1538
        %v3355 = vunpack.c.h.b16 %v1538
        %v3356 = vunpack.c.l.b16 %v1539
        %v3357 = vunpack.c.h.b16 %v1539
        %v3358 = vunpack.c.l.b16 %v1540
        %v3359 = vunpack.c.h.b16 %v1540
        %v3360 = vunpack.c.l.b16 %v1541
        %v3361 = vunpack.c.h.b16 %v1541
        %v3362 = vunpack.c.l.b16 %v1542
        %v3363 = vunpack.c.h.b16 %v1542
        %v3364 = vunpack.c.l.b16 %v1543
        %v3365 = vunpack.c.h.b16 %v1543
        %v3366 = vunpack.c.l.b16 %v1544
        %v3367 = vunpack.c.h.b16 %v1544
        %v3368 = vunpack.c.l.b16 %v1545
        %v3369 = vunpack.c.h.b16 %v1545
        %v3370 = vunpack.c.l.b16 %v1546
        %v3371 = vunpack.c.h.b16 %v1546
        %v3372 = vunpack.c.l.b16 %v1547
        %v3373 = vunpack.c.h.b16 %v1547
        %v3374 = vunpack.c.l.b16 %v1548
        %v3375 = vunpack.c.h.b16 %v1548
        %v3376 = vunpack.c.l.b16 %v1549
        %v3377 = vunpack.c.h.b16 %v1549
        %v3378 = vunpack.c.l.b16 %v1550
        %v3379 = vunpack.c.h.b16 %v1550
        %v3380 = vunpack.c.l.b16 %v1551
        %v3381 = vunpack.c.h.b16 %v1551
        %v3382 = vunpack.c.l.b16 %v1552
        %v3383 = vunpack.c.h.b16 %v1552
        %v3384 = vunpack.c.l.b16 %v1553
        %v3385 = vunpack.c.h.b16 %v1553
        %v3386 = vunpack.c.l.b16 %v1554
        %v3387 = vunpack.c.h.b16 %v1554
        %v3388 = vunpack.c.l.b16 %v1555
        %v3389 = vunpack.c.h.b16 %v1555
        %v3390 = vunpack.c.l.b16 %v1556
        %v3391 = vunpack.c.h.b16 %v1556
        %v3392 = vunpack.c.l.b16 %v1557
        %v3393 = vunpack.c.h.b16 %v1557
        %v3394 = vunpack.c.l.b16 %v1558
        %v3395 = vunpack.c.h.b16 %v1558
        %v3396 = vunpack.c.l.b16 %v1559
        %v3397 = vunpack.c.h.b16 %v1559
        %v3398 = vunpack.c.l.b16 %v1560
        %v3399 = vunpack.c.h.b16 %v1560
        %v3400 = vunpack.c.l.b16 %v1561
        %v3401 = vunpack.c.h.b16 %v1561
        %v3402 = vunpack.c.l.b16 %v1562
        %v3403 = vunpack.c.h.b16 %v1562
        %v3404 = vunpack.c.l.b16 %v1563
        %v3405 = vunpack.c.h.b16 %v1563
        %v3406 = vunpack.c.l.b16 %v1564
        %v3407 = vunpack.c.h.b16 %v1564
        %v3408 = vunpack.c.l.b16 %v1565
        %v3409 = vunpack.c.h.b16 %v1565
        %v3410 = vunpack.c.l.b16 %v1566
        %v3411 = vunpack.c.h.b16 %v1566
        %v3412 = vunpack.c.l.b16 %v1567
        %v3413 = vunpack.c.h.b16 %v1567
        %v3414 = vunpack.c.l.b16 %v1568
        %v3415 = vunpack.c.h.b16 %v1568
        %v3416 = vunpack.c.l.b16 %v1569
        %v3417 = vunpack.c.h.b16 %v1569
        %v3418 = vunpack.c.l.b16 %v1570
        %v3419 = vunpack.c.h.b16 %v1570
        %v3420 = vunpack.c.l.b16 %v1571
        %v3421 = vunpack.c.h.b16 %v1571
        %v3422 = vunpack.c.l.b16 %v1572
        %v3423 = vunpack.c.h.b16 %v1572
        %v3424 = vunpack.c.l.b16 %v1573
        %v3425 = vunpack.c.h.b16 %v1573
        %v3426 = vunpack.c.l.b16 %v1574
        %v3427 = vunpack.c.h.b16 %v1574
        %v3428 = vunpack.c.l.b16 %v1575
        %v3429 = vunpack.c.h.b16 %v1575
        %v3430 = vunpack.c.l.b16 %v1576
        %v3431 = vunpack.c.h.b16 %v1576
        %v3432 = vunpack.c.l.b16 %v1577
        %v3433 = vunpack.c.h.b16 %v1577
        %v3434 = vunpack.c.l.b16 %v1578
        %v3435 = vunpack.c.h.b16 %v1578
        %v3436 = vunpack.c.l.b16 %v1579
        %v3437 = vunpack.c.h.b16 %v1579
        %v3438 = vunpack.c.l.b16 %v1580
        %v3439 = vunpack.c.h.b16 %v1580
        %v3440 = vunpack.c.l.b16 %v1581
        %v3441 = vunpack.c.h.b16 %v1581
        %v3442 = vunpack.c.l.b16 %v1582
        %v3443 = vunpack.c.h.b16 %v1582
        %v3444 = vunpack.c.l.b16 %v1583
        %v3445 = vunpack.c.h.b16 %v1583
        %v3446 = vunpack.c.l.b16 %v1584
        %v3447 = vunpack.c.h.b16 %v1584
        %v3448 = vunpack.c.l.b16 %v1585
        %v3449 = vunpack.c.h.b16 %v1585
        %v3450 = vunpack.c.l.b16 %v1586
        %v3451 = vunpack.c.h.b16 %v1586
        %v3452 = vunpack.c.l.b16 %v1587
        %v3453 = vunpack.c.h.b16 %v1587
        %v3454 = vunpack.c.l.b16 %v1588
        %v3455 = vunpack.c.h.b16 %v1588
        %v3456 = vunpack.c.l.b16 %v1589
        %v3457 = vunpack.c.h.b16 %v1589
        %v3458 = vunpack.c.l.b16 %v1590
        %v3459 = vunpack.c.h.b16 %v1590
        %v3460 = vunpack.c.l.b16 %v1591
        %v3461 = vunpack.c.h.b16 %v1591
        %v3462 = vunpack.c.l.b16 %v1592
        %v3463 = vunpack.c.h.b16 %v1592
        %v3464 = vunpack.c.l.b16 %v1593
        %v3465 = vunpack.c.h.b16 %v1593
        %v3466 = vunpack.c.l.b16 %v1594
        %v3467 = vunpack.c.h.b16 %v1594
        %v3468 = vunpack.c.l.b16 %v1595
        %v3469 = vunpack.c.h.b16 %v1595
        %v3470 = vunpack.c.l.b16 %v1596
        %v3471 = vunpack.c.h.b16 %v1596
        %v3472 = vunpack.c.l.b16 %v1597
        %v3473 = vunpack.c.h.b16 %v1597
        %v3474 = vunpack.c.l.b16 %v1598
        %v3475 = vunpack.c.h.b16 %v1598
        %v3476 = vunpack.c.l.b16 %v1599
        %v3477 = vunpack.c.h.b16 %v1599
        %v3478 = vunpack.c.l.b16 %v1600
        %v3479 = vunpack.c.h.b16 %v1600
        %v3480 = vunpack.c.l.b16 %v1601
        %v3481 = vunpack.c.h.b16 %v1601
        %v3482 = vunpack.c.l.b16 %v1602
        %v3483 = vunpack.c.h.b16 %v1602
        %v3484 = vunpack.c.l.b16 %v1603
        %v3485 = vunpack.c.h.b16 %v1603
        %v3486 = vunpack.c.l.b16 %v1604
        %v3487 = vunpack.c.h.b16 %v1604
        %v3488 = vunpack.c.l.b16 %v1605
        %v3489 = vunpack.c.h.b16 %v1605
        %v3490 = vunpack.c.l.b16 %v1606
        %v3491 = vunpack.c.h.b16 %v1606
        %v3492 = vunpack.c.l.b16 %v1607
        %v3493 = vunpack.c.h.b16 %v1607
        %v3494 = vunpack.c.l.b16 %v1608
        %v3495 = vunpack.c.h.b16 %v1608
        %v3496 = vunpack.c.l.b16 %v1609
        %v3497 = vunpack.c.h.b16 %v1609
        %v3498 = vunpack.c.l.b16 %v1610
        %v3499 = vunpack.c.h.b16 %v1610
        %v3500 = vunpack.c.l.b16 %v1611
        %v3501 = vunpack.c.h.b16 %v1611
        %v3502 = vunpack.c.l.b16 %v1612
        %v3503 = vunpack.c.h.b16 %v1612
        %v3504 = vunpack.c.l.b16 %v1613
        %v3505 = vunpack.c.h.b16 %v1613
        %v3506 = vunpack.c.l.b16 %v1614
        %v3507 = vunpack.c.h.b16 %v1614
        %v3508 = vunpack.c.l.b16 %v1615
        %v3509 = vunpack.c.h.b16 %v1615
        %v3510 = vunpack.c.l.b16 %v1616
        %v3511 = vunpack.c.h.b16 %v1616
        %v3512 = vunpack.c.l.b16 %v1617
        %v3513 = vunpack.c.h.b16 %v1617
        %v3514 = vunpack.c.l.b16 %v1618
        %v3515 = vunpack.c.h.b16 %v1618
        %v3516 = vunpack.c.l.b16 %v1619
        %v3517 = vunpack.c.h.b16 %v1619
        %v3518 = vunpack.c.l.b16 %v1620
        %v3519 = vunpack.c.h.b16 %v1620
        %v3520 = vunpack.c.l.b16 %v1621
        %v3521 = vunpack.c.h.b16 %v1621
        %v3522 = vunpack.c.l.b16 %v1622
        %v3523 = vunpack.c.h.b16 %v1622
        %v3524 = vunpack.c.l.b16 %v1623
        %v3525 = vunpack.c.h.b16 %v1623
        %v3526 = vunpack.c.l.b16 %v1624
        %v3527 = vunpack.c.h.b16 %v1624
        %v3528 = vunpack.c.l.b16 %v1625
        %v3529 = vunpack.c.h.b16 %v1625
        %v3530 = vunpack.c.l.b16 %v1626
        %v3531 = vunpack.c.h.b16 %v1626
        %v3532 = vunpack.c.l.b16 %v1627
        %v3533 = vunpack.c.h.b16 %v1627
        %v3534 = vunpack.c.l.b16 %v1628
        %v3535 = vunpack.c.h.b16 %v1628
        %v3536 = vunpack.c.l.b16 %v1629
        %v3537 = vunpack.c.h.b16 %v1629
        %v3538 = vunpack.c.l.b16 %v1630
        %v3539 = vunpack.c.h.b16 %v1630
        %v3540 = vunpack.c.l.b16 %v1631
        %v3541 = vunpack.c.h.b16 %v1631
        %v3542 = vunpack.c.l.b16 %v1632
        %v3543 = vunpack.c.h.b16 %v1632
        %v3544 = vunpack.c.l.b16 %v1633
        %v3545 = vunpack.c.h.b16 %v1633
        %v3546 = vunpack.c.l.b16 %v1634
        %v3547 = vunpack.c.h.b16 %v1634
        %v3548 = vunpack.c.l.b16 %v1635
        %v3549 = vunpack.c.h.b16 %v1635
        %v3550 = vunpack.c.l.b16 %v1636
        %v3551 = vunpack.c.h.b16 %v1636
        %v3552 = vunpack.c.l.b16 %v1637
        %v3553 = vunpack.c.h.b16 %v1637
        %v3554 = vunpack.c.l.b16 %v1638
        %v3555 = vunpack.c.h.b16 %v1638
        %v3556 = vunpack.c.l.b16 %v1639
        %v3557 = vunpack.c.h.b16 %v1639
        %v3558 = vunpack.c.l.b16 %v1640
        %v3559 = vunpack.c.h.b16 %v1640
        %v3560 = vunpack.c.l.b16 %v1641
        %v3561 = vunpack.c.h.b16 %v1641
        %v3562 = vpack.c.b16 %v2290, %v2282
        %v3563 = vpack.c.b16 %v2291, %v2283
        %v3564 = vpack.c.b16 %v2292, %v2284
        %v3565 = vpack.c.b16 %v2293, %v2285
        %v3566 = vpack.c.b16 %v2294, %v2286
        %v3567 = vpack.c.b16 %v2295, %v2287
        %v3568 = vpack.c.b16 %v2296, %v2288
        %v3569 = vpack.c.b16 %v2297, %v2289
        %v3570 = vpack.c.b16 %v2306, %v2298
        %v3571 = vpack.c.b16 %v2307, %v2299
        %v3572 = vpack.c.b16 %v2308, %v2300
        %v3573 = vpack.c.b16 %v2309, %v2301
        %v3574 = vpack.c.b16 %v2310, %v2302
        %v3575 = vpack.c.b16 %v2311, %v2303
        %v3576 = vpack.c.b16 %v2312, %v2304
        %v3577 = vpack.c.b16 %v2313, %v2305
        %v3578 = vpack.c.b16 %v2322, %v2314
        %v3579 = vpack.c.b16 %v2323, %v2315
        %v3580 = vpack.c.b16 %v2324, %v2316
        %v3581 = vpack.c.b16 %v2325, %v2317
        %v3582 = vpack.c.b16 %v2326, %v2318
        %v3583 = vpack.c.b16 %v2327, %v2319
        %v3584 = vpack.c.b16 %v2328, %v2320
        %v3585 = vpack.c.b16 %v2329, %v2321
        %v3586 = vpack.c.b16 %v2338, %v2330
        %v3587 = vpack.c.b16 %v2339, %v2331
        %v3588 = vpack.c.b16 %v2340, %v2332
        %v3589 = vpack.c.b16 %v2341, %v2333
        %v3590 = vpack.c.b16 %v2342, %v2334
        %v3591 = vpack.c.b16 %v2343, %v2335
        %v3592 = vpack.c.b16 %v2344, %v2336
        %v3593 = vpack.c.b16 %v2345, %v2337
        %v3594 = vpack.c.b16 %v2354, %v2346
        %v3595 = vpack.c.b16 %v2355, %v2347
        %v3596 = vpack.c.b16 %v2356, %v2348
        %v3597 = vpack.c.b16 %v2357, %v2349
        %v3598 = vpack.c.b16 %v2358, %v2350
        %v3599 = vpack.c.b16 %v2359, %v2351
        %v3600 = vpack.c.b16 %v2360, %v2352
        %v3601 = vpack.c.b16 %v2361, %v2353
        %v3602 = vpack.c.b16 %v2370, %v2362
        %v3603 = vpack.c.b16 %v2371, %v2363
        %v3604 = vpack.c.b16 %v2372, %v2364
        %v3605 = vpack.c.b16 %v2373, %v2365
        %v3606 = vpack.c.b16 %v2374, %v2366
        %v3607 = vpack.c.b16 %v2375, %v2367
        %v3608 = vpack.c.b16 %v2376, %v2368
        %v3609 = vpack.c.b16 %v2377, %v2369
        %v3610 = vpack.c.b16 %v2386, %v2378
        %v3611 = vpack.c.b16 %v2387, %v2379
        %v3612 = vpack.c.b16 %v2388, %v2380
        %v3613 = vpack.c.b16 %v2389, %v2381
        %v3614 = vpack.c.b16 %v2390, %v2382
        %v3615 = vpack.c.b16 %v2391, %v2383
        %v3616 = vpack.c.b16 %v2392, %v2384
        %v3617 = vpack.c.b16 %v2393, %v2385
        %v3618 = vpack.c.b16 %v2402, %v2394
        %v3619 = vpack.c.b16 %v2403, %v2395
        %v3620 = vpack.c.b16 %v2404, %v2396
        %v3621 = vpack.c.b16 %v2405, %v2397
        %v3622 = vpack.c.b16 %v2406, %v2398
        %v3623 = vpack.c.b16 %v2407, %v2399
        %v3624 = vpack.c.b16 %v2408, %v2400
        %v3625 = vpack.c.b16 %v2409, %v2401
        %v3626 = vpack.c.b16 %v2418, %v2410
        %v3627 = vpack.c.b16 %v2419, %v2411
        %v3628 = vpack.c.b16 %v2420, %v2412
        %v3629 = vpack.c.b16 %v2421, %v2413
        %v3630 = vpack.c.b16 %v2422, %v2414
        %v3631 = vpack.c.b16 %v2423, %v2415
        %v3632 = vpack.c.b16 %v2424, %v2416
        %v3633 = vpack.c.b16 %v2425, %v2417
        %v3634 = vpack.c.b16 %v2434, %v2426
        %v3635 = vpack.c.b16 %v2435, %v2427
        %v3636 = vpack.c.b16 %v2436, %v2428
        %v3637 = vpack.c.b16 %v2437, %v2429
        %v3638 = vpack.c.b16 %v2438, %v2430
        %v3639 = vpack.c.b16 %v2439, %v2431
        %v3640 = vpack.c.b16 %v2440, %v2432
        %v3641 = vpack.c.b16 %v2441, %v2433
        %v3642 = vpack.c.b16 %v2450, %v2442
        %v3643 = vpack.c.b16 %v2451, %v2443
        %v3644 = vpack.c.b16 %v2452, %v2444
        %v3645 = vpack.c.b16 %v2453, %v2445
        %v3646 = vpack.c.b16 %v2454, %v2446
        %v3647 = vpack.c.b16 %v2455, %v2447
        %v3648 = vpack.c.b16 %v2456, %v2448
        %v3649 = vpack.c.b16 %v2457, %v2449
        %v3650 = vpack.c.b16 %v2466, %v2458
        %v3651 = vpack.c.b16 %v2467, %v2459
        %v3652 = vpack.c.b16 %v2468, %v2460
        %v3653 = vpack.c.b16 %v2469, %v2461
        %v3654 = vpack.c.b16 %v2470, %v2462
        %v3655 = vpack.c.b16 %v2471, %v2463
        %v3656 = vpack.c.b16 %v2472, %v2464
        %v3657 = vpack.c.b16 %v2473, %v2465
        %v3658 = vpack.c.b16 %v2482, %v2474
        %v3659 = vpack.c.b16 %v2483, %v2475
        %v3660 = vpack.c.b16 %v2484, %v2476
        %v3661 = vpack.c.b16 %v2485, %v2477
        %v3662 = vpack.c.b16 %v2486, %v2478
        %v3663 = vpack.c.b16 %v2487, %v2479
        %v3664 = vpack.c.b16 %v2488, %v2480
        %v3665 = vpack.c.b16 %v2489, %v2481
        %v3666 = vpack.c.b16 %v2498, %v2490
        %v3667 = vpack.c.b16 %v2499, %v2491
        %v3668 = vpack.c.b16 %v2500, %v2492
        %v3669 = vpack.c.b16 %v2501, %v2493
        %v3670 = vpack.c.b16 %v2502, %v2494
        %v3671 = vpack.c.b16 %v2503, %v2495
        %v3672 = vpack.c.b16 %v2504, %v2496
        %v3673 = vpack.c.b16 %v2505, %v2497
        %v3674 = vpack.c.b16 %v2514, %v2506
        %v3675 = vpack.c.b16 %v2515, %v2507
        %v3676 = vpack.c.b16 %v2516, %v2508
        %v3677 = vpack.c.b16 %v2517, %v2509
        %v3678 = vpack.c.b16 %v2518, %v2510
        %v3679 = vpack.c.b16 %v2519, %v2511
        %v3680 = vpack.c.b16 %v2520, %v2512
        %v3681 = vpack.c.b16 %v2521, %v2513
        %v3682 = vpack.c.b16 %v2530, %v2522
        %v3683 = vpack.c.b16 %v2531, %v2523
        %v3684 = vpack.c.b16 %v2532, %v2524
        %v3685 = vpack.c.b16 %v2533, %v2525
        %v3686 = vpack.c.b16 %v2534, %v2526
        %v3687 = vpack.c.b16 %v2535, %v2527
        %v3688 = vpack.c.b16 %v2536, %v2528
        %v3689 = vpack.c.b16 %v2537, %v2529
        %v3690 = vpack.c.b16 %v2546, %v2538
        %v3691 = vpack.c.b16 %v2547, %v2539
        %v3692 = vpack.c.b16 %v2548, %v2540
        %v3693 = vpack.c.b16 %v2549, %v2541
        %v3694 = vpack.c.b16 %v2550, %v2542
        %v3695 = vpack.c.b16 %v2551, %v2543
        %v3696 = vpack.c.b16 %v2552, %v2544
        %v3697 = vpack.c.b16 %v2553, %v2545
        %v3698 = vpack.c.b16 %v2562, %v2554
        %v3699 = vpack.c.b16 %v2563, %v2555
        %v3700 = vpack.c.b16 %v2564, %v2556
        %v3701 = vpack.c.b16 %v2565, %v2557
        %v3702 = vpack.c.b16 %v2566, %v2558
        %v3703 = vpack.c.b16 %v2567, %v2559
        %v3704 = vpack.c.b16 %v2568, %v2560
        %v3705 = vpack.c.b16 %v2569, %v2561
        %v3706 = vpack.c.b16 %v2578, %v2570
        %v3707 = vpack.c.b16 %v2579, %v2571
        %v3708 = vpack.c.b16 %v2580, %v2572
        %v3709 = vpack.c.b16 %v2581, %v2573
        %v3710 = vpack.c.b16 %v2582, %v2574
        %v3711 = vpack.c.b16 %v2583, %v2575
        %v3712 = vpack.c.b16 %v2584, %v2576
        %v3713 = vpack.c.b16 %v2585, %v2577
        %v3714 = vpack.c.b16 %v2594, %v2586
        %v3715 = vpack.c.b16 %v2595, %v2587
        %v3716 = vpack.c.b16 %v2596, %v2588
        %v3717 = vpack.c.b16 %v2597, %v2589
        %v3718 = vpack.c.b16 %v2598, %v2590
        %v3719 = vpack.c.b16 %v2599, %v2591
        %v3720 = vpack.c.b16 %v2600, %v2592
        %v3721 = vpack.c.b16 %v2601, %v2593
        %v3722 = vpack.c.b16 %v2610, %v2602
        %v3723 = vpack.c.b16 %v2611, %v2603
        %v3724 = vpack.c.b16 %v2612, %v2604
        %v3725 = vpack.c.b16 %v2613, %v2605
        %v3726 = vpack.c.b16 %v2614, %v2606
        %v3727 = vpack.c.b16 %v2615, %v2607
        %v3728 = vpack.c.b16 %v2616, %v2608
        %v3729 = vpack.c.b16 %v2617, %v2609
        %v3730 = vpack.c.b16 %v2626, %v2618
        %v3731 = vpack.c.b16 %v2627, %v2619
        %v3732 = vpack.c.b16 %v2628, %v2620
        %v3733 = vpack.c.b16 %v2629, %v2621
        %v3734 = vpack.c.b16 %v2630, %v2622
        %v3735 = vpack.c.b16 %v2631, %v2623
        %v3736 = vpack.c.b16 %v2632, %v2624
        %v3737 = vpack.c.b16 %v2633, %v2625
        %v3738 = vpack.c.b16 %v2642, %v2634
        %v3739 = vpack.c.b16 %v2643, %v2635
        %v3740 = vpack.c.b16 %v2644, %v2636
        %v3741 = vpack.c.b16 %v2645, %v2637
        %v3742 = vpack.c.b16 %v2646, %v2638
        %v3743 = vpack.c.b16 %v2647, %v2639
        %v3744 = vpack.c.b16 %v2648, %v2640
        %v3745 = vpack.c.b16 %v2649, %v2641
        %v3746 = vpack.c.b16 %v2658, %v2650
        %v3747 = vpack.c.b16 %v2659, %v2651
        %v3748 = vpack.c.b16 %v2660, %v2652
        %v3749 = vpack.c.b16 %v2661, %v2653
        %v3750 = vpack.c.b16 %v2662, %v2654
        %v3751 = vpack.c.b16 %v2663, %v2655
        %v3752 = vpack.c.b16 %v2664, %v2656
        %v3753 = vpack.c.b16 %v2665, %v2657
        %v3754 = vpack.c.b16 %v2674, %v2666
        %v3755 = vpack.c.b16 %v2675, %v2667
        %v3756 = vpack.c.b16 %v2676, %v2668
        %v3757 = vpack.c.b16 %v2677, %v2669
        %v3758 = vpack.c.b16 %v2678, %v2670
        %v3759 = vpack.c.b16 %v2679, %v2671
        %v3760 = vpack.c.b16 %v2680, %v2672
        %v3761 = vpack.c.b16 %v2681, %v2673
        %v3762 = vpack.c.b16 %v2690, %v2682
        %v3763 = vpack.c.b16 %v2691, %v2683
        %v3764 = vpack.c.b16 %v2692, %v2684
        %v3765 = vpack.c.b16 %v2693, %v2685
        %v3766 = vpack.c.b16 %v2694, %v2686
        %v3767 = vpack.c.b16 %v2695, %v2687
        %v3768 = vpack.c.b16 %v2696, %v2688
        %v3769 = vpack.c.b16 %v2697, %v2689
        %v3770 = vpack.c.b16 %v2706, %v2698
        %v3771 = vpack.c.b16 %v2707, %v2699
        %v3772 = vpack.c.b16 %v2708, %v2700
        %v3773 = vpack.c.b16 %v2709, %v2701
        %v3774 = vpack.c.b16 %v2710, %v2702
        %v3775 = vpack.c.b16 %v2711, %v2703
        %v3776 = vpack.c.b16 %v2712, %v2704
        %v3777 = vpack.c.b16 %v2713, %v2705
        %v3778 = vpack.c.b16 %v2722, %v2714
        %v3779 = vpack.c.b16 %v2723, %v2715
        %v3780 = vpack.c.b16 %v2724, %v2716
        %v3781 = vpack.c.b16 %v2725, %v2717
        %v3782 = vpack.c.b16 %v2726, %v2718
        %v3783 = vpack.c.b16 %v2727, %v2719
        %v3784 = vpack.c.b16 %v2728, %v2720
        %v3785 = vpack.c.b16 %v2729, %v2721
        %v3786 = vpack.c.b16 %v2738, %v2730
        %v3787 = vpack.c.b16 %v2739, %v2731
        %v3788 = vpack.c.b16 %v2740, %v2732
        %v3789 = vpack.c.b16 %v2741, %v2733
        %v3790 = vpack.c.b16 %v2742, %v2734
        %v3791 = vpack.c.b16 %v2743, %v2735
        %v3792 = vpack.c.b16 %v2744, %v2736
        %v3793 = vpack.c.b16 %v2745, %v2737
        %v3794 = vpack.c.b16 %v2754, %v2746
        %v3795 = vpack.c.b16 %v2755, %v2747
        %v3796 = vpack.c.b16 %v2756, %v2748
        %v3797 = vpack.c.b16 %v2757, %v2749
        %v3798 = vpack.c.b16 %v2758, %v2750
        %v3799 = vpack.c.b16 %v2759, %v2751
        %v3800 = vpack.c.b16 %v2760, %v2752
        %v3801 = vpack.c.b16 %v2761, %v2753
        %v3802 = vpack.c.b16 %v2770, %v2762
        %v3803 = vpack.c.b16 %v2771, %v2763
        %v3804 = vpack.c.b16 %v2772, %v2764
        %v3805 = vpack.c.b16 %v2773, %v2765
        %v3806 = vpack.c.b16 %v2774, %v2766
        %v3807 = vpack.c.b16 %v2775, %v2767
        %v3808 = vpack.c.b16 %v2776, %v2768
        %v3809 = vpack.c.b16 %v2777, %v2769
        %v3810 = vpack.c.b16 %v2786, %v2778
        %v3811 = vpack.c.b16 %v2787, %v2779
        %v3812 = vpack.c.b16 %v2788, %v2780
        %v3813 = vpack.c.b16 %v2789, %v2781
        %v3814 = vpack.c.b16 %v2790, %v2782
        %v3815 = vpack.c.b16 %v2791, %v2783
        %v3816 = vpack.c.b16 %v2792, %v2784
        %v3817 = vpack.c.b16 %v2793, %v2785
        %v3818 = vpack.c.b16 %v2802, %v2794
        %v3819 = vpack.c.b16 %v2803, %v2795
        %v3820 = vpack.c.b16 %v2804, %v2796
        %v3821 = vpack.c.b16 %v2805, %v2797
        %v3822 = vpack.c.b16 %v2806, %v2798
        %v3823 = vpack.c.b16 %v2807, %v2799
        %v3824 = vpack.c.b16 %v2808, %v2800
        %v3825 = vpack.c.b16 %v2809, %v2801
        %v3826 = vpack.c.b16 %v2818, %v2810
        %v3827 = vpack.c.b16 %v2819, %v2811
        %v3828 = vpack.c.b16 %v2820, %v2812
        %v3829 = vpack.c.b16 %v2821, %v2813
        %v3830 = vpack.c.b16 %v2822, %v2814
        %v3831 = vpack.c.b16 %v2823, %v2815
        %v3832 = vpack.c.b16 %v2824, %v2816
        %v3833 = vpack.c.b16 %v2825, %v2817
        %v3834 = vpack.c.b16 %v2834, %v2826
        %v3835 = vpack.c.b16 %v2835, %v2827
        %v3836 = vpack.c.b16 %v2836, %v2828
        %v3837 = vpack.c.b16 %v2837, %v2829
        %v3838 = vpack.c.b16 %v2838, %v2830
        %v3839 = vpack.c.b16 %v2839, %v2831
        %v3840 = vpack.c.b16 %v2840, %v2832
        %v3841 = vpack.c.b16 %v2841, %v2833
        %v3842 = vpack.c.b16 %v2850, %v2842
        %v3843 = vpack.c.b16 %v2851, %v2843
        %v3844 = vpack.c.b16 %v2852, %v2844
        %v3845 = vpack.c.b16 %v2853, %v2845
        %v3846 = vpack.c.b16 %v2854, %v2846
        %v3847 = vpack.c.b16 %v2855, %v2847
        %v3848 = vpack.c.b16 %v2856, %v2848
        %v3849 = vpack.c.b16 %v2857, %v2849
        %v3850 = vpack.c.b16 %v2866, %v2858
        %v3851 = vpack.c.b16 %v2867, %v2859
        %v3852 = vpack.c.b16 %v2868, %v2860
        %v3853 = vpack.c.b16 %v2869, %v2861
        %v3854 = vpack.c.b16 %v2870, %v2862
        %v3855 = vpack.c.b16 %v2871, %v2863
        %v3856 = vpack.c.b16 %v2872, %v2864
        %v3857 = vpack.c.b16 %v2873, %v2865
        %v3858 = vpack.c.b16 %v2882, %v2874
        %v3859 = vpack.c.b16 %v2883, %v2875
        %v3860 = vpack.c.b16 %v2884, %v2876
        %v3861 = vpack.c.b16 %v2885, %v2877
        %v3862 = vpack.c.b16 %v2886, %v2878
        %v3863 = vpack.c.b16 %v2887, %v2879
        %v3864 = vpack.c.b16 %v2888, %v2880
        %v3865 = vpack.c.b16 %v2889, %v2881
        %v3866 = vpack.c.b16 %v2898, %v2890
        %v3867 = vpack.c.b16 %v2899, %v2891
        %v3868 = vpack.c.b16 %v2900, %v2892
        %v3869 = vpack.c.b16 %v2901, %v2893
        %v3870 = vpack.c.b16 %v2902, %v2894
        %v3871 = vpack.c.b16 %v2903, %v2895
        %v3872 = vpack.c.b16 %v2904, %v2896
        %v3873 = vpack.c.b16 %v2905, %v2897
        %v3874 = vpack.c.b16 %v2914, %v2906
        %v3875 = vpack.c.b16 %v2915, %v2907
        %v3876 = vpack.c.b16 %v2916, %v2908
        %v3877 = vpack.c.b16 %v2917, %v2909
        %v3878 = vpack.c.b16 %v2918, %v2910
        %v3879 = vpack.c.b16 %v2919, %v2911
        %v3880 = vpack.c.b16 %v2920, %v2912
        %v3881 = vpack.c.b16 %v2921, %v2913
        %v3882 = vpack.c.b16 %v2930, %v2922
        %v3883 = vpack.c.b16 %v2931, %v2923
        %v3884 = vpack.c.b16 %v2932, %v2924
        %v3885 = vpack.c.b16 %v2933, %v2925
        %v3886 = vpack.c.b16 %v2934, %v2926
        %v3887 = vpack.c.b16 %v2935, %v2927
        %v3888 = vpack.c.b16 %v2936, %v2928
        %v3889 = vpack.c.b16 %v2937, %v2929
        %v3890 = vpack.c.b16 %v2946, %v2938
        %v3891 = vpack.c.b16 %v2947, %v2939
        %v3892 = vpack.c.b16 %v2948, %v2940
        %v3893 = vpack.c.b16 %v2949, %v2941
        %v3894 = vpack.c.b16 %v2950, %v2942
        %v3895 = vpack.c.b16 %v2951, %v2943
        %v3896 = vpack.c.b16 %v2952, %v2944
        %v3897 = vpack.c.b16 %v2953, %v2945
        %v3898 = vpack.c.b16 %v2962, %v2954
        %v3899 = vpack.c.b16 %v2963, %v2955
        %v3900 = vpack.c.b16 %v2964, %v2956
        %v3901 = vpack.c.b16 %v2965, %v2957
        %v3902 = vpack.c.b16 %v2966, %v2958
        %v3903 = vpack.c.b16 %v2967, %v2959
        %v3904 = vpack.c.b16 %v2968, %v2960
        %v3905 = vpack.c.b16 %v2969, %v2961
        %v3906 = vpack.c.b16 %v2978, %v2970
        %v3907 = vpack.c.b16 %v2979, %v2971
        %v3908 = vpack.c.b16 %v2980, %v2972
        %v3909 = vpack.c.b16 %v2981, %v2973
        %v3910 = vpack.c.b16 %v2982, %v2974
        %v3911 = vpack.c.b16 %v2983, %v2975
        %v3912 = vpack.c.b16 %v2984, %v2976
        %v3913 = vpack.c.b16 %v2985, %v2977
        %v3914 = vpack.c.b16 %v2994, %v2986
        %v3915 = vpack.c.b16 %v2995, %v2987
        %v3916 = vpack.c.b16 %v2996, %v2988
        %v3917 = vpack.c.b16 %v2997, %v2989
        %v3918 = vpack.c.b16 %v2998, %v2990
        %v3919 = vpack.c.b16 %v2999, %v2991
        %v3920 = vpack.c.b16 %v3000, %v2992
        %v3921 = vpack.c.b16 %v3001, %v2993
        %v3922 = vpack.c.b16 %v3010, %v3002
        %v3923 = vpack.c.b16 %v3011, %v3003
        %v3924 = vpack.c.b16 %v3012, %v3004
        %v3925 = vpack.c.b16 %v3013, %v3005
        %v3926 = vpack.c.b16 %v3014, %v3006
        %v3927 = vpack.c.b16 %v3015, %v3007
        %v3928 = vpack.c.b16 %v3016, %v3008
        %v3929 = vpack.c.b16 %v3017, %v3009
        %v3930 = vpack.c.b16 %v3026, %v3018
        %v3931 = vpack.c.b16 %v3027, %v3019
        %v3932 = vpack.c.b16 %v3028, %v3020
        %v3933 = vpack.c.b16 %v3029, %v3021
        %v3934 = vpack.c.b16 %v3030, %v3022
        %v3935 = vpack.c.b16 %v3031, %v3023
        %v3936 = vpack.c.b16 %v3032, %v3024
        %v3937 = vpack.c.b16 %v3033, %v3025
        %v3938 = vpack.c.b16 %v3042, %v3034
        %v3939 = vpack.c.b16 %v3043, %v3035
        %v3940 = vpack.c.b16 %v3044, %v3036
        %v3941 = vpack.c.b16 %v3045, %v3037
        %v3942 = vpack.c.b16 %v3046, %v3038
        %v3943 = vpack.c.b16 %v3047, %v3039
        %v3944 = vpack.c.b16 %v3048, %v3040
        %v3945 = vpack.c.b16 %v3049, %v3041
        %v3946 = vpack.c.b16 %v3058, %v3050
        %v3947 = vpack.c.b16 %v3059, %v3051
        %v3948 = vpack.c.b16 %v3060, %v3052
        %v3949 = vpack.c.b16 %v3061, %v3053
        %v3950 = vpack.c.b16 %v3062, %v3054
        %v3951 = vpack.c.b16 %v3063, %v3055
        %v3952 = vpack.c.b16 %v3064, %v3056
        %v3953 = vpack.c.b16 %v3065, %v3057
        %v3954 = vpack.c.b16 %v3074, %v3066
        %v3955 = vpack.c.b16 %v3075, %v3067
        %v3956 = vpack.c.b16 %v3076, %v3068
        %v3957 = vpack.c.b16 %v3077, %v3069
        %v3958 = vpack.c.b16 %v3078, %v3070
        %v3959 = vpack.c.b16 %v3079, %v3071
        %v3960 = vpack.c.b16 %v3080, %v3072
        %v3961 = vpack.c.b16 %v3081, %v3073
        %v3962 = vpack.c.b16 %v3090, %v3082
        %v3963 = vpack.c.b16 %v3091, %v3083
        %v3964 = vpack.c.b16 %v3092, %v3084
        %v3965 = vpack.c.b16 %v3093, %v3085
        %v3966 = vpack.c.b16 %v3094, %v3086
        %v3967 = vpack.c.b16 %v3095, %v3087
        %v3968 = vpack.c.b16 %v3096, %v3088
        %v3969 = vpack.c.b16 %v3097, %v3089
        %v3970 = vpack.c.b16 %v3106, %v3098
        %v3971 = vpack.c.b16 %v3107, %v3099
        %v3972 = vpack.c.b16 %v3108, %v3100
        %v3973 = vpack.c.b16 %v3109, %v3101
        %v3974 = vpack.c.b16 %v3110, %v3102
        %v3975 = vpack.c.b16 %v3111, %v3103
        %v3976 = vpack.c.b16 %v3112, %v3104
        %v3977 = vpack.c.b16 %v3113, %v3105
        %v3978 = vpack.c.b16 %v3122, %v3114
        %v3979 = vpack.c.b16 %v3123, %v3115
        %v3980 = vpack.c.b16 %v3124, %v3116
        %v3981 = vpack.c.b16 %v3125, %v3117
        %v3982 = vpack.c.b16 %v3126, %v3118
        %v3983 = vpack.c.b16 %v3127, %v3119
        %v3984 = vpack.c.b16 %v3128, %v3120
        %v3985 = vpack.c.b16 %v3129, %v3121
        %v3986 = vpack.c.b16 %v3138, %v3130
        %v3987 = vpack.c.b16 %v3139, %v3131
        %v3988 = vpack.c.b16 %v3140, %v3132
        %v3989 = vpack.c.b16 %v3141, %v3133
        %v3990 = vpack.c.b16 %v3142, %v3134
        %v3991 = vpack.c.b16 %v3143, %v3135
        %v3992 = vpack.c.b16 %v3144, %v3136
        %v3993 = vpack.c.b16 %v3145, %v3137
        %v3994 = vpack.c.b16 %v3154, %v3146
        %v3995 = vpack.c.b16 %v3155, %v3147
        %v3996 = vpack.c.b16 %v3156, %v3148
        %v3997 = vpack.c.b16 %v3157, %v3149
        %v3998 = vpack.c.b16 %v3158, %v3150
        %v3999 = vpack.c.b16 %v3159, %v3151
        %v4000 = vpack.c.b16 %v3160, %v3152
        %v4001 = vpack.c.b16 %v3161, %v3153
        %v4002 = vpack.c.b16 %v3170, %v3162
        %v4003 = vpack.c.b16 %v3171, %v3163
        %v4004 = vpack.c.b16 %v3172, %v3164
        %v4005 = vpack.c.b16 %v3173, %v3165
        %v4006 = vpack.c.b16 %v3174, %v3166
        %v4007 = vpack.c.b16 %v3175, %v3167
        %v4008 = vpack.c.b16 %v3176, %v3168
        %v4009 = vpack.c.b16 %v3177, %v3169
        %v4010 = vpack.c.b16 %v3186, %v3178
        %v4011 = vpack.c.b16 %v3187, %v3179
        %v4012 = vpack.c.b16 %v3188, %v3180
        %v4013 = vpack.c.b16 %v3189, %v3181
        %v4014 = vpack.c.b16 %v3190, %v3182
        %v4015 = vpack.c.b16 %v3191, %v3183
        %v4016 = vpack.c.b16 %v3192, %v3184
        %v4017 = vpack.c.b16 %v3193, %v3185
        %v4018 = vpack.c.b16 %v3202, %v3194
        %v4019 = vpack.c.b16 %v3203, %v3195
        %v4020 = vpack.c.b16 %v3204, %v3196
        %v4021 = vpack.c.b16 %v3205, %v3197
        %v4022 = vpack.c.b16 %v3206, %v3198
        %v4023 = vpack.c.b16 %v3207, %v3199
        %v4024 = vpack.c.b16 %v3208, %v3200
        %v4025 = vpack.c.b16 %v3209, %v3201
        %v4026 = vpack.c.b16 %v3218, %v3210
        %v4027 = vpack.c.b16 %v3219, %v3211
        %v4028 = vpack.c.b16 %v3220, %v3212
        %v4029 = vpack.c.b16 %v3221, %v3213
        %v4030 = vpack.c.b16 %v3222, %v3214
        %v4031 = vpack.c.b16 %v3223, %v3215
        %v4032 = vpack.c.b16 %v3224, %v3216
        %v4033 = vpack.c.b16 %v3225, %v3217
        %v4034 = vpack.c.b16 %v3234, %v3226
        %v4035 = vpack.c.b16 %v3235, %v3227
        %v4036 = vpack.c.b16 %v3236, %v3228
        %v4037 = vpack.c.b16 %v3237, %v3229
        %v4038 = vpack.c.b16 %v3238, %v3230
        %v4039 = vpack.c.b16 %v3239, %v3231
        %v4040 = vpack.c.b16 %v3240, %v3232
        %v4041 = vpack.c.b16 %v3241, %v3233
        %v4042 = vpack.c.b16 %v3250, %v3242
        %v4043 = vpack.c.b16 %v3251, %v3243
        %v4044 = vpack.c.b16 %v3252, %v3244
        %v4045 = vpack.c.b16 %v3253, %v3245
        %v4046 = vpack.c.b16 %v3254, %v3246
        %v4047 = vpack.c.b16 %v3255, %v3247
        %v4048 = vpack.c.b16 %v3256, %v3248
        %v4049 = vpack.c.b16 %v3257, %v3249
        %v4050 = vpack.c.b16 %v3266, %v3258
        %v4051 = vpack.c.b16 %v3267, %v3259
        %v4052 = vpack.c.b16 %v3268, %v3260
        %v4053 = vpack.c.b16 %v3269, %v3261
        %v4054 = vpack.c.b16 %v3270, %v3262
        %v4055 = vpack.c.b16 %v3271, %v3263
        %v4056 = vpack.c.b16 %v3272, %v3264
        %v4057 = vpack.c.b16 %v3273, %v3265
        %v4058 = vpack.c.b16 %v3282, %v3274
        %v4059 = vpack.c.b16 %v3283, %v3275
        %v4060 = vpack.c.b16 %v3284, %v3276
        %v4061 = vpack.c.b16 %v3285, %v3277
        %v4062 = vpack.c.b16 %v3286, %v3278
        %v4063 = vpack.c.b16 %v3287, %v3279
        %v4064 = vpack.c.b16 %v3288, %v3280
        %v4065 = vpack.c.b16 %v3289, %v3281
        %v4066 = vpack.c.b16 %v3298, %v3290
        %v4067 = vpack.c.b16 %v3299, %v3291
        %v4068 = vpack.c.b16 %v3300, %v3292
        %v4069 = vpack.c.b16 %v3301, %v3293
        %v4070 = vpack.c.b16 %v3302, %v3294
        %v4071 = vpack.c.b16 %v3303, %v3295
        %v4072 = vpack.c.b16 %v3304, %v3296
        %v4073 = vpack.c.b16 %v3305, %v3297
        %v4074 = vpack.c.b16 %v3314, %v3306
        %v4075 = vpack.c.b16 %v3315, %v3307
        %v4076 = vpack.c.b16 %v3316, %v3308
        %v4077 = vpack.c.b16 %v3317, %v3309
        %v4078 = vpack.c.b16 %v3318, %v3310
        %v4079 = vpack.c.b16 %v3319, %v3311
        %v4080 = vpack.c.b16 %v3320, %v3312
        %v4081 = vpack.c.b16 %v3321, %v3313
        %v4082 = vpack.c.b16 %v3330, %v3322
        %v4083 = vpack.c.b16 %v3331, %v3323
        %v4084 = vpack.c.b16 %v3332, %v3324
        %v4085 = vpack.c.b16 %v3333, %v3325
        %v4086 = vpack.c.b16 %v3334, %v3326
        %v4087 = vpack.c.b16 %v3335, %v3327
        %v4088 = vpack.c.b16 %v3336, %v3328
        %v4089 = vpack.c.b16 %v3337, %v3329
        %v4090 = vpack.c.b16 %v3346, %v3338
        %v4091 = vpack.c.b16 %v3347, %v3339
        %v4092 = vpack.c.b16 %v3348, %v3340
        %v4093 = vpack.c.b16 %v3349, %v3341
        %v4094 = vpack.c.b16 %v3350, %v3342
        %v4095 = vpack.c.b16 %v3351, %v3343
        %v4096 = vpack.c.b16 %v3352, %v3344
        %v4097 = vpack.c.b16 %v3353, %v3345
        %v4098 = vpack.c.b16 %v3362, %v3354
        %v4099 = vpack.c.b16 %v3363, %v3355
        %v4100 = vpack.c.b16 %v3364, %v3356
        %v4101 = vpack.c.b16 %v3365, %v3357
        %v4102 = vpack.c.b16 %v3366, %v3358
        %v4103 = vpack.c.b16 %v3367, %v3359
        %v4104 = vpack.c.b16 %v3368, %v3360
        %v4105 = vpack.c.b16 %v3369, %v3361
        %v4106 = vpack.c.b16 %v3378, %v3370
        %v4107 = vpack.c.b16 %v3379, %v3371
        %v4108 = vpack.c.b16 %v3380, %v3372
        %v4109 = vpack.c.b16 %v3381, %v3373
        %v4110 = vpack.c.b16 %v3382, %v3374
        %v4111 = vpack.c.b16 %v3383, %v3375
        %v4112 = vpack.c.b16 %v3384, %v3376
        %v4113 = vpack.c.b16 %v3385, %v3377
        %v4114 = vpack.c.b16 %v3394, %v3386
        %v4115 = vpack.c.b16 %v3395, %v3387
        %v4116 = vpack.c.b16 %v3396, %v3388
        %v4117 = vpack.c.b16 %v3397, %v3389
        %v4118 = vpack.c.b16 %v3398, %v3390
        %v4119 = vpack.c.b16 %v3399, %v3391
        %v4120 = vpack.c.b16 %v3400, %v3392
        %v4121 = vpack.c.b16 %v3401, %v3393
        %v4122 = vpack.c.b16 %v3410, %v3402
        %v4123 = vpack.c.b16 %v3411, %v3403
        %v4124 = vpack.c.b16 %v3412, %v3404
        %v4125 = vpack.c.b16 %v3413, %v3405
        %v4126 = vpack.c.b16 %v3414, %v3406
        %v4127 = vpack.c.b16 %v3415, %v3407
        %v4128 = vpack.c.b16 %v3416, %v3408
        %v4129 = vpack.c.b16 %v3417, %v3409
        %v4130 = vpack.c.b16 %v3426, %v3418
        %v4131 = vpack.c.b16 %v3427, %v3419
        %v4132 = vpack.c.b16 %v3428, %v3420
        %v4133 = vpack.c.b16 %v3429, %v3421
        %v4134 = vpack.c.b16 %v3430, %v3422
        %v4135 = vpack.c.b16 %v3431, %v3423
        %v4136 = vpack.c.b16 %v3432, %v3424
        %v4137 = vpack.c.b16 %v3433, %v3425
        %v4138 = vpack.c.b16 %v3442, %v3434
        %v4139 = vpack.c.b16 %v3443, %v3435
        %v4140 = vpack.c.b16 %v3444, %v3436
        %v4141 = vpack.c.b16 %v3445, %v3437
        %v4142 = vpack.c.b16 %v3446, %v3438
        %v4143 = vpack.c.b16 %v3447, %v3439
        %v4144 = vpack.c.b16 %v3448, %v3440
        %v4145 = vpack.c.b16 %v3449, %v3441
        %v4146 = vpack.c.b16 %v3458, %v3450
        %v4147 = vpack.c.b16 %v3459, %v3451
        %v4148 = vpack.c.b16 %v3460, %v3452
        %v4149 = vpack.c.b16 %v3461, %v3453
        %v4150 = vpack.c.b16 %v3462, %v3454
        %v4151 = vpack.c.b16 %v3463, %v3455
        %v4152 = vpack.c.b16 %v3464, %v3456
        %v4153 = vpack.c.b16 %v3465, %v3457
        %v4154 = vpack.c.b16 %v3474, %v3466
        %v4155 = vpack.c.b16 %v3475, %v3467
        %v4156 = vpack.c.b16 %v3476, %v3468
        %v4157 = vpack.c.b16 %v3477, %v3469
        %v4158 = vpack.c.b16 %v3478, %v3470
        %v4159 = vpack.c.b16 %v3479, %v3471
        %v4160 = vpack.c.b16 %v3480, %v3472
        %v4161 = vpack.c.b16 %v3481, %v3473
        %v4162 = vpack.c.b16 %v3490, %v3482
        %v4163 = vpack.c.b16 %v3491, %v3483
        %v4164 = vpack.c.b16 %v3492, %v3484
        %v4165 = vpack.c.b16 %v3493, %v3485
        %v4166 = vpack.c.b16 %v3494, %v3486
        %v4167 = vpack.c.b16 %v3495, %v3487
        %v4168 = vpack.c.b16 %v3496, %v3488
        %v4169 = vpack.c.b16 %v3497, %v3489
        %v4170 = vpack.c.b16 %v3506, %v3498
        %v4171 = vpack.c.b16 %v3507, %v3499
        %v4172 = vpack.c.b16 %v3508, %v3500
        %v4173 = vpack.c.b16 %v3509, %v3501
        %v4174 = vpack.c.b16 %v3510, %v3502
        %v4175 = vpack.c.b16 %v3511, %v3503
        %v4176 = vpack.c.b16 %v3512, %v3504
        %v4177 = vpack.c.b16 %v3513, %v3505
        %v4178 = vpack.c.b16 %v3522, %v3514
        %v4179 = vpack.c.b16 %v3523, %v3515
        %v4180 = vpack.c.b16 %v3524, %v3516
        %v4181 = vpack.c.b16 %v3525, %v3517
        %v4182 = vpack.c.b16 %v3526, %v3518
        %v4183 = vpack.c.b16 %v3527, %v3519
        %v4184 = vpack.c.b16 %v3528, %v3520
        %v4185 = vpack.c.b16 %v3529, %v3521
        %v4186 = vpack.c.b16 %v3538, %v3530
        %v4187 = vpack.c.b16 %v3539, %v3531
        %v4188 = vpack.c.b16 %v3540, %v3532
        %v4189 = vpack.c.b16 %v3541, %v3533
        %v4190 = vpack.c.b16 %v3542, %v3534
        %v4191 = vpack.c.b16 %v3543, %v3535
        %v4192 = vpack.c.b16 %v3544, %v3536
        %v4193 = vpack.c.b16 %v3545, %v3537
        %v4194 = vpack.c.b16 %v3554, %v3546
        %v4195 = vpack.c.b16 %v3555, %v3547
        %v4196 = vpack.c.b16 %v3556, %v3548
        %v4197 = vpack.c.b16 %v3557, %v3549
        %v4198 = vpack.c.b16 %v3558, %v3550
        %v4199 = vpack.c.b16 %v3559, %v3551
        %v4200 = vpack.c.b16 %v3560, %v3552
        %v4201 = vpack.c.b16 %v3561, %v3553
        %4842 = vmatprep.subr.bf16.mxu0 %v3619
        %4843 = vmatpush1.bf16.msra.mxu0 %v3618
        %4844 = vmatprep.subr.bf16.mxu0 %v3611
        %4845 = vmatpush1.bf16.msra.mxu0 %v3610
        %4846 = vmatprep.subr.bf16.mxu0 %v3603
        %4847 = vmatpush1.bf16.msra.mxu0 %v3602
        %4848 = vmatprep.subr.bf16.mxu0 %v3595
        %4849 = vmatpush1.bf16.msra.mxu0 %v3594
        %4850 = vmatprep.subr.bf16.mxu0 %v3587
        %4851 = vmatpush1.bf16.msra.mxu0 %v3586
        %4852 = vmatprep.subr.bf16.mxu0 %v3579
        %4853 = vmatpush1.bf16.msra.mxu0 %v3578
        %4854 = vmatprep.subr.bf16.mxu0 %v3571
        %4855 = vmatpush1.bf16.msra.mxu0 %v3570
        %4856 = vmatprep.subr.bf16.mxu0 %v3563
        %4857 = vmatpush1.bf16.msra.mxu0 %v3562
        %4858 = vmatprep.subr.bf16.mxu0 %v3683
        %4859 = vmatpush2.bf16.msra.mxu0 %v3682
        %4860 = vmatprep.subr.bf16.mxu0 %v3675
        %4861 = vmatpush2.bf16.msra.mxu0 %v3674
        %4862 = vmatprep.subr.bf16.mxu0 %v3667
        %4863 = vmatpush2.bf16.msra.mxu0 %v3666
        %4864 = vmatprep.subr.bf16.mxu0 %v3659
        %4865 = vmatpush2.bf16.msra.mxu0 %v3658
        %4866 = vmatprep.subr.bf16.mxu0 %v3651
        %4867 = vmatpush2.bf16.msra.mxu0 %v3650
        %4868 = vmatprep.subr.bf16.mxu0 %v3643
        %4869 = vmatpush2.bf16.msra.mxu0 %v3642
        %4870 = vmatprep.subr.bf16.mxu0 %v3635
        %4871 = vmatpush2.bf16.msra.mxu0 %v3634
        %4872 = vmatprep.subr.bf16.mxu0 %v3627
        %4873 = vmatpush2.bf16.msra.mxu0 %v3626
        %4874 = vmatprep.mubr.bf16.mxu0 %v983
        %4875 = vmatmul.mubr.bf16.gmra.mxu0 %v980
        %v4876 = vpop.f32.mrf.mxu0
        %v4877 = vadd.f32 0.0, %v4876
        %v4878 = vpop.f32.mrf.mxu0
        %v4879 = vadd.f32 0.0, %v4878
        %v4880 = vpop.f32.mrf.mxu0
        %v4881 = vpop.f32.mrf.mxu0
        %4882 = vdwg.mxu0
        %4883 = vmatprep.subr.bf16.mxu0 %v3747
        %4884 = vmatpush1.bf16.msra.mxu0 %v3746
        %4885 = vmatprep.subr.bf16.mxu0 %v3739
        %4886 = vmatpush1.bf16.msra.mxu0 %v3738
        %4887 = vmatprep.subr.bf16.mxu0 %v3731
        %4888 = vmatpush1.bf16.msra.mxu0 %v3730
        %4889 = vmatprep.subr.bf16.mxu0 %v3723
        %4890 = vmatpush1.bf16.msra.mxu0 %v3722
        %4891 = vmatprep.subr.bf16.mxu0 %v3715
        %4892 = vmatpush1.bf16.msra.mxu0 %v3714
        %4893 = vmatprep.subr.bf16.mxu0 %v3707
        %4894 = vmatpush1.bf16.msra.mxu0 %v3706
        %4895 = vmatprep.subr.bf16.mxu0 %v3699
        %4896 = vmatpush1.bf16.msra.mxu0 %v3698
        %4897 = vmatprep.subr.bf16.mxu0 %v3691
        %4898 = vmatpush1.bf16.msra.mxu0 %v3690
        %4899 = vmatprep.subr.bf16.mxu0 %v3811
        %4900 = vmatpush2.bf16.msra.mxu0 %v3810
        %4901 = vmatprep.subr.bf16.mxu0 %v3803
        %4902 = vmatpush2.bf16.msra.mxu0 %v3802
        %4903 = vmatprep.subr.bf16.mxu0 %v3795
        %4904 = vmatpush2.bf16.msra.mxu0 %v3794
        %4905 = vmatprep.subr.bf16.mxu0 %v3787
        %4906 = vmatpush2.bf16.msra.mxu0 %v3786
        %4907 = vmatprep.subr.bf16.mxu0 %v3779
        %4908 = vmatpush2.bf16.msra.mxu0 %v3778
        %4909 = vmatprep.subr.bf16.mxu0 %v3771
        %4910 = vmatpush2.bf16.msra.mxu0 %v3770
        %4911 = vmatprep.subr.bf16.mxu0 %v3763
        %4912 = vmatpush2.bf16.msra.mxu0 %v3762
        %4913 = vmatprep.subr.bf16.mxu0 %v3755
        %4914 = vmatpush2.bf16.msra.mxu0 %v3754
        %4915 = vmatprep.mubr.bf16.mxu0 %v987
        %4916 = vmatmul.mubr.bf16.gmra.mxu0 %v985
        %v4917 = vpop.f32.mrf.mxu0
        %v4918 = vadd.f32 %v4877, %v4917
        %v4919 = vpop.f32.mrf.mxu0
        %v4920 = vadd.f32 %v4879, %v4919
        %v4921 = vpop.f32.mrf.mxu0
        %v4922 = vpop.f32.mrf.mxu0
        %4923 = vdwg.mxu0
        %4924 = vmatprep.subr.bf16.mxu0 %v3875
        %4925 = vmatpush1.bf16.msra.mxu0 %v3874
        %4926 = vmatprep.subr.bf16.mxu0 %v3867
        %4927 = vmatpush1.bf16.msra.mxu0 %v3866
        %4928 = vmatprep.subr.bf16.mxu0 %v3859
        %4929 = vmatpush1.bf16.msra.mxu0 %v3858
        %4930 = vmatprep.subr.bf16.mxu0 %v3851
        %4931 = vmatpush1.bf16.msra.mxu0 %v3850
        %4932 = vmatprep.subr.bf16.mxu0 %v3843
        %4933 = vmatpush1.bf16.msra.mxu0 %v3842
        %4934 = vmatprep.subr.bf16.mxu0 %v3835
        %4935 = vmatpush1.bf16.msra.mxu0 %v3834
        %4936 = vmatprep.subr.bf16.mxu0 %v3827
        %4937 = vmatpush1.bf16.msra.mxu0 %v3826
        %4938 = vmatprep.subr.bf16.mxu0 %v3819
        %4939 = vmatpush1.bf16.msra.mxu0 %v3818
        %4940 = vmatprep.subr.bf16.mxu0 %v3939
        %4941 = vmatpush2.bf16.msra.mxu0 %v3938
        %4942 = vmatprep.subr.bf16.mxu0 %v3931
        %4943 = vmatpush2.bf16.msra.mxu0 %v3930
        %4944 = vmatprep.subr.bf16.mxu0 %v3923
        %4945 = vmatpush2.bf16.msra.mxu0 %v3922
        %4946 = vmatprep.subr.bf16.mxu0 %v3915
        %4947 = vmatpush2.bf16.msra.mxu0 %v3914
        %4948 = vmatprep.subr.bf16.mxu0 %v3907
        %4949 = vmatpush2.bf16.msra.mxu0 %v3906
        %4950 = vmatprep.subr.bf16.mxu0 %v3899
        %4951 = vmatpush2.bf16.msra.mxu0 %v3898
        %4952 = vmatprep.subr.bf16.mxu0 %v3891
        %4953 = vmatpush2.bf16.msra.mxu0 %v3890
        %4954 = vmatprep.subr.bf16.mxu0 %v3883
        %4955 = vmatpush2.bf16.msra.mxu0 %v3882
        %4956 = vmatprep.mubr.bf16.mxu0 %v991
        %4957 = vmatmul.mubr.bf16.gmra.mxu0 %v989
        %v4958 = vpop.f32.mrf.mxu0
        %v4959 = vadd.f32 %v4918, %v4958
        %v4960 = vpop.f32.mrf.mxu0
        %v4961 = vadd.f32 %v4920, %v4960
        %v4962 = vpop.f32.mrf.mxu0
        %v4963 = vpop.f32.mrf.mxu0
        %4964 = vdwg.mxu0
        %4965 = vmatprep.subr.bf16.mxu0 %v4003
        %4966 = vmatpush1.bf16.msra.mxu0 %v4002
        %4967 = vmatprep.subr.bf16.mxu0 %v3995
        %4968 = vmatpush1.bf16.msra.mxu0 %v3994
        %4969 = vmatprep.subr.bf16.mxu0 %v3987
        %4970 = vmatpush1.bf16.msra.mxu0 %v3986
        %4971 = vmatprep.subr.bf16.mxu0 %v3979
        %4972 = vmatpush1.bf16.msra.mxu0 %v3978
        %4973 = vmatprep.subr.bf16.mxu0 %v3971
        %4974 = vmatpush1.bf16.msra.mxu0 %v3970
        %4975 = vmatprep.subr.bf16.mxu0 %v3963
        %4976 = vmatpush1.bf16.msra.mxu0 %v3962
        %4977 = vmatprep.subr.bf16.mxu0 %v3955
        %4978 = vmatpush1.bf16.msra.mxu0 %v3954
        %4979 = vmatprep.subr.bf16.mxu0 %v3947
        %4980 = vmatpush1.bf16.msra.mxu0 %v3946
        %4981 = vmatprep.subr.bf16.mxu0 %v4067
        %4982 = vmatpush2.bf16.msra.mxu0 %v4066
        %4983 = vmatprep.subr.bf16.mxu0 %v4059
        %4984 = vmatpush2.bf16.msra.mxu0 %v4058
        %4985 = vmatprep.subr.bf16.mxu0 %v4051
        %4986 = vmatpush2.bf16.msra.mxu0 %v4050
        %4987 = vmatprep.subr.bf16.mxu0 %v4043
        %4988 = vmatpush2.bf16.msra.mxu0 %v4042
        %4989 = vmatprep.subr.bf16.mxu0 %v4035
        %4990 = vmatpush2.bf16.msra.mxu0 %v4034
        %4991 = vmatprep.subr.bf16.mxu0 %v4027
        %4992 = vmatpush2.bf16.msra.mxu0 %v4026
        %4993 = vmatprep.subr.bf16.mxu0 %v4019
        %4994 = vmatpush2.bf16.msra.mxu0 %v4018
        %4995 = vmatprep.subr.bf16.mxu0 %v4011
        %4996 = vmatpush2.bf16.msra.mxu0 %v4010
        %4997 = vmatprep.mubr.bf16.mxu0 %v995
        %4998 = vmatmul.mubr.bf16.gmra.mxu0 %v993
        %v4999 = vpop.f32.mrf.mxu0
        %v5000 = vadd.f32 %v4959, %v4999
        %v5001 = vpop.f32.mrf.mxu0
        %v5002 = vadd.f32 %v4961, %v5001
        %v5003 = vpop.f32.mrf.mxu0
        %v5004 = vpop.f32.mrf.mxu0
        %5005 = vdwg.mxu0
        %5006 = vmatprep.subr.bf16.mxu0 %v4131
        %5007 = vmatpush1.bf16.msra.mxu0 %v4130
        %5008 = vmatprep.subr.bf16.mxu0 %v4123
        %5009 = vmatpush1.bf16.msra.mxu0 %v4122
        %5010 = vmatprep.subr.bf16.mxu0 %v4115
        %5011 = vmatpush1.bf16.msra.mxu0 %v4114
        %5012 = vmatprep.subr.bf16.mxu0 %v4107
        %5013 = vmatpush1.bf16.msra.mxu0 %v4106
        %5014 = vmatprep.subr.bf16.mxu0 %v4099
        %5015 = vmatpush1.bf16.msra.mxu0 %v4098
        %5016 = vmatprep.subr.bf16.mxu0 %v4091
        %5017 = vmatpush1.bf16.msra.mxu0 %v4090
        %5018 = vmatprep.subr.bf16.mxu0 %v4083
        %5019 = vmatpush1.bf16.msra.mxu0 %v4082
        %5020 = vmatprep.subr.bf16.mxu0 %v4075
        %5021 = vmatpush1.bf16.msra.mxu0 %v4074
        %5022 = vmatprep.subr.bf16.mxu0 %v4195
        %5023 = vmatpush2.bf16.msra.mxu0 %v4194
        %5024 = vmatprep.subr.bf16.mxu0 %v4187
        %5025 = vmatpush2.bf16.msra.mxu0 %v4186
        %5026 = vmatprep.subr.bf16.mxu0 %v4179
        %5027 = vmatpush2.bf16.msra.mxu0 %v4178
        %5028 = vmatprep.subr.bf16.mxu0 %v4171
        %5029 = vmatpush2.bf16.msra.mxu0 %v4170
        %5030 = vmatprep.subr.bf16.mxu0 %v4163
        %5031 = vmatpush2.bf16.msra.mxu0 %v4162
        %5032 = vmatprep.subr.bf16.mxu0 %v4155
        %5033 = vmatpush2.bf16.msra.mxu0 %v4154
        %5034 = vmatprep.subr.bf16.mxu0 %v4147
        %5035 = vmatpush2.bf16.msra.mxu0 %v4146
        %5036 = vmatprep.subr.bf16.mxu0 %v4139
        %5037 = vmatpush2.bf16.msra.mxu0 %v4138
        %5038 = vmatprep.mubr.bf16.mxu0 %v998
        %5039 = vmatmul.mubr.bf16.gmra.mxu0 %v981
        %v5040 = vpop.f32.mrf.mxu0
        %v5041 = vadd.f32 %v5000, %v5040
        %v5042 = vpop.f32.mrf.mxu0
        %v5043 = vadd.f32 %v5002, %v5042
        %v5044 = vpop.f32.mrf.mxu0
        %v5045 = vpop.f32.mrf.mxu0
        %5046 = vdwg.mxu0
        %5047 = vmatprep.subr.bf16.mxu0 %v3621
        %5048 = vmatpush1.bf16.msra.mxu0 %v3620
        %5049 = vmatprep.subr.bf16.mxu0 %v3613
        %5050 = vmatpush1.bf16.msra.mxu0 %v3612
        %5051 = vmatprep.subr.bf16.mxu0 %v3605
        %5052 = vmatpush1.bf16.msra.mxu0 %v3604
        %5053 = vmatprep.subr.bf16.mxu0 %v3597
        %5054 = vmatpush1.bf16.msra.mxu0 %v3596
        %5055 = vmatprep.subr.bf16.mxu0 %v3589
        %5056 = vmatpush1.bf16.msra.mxu0 %v3588
        %5057 = vmatprep.subr.bf16.mxu0 %v3581
        %5058 = vmatpush1.bf16.msra.mxu0 %v3580
        %5059 = vmatprep.subr.bf16.mxu0 %v3573
        %5060 = vmatpush1.bf16.msra.mxu0 %v3572
        %5061 = vmatprep.subr.bf16.mxu0 %v3565
        %5062 = vmatpush1.bf16.msra.mxu0 %v3564
        %5063 = vmatprep.subr.bf16.mxu0 %v3685
        %5064 = vmatpush2.bf16.msra.mxu0 %v3684
        %5065 = vmatprep.subr.bf16.mxu0 %v3677
        %5066 = vmatpush2.bf16.msra.mxu0 %v3676
        %5067 = vmatprep.subr.bf16.mxu0 %v3669
        %5068 = vmatpush2.bf16.msra.mxu0 %v3668
        %5069 = vmatprep.subr.bf16.mxu0 %v3661
        %5070 = vmatpush2.bf16.msra.mxu0 %v3660
        %5071 = vmatprep.subr.bf16.mxu0 %v3653
        %5072 = vmatpush2.bf16.msra.mxu0 %v3652
        %5073 = vmatprep.subr.bf16.mxu0 %v3645
        %5074 = vmatpush2.bf16.msra.mxu0 %v3644
        %5075 = vmatprep.subr.bf16.mxu0 %v3637
        %5076 = vmatpush2.bf16.msra.mxu0 %v3636
        %5077 = vmatprep.subr.bf16.mxu0 %v3629
        %5078 = vmatpush2.bf16.msra.mxu0 %v3628
        %5079 = vmatprep.mubr.bf16.mxu0 %v983
        %5080 = vmatmul.mubr.bf16.gmra.mxu0 %v980
        %v5081 = vpop.f32.mrf.mxu0
        %v5082 = vadd.f32 0.0, %v5081
        %v5083 = vpop.f32.mrf.mxu0
        %v5084 = vadd.f32 0.0, %v5083
        %v5085 = vpop.f32.mrf.mxu0
        %v5086 = vpop.f32.mrf.mxu0
        %5087 = vdwg.mxu0
        %5088 = vmatprep.subr.bf16.mxu0 %v3749
        %5089 = vmatpush1.bf16.msra.mxu0 %v3748
        %5090 = vmatprep.subr.bf16.mxu0 %v3741
        %5091 = vmatpush1.bf16.msra.mxu0 %v3740
        %5092 = vmatprep.subr.bf16.mxu0 %v3733
        %5093 = vmatpush1.bf16.msra.mxu0 %v3732
        %5094 = vmatprep.subr.bf16.mxu0 %v3725
        %5095 = vmatpush1.bf16.msra.mxu0 %v3724
        %5096 = vmatprep.subr.bf16.mxu0 %v3717
        %5097 = vmatpush1.bf16.msra.mxu0 %v3716
        %5098 = vmatprep.subr.bf16.mxu0 %v3709
        %5099 = vmatpush1.bf16.msra.mxu0 %v3708
        %5100 = vmatprep.subr.bf16.mxu0 %v3701
        %5101 = vmatpush1.bf16.msra.mxu0 %v3700
        %5102 = vmatprep.subr.bf16.mxu0 %v3693
        %5103 = vmatpush1.bf16.msra.mxu0 %v3692
        %5104 = vmatprep.subr.bf16.mxu0 %v3813
        %5105 = vmatpush2.bf16.msra.mxu0 %v3812
        %5106 = vmatprep.subr.bf16.mxu0 %v3805
        %5107 = vmatpush2.bf16.msra.mxu0 %v3804
        %5108 = vmatprep.subr.bf16.mxu0 %v3797
        %5109 = vmatpush2.bf16.msra.mxu0 %v3796
        %5110 = vmatprep.subr.bf16.mxu0 %v3789
        %5111 = vmatpush2.bf16.msra.mxu0 %v3788
        %5112 = vmatprep.subr.bf16.mxu0 %v3781
        %5113 = vmatpush2.bf16.msra.mxu0 %v3780
        %5114 = vmatprep.subr.bf16.mxu0 %v3773
        %5115 = vmatpush2.bf16.msra.mxu0 %v3772
        %5116 = vmatprep.subr.bf16.mxu0 %v3765
        %5117 = vmatpush2.bf16.msra.mxu0 %v3764
        %5118 = vmatprep.subr.bf16.mxu0 %v3757
        %5119 = vmatpush2.bf16.msra.mxu0 %v3756
        %5120 = vmatprep.mubr.bf16.mxu0 %v987
        %5121 = vmatmul.mubr.bf16.gmra.mxu0 %v985
        %v5122 = vpop.f32.mrf.mxu0
        %v5123 = vadd.f32 %v5082, %v5122
        %v5124 = vpop.f32.mrf.mxu0
        %v5125 = vadd.f32 %v5084, %v5124
        %v5126 = vpop.f32.mrf.mxu0
        %v5127 = vpop.f32.mrf.mxu0
        %5128 = vdwg.mxu0
        %5129 = vmatprep.subr.bf16.mxu0 %v3877
        %5130 = vmatpush1.bf16.msra.mxu0 %v3876
        %5131 = vmatprep.subr.bf16.mxu0 %v3869
        %5132 = vmatpush1.bf16.msra.mxu0 %v3868
        %5133 = vmatprep.subr.bf16.mxu0 %v3861
        %5134 = vmatpush1.bf16.msra.mxu0 %v3860
        %5135 = vmatprep.subr.bf16.mxu0 %v3853
        %5136 = vmatpush1.bf16.msra.mxu0 %v3852
        %5137 = vmatprep.subr.bf16.mxu0 %v3845
        %5138 = vmatpush1.bf16.msra.mxu0 %v3844
        %5139 = vmatprep.subr.bf16.mxu0 %v3837
        %5140 = vmatpush1.bf16.msra.mxu0 %v3836
        %5141 = vmatprep.subr.bf16.mxu0 %v3829
        %5142 = vmatpush1.bf16.msra.mxu0 %v3828
        %5143 = vmatprep.subr.bf16.mxu0 %v3821
        %5144 = vmatpush1.bf16.msra.mxu0 %v3820
        %5145 = vmatprep.subr.bf16.mxu0 %v3941
        %5146 = vmatpush2.bf16.msra.mxu0 %v3940
        %5147 = vmatprep.subr.bf16.mxu0 %v3933
        %5148 = vmatpush2.bf16.msra.mxu0 %v3932
        %5149 = vmatprep.subr.bf16.mxu0 %v3925
        %5150 = vmatpush2.bf16.msra.mxu0 %v3924
        %5151 = vmatprep.subr.bf16.mxu0 %v3917
        %5152 = vmatpush2.bf16.msra.mxu0 %v3916
        %5153 = vmatprep.subr.bf16.mxu0 %v3909
        %5154 = vmatpush2.bf16.msra.mxu0 %v3908
        %5155 = vmatprep.subr.bf16.mxu0 %v3901
        %5156 = vmatpush2.bf16.msra.mxu0 %v3900
        %5157 = vmatprep.subr.bf16.mxu0 %v3893
        %5158 = vmatpush2.bf16.msra.mxu0 %v3892
        %5159 = vmatprep.subr.bf16.mxu0 %v3885
        %5160 = vmatpush2.bf16.msra.mxu0 %v3884
        %5161 = vmatprep.mubr.bf16.mxu0 %v991
        %5162 = vmatmul.mubr.bf16.gmra.mxu0 %v989
        %v5163 = vpop.f32.mrf.mxu0
        %v5164 = vadd.f32 %v5123, %v5163
        %v5165 = vpop.f32.mrf.mxu0
        %v5166 = vadd.f32 %v5125, %v5165
        %v5167 = vpop.f32.mrf.mxu0
        %v5168 = vpop.f32.mrf.mxu0
        %5169 = vdwg.mxu0
        %5170 = vmatprep.subr.bf16.mxu0 %v4005
        %5171 = vmatpush1.bf16.msra.mxu0 %v4004
        %5172 = vmatprep.subr.bf16.mxu0 %v3997
        %5173 = vmatpush1.bf16.msra.mxu0 %v3996
        %5174 = vmatprep.subr.bf16.mxu0 %v3989
        %5175 = vmatpush1.bf16.msra.mxu0 %v3988
        %5176 = vmatprep.subr.bf16.mxu0 %v3981
        %5177 = vmatpush1.bf16.msra.mxu0 %v3980
        %5178 = vmatprep.subr.bf16.mxu0 %v3973
        %5179 = vmatpush1.bf16.msra.mxu0 %v3972
        %5180 = vmatprep.subr.bf16.mxu0 %v3965
        %5181 = vmatpush1.bf16.msra.mxu0 %v3964
        %5182 = vmatprep.subr.bf16.mxu0 %v3957
        %5183 = vmatpush1.bf16.msra.mxu0 %v3956
        %5184 = vmatprep.subr.bf16.mxu0 %v3949
        %5185 = vmatpush1.bf16.msra.mxu0 %v3948
        %5186 = vmatprep.subr.bf16.mxu0 %v4069
        %5187 = vmatpush2.bf16.msra.mxu0 %v4068
        %5188 = vmatprep.subr.bf16.mxu0 %v4061
        %5189 = vmatpush2.bf16.msra.mxu0 %v4060
        %5190 = vmatprep.subr.bf16.mxu0 %v4053
        %5191 = vmatpush2.bf16.msra.mxu0 %v4052
        %5192 = vmatprep.subr.bf16.mxu0 %v4045
        %5193 = vmatpush2.bf16.msra.mxu0 %v4044
        %5194 = vmatprep.subr.bf16.mxu0 %v4037
        %5195 = vmatpush2.bf16.msra.mxu0 %v4036
        %5196 = vmatprep.subr.bf16.mxu0 %v4029
        %5197 = vmatpush2.bf16.msra.mxu0 %v4028
        %5198 = vmatprep.subr.bf16.mxu0 %v4021
        %5199 = vmatpush2.bf16.msra.mxu0 %v4020
        %5200 = vmatprep.subr.bf16.mxu0 %v4013
        %5201 = vmatpush2.bf16.msra.mxu0 %v4012
        %5202 = vmatprep.mubr.bf16.mxu0 %v995
        %5203 = vmatmul.mubr.bf16.gmra.mxu0 %v993
        %v5204 = vpop.f32.mrf.mxu0
        %v5205 = vadd.f32 %v5164, %v5204
        %v5206 = vpop.f32.mrf.mxu0
        %v5207 = vadd.f32 %v5166, %v5206
        %v5208 = vpop.f32.mrf.mxu0
        %v5209 = vpop.f32.mrf.mxu0
        %5210 = vdwg.mxu0
        %5211 = vmatprep.subr.bf16.mxu0 %v4133
        %5212 = vmatpush1.bf16.msra.mxu0 %v4132
        %5213 = vmatprep.subr.bf16.mxu0 %v4125
        %5214 = vmatpush1.bf16.msra.mxu0 %v4124
        %5215 = vmatprep.subr.bf16.mxu0 %v4117
        %5216 = vmatpush1.bf16.msra.mxu0 %v4116
        %5217 = vmatprep.subr.bf16.mxu0 %v4109
        %5218 = vmatpush1.bf16.msra.mxu0 %v4108
        %5219 = vmatprep.subr.bf16.mxu0 %v4101
        %5220 = vmatpush1.bf16.msra.mxu0 %v4100
        %5221 = vmatprep.subr.bf16.mxu0 %v4093
        %5222 = vmatpush1.bf16.msra.mxu0 %v4092
        %5223 = vmatprep.subr.bf16.mxu0 %v4085
        %5224 = vmatpush1.bf16.msra.mxu0 %v4084
        %5225 = vmatprep.subr.bf16.mxu0 %v4077
        %5226 = vmatpush1.bf16.msra.mxu0 %v4076
        %5227 = vmatprep.subr.bf16.mxu0 %v4197
        %5228 = vmatpush2.bf16.msra.mxu0 %v4196
        %5229 = vmatprep.subr.bf16.mxu0 %v4189
        %5230 = vmatpush2.bf16.msra.mxu0 %v4188
        %5231 = vmatprep.subr.bf16.mxu0 %v4181
        %5232 = vmatpush2.bf16.msra.mxu0 %v4180
        %5233 = vmatprep.subr.bf16.mxu0 %v4173
        %5234 = vmatpush2.bf16.msra.mxu0 %v4172
        %5235 = vmatprep.subr.bf16.mxu0 %v4165
        %5236 = vmatpush2.bf16.msra.mxu0 %v4164
        %5237 = vmatprep.subr.bf16.mxu0 %v4157
        %5238 = vmatpush2.bf16.msra.mxu0 %v4156
        %5239 = vmatprep.subr.bf16.mxu0 %v4149
        %5240 = vmatpush2.bf16.msra.mxu0 %v4148
        %5241 = vmatprep.subr.bf16.mxu0 %v4141
        %5242 = vmatpush2.bf16.msra.mxu0 %v4140
        %5243 = vmatprep.mubr.bf16.mxu0 %v998
        %5244 = vmatmul.mubr.bf16.gmra.mxu0 %v981
        %v5245 = vpop.f32.mrf.mxu0
        %v5246 = vadd.f32 %v5205, %v5245
        %v5247 = vpop.f32.mrf.mxu0
        %v5248 = vadd.f32 %v5207, %v5247
        %v5249 = vpop.f32.mrf.mxu0
        %v5250 = vpop.f32.mrf.mxu0
        %5251 = vdwg.mxu0
        %5252 = vmatprep.subr.bf16.mxu0 %v3623
        %5253 = vmatpush1.bf16.msra.mxu0 %v3622
        %5254 = vmatprep.subr.bf16.mxu0 %v3615
        %5255 = vmatpush1.bf16.msra.mxu0 %v3614
        %5256 = vmatprep.subr.bf16.mxu0 %v3607
        %5257 = vmatpush1.bf16.msra.mxu0 %v3606
        %5258 = vmatprep.subr.bf16.mxu0 %v3599
        %5259 = vmatpush1.bf16.msra.mxu0 %v3598
        %5260 = vmatprep.subr.bf16.mxu0 %v3591
        %5261 = vmatpush1.bf16.msra.mxu0 %v3590
        %5262 = vmatprep.subr.bf16.mxu0 %v3583
        %5263 = vmatpush1.bf16.msra.mxu0 %v3582
        %5264 = vmatprep.subr.bf16.mxu0 %v3575
        %5265 = vmatpush1.bf16.msra.mxu0 %v3574
        %5266 = vmatprep.subr.bf16.mxu0 %v3567
        %5267 = vmatpush1.bf16.msra.mxu0 %v3566
        %5268 = vmatprep.subr.bf16.mxu0 %v3687
        %5269 = vmatpush2.bf16.msra.mxu0 %v3686
        %5270 = vmatprep.subr.bf16.mxu0 %v3679
        %5271 = vmatpush2.bf16.msra.mxu0 %v3678
        %5272 = vmatprep.subr.bf16.mxu0 %v3671
        %5273 = vmatpush2.bf16.msra.mxu0 %v3670
        %5274 = vmatprep.subr.bf16.mxu0 %v3663
        %5275 = vmatpush2.bf16.msra.mxu0 %v3662
        %5276 = vmatprep.subr.bf16.mxu0 %v3655
        %5277 = vmatpush2.bf16.msra.mxu0 %v3654
        %5278 = vmatprep.subr.bf16.mxu0 %v3647
        %5279 = vmatpush2.bf16.msra.mxu0 %v3646
        %5280 = vmatprep.subr.bf16.mxu0 %v3639
        %5281 = vmatpush2.bf16.msra.mxu0 %v3638
        %5282 = vmatprep.subr.bf16.mxu0 %v3631
        %5283 = vmatpush2.bf16.msra.mxu0 %v3630
        %5284 = vmatprep.mubr.bf16.mxu0 %v983
        %5285 = vmatmul.mubr.bf16.gmra.mxu0 %v980
        %v5286 = vpop.f32.mrf.mxu0
        %v5287 = vadd.f32 0.0, %v5286
        %v5288 = vpop.f32.mrf.mxu0
        %v5289 = vadd.f32 0.0, %v5288
        %v5290 = vpop.f32.mrf.mxu0
        %v5291 = vpop.f32.mrf.mxu0
        %5292 = vdwg.mxu0
        %5293 = vmatprep.subr.bf16.mxu0 %v3751
        %5294 = vmatpush1.bf16.msra.mxu0 %v3750
        %5295 = vmatprep.subr.bf16.mxu0 %v3743
        %5296 = vmatpush1.bf16.msra.mxu0 %v3742
        %5297 = vmatprep.subr.bf16.mxu0 %v3735
        %5298 = vmatpush1.bf16.msra.mxu0 %v3734
        %5299 = vmatprep.subr.bf16.mxu0 %v3727
        %5300 = vmatpush1.bf16.msra.mxu0 %v3726
        %5301 = vmatprep.subr.bf16.mxu0 %v3719
        %5302 = vmatpush1.bf16.msra.mxu0 %v3718
        %5303 = vmatprep.subr.bf16.mxu0 %v3711
        %5304 = vmatpush1.bf16.msra.mxu0 %v3710
        %5305 = vmatprep.subr.bf16.mxu0 %v3703
        %5306 = vmatpush1.bf16.msra.mxu0 %v3702
        %5307 = vmatprep.subr.bf16.mxu0 %v3695
        %5308 = vmatpush1.bf16.msra.mxu0 %v3694
        %5309 = vmatprep.subr.bf16.mxu0 %v3815
        %5310 = vmatpush2.bf16.msra.mxu0 %v3814
        %5311 = vmatprep.subr.bf16.mxu0 %v3807
        %5312 = vmatpush2.bf16.msra.mxu0 %v3806
        %5313 = vmatprep.subr.bf16.mxu0 %v3799
        %5314 = vmatpush2.bf16.msra.mxu0 %v3798
        %5315 = vmatprep.subr.bf16.mxu0 %v3791
        %5316 = vmatpush2.bf16.msra.mxu0 %v3790
        %5317 = vmatprep.subr.bf16.mxu0 %v3783
        %5318 = vmatpush2.bf16.msra.mxu0 %v3782
        %5319 = vmatprep.subr.bf16.mxu0 %v3775
        %5320 = vmatpush2.bf16.msra.mxu0 %v3774
        %5321 = vmatprep.subr.bf16.mxu0 %v3767
        %5322 = vmatpush2.bf16.msra.mxu0 %v3766
        %5323 = vmatprep.subr.bf16.mxu0 %v3759
        %5324 = vmatpush2.bf16.msra.mxu0 %v3758
        %5325 = vmatprep.mubr.bf16.mxu0 %v987
        %5326 = vmatmul.mubr.bf16.gmra.mxu0 %v985
        %v5327 = vpop.f32.mrf.mxu0
        %v5328 = vadd.f32 %v5287, %v5327
        %v5329 = vpop.f32.mrf.mxu0
        %v5330 = vadd.f32 %v5289, %v5329
        %v5331 = vpop.f32.mrf.mxu0
        %v5332 = vpop.f32.mrf.mxu0
        %5333 = vdwg.mxu0
        %5334 = vmatprep.subr.bf16.mxu0 %v3879
        %5335 = vmatpush1.bf16.msra.mxu0 %v3878
        %5336 = vmatprep.subr.bf16.mxu0 %v3871
        %5337 = vmatpush1.bf16.msra.mxu0 %v3870
        %5338 = vmatprep.subr.bf16.mxu0 %v3863
        %5339 = vmatpush1.bf16.msra.mxu0 %v3862
        %5340 = vmatprep.subr.bf16.mxu0 %v3855
        %5341 = vmatpush1.bf16.msra.mxu0 %v3854
        %5342 = vmatprep.subr.bf16.mxu0 %v3847
        %5343 = vmatpush1.bf16.msra.mxu0 %v3846
        %5344 = vmatprep.subr.bf16.mxu0 %v3839
        %5345 = vmatpush1.bf16.msra.mxu0 %v3838
        %5346 = vmatprep.subr.bf16.mxu0 %v3831
        %5347 = vmatpush1.bf16.msra.mxu0 %v3830
        %5348 = vmatprep.subr.bf16.mxu0 %v3823
        %5349 = vmatpush1.bf16.msra.mxu0 %v3822
        %5350 = vmatprep.subr.bf16.mxu0 %v3943
        %5351 = vmatpush2.bf16.msra.mxu0 %v3942
        %5352 = vmatprep.subr.bf16.mxu0 %v3935
        %5353 = vmatpush2.bf16.msra.mxu0 %v3934
        %5354 = vmatprep.subr.bf16.mxu0 %v3927
        %5355 = vmatpush2.bf16.msra.mxu0 %v3926
        %5356 = vmatprep.subr.bf16.mxu0 %v3919
        %5357 = vmatpush2.bf16.msra.mxu0 %v3918
        %5358 = vmatprep.subr.bf16.mxu0 %v3911
        %5359 = vmatpush2.bf16.msra.mxu0 %v3910
        %5360 = vmatprep.subr.bf16.mxu0 %v3903
        %5361 = vmatpush2.bf16.msra.mxu0 %v3902
        %5362 = vmatprep.subr.bf16.mxu0 %v3895
        %5363 = vmatpush2.bf16.msra.mxu0 %v3894
        %5364 = vmatprep.subr.bf16.mxu0 %v3887
        %5365 = vmatpush2.bf16.msra.mxu0 %v3886
        %5366 = vmatprep.mubr.bf16.mxu0 %v991
        %5367 = vmatmul.mubr.bf16.gmra.mxu0 %v989
        %v5368 = vpop.f32.mrf.mxu0
        %v5369 = vadd.f32 %v5328, %v5368
        %v5370 = vpop.f32.mrf.mxu0
        %v5371 = vadd.f32 %v5330, %v5370
        %v5372 = vpop.f32.mrf.mxu0
        %v5373 = vpop.f32.mrf.mxu0
        %5374 = vdwg.mxu0
        %5375 = vmatprep.subr.bf16.mxu0 %v4007
        %5376 = vmatpush1.bf16.msra.mxu0 %v4006
        %5377 = vmatprep.subr.bf16.mxu0 %v3999
        %5378 = vmatpush1.bf16.msra.mxu0 %v3998
        %5379 = vmatprep.subr.bf16.mxu0 %v3991
        %5380 = vmatpush1.bf16.msra.mxu0 %v3990
        %5381 = vmatprep.subr.bf16.mxu0 %v3983
        %5382 = vmatpush1.bf16.msra.mxu0 %v3982
        %5383 = vmatprep.subr.bf16.mxu0 %v3975
        %5384 = vmatpush1.bf16.msra.mxu0 %v3974
        %5385 = vmatprep.subr.bf16.mxu0 %v3967
        %5386 = vmatpush1.bf16.msra.mxu0 %v3966
        %5387 = vmatprep.subr.bf16.mxu0 %v3959
        %5388 = vmatpush1.bf16.msra.mxu0 %v3958
        %5389 = vmatprep.subr.bf16.mxu0 %v3951
        %5390 = vmatpush1.bf16.msra.mxu0 %v3950
        %5391 = vmatprep.subr.bf16.mxu0 %v4071
        %5392 = vmatpush2.bf16.msra.mxu0 %v4070
        %5393 = vmatprep.subr.bf16.mxu0 %v4063
        %5394 = vmatpush2.bf16.msra.mxu0 %v4062
        %5395 = vmatprep.subr.bf16.mxu0 %v4055
        %5396 = vmatpush2.bf16.msra.mxu0 %v4054
        %5397 = vmatprep.subr.bf16.mxu0 %v4047
        %5398 = vmatpush2.bf16.msra.mxu0 %v4046
        %5399 = vmatprep.subr.bf16.mxu0 %v4039
        %5400 = vmatpush2.bf16.msra.mxu0 %v4038
        %5401 = vmatprep.subr.bf16.mxu0 %v4031
        %5402 = vmatpush2.bf16.msra.mxu0 %v4030
        %5403 = vmatprep.subr.bf16.mxu0 %v4023
        %5404 = vmatpush2.bf16.msra.mxu0 %v4022
        %5405 = vmatprep.subr.bf16.mxu0 %v4015
        %5406 = vmatpush2.bf16.msra.mxu0 %v4014
        %5407 = vmatprep.mubr.bf16.mxu0 %v995
        %5408 = vmatmul.mubr.bf16.gmra.mxu0 %v993
        %v5409 = vpop.f32.mrf.mxu0
        %v5410 = vadd.f32 %v5369, %v5409
        %v5411 = vpop.f32.mrf.mxu0
        %v5412 = vadd.f32 %v5371, %v5411
        %v5413 = vpop.f32.mrf.mxu0
        %v5414 = vpop.f32.mrf.mxu0
        %5415 = vdwg.mxu0
        %5416 = vmatprep.subr.bf16.mxu0 %v4135
        %5417 = vmatpush1.bf16.msra.mxu0 %v4134
        %5418 = vmatprep.subr.bf16.mxu0 %v4127
        %5419 = vmatpush1.bf16.msra.mxu0 %v4126
        %5420 = vmatprep.subr.bf16.mxu0 %v4119
        %5421 = vmatpush1.bf16.msra.mxu0 %v4118
        %5422 = vmatprep.subr.bf16.mxu0 %v4111
        %5423 = vmatpush1.bf16.msra.mxu0 %v4110
        %5424 = vmatprep.subr.bf16.mxu0 %v4103
        %5425 = vmatpush1.bf16.msra.mxu0 %v4102
        %5426 = vmatprep.subr.bf16.mxu0 %v4095
        %5427 = vmatpush1.bf16.msra.mxu0 %v4094
        %5428 = vmatprep.subr.bf16.mxu0 %v4087
        %5429 = vmatpush1.bf16.msra.mxu0 %v4086
        %5430 = vmatprep.subr.bf16.mxu0 %v4079
        %5431 = vmatpush1.bf16.msra.mxu0 %v4078
        %5432 = vmatprep.subr.bf16.mxu0 %v4199
        %5433 = vmatpush2.bf16.msra.mxu0 %v4198
        %5434 = vmatprep.subr.bf16.mxu0 %v4191
        %5435 = vmatpush2.bf16.msra.mxu0 %v4190
        %5436 = vmatprep.subr.bf16.mxu0 %v4183
        %5437 = vmatpush2.bf16.msra.mxu0 %v4182
        %5438 = vmatprep.subr.bf16.mxu0 %v4175
        %5439 = vmatpush2.bf16.msra.mxu0 %v4174
        %5440 = vmatprep.subr.bf16.mxu0 %v4167
        %5441 = vmatpush2.bf16.msra.mxu0 %v4166
        %5442 = vmatprep.subr.bf16.mxu0 %v4159
        %5443 = vmatpush2.bf16.msra.mxu0 %v4158
        %5444 = vmatprep.subr.bf16.mxu0 %v4151
        %5445 = vmatpush2.bf16.msra.mxu0 %v4150
        %5446 = vmatprep.subr.bf16.mxu0 %v4143
        %5447 = vmatpush2.bf16.msra.mxu0 %v4142
        %5448 = vmatprep.mubr.bf16.mxu0 %v998
        %5449 = vmatmul.mubr.bf16.gmra.mxu0 %v981
        %v5450 = vpop.f32.mrf.mxu0
        %v5451 = vadd.f32 %v5410, %v5450
        %v5452 = vpop.f32.mrf.mxu0
        %v5453 = vadd.f32 %v5412, %v5452
        %v5454 = vpop.f32.mrf.mxu0
        %v5455 = vpop.f32.mrf.mxu0
        %5456 = vdwg.mxu0
        %5457 = vmatprep.subr.bf16.mxu0 %v3625
        %5458 = vmatpush1.bf16.msra.mxu0 %v3624
        %5459 = vmatprep.subr.bf16.mxu0 %v3617
        %5460 = vmatpush1.bf16.msra.mxu0 %v3616
        %5461 = vmatprep.subr.bf16.mxu0 %v3609
        %5462 = vmatpush1.bf16.msra.mxu0 %v3608
        %5463 = vmatprep.subr.bf16.mxu0 %v3601
        %5464 = vmatpush1.bf16.msra.mxu0 %v3600
        %5465 = vmatprep.subr.bf16.mxu0 %v3593
        %5466 = vmatpush1.bf16.msra.mxu0 %v3592
        %5467 = vmatprep.subr.bf16.mxu0 %v3585
        %5468 = vmatpush1.bf16.msra.mxu0 %v3584
        %5469 = vmatprep.subr.bf16.mxu0 %v3577
        %5470 = vmatpush1.bf16.msra.mxu0 %v3576
        %5471 = vmatprep.subr.bf16.mxu0 %v3569
        %5472 = vmatpush1.bf16.msra.mxu0 %v3568
        %5473 = vmatprep.subr.bf16.mxu0 %v3689
        %5474 = vmatpush2.bf16.msra.mxu0 %v3688
        %5475 = vmatprep.subr.bf16.mxu0 %v3681
        %5476 = vmatpush2.bf16.msra.mxu0 %v3680
        %5477 = vmatprep.subr.bf16.mxu0 %v3673
        %5478 = vmatpush2.bf16.msra.mxu0 %v3672
        %5479 = vmatprep.subr.bf16.mxu0 %v3665
        %5480 = vmatpush2.bf16.msra.mxu0 %v3664
        %5481 = vmatprep.subr.bf16.mxu0 %v3657
        %5482 = vmatpush2.bf16.msra.mxu0 %v3656
        %5483 = vmatprep.subr.bf16.mxu0 %v3649
        %5484 = vmatpush2.bf16.msra.mxu0 %v3648
        %5485 = vmatprep.subr.bf16.mxu0 %v3641
        %5486 = vmatpush2.bf16.msra.mxu0 %v3640
        %5487 = vmatprep.subr.bf16.mxu0 %v3633
        %5488 = vmatpush2.bf16.msra.mxu0 %v3632
        %5489 = vmatprep.mubr.bf16.mxu0 %v983
        %5490 = vmatmul.mubr.bf16.gmra.mxu0 %v980
        %v5491 = vpop.f32.mrf.mxu0
        %v5492 = vadd.f32 0.0, %v5491
        %v5493 = vpop.f32.mrf.mxu0
        %v5494 = vadd.f32 0.0, %v5493
        %v5495 = vpop.f32.mrf.mxu0
        %v5496 = vpop.f32.mrf.mxu0
        %5497 = vdwg.mxu0
        %5498 = vmatprep.subr.bf16.mxu0 %v3753
        %5499 = vmatpush1.bf16.msra.mxu0 %v3752
        %5500 = vmatprep.subr.bf16.mxu0 %v3745
        %5501 = vmatpush1.bf16.msra.mxu0 %v3744
        %5502 = vmatprep.subr.bf16.mxu0 %v3737
        %5503 = vmatpush1.bf16.msra.mxu0 %v3736
        %5504 = vmatprep.subr.bf16.mxu0 %v3729
        %5505 = vmatpush1.bf16.msra.mxu0 %v3728
        %5506 = vmatprep.subr.bf16.mxu0 %v3721
        %5507 = vmatpush1.bf16.msra.mxu0 %v3720
        %5508 = vmatprep.subr.bf16.mxu0 %v3713
        %5509 = vmatpush1.bf16.msra.mxu0 %v3712
        %5510 = vmatprep.subr.bf16.mxu0 %v3705
        %5511 = vmatpush1.bf16.msra.mxu0 %v3704
        %5512 = vmatprep.subr.bf16.mxu0 %v3697
        %5513 = vmatpush1.bf16.msra.mxu0 %v3696
        %5514 = vmatprep.subr.bf16.mxu0 %v3817
        %5515 = vmatpush2.bf16.msra.mxu0 %v3816
        %5516 = vmatprep.subr.bf16.mxu0 %v3809
        %5517 = vmatpush2.bf16.msra.mxu0 %v3808
        %5518 = vmatprep.subr.bf16.mxu0 %v3801
        %5519 = vmatpush2.bf16.msra.mxu0 %v3800
        %5520 = vmatprep.subr.bf16.mxu0 %v3793
        %5521 = vmatpush2.bf16.msra.mxu0 %v3792
        %5522 = vmatprep.subr.bf16.mxu0 %v3785
        %5523 = vmatpush2.bf16.msra.mxu0 %v3784
        %5524 = vmatprep.subr.bf16.mxu0 %v3777
        %5525 = vmatpush2.bf16.msra.mxu0 %v3776
        %5526 = vmatprep.subr.bf16.mxu0 %v3769
        %5527 = vmatpush2.bf16.msra.mxu0 %v3768
        %5528 = vmatprep.subr.bf16.mxu0 %v3761
        %5529 = vmatpush2.bf16.msra.mxu0 %v3760
        %5530 = vmatprep.mubr.bf16.mxu0 %v987
        %5531 = vmatmul.mubr.bf16.gmra.mxu0 %v985
        %v5532 = vpop.f32.mrf.mxu0
        %v5533 = vadd.f32 %v5492, %v5532
        %v5534 = vpop.f32.mrf.mxu0
        %v5535 = vadd.f32 %v5494, %v5534
        %v5536 = vpop.f32.mrf.mxu0
        %v5537 = vpop.f32.mrf.mxu0
        %5538 = vdwg.mxu0
        %5539 = vmatprep.subr.bf16.mxu0 %v3881
        %5540 = vmatpush1.bf16.msra.mxu0 %v3880
        %5541 = vmatprep.subr.bf16.mxu0 %v3873
        %5542 = vmatpush1.bf16.msra.mxu0 %v3872
        %5543 = vmatprep.subr.bf16.mxu0 %v3865
        %5544 = vmatpush1.bf16.msra.mxu0 %v3864
        %5545 = vmatprep.subr.bf16.mxu0 %v3857
        %5546 = vmatpush1.bf16.msra.mxu0 %v3856
        %5547 = vmatprep.subr.bf16.mxu0 %v3849
        %5548 = vmatpush1.bf16.msra.mxu0 %v3848
        %5549 = vmatprep.subr.bf16.mxu0 %v3841
        %5550 = vmatpush1.bf16.msra.mxu0 %v3840
        %5551 = vmatprep.subr.bf16.mxu0 %v3833
        %5552 = vmatpush1.bf16.msra.mxu0 %v3832
        %5553 = vmatprep.subr.bf16.mxu0 %v3825
        %5554 = vmatpush1.bf16.msra.mxu0 %v3824
        %5555 = vmatprep.subr.bf16.mxu0 %v3945
        %5556 = vmatpush2.bf16.msra.mxu0 %v3944
        %5557 = vmatprep.subr.bf16.mxu0 %v3937
        %5558 = vmatpush2.bf16.msra.mxu0 %v3936
        %5559 = vmatprep.subr.bf16.mxu0 %v3929
        %5560 = vmatpush2.bf16.msra.mxu0 %v3928
        %5561 = vmatprep.subr.bf16.mxu0 %v3921
        %5562 = vmatpush2.bf16.msra.mxu0 %v3920
        %5563 = vmatprep.subr.bf16.mxu0 %v3913
        %5564 = vmatpush2.bf16.msra.mxu0 %v3912
        %5565 = vmatprep.subr.bf16.mxu0 %v3905
        %5566 = vmatpush2.bf16.msra.mxu0 %v3904
        %5567 = vmatprep.subr.bf16.mxu0 %v3897
        %5568 = vmatpush2.bf16.msra.mxu0 %v3896
        %5569 = vmatprep.subr.bf16.mxu0 %v3889
        %5570 = vmatpush2.bf16.msra.mxu0 %v3888
        %5571 = vmatprep.mubr.bf16.mxu0 %v991
        %5572 = vmatmul.mubr.bf16.gmra.mxu0 %v989
        %v5573 = vpop.f32.mrf.mxu0
        %v5574 = vadd.f32 %v5533, %v5573
        %v5575 = vpop.f32.mrf.mxu0
        %v5576 = vadd.f32 %v5535, %v5575
        %v5577 = vpop.f32.mrf.mxu0
        %v5578 = vpop.f32.mrf.mxu0
        %5579 = vdwg.mxu0
        %5580 = vmatprep.subr.bf16.mxu0 %v4009
        %5581 = vmatpush1.bf16.msra.mxu0 %v4008
        %5582 = vmatprep.subr.bf16.mxu0 %v4001
        %5583 = vmatpush1.bf16.msra.mxu0 %v4000
        %5584 = vmatprep.subr.bf16.mxu0 %v3993
        %5585 = vmatpush1.bf16.msra.mxu0 %v3992
        %5586 = vmatprep.subr.bf16.mxu0 %v3985
        %5587 = vmatpush1.bf16.msra.mxu0 %v3984
        %5588 = vmatprep.subr.bf16.mxu0 %v3977
        %5589 = vmatpush1.bf16.msra.mxu0 %v3976
        %5590 = vmatprep.subr.bf16.mxu0 %v3969
        %5591 = vmatpush1.bf16.msra.mxu0 %v3968
        %5592 = vmatprep.subr.bf16.mxu0 %v3961
        %5593 = vmatpush1.bf16.msra.mxu0 %v3960
        %5594 = vmatprep.subr.bf16.mxu0 %v3953
        %5595 = vmatpush1.bf16.msra.mxu0 %v3952
        %5596 = vmatprep.subr.bf16.mxu0 %v4073
        %5597 = vmatpush2.bf16.msra.mxu0 %v4072
        %5598 = vmatprep.subr.bf16.mxu0 %v4065
        %5599 = vmatpush2.bf16.msra.mxu0 %v4064
        %5600 = vmatprep.subr.bf16.mxu0 %v4057
        %5601 = vmatpush2.bf16.msra.mxu0 %v4056
        %5602 = vmatprep.subr.bf16.mxu0 %v4049
        %5603 = vmatpush2.bf16.msra.mxu0 %v4048
        %5604 = vmatprep.subr.bf16.mxu0 %v4041
        %5605 = vmatpush2.bf16.msra.mxu0 %v4040
        %5606 = vmatprep.subr.bf16.mxu0 %v4033
        %5607 = vmatpush2.bf16.msra.mxu0 %v4032
        %5608 = vmatprep.subr.bf16.mxu0 %v4025
        %5609 = vmatpush2.bf16.msra.mxu0 %v4024
        %5610 = vmatprep.subr.bf16.mxu0 %v4017
        %5611 = vmatpush2.bf16.msra.mxu0 %v4016
        %5612 = vmatprep.mubr.bf16.mxu0 %v995
        %5613 = vmatmul.mubr.bf16.gmra.mxu0 %v993
        %v5614 = vpop.f32.mrf.mxu0
        %v5615 = vadd.f32 %v5574, %v5614
        %v5616 = vpop.f32.mrf.mxu0
        %v5617 = vadd.f32 %v5576, %v5616
        %v5618 = vpop.f32.mrf.mxu0
        %v5619 = vpop.f32.mrf.mxu0
        %5620 = vdwg.mxu0
        %5621 = vmatprep.subr.bf16.mxu0 %v4137
        %5622 = vmatpush1.bf16.msra.mxu0 %v4136
        %5623 = vmatprep.subr.bf16.mxu0 %v4129
        %5624 = vmatpush1.bf16.msra.mxu0 %v4128
        %5625 = vmatprep.subr.bf16.mxu0 %v4121
        %5626 = vmatpush1.bf16.msra.mxu0 %v4120
        %5627 = vmatprep.subr.bf16.mxu0 %v4113
        %5628 = vmatpush1.bf16.msra.mxu0 %v4112
        %5629 = vmatprep.subr.bf16.mxu0 %v4105
        %5630 = vmatpush1.bf16.msra.mxu0 %v4104
        %5631 = vmatprep.subr.bf16.mxu0 %v4097
        %5632 = vmatpush1.bf16.msra.mxu0 %v4096
        %5633 = vmatprep.subr.bf16.mxu0 %v4089
        %5634 = vmatpush1.bf16.msra.mxu0 %v4088
        %5635 = vmatprep.subr.bf16.mxu0 %v4081
        %5636 = vmatpush1.bf16.msra.mxu0 %v4080
        %5637 = vmatprep.subr.bf16.mxu0 %v4201
        %5638 = vmatpush2.bf16.msra.mxu0 %v4200
        %5639 = vmatprep.subr.bf16.mxu0 %v4193
        %5640 = vmatpush2.bf16.msra.mxu0 %v4192
        %5641 = vmatprep.subr.bf16.mxu0 %v4185
        %5642 = vmatpush2.bf16.msra.mxu0 %v4184
        %5643 = vmatprep.subr.bf16.mxu0 %v4177
        %5644 = vmatpush2.bf16.msra.mxu0 %v4176
        %5645 = vmatprep.subr.bf16.mxu0 %v4169
        %5646 = vmatpush2.bf16.msra.mxu0 %v4168
        %5647 = vmatprep.subr.bf16.mxu0 %v4161
        %5648 = vmatpush2.bf16.msra.mxu0 %v4160
        %5649 = vmatprep.subr.bf16.mxu0 %v4153
        %5650 = vmatpush2.bf16.msra.mxu0 %v4152
        %5651 = vmatprep.subr.bf16.mxu0 %v4145
        %5652 = vmatpush2.bf16.msra.mxu0 %v4144
        %5653 = vmatprep.mubr.bf16.mxu0 %v998
        %5654 = vmatmul.mubr.bf16.gmra.mxu0 %v981
        %v5655 = vpop.f32.mrf.mxu0
        %v5656 = vadd.f32 %v5615, %v5655
        %v5657 = vpop.f32.mrf.mxu0
        %v5658 = vadd.f32 %v5617, %v5657
        %v5659 = vpop.f32.mrf.mxu0
        %v5660 = vpop.f32.mrf.mxu0
        %5661 = vdwg.mxu0
        %v5670 = vcombine.low %v5041, %v5043
        %v5671 = vcombine.low %v5246, %v5248
        %v5673 = vunpack.c.l.s4 1983009808
        %v5674 = vunpack.c.0.s8 %v5673
        %v5675 = vlaneseq
        %v5676 = vshrl.u32 %v5675, 7
        %v5677 = vsub.s32 %v5674, %v5676
        %v5678 = vrot.slane %v5670, %v5677
        %v5680 = vunpack.c.l.s4 1983009808
        %v5681 = vunpack.c.0.s8 %v5680
        %v5682 = vlaneseq
        %v5683 = vshrl.u32 %v5682, 7
        %v5684 = vsub.s32 %v5681, %v5683
        %v5685 = vrot.slane %v5671, %v5684
        %v5686 = vcombine.low %v5678, %v5685
        %v5687 = vcombine.low %v5451, %v5453
        %v5688 = vcombine.low %v5656, %v5658
        %v5690 = vunpack.c.l.s4 1983009808
        %v5691 = vunpack.c.0.s8 %v5690
        %v5692 = vlaneseq
        %v5693 = vshrl.u32 %v5692, 7
        %v5694 = vsub.s32 %v5691, %v5693
        %v5695 = vrot.slane %v5687, %v5694
        %v5697 = vunpack.c.l.s4 1983009808
        %v5698 = vunpack.c.0.s8 %v5697
        %v5699 = vlaneseq
        %v5700 = vshrl.u32 %v5699, 7
        %v5701 = vsub.s32 %v5698, %v5700
        %v5702 = vrot.slane %v5688, %v5701
        %v5703 = vcombine.low %v5695, %v5702
        %v5706 = vadd.f32 %v1000, %v5686
        %v5707 = vadd.f32 %v1001, %v5703
        %5708 = vst [vmem:[#allocation2] sm:$0xff] %v5706
        %5709 = vst [vmem:[#allocation2 + $0x8] sm:$0xff] %v5707
        %p5710 = scmp.eq.s32.totalorder %s34, 4
        // Predicated region
        $region113: #{decoder_forward.1} parent=67 // pred_check
          %p5711 = pneg %p5710
        $region114: #{decoder_forward.1} parent=67 // pred_check_branch
          %5713 = sbr.rel (%p5711) target = $region116
        $region115: #{decoder_forward.1} parent=67 // pred_region
          %s5714 = smul.u32 4, 128
          %s5715 = smul.u32 %s5714, 8
          %s5716 = sshll.u32 %s5715, 4
          %5717 = dma.done [#allocation5], %s5716
          %s5718 = scalar_lea.sflag [#allocation5], 1
          %s5719 = smul.u32 1024, 1
          %s5720 = sshll.u32 %s5719, 4
          %5721 = dma.done %s5718, %s5720
          %v5722 = vld [vmem:[%s5] sm:$0x3]
          %v5723 = vld [vmem:[#allocation14] ss:$2 sm:$0xff]
          %5725 = vset.pattern.permute.xlu0 0
          %5726 = vperm.xlu0 %5725, %v5722
          %v5727 = vpop.permute.xlu0 %5726
          %v5730 = vlaneseq
          %v5731 = vshrl.u32 %v5730, 7
          %v5732 = vsub.s32 0, %v5731
          %v5733 = vrot.slane %v5723, %v5732
          %v5734 = vlaneseq
          %v5735 = vshrl.u32 %v5734, 7
          %v5736 = vsub.s32 1, %v5735
          %v5737 = vrot.slane %v5723, %v5736
          %v5738 = vlaneseq
          %v5739 = vshrl.u32 %v5738, 7
          %v5740 = vsub.s32 2, %v5739
          %v5741 = vrot.slane %v5723, %v5740
          %v5742 = vlaneseq
          %v5743 = vshrl.u32 %v5742, 7
          %v5744 = vsub.s32 3, %v5743
          %v5745 = vrot.slane %v5723, %v5744
          %v5746 = vlaneseq
          %v5747 = vshrl.u32 %v5746, 7
          %v5748 = vsub.s32 4, %v5747
          %v5749 = vrot.slane %v5723, %v5748
          %v5750 = vlaneseq
          %v5751 = vshrl.u32 %v5750, 7
          %v5752 = vsub.s32 5, %v5751
          %v5753 = vrot.slane %v5723, %v5752
          %v5754 = vlaneseq
          %v5755 = vshrl.u32 %v5754, 7
          %v5756 = vsub.s32 6, %v5755
          %v5757 = vrot.slane %v5723, %v5756
          %v5758 = vlaneseq
          %v5759 = vshrl.u32 %v5758, 7
          %v5760 = vsub.s32 7, %v5759
          %v5761 = vrot.slane %v5723, %v5760
          %v5770 = vmul.f32 %v5727, %v5733
          %v5771 = vmul.f32 %v5727, %v5737
          %v5772 = vmul.f32 %v5727, %v5741
          %v5773 = vmul.f32 %v5727, %v5745
          %v5774 = vmul.f32 %v5727, %v5749
          %v5775 = vmul.f32 %v5727, %v5753
          %v5776 = vmul.f32 %v5727, %v5757
          %v5777 = vmul.f32 %v5727, %v5761
          %s5778 = scalar_lea.vmem [#allocation14], 1
          %v5779 = vld [vmem:[%s5778] ss:$2 sm:$0xff]
          %5780 = vset.pattern.permute.xlu0 1
          %5781 = vperm.xlu0 %5780, %v5722
          %v5782 = vpop.permute.xlu0 %5781
          %v5785 = vlaneseq
          %v5786 = vshrl.u32 %v5785, 7
          %v5787 = vsub.s32 0, %v5786
          %v5788 = vrot.slane %v5779, %v5787
          %v5789 = vlaneseq
          %v5790 = vshrl.u32 %v5789, 7
          %v5791 = vsub.s32 1, %v5790
          %v5792 = vrot.slane %v5779, %v5791
          %v5793 = vlaneseq
          %v5794 = vshrl.u32 %v5793, 7
          %v5795 = vsub.s32 2, %v5794
          %v5796 = vrot.slane %v5779, %v5795
          %v5797 = vlaneseq
          %v5798 = vshrl.u32 %v5797, 7
          %v5799 = vsub.s32 3, %v5798
          %v5800 = vrot.slane %v5779, %v5799
          %v5801 = vlaneseq
          %v5802 = vshrl.u32 %v5801, 7
          %v5803 = vsub.s32 4, %v5802
          %v5804 = vrot.slane %v5779, %v5803
          %v5805 = vlaneseq
          %v5806 = vshrl.u32 %v5805, 7
          %v5807 = vsub.s32 5, %v5806
          %v5808 = vrot.slane %v5779, %v5807
          %v5809 = vlaneseq
          %v5810 = vshrl.u32 %v5809, 7
          %v5811 = vsub.s32 6, %v5810
          %v5812 = vrot.slane %v5779, %v5811
          %v5813 = vlaneseq
          %v5814 = vshrl.u32 %v5813, 7
          %v5815 = vsub.s32 7, %v5814
          %v5816 = vrot.slane %v5779, %v5815
          %v5825 = vmul.f32 %v5782, %v5788
          %v5826 = vmul.f32 %v5782, %v5792
          %v5827 = vmul.f32 %v5782, %v5796
          %v5828 = vmul.f32 %v5782, %v5800
          %v5829 = vmul.f32 %v5782, %v5804
          %v5830 = vmul.f32 %v5782, %v5808
          %v5831 = vmul.f32 %v5782, %v5812
          %v5832 = vmul.f32 %v5782, %v5816
          %v5833 = vadd.f32 %v5770, %v5825
          %v5834 = vadd.f32 %v5771, %v5826
          %v5835 = vadd.f32 %v5772, %v5827
          %v5836 = vadd.f32 %v5773, %v5828
          %v5837 = vadd.f32 %v5774, %v5829
          %v5838 = vadd.f32 %v5775, %v5830
          %v5839 = vadd.f32 %v5776, %v5831
          %v5840 = vadd.f32 %v5777, %v5832
          %v5841 = vld [vmem:[#allocation2] sm:$0xff]
          %v5842 = vld [vmem:[#allocation2 + $0x8] sm:$0xff]
          %v5851 = vcombine.low %v5833, %v5834
          %v5852 = vcombine.low %v5835, %v5836
          %v5854 = vunpack.c.l.s4 1983009808
          %v5855 = vunpack.c.0.s8 %v5854
          %v5856 = vlaneseq
          %v5857 = vshrl.u32 %v5856, 7
          %v5858 = vsub.s32 %v5855, %v5857
          %v5859 = vrot.slane %v5851, %v5858
          %v5861 = vunpack.c.l.s4 1983009808
          %v5862 = vunpack.c.0.s8 %v5861
          %v5863 = vlaneseq
          %v5864 = vshrl.u32 %v5863, 7
          %v5865 = vsub.s32 %v5862, %v5864
          %v5866 = vrot.slane %v5852, %v5865
          %v5867 = vcombine.low %v5859, %v5866
          %v5868 = vcombine.low %v5837, %v5838
          %v5869 = vcombine.low %v5839, %v5840
          %v5871 = vunpack.c.l.s4 1983009808
          %v5872 = vunpack.c.0.s8 %v5871
          %v5873 = vlaneseq
          %v5874 = vshrl.u32 %v5873, 7
          %v5875 = vsub.s32 %v5872, %v5874
          %v5876 = vrot.slane %v5868, %v5875
          %v5878 = vunpack.c.l.s4 1983009808
          %v5879 = vunpack.c.0.s8 %v5878
          %v5880 = vlaneseq
          %v5881 = vshrl.u32 %v5880, 7
          %v5882 = vsub.s32 %v5879, %v5881
          %v5883 = vrot.slane %v5869, %v5882
          %v5884 = vcombine.low %v5876, %v5883
          %v5887 = vadd.f32 %v5841, %v5867
          %v5888 = vadd.f32 %v5842, %v5884
          %v5889 = vld [vmem:[#allocation15] sm:$0xff]
          %v5891 = vlaneseq
          %v5892 = vshrl.u32 %v5891, 7
          %v5893 = vsub.s32 0, %v5892
          %v5894 = vrot.slane %v5889, %v5893
          %v5895 = vlaneseq
          %v5896 = vshrl.u32 %v5895, 7
          %v5897 = vsub.s32 1, %v5896
          %v5898 = vrot.slane %v5889, %v5897
          %v5899 = vlaneseq
          %v5900 = vshrl.u32 %v5899, 7
          %v5901 = vsub.s32 2, %v5900
          %v5902 = vrot.slane %v5889, %v5901
          %v5903 = vlaneseq
          %v5904 = vshrl.u32 %v5903, 7
          %v5905 = vsub.s32 3, %v5904
          %v5906 = vrot.slane %v5889, %v5905
          %v5907 = vlaneseq
          %v5908 = vshrl.u32 %v5907, 7
          %v5909 = vsub.s32 4, %v5908
          %v5910 = vrot.slane %v5889, %v5909
          %v5911 = vlaneseq
          %v5912 = vshrl.u32 %v5911, 7
          %v5913 = vsub.s32 5, %v5912
          %v5914 = vrot.slane %v5889, %v5913
          %v5915 = vlaneseq
          %v5916 = vshrl.u32 %v5915, 7
          %v5917 = vsub.s32 6, %v5916
          %v5918 = vrot.slane %v5889, %v5917
          %v5919 = vlaneseq
          %v5920 = vshrl.u32 %v5919, 7
          %v5921 = vsub.s32 7, %v5920
          %v5922 = vrot.slane %v5889, %v5921
          %v5923 = vcombine.low %v5894, %v5898
          %v5924 = vcombine.low %v5902, %v5906
          %v5926 = vunpack.c.l.s4 1983009808
          %v5927 = vunpack.c.0.s8 %v5926
          %v5928 = vlaneseq
          %v5929 = vshrl.u32 %v5928, 7
          %v5930 = vsub.s32 %v5927, %v5929
          %v5931 = vrot.slane %v5923, %v5930
          %v5933 = vunpack.c.l.s4 1983009808
          %v5934 = vunpack.c.0.s8 %v5933
          %v5935 = vlaneseq
          %v5936 = vshrl.u32 %v5935, 7
          %v5937 = vsub.s32 %v5934, %v5936
          %v5938 = vrot.slane %v5924, %v5937
          %v5939 = vcombine.low %v5931, %v5938
          %v5940 = vcombine.low %v5910, %v5914
          %v5941 = vcombine.low %v5918, %v5922
          %v5943 = vunpack.c.l.s4 1983009808
          %v5944 = vunpack.c.0.s8 %v5943
          %v5945 = vlaneseq
          %v5946 = vshrl.u32 %v5945, 7
          %v5947 = vsub.s32 %v5944, %v5946
          %v5948 = vrot.slane %v5940, %v5947
          %v5950 = vunpack.c.l.s4 1983009808
          %v5951 = vunpack.c.0.s8 %v5950
          %v5952 = vlaneseq
          %v5953 = vshrl.u32 %v5952, 7
          %v5954 = vsub.s32 %v5951, %v5953
          %v5955 = vrot.slane %v5941, %v5954
          %v5956 = vcombine.low %v5948, %v5955
          %v5959 = vadd.f32 %v5887, %v5939
          %v5960 = vadd.f32 %v5888, %v5956
          %v5961 = vmax.f32 %v5959, 0.0
          %v5962 = vmax.f32 %v5960, 0.0
          %v5965 = vcombine.high %v5961, %v5961
          %v5967 = vunpack.c.l.s4 1983009808
          %v5968 = vunpack.c.0.s8 %v5967
          %v5969 = vlaneseq
          %v5970 = vshrl.u32 %v5969, 7
          %v5971 = vsub.s32 %v5968, %v5970
          %v5972 = vrot.slane %v5961, %v5971
          %v5974 = vunpack.c.l.s4 1983009808
          %v5975 = vunpack.c.0.s8 %v5974
          %v5976 = vlaneseq
          %v5977 = vshrl.u32 %v5976, 7
          %v5978 = vsub.s32 %v5975, %v5977
          %v5979 = vrot.slane %v5965, %v5978
          %v5980 = vcombine.high %v5972, %v5972
          %v5981 = vcombine.high %v5979, %v5979
          %v5982 = vcombine.high %v5962, %v5962
          %v5984 = vunpack.c.l.s4 1983009808
          %v5985 = vunpack.c.0.s8 %v5984
          %v5986 = vlaneseq
          %v5987 = vshrl.u32 %v5986, 7
          %v5988 = vsub.s32 %v5985, %v5987
          %v5989 = vrot.slane %v5962, %v5988
          %v5991 = vunpack.c.l.s4 1983009808
          %v5992 = vunpack.c.0.s8 %v5991
          %v5993 = vlaneseq
          %v5994 = vshrl.u32 %v5993, 7
          %v5995 = vsub.s32 %v5992, %v5994
          %v5996 = vrot.slane %v5982, %v5995
          %v5997 = vcombine.high %v5989, %v5989
          %v5998 = vcombine.high %v5996, %v5996
          %v6007 = vpack.c.bf16 %v5972, %v5972
          %v6008 = vpack.c.bf16 %v5980, %v5980
          %v6009 = vpack.c.bf16 %v5979, %v5979
          %v6010 = vpack.c.bf16 %v5981, %v5981
          %v6011 = vpack.c.bf16 %v5989, %v5989
          %v6012 = vpack.c.bf16 %v5997, %v5997
          %v6013 = vpack.c.bf16 %v5996, %v5996
          %v6014 = vpack.c.bf16 %v5998, %v5998
          %v6015 = vld [vmem:[#allocation3] sm:$0xff]
          %v6016 = vld [vmem:[#allocation3 + $0x8] sm:$0xff]
          %v6017 = vld [vmem:[#allocation3 + $0x10] sm:$0xff]
          %v6018 = vld [vmem:[#allocation3 + $0x18] sm:$0xff]
          %v6019 = vld [vmem:[#allocation3 + $0x20] sm:$0xff]
          %v6020 = vld [vmem:[#allocation3 + $0x28] sm:$0xff]
          %v6021 = vld [vmem:[#allocation3 + $0x30] sm:$0xff]
          %v6022 = vld [vmem:[#allocation3 + $0x38] sm:$0xff]
          %v6023 = vld [vmem:[#allocation3 + $0x40] sm:$0xff]
          %v6024 = vld [vmem:[#allocation3 + $0x48] sm:$0xff]
          %v6025 = vld [vmem:[#allocation3 + $0x50] sm:$0xff]
          %v6026 = vld [vmem:[#allocation3 + $0x58] sm:$0xff]
          %v6027 = vld [vmem:[#allocation3 + $0x60] sm:$0xff]
          %v6028 = vld [vmem:[#allocation3 + $0x68] sm:$0xff]
          %v6029 = vld [vmem:[#allocation3 + $0x70] sm:$0xff]
          %v6030 = vld [vmem:[#allocation3 + $0x78] sm:$0xff]
          %v6031 = vld [vmem:[#allocation3 + $0x80] sm:$0xff]
          %v6032 = vld [vmem:[#allocation3 + $0x88] sm:$0xff]
          %v6033 = vld [vmem:[#allocation3 + $0x90] sm:$0xff]
          %v6034 = vld [vmem:[#allocation3 + $0x98] sm:$0xff]
          %v6035 = vld [vmem:[#allocation3 + $0xa0] sm:$0xff]
          %v6036 = vld [vmem:[#allocation3 + $0xa8] sm:$0xff]
          %v6037 = vld [vmem:[#allocation3 + $0xb0] sm:$0xff]
          %v6038 = vld [vmem:[#allocation3 + $0xb8] sm:$0xff]
          %v6039 = vld [vmem:[#allocation3 + $0xc0] sm:$0xff]
          %v6040 = vld [vmem:[#allocation3 + $0xc8] sm:$0xff]
          %v6041 = vld [vmem:[#allocation3 + $0xd0] sm:$0xff]
          %v6042 = vld [vmem:[#allocation3 + $0xd8] sm:$0xff]
          %v6043 = vld [vmem:[#allocation3 + $0xe0] sm:$0xff]
          %v6044 = vld [vmem:[#allocation3 + $0xe8] sm:$0xff]
          %v6045 = vld [vmem:[#allocation3 + $0xf0] sm:$0xff]
          %v6046 = vld [vmem:[#allocation3 + $0xf8] sm:$0xff]
          %v6047 = vld [vmem:[#allocation3 + $0x100] sm:$0xff]
          %v6048 = vld [vmem:[#allocation3 + $0x108] sm:$0xff]
          %v6049 = vld [vmem:[#allocation3 + $0x110] sm:$0xff]
          %v6050 = vld [vmem:[#allocation3 + $0x118] sm:$0xff]
          %v6051 = vld [vmem:[#allocation3 + $0x120] sm:$0xff]
          %v6052 = vld [vmem:[#allocation3 + $0x128] sm:$0xff]
          %v6053 = vld [vmem:[#allocation3 + $0x130] sm:$0xff]
          %v6054 = vld [vmem:[#allocation3 + $0x138] sm:$0xff]
          %v6055 = vld [vmem:[#allocation3 + $0x140] sm:$0xff]
          %v6056 = vld [vmem:[#allocation3 + $0x148] sm:$0xff]
          %v6057 = vld [vmem:[#allocation3 + $0x150] sm:$0xff]
          %v6058 = vld [vmem:[#allocation3 + $0x158] sm:$0xff]
          %v6059 = vld [vmem:[#allocation3 + $0x160] sm:$0xff]
          %v6060 = vld [vmem:[#allocation3 + $0x168] sm:$0xff]
          %v6061 = vld [vmem:[#allocation3 + $0x170] sm:$0xff]
          %v6062 = vld [vmem:[#allocation3 + $0x178] sm:$0xff]
          %v6063 = vld [vmem:[#allocation3 + $0x180] sm:$0xff]
          %v6064 = vld [vmem:[#allocation3 + $0x188] sm:$0xff]
          %v6065 = vld [vmem:[#allocation3 + $0x190] sm:$0xff]
          %v6066 = vld [vmem:[#allocation3 + $0x198] sm:$0xff]
          %v6067 = vld [vmem:[#allocation3 + $0x1a0] sm:$0xff]
          %v6068 = vld [vmem:[#allocation3 + $0x1a8] sm:$0xff]
          %v6069 = vld [vmem:[#allocation3 + $0x1b0] sm:$0xff]
          %v6070 = vld [vmem:[#allocation3 + $0x1b8] sm:$0xff]
          %v6071 = vld [vmem:[#allocation3 + $0x1c0] sm:$0xff]
          %v6072 = vld [vmem:[#allocation3 + $0x1c8] sm:$0xff]
          %v6073 = vld [vmem:[#allocation3 + $0x1d0] sm:$0xff]
          %v6074 = vld [vmem:[#allocation3 + $0x1d8] sm:$0xff]
          %v6075 = vld [vmem:[#allocation3 + $0x1e0] sm:$0xff]
          %v6076 = vld [vmem:[#allocation3 + $0x1e8] sm:$0xff]
          %v6077 = vld [vmem:[#allocation3 + $0x1f0] sm:$0xff]
          %v6078 = vld [vmem:[#allocation3 + $0x1f8] sm:$0xff]
          %v6079 = vld [vmem:[#allocation3 + $0x200] sm:$0xff]
          %v6080 = vld [vmem:[#allocation3 + $0x208] sm:$0xff]
          %v6081 = vld [vmem:[#allocation3 + $0x210] sm:$0xff]
          %v6082 = vld [vmem:[#allocation3 + $0x218] sm:$0xff]
          %v6083 = vld [vmem:[#allocation3 + $0x220] sm:$0xff]
          %v6084 = vld [vmem:[#allocation3 + $0x228] sm:$0xff]
          %v6085 = vld [vmem:[#allocation3 + $0x230] sm:$0xff]
          %v6086 = vld [vmem:[#allocation3 + $0x238] sm:$0xff]
          %v6087 = vld [vmem:[#allocation3 + $0x240] sm:$0xff]
          %v6088 = vld [vmem:[#allocation3 + $0x248] sm:$0xff]
          %v6089 = vld [vmem:[#allocation3 + $0x250] sm:$0xff]
          %v6090 = vld [vmem:[#allocation3 + $0x258] sm:$0xff]
          %v6091 = vld [vmem:[#allocation3 + $0x260] sm:$0xff]
          %v6092 = vld [vmem:[#allocation3 + $0x268] sm:$0xff]
          %v6093 = vld [vmem:[#allocation3 + $0x270] sm:$0xff]
          %v6094 = vld [vmem:[#allocation3 + $0x278] sm:$0xff]
          %v6095 = vld [vmem:[#allocation3 + $0x280] sm:$0xff]
          %v6096 = vld [vmem:[#allocation3 + $0x288] sm:$0xff]
          %v6097 = vld [vmem:[#allocation3 + $0x290] sm:$0xff]
          %v6098 = vld [vmem:[#allocation3 + $0x298] sm:$0xff]
          %v6099 = vld [vmem:[#allocation3 + $0x2a0] sm:$0xff]
          %v6100 = vld [vmem:[#allocation3 + $0x2a8] sm:$0xff]
          %v6101 = vld [vmem:[#allocation3 + $0x2b0] sm:$0xff]
          %v6102 = vld [vmem:[#allocation3 + $0x2b8] sm:$0xff]
          %v6103 = vld [vmem:[#allocation3 + $0x2c0] sm:$0xff]
          %v6104 = vld [vmem:[#allocation3 + $0x2c8] sm:$0xff]
          %v6105 = vld [vmem:[#allocation3 + $0x2d0] sm:$0xff]
          %v6106 = vld [vmem:[#allocation3 + $0x2d8] sm:$0xff]
          %v6107 = vld [vmem:[#allocation3 + $0x2e0] sm:$0xff]
          %v6108 = vld [vmem:[#allocation3 + $0x2e8] sm:$0xff]
          %v6109 = vld [vmem:[#allocation3 + $0x2f0] sm:$0xff]
          %v6110 = vld [vmem:[#allocation3 + $0x2f8] sm:$0xff]
          %v6111 = vld [vmem:[#allocation3 + $0x300] sm:$0xff]
          %v6112 = vld [vmem:[#allocation3 + $0x308] sm:$0xff]
          %v6113 = vld [vmem:[#allocation3 + $0x310] sm:$0xff]
          %v6114 = vld [vmem:[#allocation3 + $0x318] sm:$0xff]
          %v6115 = vld [vmem:[#allocation3 + $0x320] sm:$0xff]
          %v6116 = vld [vmem:[#allocation3 + $0x328] sm:$0xff]
          %v6117 = vld [vmem:[#allocation3 + $0x330] sm:$0xff]
          %v6118 = vld [vmem:[#allocation3 + $0x338] sm:$0xff]
          %v6119 = vld [vmem:[#allocation3 + $0x340] sm:$0xff]
          %v6120 = vld [vmem:[#allocation3 + $0x348] sm:$0xff]
          %v6121 = vld [vmem:[#allocation3 + $0x350] sm:$0xff]
          %v6122 = vld [vmem:[#allocation3 + $0x358] sm:$0xff]
          %v6123 = vld [vmem:[#allocation3 + $0x360] sm:$0xff]
          %v6124 = vld [vmem:[#allocation3 + $0x368] sm:$0xff]
          %v6125 = vld [vmem:[#allocation3 + $0x370] sm:$0xff]
          %v6126 = vld [vmem:[#allocation3 + $0x378] sm:$0xff]
          %v6127 = vld [vmem:[#allocation3 + $0x380] sm:$0xff]
          %v6128 = vld [vmem:[#allocation3 + $0x388] sm:$0xff]
          %v6129 = vld [vmem:[#allocation3 + $0x390] sm:$0xff]
          %v6130 = vld [vmem:[#allocation3 + $0x398] sm:$0xff]
          %v6131 = vld [vmem:[#allocation3 + $0x3a0] sm:$0xff]
          %v6132 = vld [vmem:[#allocation3 + $0x3a8] sm:$0xff]
          %v6133 = vld [vmem:[#allocation3 + $0x3b0] sm:$0xff]
          %v6134 = vld [vmem:[#allocation3 + $0x3b8] sm:$0xff]
          %v6135 = vld [vmem:[#allocation3 + $0x3c0] sm:$0xff]
          %v6136 = vld [vmem:[#allocation3 + $0x3c8] sm:$0xff]
          %v6137 = vld [vmem:[#allocation3 + $0x3d0] sm:$0xff]
          %v6138 = vld [vmem:[#allocation3 + $0x3d8] sm:$0xff]
          %v6139 = vld [vmem:[#allocation3 + $0x3e0] sm:$0xff]
          %v6140 = vld [vmem:[#allocation3 + $0x3e8] sm:$0xff]
          %v6141 = vld [vmem:[#allocation3 + $0x3f0] sm:$0xff]
          %v6142 = vld [vmem:[#allocation3 + $0x3f8] sm:$0xff]
          %v6143 = vld [vmem:[#allocation3 + $0x400] sm:$0xff]
          %v6144 = vld [vmem:[#allocation3 + $0x408] sm:$0xff]
          %v6145 = vld [vmem:[#allocation3 + $0x410] sm:$0xff]
          %v6146 = vld [vmem:[#allocation3 + $0x418] sm:$0xff]
          %v6147 = vld [vmem:[#allocation3 + $0x420] sm:$0xff]
          %v6148 = vld [vmem:[#allocation3 + $0x428] sm:$0xff]
          %v6149 = vld [vmem:[#allocation3 + $0x430] sm:$0xff]
          %v6150 = vld [vmem:[#allocation3 + $0x438] sm:$0xff]
          %v6151 = vld [vmem:[#allocation3 + $0x440] sm:$0xff]
          %v6152 = vld [vmem:[#allocation3 + $0x448] sm:$0xff]
          %v6153 = vld [vmem:[#allocation3 + $0x450] sm:$0xff]
          %v6154 = vld [vmem:[#allocation3 + $0x458] sm:$0xff]
          %v6155 = vld [vmem:[#allocation3 + $0x460] sm:$0xff]
          %v6156 = vld [vmem:[#allocation3 + $0x468] sm:$0xff]
          %v6157 = vld [vmem:[#allocation3 + $0x470] sm:$0xff]
          %v6158 = vld [vmem:[#allocation3 + $0x478] sm:$0xff]
          %v6159 = vld [vmem:[#allocation3 + $0x480] sm:$0xff]
          %v6160 = vld [vmem:[#allocation3 + $0x488] sm:$0xff]
          %v6161 = vld [vmem:[#allocation3 + $0x490] sm:$0xff]
          %v6162 = vld [vmem:[#allocation3 + $0x498] sm:$0xff]
          %v6163 = vld [vmem:[#allocation3 + $0x4a0] sm:$0xff]
          %v6164 = vld [vmem:[#allocation3 + $0x4a8] sm:$0xff]
          %v6165 = vld [vmem:[#allocation3 + $0x4b0] sm:$0xff]
          %v6166 = vld [vmem:[#allocation3 + $0x4b8] sm:$0xff]
          %v6167 = vld [vmem:[#allocation3 + $0x4c0] sm:$0xff]
          %v6168 = vld [vmem:[#allocation3 + $0x4c8] sm:$0xff]
          %v6169 = vld [vmem:[#allocation3 + $0x4d0] sm:$0xff]
          %v6170 = vld [vmem:[#allocation3 + $0x4d8] sm:$0xff]
          %v6171 = vld [vmem:[#allocation3 + $0x4e0] sm:$0xff]
          %v6172 = vld [vmem:[#allocation3 + $0x4e8] sm:$0xff]
          %v6173 = vld [vmem:[#allocation3 + $0x4f0] sm:$0xff]
          %v6174 = vld [vmem:[#allocation3 + $0x4f8] sm:$0xff]
          %v6175 = vld [vmem:[#allocation3 + $0x500] sm:$0xff]
          %v6176 = vld [vmem:[#allocation3 + $0x508] sm:$0xff]
          %v6177 = vld [vmem:[#allocation3 + $0x510] sm:$0xff]
          %v6178 = vld [vmem:[#allocation3 + $0x518] sm:$0xff]
          %v6179 = vld [vmem:[#allocation3 + $0x520] sm:$0xff]
          %v6180 = vld [vmem:[#allocation3 + $0x528] sm:$0xff]
          %v6181 = vld [vmem:[#allocation3 + $0x530] sm:$0xff]
          %v6182 = vld [vmem:[#allocation3 + $0x538] sm:$0xff]
          %v6183 = vld [vmem:[#allocation3 + $0x540] sm:$0xff]
          %v6184 = vld [vmem:[#allocation3 + $0x548] sm:$0xff]
          %v6185 = vld [vmem:[#allocation3 + $0x550] sm:$0xff]
          %v6186 = vld [vmem:[#allocation3 + $0x558] sm:$0xff]
          %v6187 = vld [vmem:[#allocation3 + $0x560] sm:$0xff]
          %v6188 = vld [vmem:[#allocation3 + $0x568] sm:$0xff]
          %v6189 = vld [vmem:[#allocation3 + $0x570] sm:$0xff]
          %v6190 = vld [vmem:[#allocation3 + $0x578] sm:$0xff]
          %v6191 = vld [vmem:[#allocation3 + $0x580] sm:$0xff]
          %v6192 = vld [vmem:[#allocation3 + $0x588] sm:$0xff]
          %v6193 = vld [vmem:[#allocation3 + $0x590] sm:$0xff]
          %v6194 = vld [vmem:[#allocation3 + $0x598] sm:$0xff]
          %v6195 = vld [vmem:[#allocation3 + $0x5a0] sm:$0xff]
          %v6196 = vld [vmem:[#allocation3 + $0x5a8] sm:$0xff]
          %v6197 = vld [vmem:[#allocation3 + $0x5b0] sm:$0xff]
          %v6198 = vld [vmem:[#allocation3 + $0x5b8] sm:$0xff]
          %v6199 = vld [vmem:[#allocation3 + $0x5c0] sm:$0xff]
          %v6200 = vld [vmem:[#allocation3 + $0x5c8] sm:$0xff]
          %v6201 = vld [vmem:[#allocation3 + $0x5d0] sm:$0xff]
          %v6202 = vld [vmem:[#allocation3 + $0x5d8] sm:$0xff]
          %v6203 = vld [vmem:[#allocation3 + $0x5e0] sm:$0xff]
          %v6204 = vld [vmem:[#allocation3 + $0x5e8] sm:$0xff]
          %v6205 = vld [vmem:[#allocation3 + $0x5f0] sm:$0xff]
          %v6206 = vld [vmem:[#allocation3 + $0x5f8] sm:$0xff]
          %v6207 = vld [vmem:[#allocation3 + $0x600] sm:$0xff]
          %v6208 = vld [vmem:[#allocation3 + $0x608] sm:$0xff]
          %v6209 = vld [vmem:[#allocation3 + $0x610] sm:$0xff]
          %v6210 = vld [vmem:[#allocation3 + $0x618] sm:$0xff]
          %v6211 = vld [vmem:[#allocation3 + $0x620] sm:$0xff]
          %v6212 = vld [vmem:[#allocation3 + $0x628] sm:$0xff]
          %v6213 = vld [vmem:[#allocation3 + $0x630] sm:$0xff]
          %v6214 = vld [vmem:[#allocation3 + $0x638] sm:$0xff]
          %v6215 = vld [vmem:[#allocation3 + $0x640] sm:$0xff]
          %v6216 = vld [vmem:[#allocation3 + $0x648] sm:$0xff]
          %v6217 = vld [vmem:[#allocation3 + $0x650] sm:$0xff]
          %v6218 = vld [vmem:[#allocation3 + $0x658] sm:$0xff]
          %v6219 = vld [vmem:[#allocation3 + $0x660] sm:$0xff]
          %v6220 = vld [vmem:[#allocation3 + $0x668] sm:$0xff]
          %v6221 = vld [vmem:[#allocation3 + $0x670] sm:$0xff]
          %v6222 = vld [vmem:[#allocation3 + $0x678] sm:$0xff]
          %v6223 = vld [vmem:[#allocation3 + $0x680] sm:$0xff]
          %v6224 = vld [vmem:[#allocation3 + $0x688] sm:$0xff]
          %v6225 = vld [vmem:[#allocation3 + $0x690] sm:$0xff]
          %v6226 = vld [vmem:[#allocation3 + $0x698] sm:$0xff]
          %v6227 = vld [vmem:[#allocation3 + $0x6a0] sm:$0xff]
          %v6228 = vld [vmem:[#allocation3 + $0x6a8] sm:$0xff]
          %v6229 = vld [vmem:[#allocation3 + $0x6b0] sm:$0xff]
          %v6230 = vld [vmem:[#allocation3 + $0x6b8] sm:$0xff]
          %v6231 = vld [vmem:[#allocation3 + $0x6c0] sm:$0xff]
          %v6232 = vld [vmem:[#allocation3 + $0x6c8] sm:$0xff]
          %v6233 = vld [vmem:[#allocation3 + $0x6d0] sm:$0xff]
          %v6234 = vld [vmem:[#allocation3 + $0x6d8] sm:$0xff]
          %v6235 = vld [vmem:[#allocation3 + $0x6e0] sm:$0xff]
          %v6236 = vld [vmem:[#allocation3 + $0x6e8] sm:$0xff]
          %v6237 = vld [vmem:[#allocation3 + $0x6f0] sm:$0xff]
          %v6238 = vld [vmem:[#allocation3 + $0x6f8] sm:$0xff]
          %v6239 = vld [vmem:[#allocation3 + $0x700] sm:$0xff]
          %v6240 = vld [vmem:[#allocation3 + $0x708] sm:$0xff]
          %v6241 = vld [vmem:[#allocation3 + $0x710] sm:$0xff]
          %v6242 = vld [vmem:[#allocation3 + $0x718] sm:$0xff]
          %v6243 = vld [vmem:[#allocation3 + $0x720] sm:$0xff]
          %v6244 = vld [vmem:[#allocation3 + $0x728] sm:$0xff]
          %v6245 = vld [vmem:[#allocation3 + $0x730] sm:$0xff]
          %v6246 = vld [vmem:[#allocation3 + $0x738] sm:$0xff]
          %v6247 = vld [vmem:[#allocation3 + $0x740] sm:$0xff]
          %v6248 = vld [vmem:[#allocation3 + $0x748] sm:$0xff]
          %v6249 = vld [vmem:[#allocation3 + $0x750] sm:$0xff]
          %v6250 = vld [vmem:[#allocation3 + $0x758] sm:$0xff]
          %v6251 = vld [vmem:[#allocation3 + $0x760] sm:$0xff]
          %v6252 = vld [vmem:[#allocation3 + $0x768] sm:$0xff]
          %v6253 = vld [vmem:[#allocation3 + $0x770] sm:$0xff]
          %v6254 = vld [vmem:[#allocation3 + $0x778] sm:$0xff]
          %v6255 = vld [vmem:[#allocation3 + $0x780] sm:$0xff]
          %v6256 = vld [vmem:[#allocation3 + $0x788] sm:$0xff]
          %v6257 = vld [vmem:[#allocation3 + $0x790] sm:$0xff]
          %v6258 = vld [vmem:[#allocation3 + $0x798] sm:$0xff]
          %v6259 = vld [vmem:[#allocation3 + $0x7a0] sm:$0xff]
          %v6260 = vld [vmem:[#allocation3 + $0x7a8] sm:$0xff]
          %v6261 = vld [vmem:[#allocation3 + $0x7b0] sm:$0xff]
          %v6262 = vld [vmem:[#allocation3 + $0x7b8] sm:$0xff]
          %v6263 = vld [vmem:[#allocation3 + $0x7c0] sm:$0xff]
          %v6264 = vld [vmem:[#allocation3 + $0x7c8] sm:$0xff]
          %v6265 = vld [vmem:[#allocation3 + $0x7d0] sm:$0xff]
          %v6266 = vld [vmem:[#allocation3 + $0x7d8] sm:$0xff]
          %v6267 = vld [vmem:[#allocation3 + $0x7e0] sm:$0xff]
          %v6268 = vld [vmem:[#allocation3 + $0x7e8] sm:$0xff]
          %v6269 = vld [vmem:[#allocation3 + $0x7f0] sm:$0xff]
          %v6270 = vld [vmem:[#allocation3 + $0x7f8] sm:$0xff]
          %v6271 = vld [vmem:[#allocation3 + $0x800] sm:$0xff]
          %v6272 = vld [vmem:[#allocation3 + $0x808] sm:$0xff]
          %v6273 = vld [vmem:[#allocation3 + $0x810] sm:$0xff]
          %v6274 = vld [vmem:[#allocation3 + $0x818] sm:$0xff]
          %v6275 = vld [vmem:[#allocation3 + $0x820] sm:$0xff]
          %v6276 = vld [vmem:[#allocation3 + $0x828] sm:$0xff]
          %v6277 = vld [vmem:[#allocation3 + $0x830] sm:$0xff]
          %v6278 = vld [vmem:[#allocation3 + $0x838] sm:$0xff]
          %v6279 = vld [vmem:[#allocation3 + $0x840] sm:$0xff]
          %v6280 = vld [vmem:[#allocation3 + $0x848] sm:$0xff]
          %v6281 = vld [vmem:[#allocation3 + $0x850] sm:$0xff]
          %v6282 = vld [vmem:[#allocation3 + $0x858] sm:$0xff]
          %v6283 = vld [vmem:[#allocation3 + $0x860] sm:$0xff]
          %v6284 = vld [vmem:[#allocation3 + $0x868] sm:$0xff]
          %v6285 = vld [vmem:[#allocation3 + $0x870] sm:$0xff]
          %v6286 = vld [vmem:[#allocation3 + $0x878] sm:$0xff]
          %v6287 = vld [vmem:[#allocation3 + $0x880] sm:$0xff]
          %v6288 = vld [vmem:[#allocation3 + $0x888] sm:$0xff]
          %v6289 = vld [vmem:[#allocation3 + $0x890] sm:$0xff]
          %v6290 = vld [vmem:[#allocation3 + $0x898] sm:$0xff]
          %v6291 = vld [vmem:[#allocation3 + $0x8a0] sm:$0xff]
          %v6292 = vld [vmem:[#allocation3 + $0x8a8] sm:$0xff]
          %v6293 = vld [vmem:[#allocation3 + $0x8b0] sm:$0xff]
          %v6294 = vld [vmem:[#allocation3 + $0x8b8] sm:$0xff]
          %v6295 = vld [vmem:[#allocation3 + $0x8c0] sm:$0xff]
          %v6296 = vld [vmem:[#allocation3 + $0x8c8] sm:$0xff]
          %v6297 = vld [vmem:[#allocation3 + $0x8d0] sm:$0xff]
          %v6298 = vld [vmem:[#allocation3 + $0x8d8] sm:$0xff]
          %v6299 = vld [vmem:[#allocation3 + $0x8e0] sm:$0xff]
          %v6300 = vld [vmem:[#allocation3 + $0x8e8] sm:$0xff]
          %v6301 = vld [vmem:[#allocation3 + $0x8f0] sm:$0xff]
          %v6302 = vld [vmem:[#allocation3 + $0x8f8] sm:$0xff]
          %v6303 = vld [vmem:[#allocation3 + $0x900] sm:$0xff]
          %v6304 = vld [vmem:[#allocation3 + $0x908] sm:$0xff]
          %v6305 = vld [vmem:[#allocation3 + $0x910] sm:$0xff]
          %v6306 = vld [vmem:[#allocation3 + $0x918] sm:$0xff]
          %v6307 = vld [vmem:[#allocation3 + $0x920] sm:$0xff]
          %v6308 = vld [vmem:[#allocation3 + $0x928] sm:$0xff]
          %v6309 = vld [vmem:[#allocation3 + $0x930] sm:$0xff]
          %v6310 = vld [vmem:[#allocation3 + $0x938] sm:$0xff]
          %v6311 = vld [vmem:[#allocation3 + $0x940] sm:$0xff]
          %v6312 = vld [vmem:[#allocation3 + $0x948] sm:$0xff]
          %v6313 = vld [vmem:[#allocation3 + $0x950] sm:$0xff]
          %v6314 = vld [vmem:[#allocation3 + $0x958] sm:$0xff]
          %v6315 = vld [vmem:[#allocation3 + $0x960] sm:$0xff]
          %v6316 = vld [vmem:[#allocation3 + $0x968] sm:$0xff]
          %v6317 = vld [vmem:[#allocation3 + $0x970] sm:$0xff]
          %v6318 = vld [vmem:[#allocation3 + $0x978] sm:$0xff]
          %v6319 = vld [vmem:[#allocation3 + $0x980] sm:$0xff]
          %v6320 = vld [vmem:[#allocation3 + $0x988] sm:$0xff]
          %v6321 = vld [vmem:[#allocation3 + $0x990] sm:$0xff]
          %v6322 = vld [vmem:[#allocation3 + $0x998] sm:$0xff]
          %v6323 = vld [vmem:[#allocation3 + $0x9a0] sm:$0xff]
          %v6324 = vld [vmem:[#allocation3 + $0x9a8] sm:$0xff]
          %v6325 = vld [vmem:[#allocation3 + $0x9b0] sm:$0xff]
          %v6326 = vld [vmem:[#allocation3 + $0x9b8] sm:$0xff]
          %v6327 = vld [vmem:[#allocation3 + $0x9c0] sm:$0xff]
          %v6328 = vld [vmem:[#allocation3 + $0x9c8] sm:$0xff]
          %v6329 = vld [vmem:[#allocation3 + $0x9d0] sm:$0xff]
          %v6330 = vld [vmem:[#allocation3 + $0x9d8] sm:$0xff]
          %v6331 = vld [vmem:[#allocation3 + $0x9e0] sm:$0xff]
          %v6332 = vld [vmem:[#allocation3 + $0x9e8] sm:$0xff]
          %v6333 = vld [vmem:[#allocation3 + $0x9f0] sm:$0xff]
          %v6334 = vld [vmem:[#allocation3 + $0x9f8] sm:$0xff]
          %v6335 = vld [vmem:[#allocation3 + $0xa00] sm:$0xff]
          %v6336 = vld [vmem:[#allocation3 + $0xa08] sm:$0xff]
          %v6337 = vld [vmem:[#allocation3 + $0xa10] sm:$0xff]
          %v6338 = vld [vmem:[#allocation3 + $0xa18] sm:$0xff]
          %v6339 = vld [vmem:[#allocation3 + $0xa20] sm:$0xff]
          %v6340 = vld [vmem:[#allocation3 + $0xa28] sm:$0xff]
          %v6341 = vld [vmem:[#allocation3 + $0xa30] sm:$0xff]
          %v6342 = vld [vmem:[#allocation3 + $0xa38] sm:$0xff]
          %v6343 = vld [vmem:[#allocation3 + $0xa40] sm:$0xff]
          %v6344 = vld [vmem:[#allocation3 + $0xa48] sm:$0xff]
          %v6345 = vld [vmem:[#allocation3 + $0xa50] sm:$0xff]
          %v6346 = vld [vmem:[#allocation3 + $0xa58] sm:$0xff]
          %v6347 = vld [vmem:[#allocation3 + $0xa60] sm:$0xff]
          %v6348 = vld [vmem:[#allocation3 + $0xa68] sm:$0xff]
          %v6349 = vld [vmem:[#allocation3 + $0xa70] sm:$0xff]
          %v6350 = vld [vmem:[#allocation3 + $0xa78] sm:$0xff]
          %v6351 = vld [vmem:[#allocation3 + $0xa80] sm:$0xff]
          %v6352 = vld [vmem:[#allocation3 + $0xa88] sm:$0xff]
          %v6353 = vld [vmem:[#allocation3 + $0xa90] sm:$0xff]
          %v6354 = vld [vmem:[#allocation3 + $0xa98] sm:$0xff]
          %v6355 = vld [vmem:[#allocation3 + $0xaa0] sm:$0xff]
          %v6356 = vld [vmem:[#allocation3 + $0xaa8] sm:$0xff]
          %v6357 = vld [vmem:[#allocation3 + $0xab0] sm:$0xff]
          %v6358 = vld [vmem:[#allocation3 + $0xab8] sm:$0xff]
          %v6359 = vld [vmem:[#allocation3 + $0xac0] sm:$0xff]
          %v6360 = vld [vmem:[#allocation3 + $0xac8] sm:$0xff]
          %v6361 = vld [vmem:[#allocation3 + $0xad0] sm:$0xff]
          %v6362 = vld [vmem:[#allocation3 + $0xad8] sm:$0xff]
          %v6363 = vld [vmem:[#allocation3 + $0xae0] sm:$0xff]
          %v6364 = vld [vmem:[#allocation3 + $0xae8] sm:$0xff]
          %v6365 = vld [vmem:[#allocation3 + $0xaf0] sm:$0xff]
          %v6366 = vld [vmem:[#allocation3 + $0xaf8] sm:$0xff]
          %v6367 = vld [vmem:[#allocation3 + $0xb00] sm:$0xff]
          %v6368 = vld [vmem:[#allocation3 + $0xb08] sm:$0xff]
          %v6369 = vld [vmem:[#allocation3 + $0xb10] sm:$0xff]
          %v6370 = vld [vmem:[#allocation3 + $0xb18] sm:$0xff]
          %v6371 = vld [vmem:[#allocation3 + $0xb20] sm:$0xff]
          %v6372 = vld [vmem:[#allocation3 + $0xb28] sm:$0xff]
          %v6373 = vld [vmem:[#allocation3 + $0xb30] sm:$0xff]
          %v6374 = vld [vmem:[#allocation3 + $0xb38] sm:$0xff]
          %v6375 = vld [vmem:[#allocation3 + $0xb40] sm:$0xff]
          %v6376 = vld [vmem:[#allocation3 + $0xb48] sm:$0xff]
          %v6377 = vld [vmem:[#allocation3 + $0xb50] sm:$0xff]
          %v6378 = vld [vmem:[#allocation3 + $0xb58] sm:$0xff]
          %v6379 = vld [vmem:[#allocation3 + $0xb60] sm:$0xff]
          %v6380 = vld [vmem:[#allocation3 + $0xb68] sm:$0xff]
          %v6381 = vld [vmem:[#allocation3 + $0xb70] sm:$0xff]
          %v6382 = vld [vmem:[#allocation3 + $0xb78] sm:$0xff]
          %v6383 = vld [vmem:[#allocation3 + $0xb80] sm:$0xff]
          %v6384 = vld [vmem:[#allocation3 + $0xb88] sm:$0xff]
          %v6385 = vld [vmem:[#allocation3 + $0xb90] sm:$0xff]
          %v6386 = vld [vmem:[#allocation3 + $0xb98] sm:$0xff]
          %v6387 = vld [vmem:[#allocation3 + $0xba0] sm:$0xff]
          %v6388 = vld [vmem:[#allocation3 + $0xba8] sm:$0xff]
          %v6389 = vld [vmem:[#allocation3 + $0xbb0] sm:$0xff]
          %v6390 = vld [vmem:[#allocation3 + $0xbb8] sm:$0xff]
          %v6391 = vld [vmem:[#allocation3 + $0xbc0] sm:$0xff]
          %v6392 = vld [vmem:[#allocation3 + $0xbc8] sm:$0xff]
          %v6393 = vld [vmem:[#allocation3 + $0xbd0] sm:$0xff]
          %v6394 = vld [vmem:[#allocation3 + $0xbd8] sm:$0xff]
          %v6395 = vld [vmem:[#allocation3 + $0xbe0] sm:$0xff]
          %v6396 = vld [vmem:[#allocation3 + $0xbe8] sm:$0xff]
          %v6397 = vld [vmem:[#allocation3 + $0xbf0] sm:$0xff]
          %v6398 = vld [vmem:[#allocation3 + $0xbf8] sm:$0xff]
          %v6399 = vld [vmem:[#allocation3 + $0xc00] sm:$0xff]
          %v6400 = vld [vmem:[#allocation3 + $0xc08] sm:$0xff]
          %v6401 = vld [vmem:[#allocation3 + $0xc10] sm:$0xff]
          %v6402 = vld [vmem:[#allocation3 + $0xc18] sm:$0xff]
          %v6403 = vld [vmem:[#allocation3 + $0xc20] sm:$0xff]
          %v6404 = vld [vmem:[#allocation3 + $0xc28] sm:$0xff]
          %v6405 = vld [vmem:[#allocation3 + $0xc30] sm:$0xff]
          %v6406 = vld [vmem:[#allocation3 + $0xc38] sm:$0xff]
          %v6407 = vld [vmem:[#allocation3 + $0xc40] sm:$0xff]
          %v6408 = vld [vmem:[#allocation3 + $0xc48] sm:$0xff]
          %v6409 = vld [vmem:[#allocation3 + $0xc50] sm:$0xff]
          %v6410 = vld [vmem:[#allocation3 + $0xc58] sm:$0xff]
          %v6411 = vld [vmem:[#allocation3 + $0xc60] sm:$0xff]
          %v6412 = vld [vmem:[#allocation3 + $0xc68] sm:$0xff]
          %v6413 = vld [vmem:[#allocation3 + $0xc70] sm:$0xff]
          %v6414 = vld [vmem:[#allocation3 + $0xc78] sm:$0xff]
          %v6415 = vld [vmem:[#allocation3 + $0xc80] sm:$0xff]
          %v6416 = vld [vmem:[#allocation3 + $0xc88] sm:$0xff]
          %v6417 = vld [vmem:[#allocation3 + $0xc90] sm:$0xff]
          %v6418 = vld [vmem:[#allocation3 + $0xc98] sm:$0xff]
          %v6419 = vld [vmem:[#allocation3 + $0xca0] sm:$0xff]
          %v6420 = vld [vmem:[#allocation3 + $0xca8] sm:$0xff]
          %v6421 = vld [vmem:[#allocation3 + $0xcb0] sm:$0xff]
          %v6422 = vld [vmem:[#allocation3 + $0xcb8] sm:$0xff]
          %v6423 = vld [vmem:[#allocation3 + $0xcc0] sm:$0xff]
          %v6424 = vld [vmem:[#allocation3 + $0xcc8] sm:$0xff]
          %v6425 = vld [vmem:[#allocation3 + $0xcd0] sm:$0xff]
          %v6426 = vld [vmem:[#allocation3 + $0xcd8] sm:$0xff]
          %v6427 = vld [vmem:[#allocation3 + $0xce0] sm:$0xff]
          %v6428 = vld [vmem:[#allocation3 + $0xce8] sm:$0xff]
          %v6429 = vld [vmem:[#allocation3 + $0xcf0] sm:$0xff]
          %v6430 = vld [vmem:[#allocation3 + $0xcf8] sm:$0xff]
          %v6431 = vld [vmem:[#allocation3 + $0xd00] sm:$0xff]
          %v6432 = vld [vmem:[#allocation3 + $0xd08] sm:$0xff]
          %v6433 = vld [vmem:[#allocation3 + $0xd10] sm:$0xff]
          %v6434 = vld [vmem:[#allocation3 + $0xd18] sm:$0xff]
          %v6435 = vld [vmem:[#allocation3 + $0xd20] sm:$0xff]
          %v6436 = vld [vmem:[#allocation3 + $0xd28] sm:$0xff]
          %v6437 = vld [vmem:[#allocation3 + $0xd30] sm:$0xff]
          %v6438 = vld [vmem:[#allocation3 + $0xd38] sm:$0xff]
          %v6439 = vld [vmem:[#allocation3 + $0xd40] sm:$0xff]
          %v6440 = vld [vmem:[#allocation3 + $0xd48] sm:$0xff]
          %v6441 = vld [vmem:[#allocation3 + $0xd50] sm:$0xff]
          %v6442 = vld [vmem:[#allocation3 + $0xd58] sm:$0xff]
          %v6443 = vld [vmem:[#allocation3 + $0xd60] sm:$0xff]
          %v6444 = vld [vmem:[#allocation3 + $0xd68] sm:$0xff]
          %v6445 = vld [vmem:[#allocation3 + $0xd70] sm:$0xff]
          %v6446 = vld [vmem:[#allocation3 + $0xd78] sm:$0xff]
          %v6447 = vld [vmem:[#allocation3 + $0xd80] sm:$0xff]
          %v6448 = vld [vmem:[#allocation3 + $0xd88] sm:$0xff]
          %v6449 = vld [vmem:[#allocation3 + $0xd90] sm:$0xff]
          %v6450 = vld [vmem:[#allocation3 + $0xd98] sm:$0xff]
          %v6451 = vld [vmem:[#allocation3 + $0xda0] sm:$0xff]
          %v6452 = vld [vmem:[#allocation3 + $0xda8] sm:$0xff]
          %v6453 = vld [vmem:[#allocation3 + $0xdb0] sm:$0xff]
          %v6454 = vld [vmem:[#allocation3 + $0xdb8] sm:$0xff]
          %v6455 = vld [vmem:[#allocation3 + $0xdc0] sm:$0xff]
          %v6456 = vld [vmem:[#allocation3 + $0xdc8] sm:$0xff]
          %v6457 = vld [vmem:[#allocation3 + $0xdd0] sm:$0xff]
          %v6458 = vld [vmem:[#allocation3 + $0xdd8] sm:$0xff]
          %v6459 = vld [vmem:[#allocation3 + $0xde0] sm:$0xff]
          %v6460 = vld [vmem:[#allocation3 + $0xde8] sm:$0xff]
          %v6461 = vld [vmem:[#allocation3 + $0xdf0] sm:$0xff]
          %v6462 = vld [vmem:[#allocation3 + $0xdf8] sm:$0xff]
          %v6463 = vld [vmem:[#allocation3 + $0xe00] sm:$0xff]
          %v6464 = vld [vmem:[#allocation3 + $0xe08] sm:$0xff]
          %v6465 = vld [vmem:[#allocation3 + $0xe10] sm:$0xff]
          %v6466 = vld [vmem:[#allocation3 + $0xe18] sm:$0xff]
          %v6467 = vld [vmem:[#allocation3 + $0xe20] sm:$0xff]
          %v6468 = vld [vmem:[#allocation3 + $0xe28] sm:$0xff]
          %v6469 = vld [vmem:[#allocation3 + $0xe30] sm:$0xff]
          %v6470 = vld [vmem:[#allocation3 + $0xe38] sm:$0xff]
          %v6471 = vld [vmem:[#allocation3 + $0xe40] sm:$0xff]
          %v6472 = vld [vmem:[#allocation3 + $0xe48] sm:$0xff]
          %v6473 = vld [vmem:[#allocation3 + $0xe50] sm:$0xff]
          %v6474 = vld [vmem:[#allocation3 + $0xe58] sm:$0xff]
          %v6475 = vld [vmem:[#allocation3 + $0xe60] sm:$0xff]
          %v6476 = vld [vmem:[#allocation3 + $0xe68] sm:$0xff]
          %v6477 = vld [vmem:[#allocation3 + $0xe70] sm:$0xff]
          %v6478 = vld [vmem:[#allocation3 + $0xe78] sm:$0xff]
          %v6479 = vld [vmem:[#allocation3 + $0xe80] sm:$0xff]
          %v6480 = vld [vmem:[#allocation3 + $0xe88] sm:$0xff]
          %v6481 = vld [vmem:[#allocation3 + $0xe90] sm:$0xff]
          %v6482 = vld [vmem:[#allocation3 + $0xe98] sm:$0xff]
          %v6483 = vld [vmem:[#allocation3 + $0xea0] sm:$0xff]
          %v6484 = vld [vmem:[#allocation3 + $0xea8] sm:$0xff]
          %v6485 = vld [vmem:[#allocation3 + $0xeb0] sm:$0xff]
          %v6486 = vld [vmem:[#allocation3 + $0xeb8] sm:$0xff]
          %v6487 = vld [vmem:[#allocation3 + $0xec0] sm:$0xff]
          %v6488 = vld [vmem:[#allocation3 + $0xec8] sm:$0xff]
          %v6489 = vld [vmem:[#allocation3 + $0xed0] sm:$0xff]
          %v6490 = vld [vmem:[#allocation3 + $0xed8] sm:$0xff]
          %v6491 = vld [vmem:[#allocation3 + $0xee0] sm:$0xff]
          %v6492 = vld [vmem:[#allocation3 + $0xee8] sm:$0xff]
          %v6493 = vld [vmem:[#allocation3 + $0xef0] sm:$0xff]
          %v6494 = vld [vmem:[#allocation3 + $0xef8] sm:$0xff]
          %v6495 = vld [vmem:[#allocation3 + $0xf00] sm:$0xff]
          %v6496 = vld [vmem:[#allocation3 + $0xf08] sm:$0xff]
          %v6497 = vld [vmem:[#allocation3 + $0xf10] sm:$0xff]
          %v6498 = vld [vmem:[#allocation3 + $0xf18] sm:$0xff]
          %v6499 = vld [vmem:[#allocation3 + $0xf20] sm:$0xff]
          %v6500 = vld [vmem:[#allocation3 + $0xf28] sm:$0xff]
          %v6501 = vld [vmem:[#allocation3 + $0xf30] sm:$0xff]
          %v6502 = vld [vmem:[#allocation3 + $0xf38] sm:$0xff]
          %v6503 = vld [vmem:[#allocation3 + $0xf40] sm:$0xff]
          %v6504 = vld [vmem:[#allocation3 + $0xf48] sm:$0xff]
          %v6505 = vld [vmem:[#allocation3 + $0xf50] sm:$0xff]
          %v6506 = vld [vmem:[#allocation3 + $0xf58] sm:$0xff]
          %v6507 = vld [vmem:[#allocation3 + $0xf60] sm:$0xff]
          %v6508 = vld [vmem:[#allocation3 + $0xf68] sm:$0xff]
          %v6509 = vld [vmem:[#allocation3 + $0xf70] sm:$0xff]
          %v6510 = vld [vmem:[#allocation3 + $0xf78] sm:$0xff]
          %v6511 = vld [vmem:[#allocation3 + $0xf80] sm:$0xff]
          %v6512 = vld [vmem:[#allocation3 + $0xf88] sm:$0xff]
          %v6513 = vld [vmem:[#allocation3 + $0xf90] sm:$0xff]
          %v6514 = vld [vmem:[#allocation3 + $0xf98] sm:$0xff]
          %v6515 = vld [vmem:[#allocation3 + $0xfa0] sm:$0xff]
          %v6516 = vld [vmem:[#allocation3 + $0xfa8] sm:$0xff]
          %v6517 = vld [vmem:[#allocation3 + $0xfb0] sm:$0xff]
          %v6518 = vld [vmem:[#allocation3 + $0xfb8] sm:$0xff]
          %v6519 = vld [vmem:[#allocation3 + $0xfc0] sm:$0xff]
          %v6520 = vld [vmem:[#allocation3 + $0xfc8] sm:$0xff]
          %v6521 = vld [vmem:[#allocation3 + $0xfd0] sm:$0xff]
          %v6522 = vld [vmem:[#allocation3 + $0xfd8] sm:$0xff]
          %v6523 = vld [vmem:[#allocation3 + $0xfe0] sm:$0xff]
          %v6524 = vld [vmem:[#allocation3 + $0xfe8] sm:$0xff]
          %v6525 = vld [vmem:[#allocation3 + $0xff0] sm:$0xff]
          %v6526 = vld [vmem:[#allocation3 + $0xff8] sm:$0xff]
          %v6527 = vld [vmem:[#allocation17] sm:$0xff]
          %v6529 = vlaneseq
          %v6530 = vshrl.u32 %v6529, 7
          %v6531 = vsub.s32 0, %v6530
          %v6532 = vrot.slane %v6527, %v6531
          %v6533 = vlaneseq
          %v6534 = vshrl.u32 %v6533, 7
          %v6535 = vsub.s32 1, %v6534
          %v6536 = vrot.slane %v6527, %v6535
          %v6537 = vlaneseq
          %v6538 = vshrl.u32 %v6537, 7
          %v6539 = vsub.s32 2, %v6538
          %v6540 = vrot.slane %v6527, %v6539
          %v6541 = vlaneseq
          %v6542 = vshrl.u32 %v6541, 7
          %v6543 = vsub.s32 3, %v6542
          %v6544 = vrot.slane %v6527, %v6543
          %v6545 = vlaneseq
          %v6546 = vshrl.u32 %v6545, 7
          %v6547 = vsub.s32 4, %v6546
          %v6548 = vrot.slane %v6527, %v6547
          %v6549 = vlaneseq
          %v6550 = vshrl.u32 %v6549, 7
          %v6551 = vsub.s32 5, %v6550
          %v6552 = vrot.slane %v6527, %v6551
          %v6553 = vlaneseq
          %v6554 = vshrl.u32 %v6553, 7
          %v6555 = vsub.s32 6, %v6554
          %v6556 = vrot.slane %v6527, %v6555
          %v6557 = vlaneseq
          %v6558 = vshrl.u32 %v6557, 7
          %v6559 = vsub.s32 7, %v6558
          %v6560 = vrot.slane %v6527, %v6559
          %v7081 = vunpack.c.l.b16 %v6015
          %v7082 = vunpack.c.h.b16 %v6015
          %v7083 = vunpack.c.l.b16 %v6016
          %v7084 = vunpack.c.h.b16 %v6016
          %v7085 = vunpack.c.l.b16 %v6017
          %v7086 = vunpack.c.h.b16 %v6017
          %v7087 = vunpack.c.l.b16 %v6018
          %v7088 = vunpack.c.h.b16 %v6018
          %v7089 = vunpack.c.l.b16 %v6019
          %v7090 = vunpack.c.h.b16 %v6019
          %v7091 = vunpack.c.l.b16 %v6020
          %v7092 = vunpack.c.h.b16 %v6020
          %v7093 = vunpack.c.l.b16 %v6021
          %v7094 = vunpack.c.h.b16 %v6021
          %v7095 = vunpack.c.l.b16 %v6022
          %v7096 = vunpack.c.h.b16 %v6022
          %v7097 = vunpack.c.l.b16 %v6023
          %v7098 = vunpack.c.h.b16 %v6023
          %v7099 = vunpack.c.l.b16 %v6024
          %v7100 = vunpack.c.h.b16 %v6024
          %v7101 = vunpack.c.l.b16 %v6025
          %v7102 = vunpack.c.h.b16 %v6025
          %v7103 = vunpack.c.l.b16 %v6026
          %v7104 = vunpack.c.h.b16 %v6026
          %v7105 = vunpack.c.l.b16 %v6027
          %v7106 = vunpack.c.h.b16 %v6027
          %v7107 = vunpack.c.l.b16 %v6028
          %v7108 = vunpack.c.h.b16 %v6028
          %v7109 = vunpack.c.l.b16 %v6029
          %v7110 = vunpack.c.h.b16 %v6029
          %v7111 = vunpack.c.l.b16 %v6030
          %v7112 = vunpack.c.h.b16 %v6030
          %v7113 = vunpack.c.l.b16 %v6031
          %v7114 = vunpack.c.h.b16 %v6031
          %v7115 = vunpack.c.l.b16 %v6032
          %v7116 = vunpack.c.h.b16 %v6032
          %v7117 = vunpack.c.l.b16 %v6033
          %v7118 = vunpack.c.h.b16 %v6033
          %v7119 = vunpack.c.l.b16 %v6034
          %v7120 = vunpack.c.h.b16 %v6034
          %v7121 = vunpack.c.l.b16 %v6035
          %v7122 = vunpack.c.h.b16 %v6035
          %v7123 = vunpack.c.l.b16 %v6036
          %v7124 = vunpack.c.h.b16 %v6036
          %v7125 = vunpack.c.l.b16 %v6037
          %v7126 = vunpack.c.h.b16 %v6037
          %v7127 = vunpack.c.l.b16 %v6038
          %v7128 = vunpack.c.h.b16 %v6038
          %v7129 = vunpack.c.l.b16 %v6039
          %v7130 = vunpack.c.h.b16 %v6039
          %v7131 = vunpack.c.l.b16 %v6040
          %v7132 = vunpack.c.h.b16 %v6040
          %v7133 = vunpack.c.l.b16 %v6041
          %v7134 = vunpack.c.h.b16 %v6041
          %v7135 = vunpack.c.l.b16 %v6042
          %v7136 = vunpack.c.h.b16 %v6042
          %v7137 = vunpack.c.l.b16 %v6043
          %v7138 = vunpack.c.h.b16 %v6043
          %v7139 = vunpack.c.l.b16 %v6044
          %v7140 = vunpack.c.h.b16 %v6044
          %v7141 = vunpack.c.l.b16 %v6045
          %v7142 = vunpack.c.h.b16 %v6045
          %v7143 = vunpack.c.l.b16 %v6046
          %v7144 = vunpack.c.h.b16 %v6046
          %v7145 = vunpack.c.l.b16 %v6047
          %v7146 = vunpack.c.h.b16 %v6047
          %v7147 = vunpack.c.l.b16 %v6048
          %v7148 = vunpack.c.h.b16 %v6048
          %v7149 = vunpack.c.l.b16 %v6049
          %v7150 = vunpack.c.h.b16 %v6049
          %v7151 = vunpack.c.l.b16 %v6050
          %v7152 = vunpack.c.h.b16 %v6050
          %v7153 = vunpack.c.l.b16 %v6051
          %v7154 = vunpack.c.h.b16 %v6051
          %v7155 = vunpack.c.l.b16 %v6052
          %v7156 = vunpack.c.h.b16 %v6052
          %v7157 = vunpack.c.l.b16 %v6053
          %v7158 = vunpack.c.h.b16 %v6053
          %v7159 = vunpack.c.l.b16 %v6054
          %v7160 = vunpack.c.h.b16 %v6054
          %v7161 = vunpack.c.l.b16 %v6055
          %v7162 = vunpack.c.h.b16 %v6055
          %v7163 = vunpack.c.l.b16 %v6056
          %v7164 = vunpack.c.h.b16 %v6056
          %v7165 = vunpack.c.l.b16 %v6057
          %v7166 = vunpack.c.h.b16 %v6057
          %v7167 = vunpack.c.l.b16 %v6058
          %v7168 = vunpack.c.h.b16 %v6058
          %v7169 = vunpack.c.l.b16 %v6059
          %v7170 = vunpack.c.h.b16 %v6059
          %v7171 = vunpack.c.l.b16 %v6060
          %v7172 = vunpack.c.h.b16 %v6060
          %v7173 = vunpack.c.l.b16 %v6061
          %v7174 = vunpack.c.h.b16 %v6061
          %v7175 = vunpack.c.l.b16 %v6062
          %v7176 = vunpack.c.h.b16 %v6062
          %v7177 = vunpack.c.l.b16 %v6063
          %v7178 = vunpack.c.h.b16 %v6063
          %v7179 = vunpack.c.l.b16 %v6064
          %v7180 = vunpack.c.h.b16 %v6064
          %v7181 = vunpack.c.l.b16 %v6065
          %v7182 = vunpack.c.h.b16 %v6065
          %v7183 = vunpack.c.l.b16 %v6066
          %v7184 = vunpack.c.h.b16 %v6066
          %v7185 = vunpack.c.l.b16 %v6067
          %v7186 = vunpack.c.h.b16 %v6067
          %v7187 = vunpack.c.l.b16 %v6068
          %v7188 = vunpack.c.h.b16 %v6068
          %v7189 = vunpack.c.l.b16 %v6069
          %v7190 = vunpack.c.h.b16 %v6069
          %v7191 = vunpack.c.l.b16 %v6070
          %v7192 = vunpack.c.h.b16 %v6070
          %v7193 = vunpack.c.l.b16 %v6071
          %v7194 = vunpack.c.h.b16 %v6071
          %v7195 = vunpack.c.l.b16 %v6072
          %v7196 = vunpack.c.h.b16 %v6072
          %v7197 = vunpack.c.l.b16 %v6073
          %v7198 = vunpack.c.h.b16 %v6073
          %v7199 = vunpack.c.l.b16 %v6074
          %v7200 = vunpack.c.h.b16 %v6074
          %v7201 = vunpack.c.l.b16 %v6075
          %v7202 = vunpack.c.h.b16 %v6075
          %v7203 = vunpack.c.l.b16 %v6076
          %v7204 = vunpack.c.h.b16 %v6076
          %v7205 = vunpack.c.l.b16 %v6077
          %v7206 = vunpack.c.h.b16 %v6077
          %v7207 = vunpack.c.l.b16 %v6078
          %v7208 = vunpack.c.h.b16 %v6078
          %v7209 = vunpack.c.l.b16 %v6079
          %v7210 = vunpack.c.h.b16 %v6079
          %v7211 = vunpack.c.l.b16 %v6080
          %v7212 = vunpack.c.h.b16 %v6080
          %v7213 = vunpack.c.l.b16 %v6081
          %v7214 = vunpack.c.h.b16 %v6081
          %v7215 = vunpack.c.l.b16 %v6082
          %v7216 = vunpack.c.h.b16 %v6082
          %v7217 = vunpack.c.l.b16 %v6083
          %v7218 = vunpack.c.h.b16 %v6083
          %v7219 = vunpack.c.l.b16 %v6084
          %v7220 = vunpack.c.h.b16 %v6084
          %v7221 = vunpack.c.l.b16 %v6085
          %v7222 = vunpack.c.h.b16 %v6085
          %v7223 = vunpack.c.l.b16 %v6086
          %v7224 = vunpack.c.h.b16 %v6086
          %v7225 = vunpack.c.l.b16 %v6087
          %v7226 = vunpack.c.h.b16 %v6087
          %v7227 = vunpack.c.l.b16 %v6088
          %v7228 = vunpack.c.h.b16 %v6088
          %v7229 = vunpack.c.l.b16 %v6089
          %v7230 = vunpack.c.h.b16 %v6089
          %v7231 = vunpack.c.l.b16 %v6090
          %v7232 = vunpack.c.h.b16 %v6090
          %v7233 = vunpack.c.l.b16 %v6091
          %v7234 = vunpack.c.h.b16 %v6091
          %v7235 = vunpack.c.l.b16 %v6092
          %v7236 = vunpack.c.h.b16 %v6092
          %v7237 = vunpack.c.l.b16 %v6093
          %v7238 = vunpack.c.h.b16 %v6093
          %v7239 = vunpack.c.l.b16 %v6094
          %v7240 = vunpack.c.h.b16 %v6094
          %v7241 = vunpack.c.l.b16 %v6095
          %v7242 = vunpack.c.h.b16 %v6095
          %v7243 = vunpack.c.l.b16 %v6096
          %v7244 = vunpack.c.h.b16 %v6096
          %v7245 = vunpack.c.l.b16 %v6097
          %v7246 = vunpack.c.h.b16 %v6097
          %v7247 = vunpack.c.l.b16 %v6098
          %v7248 = vunpack.c.h.b16 %v6098
          %v7249 = vunpack.c.l.b16 %v6099
          %v7250 = vunpack.c.h.b16 %v6099
          %v7251 = vunpack.c.l.b16 %v6100
          %v7252 = vunpack.c.h.b16 %v6100
          %v7253 = vunpack.c.l.b16 %v6101
          %v7254 = vunpack.c.h.b16 %v6101
          %v7255 = vunpack.c.l.b16 %v6102
          %v7256 = vunpack.c.h.b16 %v6102
          %v7257 = vunpack.c.l.b16 %v6103
          %v7258 = vunpack.c.h.b16 %v6103
          %v7259 = vunpack.c.l.b16 %v6104
          %v7260 = vunpack.c.h.b16 %v6104
          %v7261 = vunpack.c.l.b16 %v6105
          %v7262 = vunpack.c.h.b16 %v6105
          %v7263 = vunpack.c.l.b16 %v6106
          %v7264 = vunpack.c.h.b16 %v6106
          %v7265 = vunpack.c.l.b16 %v6107
          %v7266 = vunpack.c.h.b16 %v6107
          %v7267 = vunpack.c.l.b16 %v6108
          %v7268 = vunpack.c.h.b16 %v6108
          %v7269 = vunpack.c.l.b16 %v6109
          %v7270 = vunpack.c.h.b16 %v6109
          %v7271 = vunpack.c.l.b16 %v6110
          %v7272 = vunpack.c.h.b16 %v6110
          %v7273 = vunpack.c.l.b16 %v6111
          %v7274 = vunpack.c.h.b16 %v6111
          %v7275 = vunpack.c.l.b16 %v6112
          %v7276 = vunpack.c.h.b16 %v6112
          %v7277 = vunpack.c.l.b16 %v6113
          %v7278 = vunpack.c.h.b16 %v6113
          %v7279 = vunpack.c.l.b16 %v6114
          %v7280 = vunpack.c.h.b16 %v6114
          %v7281 = vunpack.c.l.b16 %v6115
          %v7282 = vunpack.c.h.b16 %v6115
          %v7283 = vunpack.c.l.b16 %v6116
          %v7284 = vunpack.c.h.b16 %v6116
          %v7285 = vunpack.c.l.b16 %v6117
          %v7286 = vunpack.c.h.b16 %v6117
          %v7287 = vunpack.c.l.b16 %v6118
          %v7288 = vunpack.c.h.b16 %v6118
          %v7289 = vunpack.c.l.b16 %v6119
          %v7290 = vunpack.c.h.b16 %v6119
          %v7291 = vunpack.c.l.b16 %v6120
          %v7292 = vunpack.c.h.b16 %v6120
          %v7293 = vunpack.c.l.b16 %v6121
          %v7294 = vunpack.c.h.b16 %v6121
          %v7295 = vunpack.c.l.b16 %v6122
          %v7296 = vunpack.c.h.b16 %v6122
          %v7297 = vunpack.c.l.b16 %v6123
          %v7298 = vunpack.c.h.b16 %v6123
          %v7299 = vunpack.c.l.b16 %v6124
          %v7300 = vunpack.c.h.b16 %v6124
          %v7301 = vunpack.c.l.b16 %v6125
          %v7302 = vunpack.c.h.b16 %v6125
          %v7303 = vunpack.c.l.b16 %v6126
          %v7304 = vunpack.c.h.b16 %v6126
          %v7305 = vunpack.c.l.b16 %v6127
          %v7306 = vunpack.c.h.b16 %v6127
          %v7307 = vunpack.c.l.b16 %v6128
          %v7308 = vunpack.c.h.b16 %v6128
          %v7309 = vunpack.c.l.b16 %v6129
          %v7310 = vunpack.c.h.b16 %v6129
          %v7311 = vunpack.c.l.b16 %v6130
          %v7312 = vunpack.c.h.b16 %v6130
          %v7313 = vunpack.c.l.b16 %v6131
          %v7314 = vunpack.c.h.b16 %v6131
          %v7315 = vunpack.c.l.b16 %v6132
          %v7316 = vunpack.c.h.b16 %v6132
          %v7317 = vunpack.c.l.b16 %v6133
          %v7318 = vunpack.c.h.b16 %v6133
          %v7319 = vunpack.c.l.b16 %v6134
          %v7320 = vunpack.c.h.b16 %v6134
          %v7321 = vunpack.c.l.b16 %v6135
          %v7322 = vunpack.c.h.b16 %v6135
          %v7323 = vunpack.c.l.b16 %v6136
          %v7324 = vunpack.c.h.b16 %v6136
          %v7325 = vunpack.c.l.b16 %v6137
          %v7326 = vunpack.c.h.b16 %v6137
          %v7327 = vunpack.c.l.b16 %v6138
          %v7328 = vunpack.c.h.b16 %v6138
          %v7329 = vunpack.c.l.b16 %v6139
          %v7330 = vunpack.c.h.b16 %v6139
          %v7331 = vunpack.c.l.b16 %v6140
          %v7332 = vunpack.c.h.b16 %v6140
          %v7333 = vunpack.c.l.b16 %v6141
          %v7334 = vunpack.c.h.b16 %v6141
          %v7335 = vunpack.c.l.b16 %v6142
          %v7336 = vunpack.c.h.b16 %v6142
          %v7337 = vunpack.c.l.b16 %v6143
          %v7338 = vunpack.c.h.b16 %v6143
          %v7339 = vunpack.c.l.b16 %v6144
          %v7340 = vunpack.c.h.b16 %v6144
          %v7341 = vunpack.c.l.b16 %v6145
          %v7342 = vunpack.c.h.b16 %v6145
          %v7343 = vunpack.c.l.b16 %v6146
          %v7344 = vunpack.c.h.b16 %v6146
          %v7345 = vunpack.c.l.b16 %v6147
          %v7346 = vunpack.c.h.b16 %v6147
          %v7347 = vunpack.c.l.b16 %v6148
          %v7348 = vunpack.c.h.b16 %v6148
          %v7349 = vunpack.c.l.b16 %v6149
          %v7350 = vunpack.c.h.b16 %v6149
          %v7351 = vunpack.c.l.b16 %v6150
          %v7352 = vunpack.c.h.b16 %v6150
          %v7353 = vunpack.c.l.b16 %v6151
          %v7354 = vunpack.c.h.b16 %v6151
          %v7355 = vunpack.c.l.b16 %v6152
          %v7356 = vunpack.c.h.b16 %v6152
          %v7357 = vunpack.c.l.b16 %v6153
          %v7358 = vunpack.c.h.b16 %v6153
          %v7359 = vunpack.c.l.b16 %v6154
          %v7360 = vunpack.c.h.b16 %v6154
          %v7361 = vunpack.c.l.b16 %v6155
          %v7362 = vunpack.c.h.b16 %v6155
          %v7363 = vunpack.c.l.b16 %v6156
          %v7364 = vunpack.c.h.b16 %v6156
          %v7365 = vunpack.c.l.b16 %v6157
          %v7366 = vunpack.c.h.b16 %v6157
          %v7367 = vunpack.c.l.b16 %v6158
          %v7368 = vunpack.c.h.b16 %v6158
          %v7369 = vunpack.c.l.b16 %v6159
          %v7370 = vunpack.c.h.b16 %v6159
          %v7371 = vunpack.c.l.b16 %v6160
          %v7372 = vunpack.c.h.b16 %v6160
          %v7373 = vunpack.c.l.b16 %v6161
          %v7374 = vunpack.c.h.b16 %v6161
          %v7375 = vunpack.c.l.b16 %v6162
          %v7376 = vunpack.c.h.b16 %v6162
          %v7377 = vunpack.c.l.b16 %v6163
          %v7378 = vunpack.c.h.b16 %v6163
          %v7379 = vunpack.c.l.b16 %v6164
          %v7380 = vunpack.c.h.b16 %v6164
          %v7381 = vunpack.c.l.b16 %v6165
          %v7382 = vunpack.c.h.b16 %v6165
          %v7383 = vunpack.c.l.b16 %v6166
          %v7384 = vunpack.c.h.b16 %v6166
          %v7385 = vunpack.c.l.b16 %v6167
          %v7386 = vunpack.c.h.b16 %v6167
          %v7387 = vunpack.c.l.b16 %v6168
          %v7388 = vunpack.c.h.b16 %v6168
          %v7389 = vunpack.c.l.b16 %v6169
          %v7390 = vunpack.c.h.b16 %v6169
          %v7391 = vunpack.c.l.b16 %v6170
          %v7392 = vunpack.c.h.b16 %v6170
          %v7393 = vunpack.c.l.b16 %v6171
          %v7394 = vunpack.c.h.b16 %v6171
          %v7395 = vunpack.c.l.b16 %v6172
          %v7396 = vunpack.c.h.b16 %v6172
          %v7397 = vunpack.c.l.b16 %v6173
          %v7398 = vunpack.c.h.b16 %v6173
          %v7399 = vunpack.c.l.b16 %v6174
          %v7400 = vunpack.c.h.b16 %v6174
          %v7401 = vunpack.c.l.b16 %v6175
          %v7402 = vunpack.c.h.b16 %v6175
          %v7403 = vunpack.c.l.b16 %v6176
          %v7404 = vunpack.c.h.b16 %v6176
          %v7405 = vunpack.c.l.b16 %v6177
          %v7406 = vunpack.c.h.b16 %v6177
          %v7407 = vunpack.c.l.b16 %v6178
          %v7408 = vunpack.c.h.b16 %v6178
          %v7409 = vunpack.c.l.b16 %v6179
          %v7410 = vunpack.c.h.b16 %v6179
          %v7411 = vunpack.c.l.b16 %v6180
          %v7412 = vunpack.c.h.b16 %v6180
          %v7413 = vunpack.c.l.b16 %v6181
          %v7414 = vunpack.c.h.b16 %v6181
          %v7415 = vunpack.c.l.b16 %v6182
          %v7416 = vunpack.c.h.b16 %v6182
          %v7417 = vunpack.c.l.b16 %v6183
          %v7418 = vunpack.c.h.b16 %v6183
          %v7419 = vunpack.c.l.b16 %v6184
          %v7420 = vunpack.c.h.b16 %v6184
          %v7421 = vunpack.c.l.b16 %v6185
          %v7422 = vunpack.c.h.b16 %v6185
          %v7423 = vunpack.c.l.b16 %v6186
          %v7424 = vunpack.c.h.b16 %v6186
          %v7425 = vunpack.c.l.b16 %v6187
          %v7426 = vunpack.c.h.b16 %v6187
          %v7427 = vunpack.c.l.b16 %v6188
          %v7428 = vunpack.c.h.b16 %v6188
          %v7429 = vunpack.c.l.b16 %v6189
          %v7430 = vunpack.c.h.b16 %v6189
          %v7431 = vunpack.c.l.b16 %v6190
          %v7432 = vunpack.c.h.b16 %v6190
          %v7433 = vunpack.c.l.b16 %v6191
          %v7434 = vunpack.c.h.b16 %v6191
          %v7435 = vunpack.c.l.b16 %v6192
          %v7436 = vunpack.c.h.b16 %v6192
          %v7437 = vunpack.c.l.b16 %v6193
          %v7438 = vunpack.c.h.b16 %v6193
          %v7439 = vunpack.c.l.b16 %v6194
          %v7440 = vunpack.c.h.b16 %v6194
          %v7441 = vunpack.c.l.b16 %v6195
          %v7442 = vunpack.c.h.b16 %v6195
          %v7443 = vunpack.c.l.b16 %v6196
          %v7444 = vunpack.c.h.b16 %v6196
          %v7445 = vunpack.c.l.b16 %v6197
          %v7446 = vunpack.c.h.b16 %v6197
          %v7447 = vunpack.c.l.b16 %v6198
          %v7448 = vunpack.c.h.b16 %v6198
          %v7449 = vunpack.c.l.b16 %v6199
          %v7450 = vunpack.c.h.b16 %v6199
          %v7451 = vunpack.c.l.b16 %v6200
          %v7452 = vunpack.c.h.b16 %v6200
          %v7453 = vunpack.c.l.b16 %v6201
          %v7454 = vunpack.c.h.b16 %v6201
          %v7455 = vunpack.c.l.b16 %v6202
          %v7456 = vunpack.c.h.b16 %v6202
          %v7457 = vunpack.c.l.b16 %v6203
          %v7458 = vunpack.c.h.b16 %v6203
          %v7459 = vunpack.c.l.b16 %v6204
          %v7460 = vunpack.c.h.b16 %v6204
          %v7461 = vunpack.c.l.b16 %v6205
          %v7462 = vunpack.c.h.b16 %v6205
          %v7463 = vunpack.c.l.b16 %v6206
          %v7464 = vunpack.c.h.b16 %v6206
          %v7465 = vunpack.c.l.b16 %v6207
          %v7466 = vunpack.c.h.b16 %v6207
          %v7467 = vunpack.c.l.b16 %v6208
          %v7468 = vunpack.c.h.b16 %v6208
          %v7469 = vunpack.c.l.b16 %v6209
          %v7470 = vunpack.c.h.b16 %v6209
          %v7471 = vunpack.c.l.b16 %v6210
          %v7472 = vunpack.c.h.b16 %v6210
          %v7473 = vunpack.c.l.b16 %v6211
          %v7474 = vunpack.c.h.b16 %v6211
          %v7475 = vunpack.c.l.b16 %v6212
          %v7476 = vunpack.c.h.b16 %v6212
          %v7477 = vunpack.c.l.b16 %v6213
          %v7478 = vunpack.c.h.b16 %v6213
          %v7479 = vunpack.c.l.b16 %v6214
          %v7480 = vunpack.c.h.b16 %v6214
          %v7481 = vunpack.c.l.b16 %v6215
          %v7482 = vunpack.c.h.b16 %v6215
          %v7483 = vunpack.c.l.b16 %v6216
          %v7484 = vunpack.c.h.b16 %v6216
          %v7485 = vunpack.c.l.b16 %v6217
          %v7486 = vunpack.c.h.b16 %v6217
          %v7487 = vunpack.c.l.b16 %v6218
          %v7488 = vunpack.c.h.b16 %v6218
          %v7489 = vunpack.c.l.b16 %v6219
          %v7490 = vunpack.c.h.b16 %v6219
          %v7491 = vunpack.c.l.b16 %v6220
          %v7492 = vunpack.c.h.b16 %v6220
          %v7493 = vunpack.c.l.b16 %v6221
          %v7494 = vunpack.c.h.b16 %v6221
          %v7495 = vunpack.c.l.b16 %v6222
          %v7496 = vunpack.c.h.b16 %v6222
          %v7497 = vunpack.c.l.b16 %v6223
          %v7498 = vunpack.c.h.b16 %v6223
          %v7499 = vunpack.c.l.b16 %v6224
          %v7500 = vunpack.c.h.b16 %v6224
          %v7501 = vunpack.c.l.b16 %v6225
          %v7502 = vunpack.c.h.b16 %v6225
          %v7503 = vunpack.c.l.b16 %v6226
          %v7504 = vunpack.c.h.b16 %v6226
          %v7505 = vunpack.c.l.b16 %v6227
          %v7506 = vunpack.c.h.b16 %v6227
          %v7507 = vunpack.c.l.b16 %v6228
          %v7508 = vunpack.c.h.b16 %v6228
          %v7509 = vunpack.c.l.b16 %v6229
          %v7510 = vunpack.c.h.b16 %v6229
          %v7511 = vunpack.c.l.b16 %v6230
          %v7512 = vunpack.c.h.b16 %v6230
          %v7513 = vunpack.c.l.b16 %v6231
          %v7514 = vunpack.c.h.b16 %v6231
          %v7515 = vunpack.c.l.b16 %v6232
          %v7516 = vunpack.c.h.b16 %v6232
          %v7517 = vunpack.c.l.b16 %v6233
          %v7518 = vunpack.c.h.b16 %v6233
          %v7519 = vunpack.c.l.b16 %v6234
          %v7520 = vunpack.c.h.b16 %v6234
          %v7521 = vunpack.c.l.b16 %v6235
          %v7522 = vunpack.c.h.b16 %v6235
          %v7523 = vunpack.c.l.b16 %v6236
          %v7524 = vunpack.c.h.b16 %v6236
          %v7525 = vunpack.c.l.b16 %v6237
          %v7526 = vunpack.c.h.b16 %v6237
          %v7527 = vunpack.c.l.b16 %v6238
          %v7528 = vunpack.c.h.b16 %v6238
          %v7529 = vunpack.c.l.b16 %v6239
          %v7530 = vunpack.c.h.b16 %v6239
          %v7531 = vunpack.c.l.b16 %v6240
          %v7532 = vunpack.c.h.b16 %v6240
          %v7533 = vunpack.c.l.b16 %v6241
          %v7534 = vunpack.c.h.b16 %v6241
          %v7535 = vunpack.c.l.b16 %v6242
          %v7536 = vunpack.c.h.b16 %v6242
          %v7537 = vunpack.c.l.b16 %v6243
          %v7538 = vunpack.c.h.b16 %v6243
          %v7539 = vunpack.c.l.b16 %v6244
          %v7540 = vunpack.c.h.b16 %v6244
          %v7541 = vunpack.c.l.b16 %v6245
          %v7542 = vunpack.c.h.b16 %v6245
          %v7543 = vunpack.c.l.b16 %v6246
          %v7544 = vunpack.c.h.b16 %v6246
          %v7545 = vunpack.c.l.b16 %v6247
          %v7546 = vunpack.c.h.b16 %v6247
          %v7547 = vunpack.c.l.b16 %v6248
          %v7548 = vunpack.c.h.b16 %v6248
          %v7549 = vunpack.c.l.b16 %v6249
          %v7550 = vunpack.c.h.b16 %v6249
          %v7551 = vunpack.c.l.b16 %v6250
          %v7552 = vunpack.c.h.b16 %v6250
          %v7553 = vunpack.c.l.b16 %v6251
          %v7554 = vunpack.c.h.b16 %v6251
          %v7555 = vunpack.c.l.b16 %v6252
          %v7556 = vunpack.c.h.b16 %v6252
          %v7557 = vunpack.c.l.b16 %v6253
          %v7558 = vunpack.c.h.b16 %v6253
          %v7559 = vunpack.c.l.b16 %v6254
          %v7560 = vunpack.c.h.b16 %v6254
          %v7561 = vunpack.c.l.b16 %v6255
          %v7562 = vunpack.c.h.b16 %v6255
          %v7563 = vunpack.c.l.b16 %v6256
          %v7564 = vunpack.c.h.b16 %v6256
          %v7565 = vunpack.c.l.b16 %v6257
          %v7566 = vunpack.c.h.b16 %v6257
          %v7567 = vunpack.c.l.b16 %v6258
          %v7568 = vunpack.c.h.b16 %v6258
          %v7569 = vunpack.c.l.b16 %v6259
          %v7570 = vunpack.c.h.b16 %v6259
          %v7571 = vunpack.c.l.b16 %v6260
          %v7572 = vunpack.c.h.b16 %v6260
          %v7573 = vunpack.c.l.b16 %v6261
          %v7574 = vunpack.c.h.b16 %v6261
          %v7575 = vunpack.c.l.b16 %v6262
          %v7576 = vunpack.c.h.b16 %v6262
          %v7577 = vunpack.c.l.b16 %v6263
          %v7578 = vunpack.c.h.b16 %v6263
          %v7579 = vunpack.c.l.b16 %v6264
          %v7580 = vunpack.c.h.b16 %v6264
          %v7581 = vunpack.c.l.b16 %v6265
          %v7582 = vunpack.c.h.b16 %v6265
          %v7583 = vunpack.c.l.b16 %v6266
          %v7584 = vunpack.c.h.b16 %v6266
          %v7585 = vunpack.c.l.b16 %v6267
          %v7586 = vunpack.c.h.b16 %v6267
          %v7587 = vunpack.c.l.b16 %v6268
          %v7588 = vunpack.c.h.b16 %v6268
          %v7589 = vunpack.c.l.b16 %v6269
          %v7590 = vunpack.c.h.b16 %v6269
          %v7591 = vunpack.c.l.b16 %v6270
          %v7592 = vunpack.c.h.b16 %v6270
          %v7593 = vunpack.c.l.b16 %v6271
          %v7594 = vunpack.c.h.b16 %v6271
          %v7595 = vunpack.c.l.b16 %v6272
          %v7596 = vunpack.c.h.b16 %v6272
          %v7597 = vunpack.c.l.b16 %v6273
          %v7598 = vunpack.c.h.b16 %v6273
          %v7599 = vunpack.c.l.b16 %v6274
          %v7600 = vunpack.c.h.b16 %v6274
          %v7601 = vunpack.c.l.b16 %v6275
          %v7602 = vunpack.c.h.b16 %v6275
          %v7603 = vunpack.c.l.b16 %v6276
          %v7604 = vunpack.c.h.b16 %v6276
          %v7605 = vunpack.c.l.b16 %v6277
          %v7606 = vunpack.c.h.b16 %v6277
          %v7607 = vunpack.c.l.b16 %v6278
          %v7608 = vunpack.c.h.b16 %v6278
          %v7609 = vunpack.c.l.b16 %v6279
          %v7610 = vunpack.c.h.b16 %v6279
          %v7611 = vunpack.c.l.b16 %v6280
          %v7612 = vunpack.c.h.b16 %v6280
          %v7613 = vunpack.c.l.b16 %v6281
          %v7614 = vunpack.c.h.b16 %v6281
          %v7615 = vunpack.c.l.b16 %v6282
          %v7616 = vunpack.c.h.b16 %v6282
          %v7617 = vunpack.c.l.b16 %v6283
          %v7618 = vunpack.c.h.b16 %v6283
          %v7619 = vunpack.c.l.b16 %v6284
          %v7620 = vunpack.c.h.b16 %v6284
          %v7621 = vunpack.c.l.b16 %v6285
          %v7622 = vunpack.c.h.b16 %v6285
          %v7623 = vunpack.c.l.b16 %v6286
          %v7624 = vunpack.c.h.b16 %v6286
          %v7625 = vunpack.c.l.b16 %v6287
          %v7626 = vunpack.c.h.b16 %v6287
          %v7627 = vunpack.c.l.b16 %v6288
          %v7628 = vunpack.c.h.b16 %v6288
          %v7629 = vunpack.c.l.b16 %v6289
          %v7630 = vunpack.c.h.b16 %v6289
          %v7631 = vunpack.c.l.b16 %v6290
          %v7632 = vunpack.c.h.b16 %v6290
          %v7633 = vunpack.c.l.b16 %v6291
          %v7634 = vunpack.c.h.b16 %v6291
          %v7635 = vunpack.c.l.b16 %v6292
          %v7636 = vunpack.c.h.b16 %v6292
          %v7637 = vunpack.c.l.b16 %v6293
          %v7638 = vunpack.c.h.b16 %v6293
          %v7639 = vunpack.c.l.b16 %v6294
          %v7640 = vunpack.c.h.b16 %v6294
          %v7641 = vunpack.c.l.b16 %v6295
          %v7642 = vunpack.c.h.b16 %v6295
          %v7643 = vunpack.c.l.b16 %v6296
          %v7644 = vunpack.c.h.b16 %v6296
          %v7645 = vunpack.c.l.b16 %v6297
          %v7646 = vunpack.c.h.b16 %v6297
          %v7647 = vunpack.c.l.b16 %v6298
          %v7648 = vunpack.c.h.b16 %v6298
          %v7649 = vunpack.c.l.b16 %v6299
          %v7650 = vunpack.c.h.b16 %v6299
          %v7651 = vunpack.c.l.b16 %v6300
          %v7652 = vunpack.c.h.b16 %v6300
          %v7653 = vunpack.c.l.b16 %v6301
          %v7654 = vunpack.c.h.b16 %v6301
          %v7655 = vunpack.c.l.b16 %v6302
          %v7656 = vunpack.c.h.b16 %v6302
          %v7657 = vunpack.c.l.b16 %v6303
          %v7658 = vunpack.c.h.b16 %v6303
          %v7659 = vunpack.c.l.b16 %v6304
          %v7660 = vunpack.c.h.b16 %v6304
          %v7661 = vunpack.c.l.b16 %v6305
          %v7662 = vunpack.c.h.b16 %v6305
          %v7663 = vunpack.c.l.b16 %v6306
          %v7664 = vunpack.c.h.b16 %v6306
          %v7665 = vunpack.c.l.b16 %v6307
          %v7666 = vunpack.c.h.b16 %v6307
          %v7667 = vunpack.c.l.b16 %v6308
          %v7668 = vunpack.c.h.b16 %v6308
          %v7669 = vunpack.c.l.b16 %v6309
          %v7670 = vunpack.c.h.b16 %v6309
          %v7671 = vunpack.c.l.b16 %v6310
          %v7672 = vunpack.c.h.b16 %v6310
          %v7673 = vunpack.c.l.b16 %v6311
          %v7674 = vunpack.c.h.b16 %v6311
          %v7675 = vunpack.c.l.b16 %v6312
          %v7676 = vunpack.c.h.b16 %v6312
          %v7677 = vunpack.c.l.b16 %v6313
          %v7678 = vunpack.c.h.b16 %v6313
          %v7679 = vunpack.c.l.b16 %v6314
          %v7680 = vunpack.c.h.b16 %v6314
          %v7681 = vunpack.c.l.b16 %v6315
          %v7682 = vunpack.c.h.b16 %v6315
          %v7683 = vunpack.c.l.b16 %v6316
          %v7684 = vunpack.c.h.b16 %v6316
          %v7685 = vunpack.c.l.b16 %v6317
          %v7686 = vunpack.c.h.b16 %v6317
          %v7687 = vunpack.c.l.b16 %v6318
          %v7688 = vunpack.c.h.b16 %v6318
          %v7689 = vunpack.c.l.b16 %v6319
          %v7690 = vunpack.c.h.b16 %v6319
          %v7691 = vunpack.c.l.b16 %v6320
          %v7692 = vunpack.c.h.b16 %v6320
          %v7693 = vunpack.c.l.b16 %v6321
          %v7694 = vunpack.c.h.b16 %v6321
          %v7695 = vunpack.c.l.b16 %v6322
          %v7696 = vunpack.c.h.b16 %v6322
          %v7697 = vunpack.c.l.b16 %v6323
          %v7698 = vunpack.c.h.b16 %v6323
          %v7699 = vunpack.c.l.b16 %v6324
          %v7700 = vunpack.c.h.b16 %v6324
          %v7701 = vunpack.c.l.b16 %v6325
          %v7702 = vunpack.c.h.b16 %v6325
          %v7703 = vunpack.c.l.b16 %v6326
          %v7704 = vunpack.c.h.b16 %v6326
          %v7705 = vunpack.c.l.b16 %v6327
          %v7706 = vunpack.c.h.b16 %v6327
          %v7707 = vunpack.c.l.b16 %v6328
          %v7708 = vunpack.c.h.b16 %v6328
          %v7709 = vunpack.c.l.b16 %v6329
          %v7710 = vunpack.c.h.b16 %v6329
          %v7711 = vunpack.c.l.b16 %v6330
          %v7712 = vunpack.c.h.b16 %v6330
          %v7713 = vunpack.c.l.b16 %v6331
          %v7714 = vunpack.c.h.b16 %v6331
          %v7715 = vunpack.c.l.b16 %v6332
          %v7716 = vunpack.c.h.b16 %v6332
          %v7717 = vunpack.c.l.b16 %v6333
          %v7718 = vunpack.c.h.b16 %v6333
          %v7719 = vunpack.c.l.b16 %v6334
          %v7720 = vunpack.c.h.b16 %v6334
          %v7721 = vunpack.c.l.b16 %v6335
          %v7722 = vunpack.c.h.b16 %v6335
          %v7723 = vunpack.c.l.b16 %v6336
          %v7724 = vunpack.c.h.b16 %v6336
          %v7725 = vunpack.c.l.b16 %v6337
          %v7726 = vunpack.c.h.b16 %v6337
          %v7727 = vunpack.c.l.b16 %v6338
          %v7728 = vunpack.c.h.b16 %v6338
          %v7729 = vunpack.c.l.b16 %v6339
          %v7730 = vunpack.c.h.b16 %v6339
          %v7731 = vunpack.c.l.b16 %v6340
          %v7732 = vunpack.c.h.b16 %v6340
          %v7733 = vunpack.c.l.b16 %v6341
          %v7734 = vunpack.c.h.b16 %v6341
          %v7735 = vunpack.c.l.b16 %v6342
          %v7736 = vunpack.c.h.b16 %v6342
          %v7737 = vunpack.c.l.b16 %v6343
          %v7738 = vunpack.c.h.b16 %v6343
          %v7739 = vunpack.c.l.b16 %v6344
          %v7740 = vunpack.c.h.b16 %v6344
          %v7741 = vunpack.c.l.b16 %v6345
          %v7742 = vunpack.c.h.b16 %v6345
          %v7743 = vunpack.c.l.b16 %v6346
          %v7744 = vunpack.c.h.b16 %v6346
          %v7745 = vunpack.c.l.b16 %v6347
          %v7746 = vunpack.c.h.b16 %v6347
          %v7747 = vunpack.c.l.b16 %v6348
          %v7748 = vunpack.c.h.b16 %v6348
          %v7749 = vunpack.c.l.b16 %v6349
          %v7750 = vunpack.c.h.b16 %v6349
          %v7751 = vunpack.c.l.b16 %v6350
          %v7752 = vunpack.c.h.b16 %v6350
          %v7753 = vunpack.c.l.b16 %v6351
          %v7754 = vunpack.c.h.b16 %v6351
          %v7755 = vunpack.c.l.b16 %v6352
          %v7756 = vunpack.c.h.b16 %v6352
          %v7757 = vunpack.c.l.b16 %v6353
          %v7758 = vunpack.c.h.b16 %v6353
          %v7759 = vunpack.c.l.b16 %v6354
          %v7760 = vunpack.c.h.b16 %v6354
          %v7761 = vunpack.c.l.b16 %v6355
          %v7762 = vunpack.c.h.b16 %v6355
          %v7763 = vunpack.c.l.b16 %v6356
          %v7764 = vunpack.c.h.b16 %v6356
          %v7765 = vunpack.c.l.b16 %v6357
          %v7766 = vunpack.c.h.b16 %v6357
          %v7767 = vunpack.c.l.b16 %v6358
          %v7768 = vunpack.c.h.b16 %v6358
          %v7769 = vunpack.c.l.b16 %v6359
          %v7770 = vunpack.c.h.b16 %v6359
          %v7771 = vunpack.c.l.b16 %v6360
          %v7772 = vunpack.c.h.b16 %v6360
          %v7773 = vunpack.c.l.b16 %v6361
          %v7774 = vunpack.c.h.b16 %v6361
          %v7775 = vunpack.c.l.b16 %v6362
          %v7776 = vunpack.c.h.b16 %v6362
          %v7777 = vunpack.c.l.b16 %v6363
          %v7778 = vunpack.c.h.b16 %v6363
          %v7779 = vunpack.c.l.b16 %v6364
          %v7780 = vunpack.c.h.b16 %v6364
          %v7781 = vunpack.c.l.b16 %v6365
          %v7782 = vunpack.c.h.b16 %v6365
          %v7783 = vunpack.c.l.b16 %v6366
          %v7784 = vunpack.c.h.b16 %v6366
          %v7785 = vunpack.c.l.b16 %v6367
          %v7786 = vunpack.c.h.b16 %v6367
          %v7787 = vunpack.c.l.b16 %v6368
          %v7788 = vunpack.c.h.b16 %v6368
          %v7789 = vunpack.c.l.b16 %v6369
          %v7790 = vunpack.c.h.b16 %v6369
          %v7791 = vunpack.c.l.b16 %v6370
          %v7792 = vunpack.c.h.b16 %v6370
          %v7793 = vunpack.c.l.b16 %v6371
          %v7794 = vunpack.c.h.b16 %v6371
          %v7795 = vunpack.c.l.b16 %v6372
          %v7796 = vunpack.c.h.b16 %v6372
          %v7797 = vunpack.c.l.b16 %v6373
          %v7798 = vunpack.c.h.b16 %v6373
          %v7799 = vunpack.c.l.b16 %v6374
          %v7800 = vunpack.c.h.b16 %v6374
          %v7801 = vunpack.c.l.b16 %v6375
          %v7802 = vunpack.c.h.b16 %v6375
          %v7803 = vunpack.c.l.b16 %v6376
          %v7804 = vunpack.c.h.b16 %v6376
          %v7805 = vunpack.c.l.b16 %v6377
          %v7806 = vunpack.c.h.b16 %v6377
          %v7807 = vunpack.c.l.b16 %v6378
          %v7808 = vunpack.c.h.b16 %v6378
          %v7809 = vunpack.c.l.b16 %v6379
          %v7810 = vunpack.c.h.b16 %v6379
          %v7811 = vunpack.c.l.b16 %v6380
          %v7812 = vunpack.c.h.b16 %v6380
          %v7813 = vunpack.c.l.b16 %v6381
          %v7814 = vunpack.c.h.b16 %v6381
          %v7815 = vunpack.c.l.b16 %v6382
          %v7816 = vunpack.c.h.b16 %v6382
          %v7817 = vunpack.c.l.b16 %v6383
          %v7818 = vunpack.c.h.b16 %v6383
          %v7819 = vunpack.c.l.b16 %v6384
          %v7820 = vunpack.c.h.b16 %v6384
          %v7821 = vunpack.c.l.b16 %v6385
          %v7822 = vunpack.c.h.b16 %v6385
          %v7823 = vunpack.c.l.b16 %v6386
          %v7824 = vunpack.c.h.b16 %v6386
          %v7825 = vunpack.c.l.b16 %v6387
          %v7826 = vunpack.c.h.b16 %v6387
          %v7827 = vunpack.c.l.b16 %v6388
          %v7828 = vunpack.c.h.b16 %v6388
          %v7829 = vunpack.c.l.b16 %v6389
          %v7830 = vunpack.c.h.b16 %v6389
          %v7831 = vunpack.c.l.b16 %v6390
          %v7832 = vunpack.c.h.b16 %v6390
          %v7833 = vunpack.c.l.b16 %v6391
          %v7834 = vunpack.c.h.b16 %v6391
          %v7835 = vunpack.c.l.b16 %v6392
          %v7836 = vunpack.c.h.b16 %v6392
          %v7837 = vunpack.c.l.b16 %v6393
          %v7838 = vunpack.c.h.b16 %v6393
          %v7839 = vunpack.c.l.b16 %v6394
          %v7840 = vunpack.c.h.b16 %v6394
          %v7841 = vunpack.c.l.b16 %v6395
          %v7842 = vunpack.c.h.b16 %v6395
          %v7843 = vunpack.c.l.b16 %v6396
          %v7844 = vunpack.c.h.b16 %v6396
          %v7845 = vunpack.c.l.b16 %v6397
          %v7846 = vunpack.c.h.b16 %v6397
          %v7847 = vunpack.c.l.b16 %v6398
          %v7848 = vunpack.c.h.b16 %v6398
          %v7849 = vunpack.c.l.b16 %v6399
          %v7850 = vunpack.c.h.b16 %v6399
          %v7851 = vunpack.c.l.b16 %v6400
          %v7852 = vunpack.c.h.b16 %v6400
          %v7853 = vunpack.c.l.b16 %v6401
          %v7854 = vunpack.c.h.b16 %v6401
          %v7855 = vunpack.c.l.b16 %v6402
          %v7856 = vunpack.c.h.b16 %v6402
          %v7857 = vunpack.c.l.b16 %v6403
          %v7858 = vunpack.c.h.b16 %v6403
          %v7859 = vunpack.c.l.b16 %v6404
          %v7860 = vunpack.c.h.b16 %v6404
          %v7861 = vunpack.c.l.b16 %v6405
          %v7862 = vunpack.c.h.b16 %v6405
          %v7863 = vunpack.c.l.b16 %v6406
          %v7864 = vunpack.c.h.b16 %v6406
          %v7865 = vunpack.c.l.b16 %v6407
          %v7866 = vunpack.c.h.b16 %v6407
          %v7867 = vunpack.c.l.b16 %v6408
          %v7868 = vunpack.c.h.b16 %v6408
          %v7869 = vunpack.c.l.b16 %v6409
          %v7870 = vunpack.c.h.b16 %v6409
          %v7871 = vunpack.c.l.b16 %v6410
          %v7872 = vunpack.c.h.b16 %v6410
          %v7873 = vunpack.c.l.b16 %v6411
          %v7874 = vunpack.c.h.b16 %v6411
          %v7875 = vunpack.c.l.b16 %v6412
          %v7876 = vunpack.c.h.b16 %v6412
          %v7877 = vunpack.c.l.b16 %v6413
          %v7878 = vunpack.c.h.b16 %v6413
          %v7879 = vunpack.c.l.b16 %v6414
          %v7880 = vunpack.c.h.b16 %v6414
          %v7881 = vunpack.c.l.b16 %v6415
          %v7882 = vunpack.c.h.b16 %v6415
          %v7883 = vunpack.c.l.b16 %v6416
          %v7884 = vunpack.c.h.b16 %v6416
          %v7885 = vunpack.c.l.b16 %v6417
          %v7886 = vunpack.c.h.b16 %v6417
          %v7887 = vunpack.c.l.b16 %v6418
          %v7888 = vunpack.c.h.b16 %v6418
          %v7889 = vunpack.c.l.b16 %v6419
          %v7890 = vunpack.c.h.b16 %v6419
          %v7891 = vunpack.c.l.b16 %v6420
          %v7892 = vunpack.c.h.b16 %v6420
          %v7893 = vunpack.c.l.b16 %v6421
          %v7894 = vunpack.c.h.b16 %v6421
          %v7895 = vunpack.c.l.b16 %v6422
          %v7896 = vunpack.c.h.b16 %v6422
          %v7897 = vunpack.c.l.b16 %v6423
          %v7898 = vunpack.c.h.b16 %v6423
          %v7899 = vunpack.c.l.b16 %v6424
          %v7900 = vunpack.c.h.b16 %v6424
          %v7901 = vunpack.c.l.b16 %v6425
          %v7902 = vunpack.c.h.b16 %v6425
          %v7903 = vunpack.c.l.b16 %v6426
          %v7904 = vunpack.c.h.b16 %v6426
          %v7905 = vunpack.c.l.b16 %v6427
          %v7906 = vunpack.c.h.b16 %v6427
          %v7907 = vunpack.c.l.b16 %v6428
          %v7908 = vunpack.c.h.b16 %v6428
          %v7909 = vunpack.c.l.b16 %v6429
          %v7910 = vunpack.c.h.b16 %v6429
          %v7911 = vunpack.c.l.b16 %v6430
          %v7912 = vunpack.c.h.b16 %v6430
          %v7913 = vunpack.c.l.b16 %v6431
          %v7914 = vunpack.c.h.b16 %v6431
          %v7915 = vunpack.c.l.b16 %v6432
          %v7916 = vunpack.c.h.b16 %v6432
          %v7917 = vunpack.c.l.b16 %v6433
          %v7918 = vunpack.c.h.b16 %v6433
          %v7919 = vunpack.c.l.b16 %v6434
          %v7920 = vunpack.c.h.b16 %v6434
          %v7921 = vunpack.c.l.b16 %v6435
          %v7922 = vunpack.c.h.b16 %v6435
          %v7923 = vunpack.c.l.b16 %v6436
          %v7924 = vunpack.c.h.b16 %v6436
          %v7925 = vunpack.c.l.b16 %v6437
          %v7926 = vunpack.c.h.b16 %v6437
          %v7927 = vunpack.c.l.b16 %v6438
          %v7928 = vunpack.c.h.b16 %v6438
          %v7929 = vunpack.c.l.b16 %v6439
          %v7930 = vunpack.c.h.b16 %v6439
          %v7931 = vunpack.c.l.b16 %v6440
          %v7932 = vunpack.c.h.b16 %v6440
          %v7933 = vunpack.c.l.b16 %v6441
          %v7934 = vunpack.c.h.b16 %v6441
          %v7935 = vunpack.c.l.b16 %v6442
          %v7936 = vunpack.c.h.b16 %v6442
          %v7937 = vunpack.c.l.b16 %v6443
          %v7938 = vunpack.c.h.b16 %v6443
          %v7939 = vunpack.c.l.b16 %v6444
          %v7940 = vunpack.c.h.b16 %v6444
          %v7941 = vunpack.c.l.b16 %v6445
          %v7942 = vunpack.c.h.b16 %v6445
          %v7943 = vunpack.c.l.b16 %v6446
          %v7944 = vunpack.c.h.b16 %v6446
          %v7945 = vunpack.c.l.b16 %v6447
          %v7946 = vunpack.c.h.b16 %v6447
          %v7947 = vunpack.c.l.b16 %v6448
          %v7948 = vunpack.c.h.b16 %v6448
          %v7949 = vunpack.c.l.b16 %v6449
          %v7950 = vunpack.c.h.b16 %v6449
          %v7951 = vunpack.c.l.b16 %v6450
          %v7952 = vunpack.c.h.b16 %v6450
          %v7953 = vunpack.c.l.b16 %v6451
          %v7954 = vunpack.c.h.b16 %v6451
          %v7955 = vunpack.c.l.b16 %v6452
          %v7956 = vunpack.c.h.b16 %v6452
          %v7957 = vunpack.c.l.b16 %v6453
          %v7958 = vunpack.c.h.b16 %v6453
          %v7959 = vunpack.c.l.b16 %v6454
          %v7960 = vunpack.c.h.b16 %v6454
          %v7961 = vunpack.c.l.b16 %v6455
          %v7962 = vunpack.c.h.b16 %v6455
          %v7963 = vunpack.c.l.b16 %v6456
          %v7964 = vunpack.c.h.b16 %v6456
          %v7965 = vunpack.c.l.b16 %v6457
          %v7966 = vunpack.c.h.b16 %v6457
          %v7967 = vunpack.c.l.b16 %v6458
          %v7968 = vunpack.c.h.b16 %v6458
          %v7969 = vunpack.c.l.b16 %v6459
          %v7970 = vunpack.c.h.b16 %v6459
          %v7971 = vunpack.c.l.b16 %v6460
          %v7972 = vunpack.c.h.b16 %v6460
          %v7973 = vunpack.c.l.b16 %v6461
          %v7974 = vunpack.c.h.b16 %v6461
          %v7975 = vunpack.c.l.b16 %v6462
          %v7976 = vunpack.c.h.b16 %v6462
          %v7977 = vunpack.c.l.b16 %v6463
          %v7978 = vunpack.c.h.b16 %v6463
          %v7979 = vunpack.c.l.b16 %v6464
          %v7980 = vunpack.c.h.b16 %v6464
          %v7981 = vunpack.c.l.b16 %v6465
          %v7982 = vunpack.c.h.b16 %v6465
          %v7983 = vunpack.c.l.b16 %v6466
          %v7984 = vunpack.c.h.b16 %v6466
          %v7985 = vunpack.c.l.b16 %v6467
          %v7986 = vunpack.c.h.b16 %v6467
          %v7987 = vunpack.c.l.b16 %v6468
          %v7988 = vunpack.c.h.b16 %v6468
          %v7989 = vunpack.c.l.b16 %v6469
          %v7990 = vunpack.c.h.b16 %v6469
          %v7991 = vunpack.c.l.b16 %v6470
          %v7992 = vunpack.c.h.b16 %v6470
          %v7993 = vunpack.c.l.b16 %v6471
          %v7994 = vunpack.c.h.b16 %v6471
          %v7995 = vunpack.c.l.b16 %v6472
          %v7996 = vunpack.c.h.b16 %v6472
          %v7997 = vunpack.c.l.b16 %v6473
          %v7998 = vunpack.c.h.b16 %v6473
          %v7999 = vunpack.c.l.b16 %v6474
          %v8000 = vunpack.c.h.b16 %v6474
          %v8001 = vunpack.c.l.b16 %v6475
          %v8002 = vunpack.c.h.b16 %v6475
          %v8003 = vunpack.c.l.b16 %v6476
          %v8004 = vunpack.c.h.b16 %v6476
          %v8005 = vunpack.c.l.b16 %v6477
          %v8006 = vunpack.c.h.b16 %v6477
          %v8007 = vunpack.c.l.b16 %v6478
          %v8008 = vunpack.c.h.b16 %v6478
          %v8009 = vunpack.c.l.b16 %v6479
          %v8010 = vunpack.c.h.b16 %v6479
          %v8011 = vunpack.c.l.b16 %v6480
          %v8012 = vunpack.c.h.b16 %v6480
          %v8013 = vunpack.c.l.b16 %v6481
          %v8014 = vunpack.c.h.b16 %v6481
          %v8015 = vunpack.c.l.b16 %v6482
          %v8016 = vunpack.c.h.b16 %v6482
          %v8017 = vunpack.c.l.b16 %v6483
          %v8018 = vunpack.c.h.b16 %v6483
          %v8019 = vunpack.c.l.b16 %v6484
          %v8020 = vunpack.c.h.b16 %v6484
          %v8021 = vunpack.c.l.b16 %v6485
          %v8022 = vunpack.c.h.b16 %v6485
          %v8023 = vunpack.c.l.b16 %v6486
          %v8024 = vunpack.c.h.b16 %v6486
          %v8025 = vunpack.c.l.b16 %v6487
          %v8026 = vunpack.c.h.b16 %v6487
          %v8027 = vunpack.c.l.b16 %v6488
          %v8028 = vunpack.c.h.b16 %v6488
          %v8029 = vunpack.c.l.b16 %v6489
          %v8030 = vunpack.c.h.b16 %v6489
          %v8031 = vunpack.c.l.b16 %v6490
          %v8032 = vunpack.c.h.b16 %v6490
          %v8033 = vunpack.c.l.b16 %v6491
          %v8034 = vunpack.c.h.b16 %v6491
          %v8035 = vunpack.c.l.b16 %v6492
          %v8036 = vunpack.c.h.b16 %v6492
          %v8037 = vunpack.c.l.b16 %v6493
          %v8038 = vunpack.c.h.b16 %v6493
          %v8039 = vunpack.c.l.b16 %v6494
          %v8040 = vunpack.c.h.b16 %v6494
          %v8041 = vunpack.c.l.b16 %v6495
          %v8042 = vunpack.c.h.b16 %v6495
          %v8043 = vunpack.c.l.b16 %v6496
          %v8044 = vunpack.c.h.b16 %v6496
          %v8045 = vunpack.c.l.b16 %v6497
          %v8046 = vunpack.c.h.b16 %v6497
          %v8047 = vunpack.c.l.b16 %v6498
          %v8048 = vunpack.c.h.b16 %v6498
          %v8049 = vunpack.c.l.b16 %v6499
          %v8050 = vunpack.c.h.b16 %v6499
          %v8051 = vunpack.c.l.b16 %v6500
          %v8052 = vunpack.c.h.b16 %v6500
          %v8053 = vunpack.c.l.b16 %v6501
          %v8054 = vunpack.c.h.b16 %v6501
          %v8055 = vunpack.c.l.b16 %v6502
          %v8056 = vunpack.c.h.b16 %v6502
          %v8057 = vunpack.c.l.b16 %v6503
          %v8058 = vunpack.c.h.b16 %v6503
          %v8059 = vunpack.c.l.b16 %v6504
          %v8060 = vunpack.c.h.b16 %v6504
          %v8061 = vunpack.c.l.b16 %v6505
          %v8062 = vunpack.c.h.b16 %v6505
          %v8063 = vunpack.c.l.b16 %v6506
          %v8064 = vunpack.c.h.b16 %v6506
          %v8065 = vunpack.c.l.b16 %v6507
          %v8066 = vunpack.c.h.b16 %v6507
          %v8067 = vunpack.c.l.b16 %v6508
          %v8068 = vunpack.c.h.b16 %v6508
          %v8069 = vunpack.c.l.b16 %v6509
          %v8070 = vunpack.c.h.b16 %v6509
          %v8071 = vunpack.c.l.b16 %v6510
          %v8072 = vunpack.c.h.b16 %v6510
          %v8073 = vunpack.c.l.b16 %v6511
          %v8074 = vunpack.c.h.b16 %v6511
          %v8075 = vunpack.c.l.b16 %v6512
          %v8076 = vunpack.c.h.b16 %v6512
          %v8077 = vunpack.c.l.b16 %v6513
          %v8078 = vunpack.c.h.b16 %v6513
          %v8079 = vunpack.c.l.b16 %v6514
          %v8080 = vunpack.c.h.b16 %v6514
          %v8081 = vunpack.c.l.b16 %v6515
          %v8082 = vunpack.c.h.b16 %v6515
          %v8083 = vunpack.c.l.b16 %v6516
          %v8084 = vunpack.c.h.b16 %v6516
          %v8085 = vunpack.c.l.b16 %v6517
          %v8086 = vunpack.c.h.b16 %v6517
          %v8087 = vunpack.c.l.b16 %v6518
          %v8088 = vunpack.c.h.b16 %v6518
          %v8089 = vunpack.c.l.b16 %v6519
          %v8090 = vunpack.c.h.b16 %v6519
          %v8091 = vunpack.c.l.b16 %v6520
          %v8092 = vunpack.c.h.b16 %v6520
          %v8093 = vunpack.c.l.b16 %v6521
          %v8094 = vunpack.c.h.b16 %v6521
          %v8095 = vunpack.c.l.b16 %v6522
          %v8096 = vunpack.c.h.b16 %v6522
          %v8097 = vunpack.c.l.b16 %v6523
          %v8098 = vunpack.c.h.b16 %v6523
          %v8099 = vunpack.c.l.b16 %v6524
          %v8100 = vunpack.c.h.b16 %v6524
          %v8101 = vunpack.c.l.b16 %v6525
          %v8102 = vunpack.c.h.b16 %v6525
          %v8103 = vunpack.c.l.b16 %v6526
          %v8104 = vunpack.c.h.b16 %v6526
          %v8105 = vpack.c.b16 %v7089, %v7081
          %v8106 = vpack.c.b16 %v7090, %v7082
          %v8107 = vpack.c.b16 %v7091, %v7083
          %v8108 = vpack.c.b16 %v7092, %v7084
          %v8109 = vpack.c.b16 %v7093, %v7085
          %v8110 = vpack.c.b16 %v7094, %v7086
          %v8111 = vpack.c.b16 %v7095, %v7087
          %v8112 = vpack.c.b16 %v7096, %v7088
          %v8113 = vpack.c.b16 %v7105, %v7097
          %v8114 = vpack.c.b16 %v7106, %v7098
          %v8115 = vpack.c.b16 %v7107, %v7099
          %v8116 = vpack.c.b16 %v7108, %v7100
          %v8117 = vpack.c.b16 %v7109, %v7101
          %v8118 = vpack.c.b16 %v7110, %v7102
          %v8119 = vpack.c.b16 %v7111, %v7103
          %v8120 = vpack.c.b16 %v7112, %v7104
          %v8121 = vpack.c.b16 %v7121, %v7113
          %v8122 = vpack.c.b16 %v7122, %v7114
          %v8123 = vpack.c.b16 %v7123, %v7115
          %v8124 = vpack.c.b16 %v7124, %v7116
          %v8125 = vpack.c.b16 %v7125, %v7117
          %v8126 = vpack.c.b16 %v7126, %v7118
          %v8127 = vpack.c.b16 %v7127, %v7119
          %v8128 = vpack.c.b16 %v7128, %v7120
          %v8129 = vpack.c.b16 %v7137, %v7129
          %v8130 = vpack.c.b16 %v7138, %v7130
          %v8131 = vpack.c.b16 %v7139, %v7131
          %v8132 = vpack.c.b16 %v7140, %v7132
          %v8133 = vpack.c.b16 %v7141, %v7133
          %v8134 = vpack.c.b16 %v7142, %v7134
          %v8135 = vpack.c.b16 %v7143, %v7135
          %v8136 = vpack.c.b16 %v7144, %v7136
          %v8137 = vpack.c.b16 %v7153, %v7145
          %v8138 = vpack.c.b16 %v7154, %v7146
          %v8139 = vpack.c.b16 %v7155, %v7147
          %v8140 = vpack.c.b16 %v7156, %v7148
          %v8141 = vpack.c.b16 %v7157, %v7149
          %v8142 = vpack.c.b16 %v7158, %v7150
          %v8143 = vpack.c.b16 %v7159, %v7151
          %v8144 = vpack.c.b16 %v7160, %v7152
          %v8145 = vpack.c.b16 %v7169, %v7161
          %v8146 = vpack.c.b16 %v7170, %v7162
          %v8147 = vpack.c.b16 %v7171, %v7163
          %v8148 = vpack.c.b16 %v7172, %v7164
          %v8149 = vpack.c.b16 %v7173, %v7165
          %v8150 = vpack.c.b16 %v7174, %v7166
          %v8151 = vpack.c.b16 %v7175, %v7167
          %v8152 = vpack.c.b16 %v7176, %v7168
          %v8153 = vpack.c.b16 %v7185, %v7177
          %v8154 = vpack.c.b16 %v7186, %v7178
          %v8155 = vpack.c.b16 %v7187, %v7179
          %v8156 = vpack.c.b16 %v7188, %v7180
          %v8157 = vpack.c.b16 %v7189, %v7181
          %v8158 = vpack.c.b16 %v7190, %v7182
          %v8159 = vpack.c.b16 %v7191, %v7183
          %v8160 = vpack.c.b16 %v7192, %v7184
          %v8161 = vpack.c.b16 %v7201, %v7193
          %v8162 = vpack.c.b16 %v7202, %v7194
          %v8163 = vpack.c.b16 %v7203, %v7195
          %v8164 = vpack.c.b16 %v7204, %v7196
          %v8165 = vpack.c.b16 %v7205, %v7197
          %v8166 = vpack.c.b16 %v7206, %v7198
          %v8167 = vpack.c.b16 %v7207, %v7199
          %v8168 = vpack.c.b16 %v7208, %v7200
          %v8169 = vpack.c.b16 %v7217, %v7209
          %v8170 = vpack.c.b16 %v7218, %v7210
          %v8171 = vpack.c.b16 %v7219, %v7211
          %v8172 = vpack.c.b16 %v7220, %v7212
          %v8173 = vpack.c.b16 %v7221, %v7213
          %v8174 = vpack.c.b16 %v7222, %v7214
          %v8175 = vpack.c.b16 %v7223, %v7215
          %v8176 = vpack.c.b16 %v7224, %v7216
          %v8177 = vpack.c.b16 %v7233, %v7225
          %v8178 = vpack.c.b16 %v7234, %v7226
          %v8179 = vpack.c.b16 %v7235, %v7227
          %v8180 = vpack.c.b16 %v7236, %v7228
          %v8181 = vpack.c.b16 %v7237, %v7229
          %v8182 = vpack.c.b16 %v7238, %v7230
          %v8183 = vpack.c.b16 %v7239, %v7231
          %v8184 = vpack.c.b16 %v7240, %v7232
          %v8185 = vpack.c.b16 %v7249, %v7241
          %v8186 = vpack.c.b16 %v7250, %v7242
          %v8187 = vpack.c.b16 %v7251, %v7243
          %v8188 = vpack.c.b16 %v7252, %v7244
          %v8189 = vpack.c.b16 %v7253, %v7245
          %v8190 = vpack.c.b16 %v7254, %v7246
          %v8191 = vpack.c.b16 %v7255, %v7247
          %v8192 = vpack.c.b16 %v7256, %v7248
          %v8193 = vpack.c.b16 %v7265, %v7257
          %v8194 = vpack.c.b16 %v7266, %v7258
          %v8195 = vpack.c.b16 %v7267, %v7259
          %v8196 = vpack.c.b16 %v7268, %v7260
          %v8197 = vpack.c.b16 %v7269, %v7261
          %v8198 = vpack.c.b16 %v7270, %v7262
          %v8199 = vpack.c.b16 %v7271, %v7263
          %v8200 = vpack.c.b16 %v7272, %v7264
          %v8201 = vpack.c.b16 %v7281, %v7273
          %v8202 = vpack.c.b16 %v7282, %v7274
          %v8203 = vpack.c.b16 %v7283, %v7275
          %v8204 = vpack.c.b16 %v7284, %v7276
          %v8205 = vpack.c.b16 %v7285, %v7277
          %v8206 = vpack.c.b16 %v7286, %v7278
          %v8207 = vpack.c.b16 %v7287, %v7279
          %v8208 = vpack.c.b16 %v7288, %v7280
          %v8209 = vpack.c.b16 %v7297, %v7289
          %v8210 = vpack.c.b16 %v7298, %v7290
          %v8211 = vpack.c.b16 %v7299, %v7291
          %v8212 = vpack.c.b16 %v7300, %v7292
          %v8213 = vpack.c.b16 %v7301, %v7293
          %v8214 = vpack.c.b16 %v7302, %v7294
          %v8215 = vpack.c.b16 %v7303, %v7295
          %v8216 = vpack.c.b16 %v7304, %v7296
          %v8217 = vpack.c.b16 %v7313, %v7305
          %v8218 = vpack.c.b16 %v7314, %v7306
          %v8219 = vpack.c.b16 %v7315, %v7307
          %v8220 = vpack.c.b16 %v7316, %v7308
          %v8221 = vpack.c.b16 %v7317, %v7309
          %v8222 = vpack.c.b16 %v7318, %v7310
          %v8223 = vpack.c.b16 %v7319, %v7311
          %v8224 = vpack.c.b16 %v7320, %v7312
          %v8225 = vpack.c.b16 %v7329, %v7321
          %v8226 = vpack.c.b16 %v7330, %v7322
          %v8227 = vpack.c.b16 %v7331, %v7323
          %v8228 = vpack.c.b16 %v7332, %v7324
          %v8229 = vpack.c.b16 %v7333, %v7325
          %v8230 = vpack.c.b16 %v7334, %v7326
          %v8231 = vpack.c.b16 %v7335, %v7327
          %v8232 = vpack.c.b16 %v7336, %v7328
          %v8233 = vpack.c.b16 %v7345, %v7337
          %v8234 = vpack.c.b16 %v7346, %v7338
          %v8235 = vpack.c.b16 %v7347, %v7339
          %v8236 = vpack.c.b16 %v7348, %v7340
          %v8237 = vpack.c.b16 %v7349, %v7341
          %v8238 = vpack.c.b16 %v7350, %v7342
          %v8239 = vpack.c.b16 %v7351, %v7343
          %v8240 = vpack.c.b16 %v7352, %v7344
          %v8241 = vpack.c.b16 %v7361, %v7353
          %v8242 = vpack.c.b16 %v7362, %v7354
          %v8243 = vpack.c.b16 %v7363, %v7355
          %v8244 = vpack.c.b16 %v7364, %v7356
          %v8245 = vpack.c.b16 %v7365, %v7357
          %v8246 = vpack.c.b16 %v7366, %v7358
          %v8247 = vpack.c.b16 %v7367, %v7359
          %v8248 = vpack.c.b16 %v7368, %v7360
          %v8249 = vpack.c.b16 %v7377, %v7369
          %v8250 = vpack.c.b16 %v7378, %v7370
          %v8251 = vpack.c.b16 %v7379, %v7371
          %v8252 = vpack.c.b16 %v7380, %v7372
          %v8253 = vpack.c.b16 %v7381, %v7373
          %v8254 = vpack.c.b16 %v7382, %v7374
          %v8255 = vpack.c.b16 %v7383, %v7375
          %v8256 = vpack.c.b16 %v7384, %v7376
          %v8257 = vpack.c.b16 %v7393, %v7385
          %v8258 = vpack.c.b16 %v7394, %v7386
          %v8259 = vpack.c.b16 %v7395, %v7387
          %v8260 = vpack.c.b16 %v7396, %v7388
          %v8261 = vpack.c.b16 %v7397, %v7389
          %v8262 = vpack.c.b16 %v7398, %v7390
          %v8263 = vpack.c.b16 %v7399, %v7391
          %v8264 = vpack.c.b16 %v7400, %v7392
          %v8265 = vpack.c.b16 %v7409, %v7401
          %v8266 = vpack.c.b16 %v7410, %v7402
          %v8267 = vpack.c.b16 %v7411, %v7403
          %v8268 = vpack.c.b16 %v7412, %v7404
          %v8269 = vpack.c.b16 %v7413, %v7405
          %v8270 = vpack.c.b16 %v7414, %v7406
          %v8271 = vpack.c.b16 %v7415, %v7407
          %v8272 = vpack.c.b16 %v7416, %v7408
          %v8273 = vpack.c.b16 %v7425, %v7417
          %v8274 = vpack.c.b16 %v7426, %v7418
          %v8275 = vpack.c.b16 %v7427, %v7419
          %v8276 = vpack.c.b16 %v7428, %v7420
          %v8277 = vpack.c.b16 %v7429, %v7421
          %v8278 = vpack.c.b16 %v7430, %v7422
          %v8279 = vpack.c.b16 %v7431, %v7423
          %v8280 = vpack.c.b16 %v7432, %v7424
          %v8281 = vpack.c.b16 %v7441, %v7433
          %v8282 = vpack.c.b16 %v7442, %v7434
          %v8283 = vpack.c.b16 %v7443, %v7435
          %v8284 = vpack.c.b16 %v7444, %v7436
          %v8285 = vpack.c.b16 %v7445, %v7437
          %v8286 = vpack.c.b16 %v7446, %v7438
          %v8287 = vpack.c.b16 %v7447, %v7439
          %v8288 = vpack.c.b16 %v7448, %v7440
          %v8289 = vpack.c.b16 %v7457, %v7449
          %v8290 = vpack.c.b16 %v7458, %v7450
          %v8291 = vpack.c.b16 %v7459, %v7451
          %v8292 = vpack.c.b16 %v7460, %v7452
          %v8293 = vpack.c.b16 %v7461, %v7453
          %v8294 = vpack.c.b16 %v7462, %v7454
          %v8295 = vpack.c.b16 %v7463, %v7455
          %v8296 = vpack.c.b16 %v7464, %v7456
          %v8297 = vpack.c.b16 %v7473, %v7465
          %v8298 = vpack.c.b16 %v7474, %v7466
          %v8299 = vpack.c.b16 %v7475, %v7467
          %v8300 = vpack.c.b16 %v7476, %v7468
          %v8301 = vpack.c.b16 %v7477, %v7469
          %v8302 = vpack.c.b16 %v7478, %v7470
          %v8303 = vpack.c.b16 %v7479, %v7471
          %v8304 = vpack.c.b16 %v7480, %v7472
          %v8305 = vpack.c.b16 %v7489, %v7481
          %v8306 = vpack.c.b16 %v7490, %v7482
          %v8307 = vpack.c.b16 %v7491, %v7483
          %v8308 = vpack.c.b16 %v7492, %v7484
          %v8309 = vpack.c.b16 %v7493, %v7485
          %v8310 = vpack.c.b16 %v7494, %v7486
          %v8311 = vpack.c.b16 %v7495, %v7487
          %v8312 = vpack.c.b16 %v7496, %v7488
          %v8313 = vpack.c.b16 %v7505, %v7497
          %v8314 = vpack.c.b16 %v7506, %v7498
          %v8315 = vpack.c.b16 %v7507, %v7499
          %v8316 = vpack.c.b16 %v7508, %v7500
          %v8317 = vpack.c.b16 %v7509, %v7501
          %v8318 = vpack.c.b16 %v7510, %v7502
          %v8319 = vpack.c.b16 %v7511, %v7503
          %v8320 = vpack.c.b16 %v7512, %v7504
          %v8321 = vpack.c.b16 %v7521, %v7513
          %v8322 = vpack.c.b16 %v7522, %v7514
          %v8323 = vpack.c.b16 %v7523, %v7515
          %v8324 = vpack.c.b16 %v7524, %v7516
          %v8325 = vpack.c.b16 %v7525, %v7517
          %v8326 = vpack.c.b16 %v7526, %v7518
          %v8327 = vpack.c.b16 %v7527, %v7519
          %v8328 = vpack.c.b16 %v7528, %v7520
          %v8329 = vpack.c.b16 %v7537, %v7529
          %v8330 = vpack.c.b16 %v7538, %v7530
          %v8331 = vpack.c.b16 %v7539, %v7531
          %v8332 = vpack.c.b16 %v7540, %v7532
          %v8333 = vpack.c.b16 %v7541, %v7533
          %v8334 = vpack.c.b16 %v7542, %v7534
          %v8335 = vpack.c.b16 %v7543, %v7535
          %v8336 = vpack.c.b16 %v7544, %v7536
          %v8337 = vpack.c.b16 %v7553, %v7545
          %v8338 = vpack.c.b16 %v7554, %v7546
          %v8339 = vpack.c.b16 %v7555, %v7547
          %v8340 = vpack.c.b16 %v7556, %v7548
          %v8341 = vpack.c.b16 %v7557, %v7549
          %v8342 = vpack.c.b16 %v7558, %v7550
          %v8343 = vpack.c.b16 %v7559, %v7551
          %v8344 = vpack.c.b16 %v7560, %v7552
          %v8345 = vpack.c.b16 %v7569, %v7561
          %v8346 = vpack.c.b16 %v7570, %v7562
          %v8347 = vpack.c.b16 %v7571, %v7563
          %v8348 = vpack.c.b16 %v7572, %v7564
          %v8349 = vpack.c.b16 %v7573, %v7565
          %v8350 = vpack.c.b16 %v7574, %v7566
          %v8351 = vpack.c.b16 %v7575, %v7567
          %v8352 = vpack.c.b16 %v7576, %v7568
          %v8353 = vpack.c.b16 %v7585, %v7577
          %v8354 = vpack.c.b16 %v7586, %v7578
          %v8355 = vpack.c.b16 %v7587, %v7579
          %v8356 = vpack.c.b16 %v7588, %v7580
          %v8357 = vpack.c.b16 %v7589, %v7581
          %v8358 = vpack.c.b16 %v7590, %v7582
          %v8359 = vpack.c.b16 %v7591, %v7583
          %v8360 = vpack.c.b16 %v7592, %v7584
          %v8361 = vpack.c.b16 %v7601, %v7593
          %v8362 = vpack.c.b16 %v7602, %v7594
          %v8363 = vpack.c.b16 %v7603, %v7595
          %v8364 = vpack.c.b16 %v7604, %v7596
          %v8365 = vpack.c.b16 %v7605, %v7597
          %v8366 = vpack.c.b16 %v7606, %v7598
          %v8367 = vpack.c.b16 %v7607, %v7599
          %v8368 = vpack.c.b16 %v7608, %v7600
          %v8369 = vpack.c.b16 %v7617, %v7609
          %v8370 = vpack.c.b16 %v7618, %v7610
          %v8371 = vpack.c.b16 %v7619, %v7611
          %v8372 = vpack.c.b16 %v7620, %v7612
          %v8373 = vpack.c.b16 %v7621, %v7613
          %v8374 = vpack.c.b16 %v7622, %v7614
          %v8375 = vpack.c.b16 %v7623, %v7615
          %v8376 = vpack.c.b16 %v7624, %v7616
          %v8377 = vpack.c.b16 %v7633, %v7625
          %v8378 = vpack.c.b16 %v7634, %v7626
          %v8379 = vpack.c.b16 %v7635, %v7627
          %v8380 = vpack.c.b16 %v7636, %v7628
          %v8381 = vpack.c.b16 %v7637, %v7629
          %v8382 = vpack.c.b16 %v7638, %v7630
          %v8383 = vpack.c.b16 %v7639, %v7631
          %v8384 = vpack.c.b16 %v7640, %v7632
          %v8385 = vpack.c.b16 %v7649, %v7641
          %v8386 = vpack.c.b16 %v7650, %v7642
          %v8387 = vpack.c.b16 %v7651, %v7643
          %v8388 = vpack.c.b16 %v7652, %v7644
          %v8389 = vpack.c.b16 %v7653, %v7645
          %v8390 = vpack.c.b16 %v7654, %v7646
          %v8391 = vpack.c.b16 %v7655, %v7647
          %v8392 = vpack.c.b16 %v7656, %v7648
          %v8393 = vpack.c.b16 %v7665, %v7657
          %v8394 = vpack.c.b16 %v7666, %v7658
          %v8395 = vpack.c.b16 %v7667, %v7659
          %v8396 = vpack.c.b16 %v7668, %v7660
          %v8397 = vpack.c.b16 %v7669, %v7661
          %v8398 = vpack.c.b16 %v7670, %v7662
          %v8399 = vpack.c.b16 %v7671, %v7663
          %v8400 = vpack.c.b16 %v7672, %v7664
          %v8401 = vpack.c.b16 %v7681, %v7673
          %v8402 = vpack.c.b16 %v7682, %v7674
          %v8403 = vpack.c.b16 %v7683, %v7675
          %v8404 = vpack.c.b16 %v7684, %v7676
          %v8405 = vpack.c.b16 %v7685, %v7677
          %v8406 = vpack.c.b16 %v7686, %v7678
          %v8407 = vpack.c.b16 %v7687, %v7679
          %v8408 = vpack.c.b16 %v7688, %v7680
          %v8409 = vpack.c.b16 %v7697, %v7689
          %v8410 = vpack.c.b16 %v7698, %v7690
          %v8411 = vpack.c.b16 %v7699, %v7691
          %v8412 = vpack.c.b16 %v7700, %v7692
          %v8413 = vpack.c.b16 %v7701, %v7693
          %v8414 = vpack.c.b16 %v7702, %v7694
          %v8415 = vpack.c.b16 %v7703, %v7695
          %v8416 = vpack.c.b16 %v7704, %v7696
          %v8417 = vpack.c.b16 %v7713, %v7705
          %v8418 = vpack.c.b16 %v7714, %v7706
          %v8419 = vpack.c.b16 %v7715, %v7707
          %v8420 = vpack.c.b16 %v7716, %v7708
          %v8421 = vpack.c.b16 %v7717, %v7709
          %v8422 = vpack.c.b16 %v7718, %v7710
          %v8423 = vpack.c.b16 %v7719, %v7711
          %v8424 = vpack.c.b16 %v7720, %v7712
          %v8425 = vpack.c.b16 %v7729, %v7721
          %v8426 = vpack.c.b16 %v7730, %v7722
          %v8427 = vpack.c.b16 %v7731, %v7723
          %v8428 = vpack.c.b16 %v7732, %v7724
          %v8429 = vpack.c.b16 %v7733, %v7725
          %v8430 = vpack.c.b16 %v7734, %v7726
          %v8431 = vpack.c.b16 %v7735, %v7727
          %v8432 = vpack.c.b16 %v7736, %v7728
          %v8433 = vpack.c.b16 %v7745, %v7737
          %v8434 = vpack.c.b16 %v7746, %v7738
          %v8435 = vpack.c.b16 %v7747, %v7739
          %v8436 = vpack.c.b16 %v7748, %v7740
          %v8437 = vpack.c.b16 %v7749, %v7741
          %v8438 = vpack.c.b16 %v7750, %v7742
          %v8439 = vpack.c.b16 %v7751, %v7743
          %v8440 = vpack.c.b16 %v7752, %v7744
          %v8441 = vpack.c.b16 %v7761, %v7753
          %v8442 = vpack.c.b16 %v7762, %v7754
          %v8443 = vpack.c.b16 %v7763, %v7755
          %v8444 = vpack.c.b16 %v7764, %v7756
          %v8445 = vpack.c.b16 %v7765, %v7757
          %v8446 = vpack.c.b16 %v7766, %v7758
          %v8447 = vpack.c.b16 %v7767, %v7759
          %v8448 = vpack.c.b16 %v7768, %v7760
          %v8449 = vpack.c.b16 %v7777, %v7769
          %v8450 = vpack.c.b16 %v7778, %v7770
          %v8451 = vpack.c.b16 %v7779, %v7771
          %v8452 = vpack.c.b16 %v7780, %v7772
          %v8453 = vpack.c.b16 %v7781, %v7773
          %v8454 = vpack.c.b16 %v7782, %v7774
          %v8455 = vpack.c.b16 %v7783, %v7775
          %v8456 = vpack.c.b16 %v7784, %v7776
          %v8457 = vpack.c.b16 %v7793, %v7785
          %v8458 = vpack.c.b16 %v7794, %v7786
          %v8459 = vpack.c.b16 %v7795, %v7787
          %v8460 = vpack.c.b16 %v7796, %v7788
          %v8461 = vpack.c.b16 %v7797, %v7789
          %v8462 = vpack.c.b16 %v7798, %v7790
          %v8463 = vpack.c.b16 %v7799, %v7791
          %v8464 = vpack.c.b16 %v7800, %v7792
          %v8465 = vpack.c.b16 %v7809, %v7801
          %v8466 = vpack.c.b16 %v7810, %v7802
          %v8467 = vpack.c.b16 %v7811, %v7803
          %v8468 = vpack.c.b16 %v7812, %v7804
          %v8469 = vpack.c.b16 %v7813, %v7805
          %v8470 = vpack.c.b16 %v7814, %v7806
          %v8471 = vpack.c.b16 %v7815, %v7807
          %v8472 = vpack.c.b16 %v7816, %v7808
          %v8473 = vpack.c.b16 %v7825, %v7817
          %v8474 = vpack.c.b16 %v7826, %v7818
          %v8475 = vpack.c.b16 %v7827, %v7819
          %v8476 = vpack.c.b16 %v7828, %v7820
          %v8477 = vpack.c.b16 %v7829, %v7821
          %v8478 = vpack.c.b16 %v7830, %v7822
          %v8479 = vpack.c.b16 %v7831, %v7823
          %v8480 = vpack.c.b16 %v7832, %v7824
          %v8481 = vpack.c.b16 %v7841, %v7833
          %v8482 = vpack.c.b16 %v7842, %v7834
          %v8483 = vpack.c.b16 %v7843, %v7835
          %v8484 = vpack.c.b16 %v7844, %v7836
          %v8485 = vpack.c.b16 %v7845, %v7837
          %v8486 = vpack.c.b16 %v7846, %v7838
          %v8487 = vpack.c.b16 %v7847, %v7839
          %v8488 = vpack.c.b16 %v7848, %v7840
          %v8489 = vpack.c.b16 %v7857, %v7849
          %v8490 = vpack.c.b16 %v7858, %v7850
          %v8491 = vpack.c.b16 %v7859, %v7851
          %v8492 = vpack.c.b16 %v7860, %v7852
          %v8493 = vpack.c.b16 %v7861, %v7853
          %v8494 = vpack.c.b16 %v7862, %v7854
          %v8495 = vpack.c.b16 %v7863, %v7855
          %v8496 = vpack.c.b16 %v7864, %v7856
          %v8497 = vpack.c.b16 %v7873, %v7865
          %v8498 = vpack.c.b16 %v7874, %v7866
          %v8499 = vpack.c.b16 %v7875, %v7867
          %v8500 = vpack.c.b16 %v7876, %v7868
          %v8501 = vpack.c.b16 %v7877, %v7869
          %v8502 = vpack.c.b16 %v7878, %v7870
          %v8503 = vpack.c.b16 %v7879, %v7871
          %v8504 = vpack.c.b16 %v7880, %v7872
          %v8505 = vpack.c.b16 %v7889, %v7881
          %v8506 = vpack.c.b16 %v7890, %v7882
          %v8507 = vpack.c.b16 %v7891, %v7883
          %v8508 = vpack.c.b16 %v7892, %v7884
          %v8509 = vpack.c.b16 %v7893, %v7885
          %v8510 = vpack.c.b16 %v7894, %v7886
          %v8511 = vpack.c.b16 %v7895, %v7887
          %v8512 = vpack.c.b16 %v7896, %v7888
          %v8513 = vpack.c.b16 %v7905, %v7897
          %v8514 = vpack.c.b16 %v7906, %v7898
          %v8515 = vpack.c.b16 %v7907, %v7899
          %v8516 = vpack.c.b16 %v7908, %v7900
          %v8517 = vpack.c.b16 %v7909, %v7901
          %v8518 = vpack.c.b16 %v7910, %v7902
          %v8519 = vpack.c.b16 %v7911, %v7903
          %v8520 = vpack.c.b16 %v7912, %v7904
          %v8521 = vpack.c.b16 %v7921, %v7913
          %v8522 = vpack.c.b16 %v7922, %v7914
          %v8523 = vpack.c.b16 %v7923, %v7915
          %v8524 = vpack.c.b16 %v7924, %v7916
          %v8525 = vpack.c.b16 %v7925, %v7917
          %v8526 = vpack.c.b16 %v7926, %v7918
          %v8527 = vpack.c.b16 %v7927, %v7919
          %v8528 = vpack.c.b16 %v7928, %v7920
          %v8529 = vpack.c.b16 %v7937, %v7929
          %v8530 = vpack.c.b16 %v7938, %v7930
          %v8531 = vpack.c.b16 %v7939, %v7931
          %v8532 = vpack.c.b16 %v7940, %v7932
          %v8533 = vpack.c.b16 %v7941, %v7933
          %v8534 = vpack.c.b16 %v7942, %v7934
          %v8535 = vpack.c.b16 %v7943, %v7935
          %v8536 = vpack.c.b16 %v7944, %v7936
          %v8537 = vpack.c.b16 %v7953, %v7945
          %v8538 = vpack.c.b16 %v7954, %v7946
          %v8539 = vpack.c.b16 %v7955, %v7947
          %v8540 = vpack.c.b16 %v7956, %v7948
          %v8541 = vpack.c.b16 %v7957, %v7949
          %v8542 = vpack.c.b16 %v7958, %v7950
          %v8543 = vpack.c.b16 %v7959, %v7951
          %v8544 = vpack.c.b16 %v7960, %v7952
          %v8545 = vpack.c.b16 %v7969, %v7961
          %v8546 = vpack.c.b16 %v7970, %v7962
          %v8547 = vpack.c.b16 %v7971, %v7963
          %v8548 = vpack.c.b16 %v7972, %v7964
          %v8549 = vpack.c.b16 %v7973, %v7965
          %v8550 = vpack.c.b16 %v7974, %v7966
          %v8551 = vpack.c.b16 %v7975, %v7967
          %v8552 = vpack.c.b16 %v7976, %v7968
          %v8553 = vpack.c.b16 %v7985, %v7977
          %v8554 = vpack.c.b16 %v7986, %v7978
          %v8555 = vpack.c.b16 %v7987, %v7979
          %v8556 = vpack.c.b16 %v7988, %v7980
          %v8557 = vpack.c.b16 %v7989, %v7981
          %v8558 = vpack.c.b16 %v7990, %v7982
          %v8559 = vpack.c.b16 %v7991, %v7983
          %v8560 = vpack.c.b16 %v7992, %v7984
          %v8561 = vpack.c.b16 %v8001, %v7993
          %v8562 = vpack.c.b16 %v8002, %v7994
          %v8563 = vpack.c.b16 %v8003, %v7995
          %v8564 = vpack.c.b16 %v8004, %v7996
          %v8565 = vpack.c.b16 %v8005, %v7997
          %v8566 = vpack.c.b16 %v8006, %v7998
          %v8567 = vpack.c.b16 %v8007, %v7999
          %v8568 = vpack.c.b16 %v8008, %v8000
          %v8569 = vpack.c.b16 %v8017, %v8009
          %v8570 = vpack.c.b16 %v8018, %v8010
          %v8571 = vpack.c.b16 %v8019, %v8011
          %v8572 = vpack.c.b16 %v8020, %v8012
          %v8573 = vpack.c.b16 %v8021, %v8013
          %v8574 = vpack.c.b16 %v8022, %v8014
          %v8575 = vpack.c.b16 %v8023, %v8015
          %v8576 = vpack.c.b16 %v8024, %v8016
          %v8577 = vpack.c.b16 %v8033, %v8025
          %v8578 = vpack.c.b16 %v8034, %v8026
          %v8579 = vpack.c.b16 %v8035, %v8027
          %v8580 = vpack.c.b16 %v8036, %v8028
          %v8581 = vpack.c.b16 %v8037, %v8029
          %v8582 = vpack.c.b16 %v8038, %v8030
          %v8583 = vpack.c.b16 %v8039, %v8031
          %v8584 = vpack.c.b16 %v8040, %v8032
          %v8585 = vpack.c.b16 %v8049, %v8041
          %v8586 = vpack.c.b16 %v8050, %v8042
          %v8587 = vpack.c.b16 %v8051, %v8043
          %v8588 = vpack.c.b16 %v8052, %v8044
          %v8589 = vpack.c.b16 %v8053, %v8045
          %v8590 = vpack.c.b16 %v8054, %v8046
          %v8591 = vpack.c.b16 %v8055, %v8047
          %v8592 = vpack.c.b16 %v8056, %v8048
          %v8593 = vpack.c.b16 %v8065, %v8057
          %v8594 = vpack.c.b16 %v8066, %v8058
          %v8595 = vpack.c.b16 %v8067, %v8059
          %v8596 = vpack.c.b16 %v8068, %v8060
          %v8597 = vpack.c.b16 %v8069, %v8061
          %v8598 = vpack.c.b16 %v8070, %v8062
          %v8599 = vpack.c.b16 %v8071, %v8063
          %v8600 = vpack.c.b16 %v8072, %v8064
          %v8601 = vpack.c.b16 %v8081, %v8073
          %v8602 = vpack.c.b16 %v8082, %v8074
          %v8603 = vpack.c.b16 %v8083, %v8075
          %v8604 = vpack.c.b16 %v8084, %v8076
          %v8605 = vpack.c.b16 %v8085, %v8077
          %v8606 = vpack.c.b16 %v8086, %v8078
          %v8607 = vpack.c.b16 %v8087, %v8079
          %v8608 = vpack.c.b16 %v8088, %v8080
          %v8609 = vpack.c.b16 %v8097, %v8089
          %v8610 = vpack.c.b16 %v8098, %v8090
          %v8611 = vpack.c.b16 %v8099, %v8091
          %v8612 = vpack.c.b16 %v8100, %v8092
          %v8613 = vpack.c.b16 %v8101, %v8093
          %v8614 = vpack.c.b16 %v8102, %v8094
          %v8615 = vpack.c.b16 %v8103, %v8095
          %v8616 = vpack.c.b16 %v8104, %v8096
          %9129 = vmatprep.subr.bf16.mxu0 %v8162
          %9130 = vmatpush1.bf16.msra.mxu0 %v8161
          %9131 = vmatprep.subr.bf16.mxu0 %v8154
          %9132 = vmatpush1.bf16.msra.mxu0 %v8153
          %9133 = vmatprep.subr.bf16.mxu0 %v8146
          %9134 = vmatpush1.bf16.msra.mxu0 %v8145
          %9135 = vmatprep.subr.bf16.mxu0 %v8138
          %9136 = vmatpush1.bf16.msra.mxu0 %v8137
          %9137 = vmatprep.subr.bf16.mxu0 %v8130
          %9138 = vmatpush1.bf16.msra.mxu0 %v8129
          %9139 = vmatprep.subr.bf16.mxu0 %v8122
          %9140 = vmatpush1.bf16.msra.mxu0 %v8121
          %9141 = vmatprep.subr.bf16.mxu0 %v8114
          %9142 = vmatpush1.bf16.msra.mxu0 %v8113
          %9143 = vmatprep.subr.bf16.mxu0 %v8106
          %9144 = vmatpush1.bf16.msra.mxu0 %v8105
          %9145 = vmatprep.subr.bf16.mxu0 %v8226
          %9146 = vmatpush2.bf16.msra.mxu0 %v8225
          %9147 = vmatprep.subr.bf16.mxu0 %v8218
          %9148 = vmatpush2.bf16.msra.mxu0 %v8217
          %9149 = vmatprep.subr.bf16.mxu0 %v8210
          %9150 = vmatpush2.bf16.msra.mxu0 %v8209
          %9151 = vmatprep.subr.bf16.mxu0 %v8202
          %9152 = vmatpush2.bf16.msra.mxu0 %v8201
          %9153 = vmatprep.subr.bf16.mxu0 %v8194
          %9154 = vmatpush2.bf16.msra.mxu0 %v8193
          %9155 = vmatprep.subr.bf16.mxu0 %v8186
          %9156 = vmatpush2.bf16.msra.mxu0 %v8185
          %9157 = vmatprep.subr.bf16.mxu0 %v8178
          %9158 = vmatpush2.bf16.msra.mxu0 %v8177
          %9159 = vmatprep.subr.bf16.mxu0 %v8170
          %9160 = vmatpush2.bf16.msra.mxu0 %v8169
          %9161 = vmatprep.mubr.bf16.mxu0 %v6008
          %9162 = vmatmul.mubr.bf16.gmra.mxu0 %v6007
          %v9163 = vpop.f32.mrf.mxu0
          %v9164 = vadd.f32 %v6532, %v9163
          %v9165 = vpop.f32.mrf.mxu0
          %v9166 = vadd.f32 %v6536, %v9165
          %v9167 = vpop.f32.mrf.mxu0
          %v9168 = vpop.f32.mrf.mxu0
          %9169 = vdwg.mxu0
          %9170 = vmatprep.subr.bf16.mxu0 %v8290
          %9171 = vmatpush1.bf16.msra.mxu0 %v8289
          %9172 = vmatprep.subr.bf16.mxu0 %v8282
          %9173 = vmatpush1.bf16.msra.mxu0 %v8281
          %9174 = vmatprep.subr.bf16.mxu0 %v8274
          %9175 = vmatpush1.bf16.msra.mxu0 %v8273
          %9176 = vmatprep.subr.bf16.mxu0 %v8266
          %9177 = vmatpush1.bf16.msra.mxu0 %v8265
          %9178 = vmatprep.subr.bf16.mxu0 %v8258
          %9179 = vmatpush1.bf16.msra.mxu0 %v8257
          %9180 = vmatprep.subr.bf16.mxu0 %v8250
          %9181 = vmatpush1.bf16.msra.mxu0 %v8249
          %9182 = vmatprep.subr.bf16.mxu0 %v8242
          %9183 = vmatpush1.bf16.msra.mxu0 %v8241
          %9184 = vmatprep.subr.bf16.mxu0 %v8234
          %9185 = vmatpush1.bf16.msra.mxu0 %v8233
          %9186 = vmatprep.subr.bf16.mxu0 %v8354
          %9187 = vmatpush2.bf16.msra.mxu0 %v8353
          %9188 = vmatprep.subr.bf16.mxu0 %v8346
          %9189 = vmatpush2.bf16.msra.mxu0 %v8345
          %9190 = vmatprep.subr.bf16.mxu0 %v8338
          %9191 = vmatpush2.bf16.msra.mxu0 %v8337
          %9192 = vmatprep.subr.bf16.mxu0 %v8330
          %9193 = vmatpush2.bf16.msra.mxu0 %v8329
          %9194 = vmatprep.subr.bf16.mxu0 %v8322
          %9195 = vmatpush2.bf16.msra.mxu0 %v8321
          %9196 = vmatprep.subr.bf16.mxu0 %v8314
          %9197 = vmatpush2.bf16.msra.mxu0 %v8313
          %9198 = vmatprep.subr.bf16.mxu0 %v8306
          %9199 = vmatpush2.bf16.msra.mxu0 %v8305
          %9200 = vmatprep.subr.bf16.mxu0 %v8298
          %9201 = vmatpush2.bf16.msra.mxu0 %v8297
          %9202 = vmatprep.mubr.bf16.mxu0 %v6010
          %9203 = vmatmul.mubr.bf16.gmra.mxu0 %v6009
          %v9204 = vpop.f32.mrf.mxu0
          %v9205 = vadd.f32 %v9164, %v9204
          %v9206 = vpop.f32.mrf.mxu0
          %v9207 = vadd.f32 %v9166, %v9206
          %v9208 = vpop.f32.mrf.mxu0
          %v9209 = vpop.f32.mrf.mxu0
          %9210 = vdwg.mxu0
          %9211 = vmatprep.subr.bf16.mxu0 %v8418
          %9212 = vmatpush1.bf16.msra.mxu0 %v8417
          %9213 = vmatprep.subr.bf16.mxu0 %v8410
          %9214 = vmatpush1.bf16.msra.mxu0 %v8409
          %9215 = vmatprep.subr.bf16.mxu0 %v8402
          %9216 = vmatpush1.bf16.msra.mxu0 %v8401
          %9217 = vmatprep.subr.bf16.mxu0 %v8394
          %9218 = vmatpush1.bf16.msra.mxu0 %v8393
          %9219 = vmatprep.subr.bf16.mxu0 %v8386
          %9220 = vmatpush1.bf16.msra.mxu0 %v8385
          %9221 = vmatprep.subr.bf16.mxu0 %v8378
          %9222 = vmatpush1.bf16.msra.mxu0 %v8377
          %9223 = vmatprep.subr.bf16.mxu0 %v8370
          %9224 = vmatpush1.bf16.msra.mxu0 %v8369
          %9225 = vmatprep.subr.bf16.mxu0 %v8362
          %9226 = vmatpush1.bf16.msra.mxu0 %v8361
          %9227 = vmatprep.subr.bf16.mxu0 %v8482
          %9228 = vmatpush2.bf16.msra.mxu0 %v8481
          %9229 = vmatprep.subr.bf16.mxu0 %v8474
          %9230 = vmatpush2.bf16.msra.mxu0 %v8473
          %9231 = vmatprep.subr.bf16.mxu0 %v8466
          %9232 = vmatpush2.bf16.msra.mxu0 %v8465
          %9233 = vmatprep.subr.bf16.mxu0 %v8458
          %9234 = vmatpush2.bf16.msra.mxu0 %v8457
          %9235 = vmatprep.subr.bf16.mxu0 %v8450
          %9236 = vmatpush2.bf16.msra.mxu0 %v8449
          %9237 = vmatprep.subr.bf16.mxu0 %v8442
          %9238 = vmatpush2.bf16.msra.mxu0 %v8441
          %9239 = vmatprep.subr.bf16.mxu0 %v8434
          %9240 = vmatpush2.bf16.msra.mxu0 %v8433
          %9241 = vmatprep.subr.bf16.mxu0 %v8426
          %9242 = vmatpush2.bf16.msra.mxu0 %v8425
          %9243 = vmatprep.mubr.bf16.mxu0 %v6012
          %9244 = vmatmul.mubr.bf16.gmra.mxu0 %v6011
          %v9245 = vpop.f32.mrf.mxu0
          %v9246 = vadd.f32 %v9205, %v9245
          %v9247 = vpop.f32.mrf.mxu0
          %v9248 = vadd.f32 %v9207, %v9247
          %v9249 = vpop.f32.mrf.mxu0
          %v9250 = vpop.f32.mrf.mxu0
          %9251 = vdwg.mxu0
          %9252 = vmatprep.subr.bf16.mxu0 %v8546
          %9253 = vmatpush1.bf16.msra.mxu0 %v8545
          %9254 = vmatprep.subr.bf16.mxu0 %v8538
          %9255 = vmatpush1.bf16.msra.mxu0 %v8537
          %9256 = vmatprep.subr.bf16.mxu0 %v8530
          %9257 = vmatpush1.bf16.msra.mxu0 %v8529
          %9258 = vmatprep.subr.bf16.mxu0 %v8522
          %9259 = vmatpush1.bf16.msra.mxu0 %v8521
          %9260 = vmatprep.subr.bf16.mxu0 %v8514
          %9261 = vmatpush1.bf16.msra.mxu0 %v8513
          %9262 = vmatprep.subr.bf16.mxu0 %v8506
          %9263 = vmatpush1.bf16.msra.mxu0 %v8505
          %9264 = vmatprep.subr.bf16.mxu0 %v8498
          %9265 = vmatpush1.bf16.msra.mxu0 %v8497
          %9266 = vmatprep.subr.bf16.mxu0 %v8490
          %9267 = vmatpush1.bf16.msra.mxu0 %v8489
          %9268 = vmatprep.subr.bf16.mxu0 %v8610
          %9269 = vmatpush2.bf16.msra.mxu0 %v8609
          %9270 = vmatprep.subr.bf16.mxu0 %v8602
          %9271 = vmatpush2.bf16.msra.mxu0 %v8601
          %9272 = vmatprep.subr.bf16.mxu0 %v8594
          %9273 = vmatpush2.bf16.msra.mxu0 %v8593
          %9274 = vmatprep.subr.bf16.mxu0 %v8586
          %9275 = vmatpush2.bf16.msra.mxu0 %v8585
          %9276 = vmatprep.subr.bf16.mxu0 %v8578
          %9277 = vmatpush2.bf16.msra.mxu0 %v8577
          %9278 = vmatprep.subr.bf16.mxu0 %v8570
          %9279 = vmatpush2.bf16.msra.mxu0 %v8569
          %9280 = vmatprep.subr.bf16.mxu0 %v8562
          %9281 = vmatpush2.bf16.msra.mxu0 %v8561
          %9282 = vmatprep.subr.bf16.mxu0 %v8554
          %9283 = vmatpush2.bf16.msra.mxu0 %v8553
          %9284 = vmatprep.mubr.bf16.mxu0 %v6014
          %9285 = vmatmul.mubr.bf16.gmra.mxu0 %v6013
          %v9286 = vpop.f32.mrf.mxu0
          %v9287 = vadd.f32 %v9246, %v9286
          %v9288 = vpop.f32.mrf.mxu0
          %v9289 = vadd.f32 %v9248, %v9288
          %v9290 = vpop.f32.mrf.mxu0
          %v9291 = vpop.f32.mrf.mxu0
          %9292 = vdwg.mxu0
          %9293 = vmatprep.subr.bf16.mxu0 %v8164
          %9294 = vmatpush1.bf16.msra.mxu0 %v8163
          %9295 = vmatprep.subr.bf16.mxu0 %v8156
          %9296 = vmatpush1.bf16.msra.mxu0 %v8155
          %9297 = vmatprep.subr.bf16.mxu0 %v8148
          %9298 = vmatpush1.bf16.msra.mxu0 %v8147
          %9299 = vmatprep.subr.bf16.mxu0 %v8140
          %9300 = vmatpush1.bf16.msra.mxu0 %v8139
          %9301 = vmatprep.subr.bf16.mxu0 %v8132
          %9302 = vmatpush1.bf16.msra.mxu0 %v8131
          %9303 = vmatprep.subr.bf16.mxu0 %v8124
          %9304 = vmatpush1.bf16.msra.mxu0 %v8123
          %9305 = vmatprep.subr.bf16.mxu0 %v8116
          %9306 = vmatpush1.bf16.msra.mxu0 %v8115
          %9307 = vmatprep.subr.bf16.mxu0 %v8108
          %9308 = vmatpush1.bf16.msra.mxu0 %v8107
          %9309 = vmatprep.subr.bf16.mxu0 %v8228
          %9310 = vmatpush2.bf16.msra.mxu0 %v8227
          %9311 = vmatprep.subr.bf16.mxu0 %v8220
          %9312 = vmatpush2.bf16.msra.mxu0 %v8219
          %9313 = vmatprep.subr.bf16.mxu0 %v8212
          %9314 = vmatpush2.bf16.msra.mxu0 %v8211
          %9315 = vmatprep.subr.bf16.mxu0 %v8204
          %9316 = vmatpush2.bf16.msra.mxu0 %v8203
          %9317 = vmatprep.subr.bf16.mxu0 %v8196
          %9318 = vmatpush2.bf16.msra.mxu0 %v8195
          %9319 = vmatprep.subr.bf16.mxu0 %v8188
          %9320 = vmatpush2.bf16.msra.mxu0 %v8187
          %9321 = vmatprep.subr.bf16.mxu0 %v8180
          %9322 = vmatpush2.bf16.msra.mxu0 %v8179
          %9323 = vmatprep.subr.bf16.mxu0 %v8172
          %9324 = vmatpush2.bf16.msra.mxu0 %v8171
          %9325 = vmatprep.mubr.bf16.mxu0 %v6008
          %9326 = vmatmul.mubr.bf16.gmra.mxu0 %v6007
          %v9327 = vpop.f32.mrf.mxu0
          %v9328 = vadd.f32 %v6540, %v9327
          %v9329 = vpop.f32.mrf.mxu0
          %v9330 = vadd.f32 %v6544, %v9329
          %v9331 = vpop.f32.mrf.mxu0
          %v9332 = vpop.f32.mrf.mxu0
          %9333 = vdwg.mxu0
          %9334 = vmatprep.subr.bf16.mxu0 %v8292
          %9335 = vmatpush1.bf16.msra.mxu0 %v8291
          %9336 = vmatprep.subr.bf16.mxu0 %v8284
          %9337 = vmatpush1.bf16.msra.mxu0 %v8283
          %9338 = vmatprep.subr.bf16.mxu0 %v8276
          %9339 = vmatpush1.bf16.msra.mxu0 %v8275
          %9340 = vmatprep.subr.bf16.mxu0 %v8268
          %9341 = vmatpush1.bf16.msra.mxu0 %v8267
          %9342 = vmatprep.subr.bf16.mxu0 %v8260
          %9343 = vmatpush1.bf16.msra.mxu0 %v8259
          %9344 = vmatprep.subr.bf16.mxu0 %v8252
          %9345 = vmatpush1.bf16.msra.mxu0 %v8251
          %9346 = vmatprep.subr.bf16.mxu0 %v8244
          %9347 = vmatpush1.bf16.msra.mxu0 %v8243
          %9348 = vmatprep.subr.bf16.mxu0 %v8236
          %9349 = vmatpush1.bf16.msra.mxu0 %v8235
          %9350 = vmatprep.subr.bf16.mxu0 %v8356
          %9351 = vmatpush2.bf16.msra.mxu0 %v8355
          %9352 = vmatprep.subr.bf16.mxu0 %v8348
          %9353 = vmatpush2.bf16.msra.mxu0 %v8347
          %9354 = vmatprep.subr.bf16.mxu0 %v8340
          %9355 = vmatpush2.bf16.msra.mxu0 %v8339
          %9356 = vmatprep.subr.bf16.mxu0 %v8332
          %9357 = vmatpush2.bf16.msra.mxu0 %v8331
          %9358 = vmatprep.subr.bf16.mxu0 %v8324
          %9359 = vmatpush2.bf16.msra.mxu0 %v8323
          %9360 = vmatprep.subr.bf16.mxu0 %v8316
          %9361 = vmatpush2.bf16.msra.mxu0 %v8315
          %9362 = vmatprep.subr.bf16.mxu0 %v8308
          %9363 = vmatpush2.bf16.msra.mxu0 %v8307
          %9364 = vmatprep.subr.bf16.mxu0 %v8300
          %9365 = vmatpush2.bf16.msra.mxu0 %v8299
          %9366 = vmatprep.mubr.bf16.mxu0 %v6010
          %9367 = vmatmul.mubr.bf16.gmra.mxu0 %v6009
          %v9368 = vpop.f32.mrf.mxu0
          %v9369 = vadd.f32 %v9328, %v9368
          %v9370 = vpop.f32.mrf.mxu0
          %v9371 = vadd.f32 %v9330, %v9370
          %v9372 = vpop.f32.mrf.mxu0
          %v9373 = vpop.f32.mrf.mxu0
          %9374 = vdwg.mxu0
          %9375 = vmatprep.subr.bf16.mxu0 %v8420
          %9376 = vmatpush1.bf16.msra.mxu0 %v8419
          %9377 = vmatprep.subr.bf16.mxu0 %v8412
          %9378 = vmatpush1.bf16.msra.mxu0 %v8411
          %9379 = vmatprep.subr.bf16.mxu0 %v8404
          %9380 = vmatpush1.bf16.msra.mxu0 %v8403
          %9381 = vmatprep.subr.bf16.mxu0 %v8396
          %9382 = vmatpush1.bf16.msra.mxu0 %v8395
          %9383 = vmatprep.subr.bf16.mxu0 %v8388
          %9384 = vmatpush1.bf16.msra.mxu0 %v8387
          %9385 = vmatprep.subr.bf16.mxu0 %v8380
          %9386 = vmatpush1.bf16.msra.mxu0 %v8379
          %9387 = vmatprep.subr.bf16.mxu0 %v8372
          %9388 = vmatpush1.bf16.msra.mxu0 %v8371
          %9389 = vmatprep.subr.bf16.mxu0 %v8364
          %9390 = vmatpush1.bf16.msra.mxu0 %v8363
          %9391 = vmatprep.subr.bf16.mxu0 %v8484
          %9392 = vmatpush2.bf16.msra.mxu0 %v8483
          %9393 = vmatprep.subr.bf16.mxu0 %v8476
          %9394 = vmatpush2.bf16.msra.mxu0 %v8475
          %9395 = vmatprep.subr.bf16.mxu0 %v8468
          %9396 = vmatpush2.bf16.msra.mxu0 %v8467
          %9397 = vmatprep.subr.bf16.mxu0 %v8460
          %9398 = vmatpush2.bf16.msra.mxu0 %v8459
          %9399 = vmatprep.subr.bf16.mxu0 %v8452
          %9400 = vmatpush2.bf16.msra.mxu0 %v8451
          %9401 = vmatprep.subr.bf16.mxu0 %v8444
          %9402 = vmatpush2.bf16.msra.mxu0 %v8443
          %9403 = vmatprep.subr.bf16.mxu0 %v8436
          %9404 = vmatpush2.bf16.msra.mxu0 %v8435
          %9405 = vmatprep.subr.bf16.mxu0 %v8428
          %9406 = vmatpush2.bf16.msra.mxu0 %v8427
          %9407 = vmatprep.mubr.bf16.mxu0 %v6012
          %9408 = vmatmul.mubr.bf16.gmra.mxu0 %v6011
          %v9409 = vpop.f32.mrf.mxu0
          %v9410 = vadd.f32 %v9369, %v9409
          %v9411 = vpop.f32.mrf.mxu0
          %v9412 = vadd.f32 %v9371, %v9411
          %v9413 = vpop.f32.mrf.mxu0
          %v9414 = vpop.f32.mrf.mxu0
          %9415 = vdwg.mxu0
          %9416 = vmatprep.subr.bf16.mxu0 %v8548
          %9417 = vmatpush1.bf16.msra.mxu0 %v8547
          %9418 = vmatprep.subr.bf16.mxu0 %v8540
          %9419 = vmatpush1.bf16.msra.mxu0 %v8539
          %9420 = vmatprep.subr.bf16.mxu0 %v8532
          %9421 = vmatpush1.bf16.msra.mxu0 %v8531
          %9422 = vmatprep.subr.bf16.mxu0 %v8524
          %9423 = vmatpush1.bf16.msra.mxu0 %v8523
          %9424 = vmatprep.subr.bf16.mxu0 %v8516
          %9425 = vmatpush1.bf16.msra.mxu0 %v8515
          %9426 = vmatprep.subr.bf16.mxu0 %v8508
          %9427 = vmatpush1.bf16.msra.mxu0 %v8507
          %9428 = vmatprep.subr.bf16.mxu0 %v8500
          %9429 = vmatpush1.bf16.msra.mxu0 %v8499
          %9430 = vmatprep.subr.bf16.mxu0 %v8492
          %9431 = vmatpush1.bf16.msra.mxu0 %v8491
          %9432 = vmatprep.subr.bf16.mxu0 %v8612
          %9433 = vmatpush2.bf16.msra.mxu0 %v8611
          %9434 = vmatprep.subr.bf16.mxu0 %v8604
          %9435 = vmatpush2.bf16.msra.mxu0 %v8603
          %9436 = vmatprep.subr.bf16.mxu0 %v8596
          %9437 = vmatpush2.bf16.msra.mxu0 %v8595
          %9438 = vmatprep.subr.bf16.mxu0 %v8588
          %9439 = vmatpush2.bf16.msra.mxu0 %v8587
          %9440 = vmatprep.subr.bf16.mxu0 %v8580
          %9441 = vmatpush2.bf16.msra.mxu0 %v8579
          %9442 = vmatprep.subr.bf16.mxu0 %v8572
          %9443 = vmatpush2.bf16.msra.mxu0 %v8571
          %9444 = vmatprep.subr.bf16.mxu0 %v8564
          %9445 = vmatpush2.bf16.msra.mxu0 %v8563
          %9446 = vmatprep.subr.bf16.mxu0 %v8556
          %9447 = vmatpush2.bf16.msra.mxu0 %v8555
          %9448 = vmatprep.mubr.bf16.mxu0 %v6014
          %9449 = vmatmul.mubr.bf16.gmra.mxu0 %v6013
          %v9450 = vpop.f32.mrf.mxu0
          %v9451 = vadd.f32 %v9410, %v9450
          %v9452 = vpop.f32.mrf.mxu0
          %v9453 = vadd.f32 %v9412, %v9452
          %v9454 = vpop.f32.mrf.mxu0
          %v9455 = vpop.f32.mrf.mxu0
          %9456 = vdwg.mxu0
          %9457 = vmatprep.subr.bf16.mxu0 %v8166
          %9458 = vmatpush1.bf16.msra.mxu0 %v8165
          %9459 = vmatprep.subr.bf16.mxu0 %v8158
          %9460 = vmatpush1.bf16.msra.mxu0 %v8157
          %9461 = vmatprep.subr.bf16.mxu0 %v8150
          %9462 = vmatpush1.bf16.msra.mxu0 %v8149
          %9463 = vmatprep.subr.bf16.mxu0 %v8142
          %9464 = vmatpush1.bf16.msra.mxu0 %v8141
          %9465 = vmatprep.subr.bf16.mxu0 %v8134
          %9466 = vmatpush1.bf16.msra.mxu0 %v8133
          %9467 = vmatprep.subr.bf16.mxu0 %v8126
          %9468 = vmatpush1.bf16.msra.mxu0 %v8125
          %9469 = vmatprep.subr.bf16.mxu0 %v8118
          %9470 = vmatpush1.bf16.msra.mxu0 %v8117
          %9471 = vmatprep.subr.bf16.mxu0 %v8110
          %9472 = vmatpush1.bf16.msra.mxu0 %v8109
          %9473 = vmatprep.subr.bf16.mxu0 %v8230
          %9474 = vmatpush2.bf16.msra.mxu0 %v8229
          %9475 = vmatprep.subr.bf16.mxu0 %v8222
          %9476 = vmatpush2.bf16.msra.mxu0 %v8221
          %9477 = vmatprep.subr.bf16.mxu0 %v8214
          %9478 = vmatpush2.bf16.msra.mxu0 %v8213
          %9479 = vmatprep.subr.bf16.mxu0 %v8206
          %9480 = vmatpush2.bf16.msra.mxu0 %v8205
          %9481 = vmatprep.subr.bf16.mxu0 %v8198
          %9482 = vmatpush2.bf16.msra.mxu0 %v8197
          %9483 = vmatprep.subr.bf16.mxu0 %v8190
          %9484 = vmatpush2.bf16.msra.mxu0 %v8189
          %9485 = vmatprep.subr.bf16.mxu0 %v8182
          %9486 = vmatpush2.bf16.msra.mxu0 %v8181
          %9487 = vmatprep.subr.bf16.mxu0 %v8174
          %9488 = vmatpush2.bf16.msra.mxu0 %v8173
          %9489 = vmatprep.mubr.bf16.mxu0 %v6008
          %9490 = vmatmul.mubr.bf16.gmra.mxu0 %v6007
          %v9491 = vpop.f32.mrf.mxu0
          %v9492 = vadd.f32 %v6548, %v9491
          %v9493 = vpop.f32.mrf.mxu0
          %v9494 = vadd.f32 %v6552, %v9493
          %v9495 = vpop.f32.mrf.mxu0
          %v9496 = vpop.f32.mrf.mxu0
          %9497 = vdwg.mxu0
          %9498 = vmatprep.subr.bf16.mxu0 %v8294
          %9499 = vmatpush1.bf16.msra.mxu0 %v8293
          %9500 = vmatprep.subr.bf16.mxu0 %v8286
          %9501 = vmatpush1.bf16.msra.mxu0 %v8285
          %9502 = vmatprep.subr.bf16.mxu0 %v8278
          %9503 = vmatpush1.bf16.msra.mxu0 %v8277
          %9504 = vmatprep.subr.bf16.mxu0 %v8270
          %9505 = vmatpush1.bf16.msra.mxu0 %v8269
          %9506 = vmatprep.subr.bf16.mxu0 %v8262
          %9507 = vmatpush1.bf16.msra.mxu0 %v8261
          %9508 = vmatprep.subr.bf16.mxu0 %v8254
          %9509 = vmatpush1.bf16.msra.mxu0 %v8253
          %9510 = vmatprep.subr.bf16.mxu0 %v8246
          %9511 = vmatpush1.bf16.msra.mxu0 %v8245
          %9512 = vmatprep.subr.bf16.mxu0 %v8238
          %9513 = vmatpush1.bf16.msra.mxu0 %v8237
          %9514 = vmatprep.subr.bf16.mxu0 %v8358
          %9515 = vmatpush2.bf16.msra.mxu0 %v8357
          %9516 = vmatprep.subr.bf16.mxu0 %v8350
          %9517 = vmatpush2.bf16.msra.mxu0 %v8349
          %9518 = vmatprep.subr.bf16.mxu0 %v8342
          %9519 = vmatpush2.bf16.msra.mxu0 %v8341
          %9520 = vmatprep.subr.bf16.mxu0 %v8334
          %9521 = vmatpush2.bf16.msra.mxu0 %v8333
          %9522 = vmatprep.subr.bf16.mxu0 %v8326
          %9523 = vmatpush2.bf16.msra.mxu0 %v8325
          %9524 = vmatprep.subr.bf16.mxu0 %v8318
          %9525 = vmatpush2.bf16.msra.mxu0 %v8317
          %9526 = vmatprep.subr.bf16.mxu0 %v8310
          %9527 = vmatpush2.bf16.msra.mxu0 %v8309
          %9528 = vmatprep.subr.bf16.mxu0 %v8302
          %9529 = vmatpush2.bf16.msra.mxu0 %v8301
          %9530 = vmatprep.mubr.bf16.mxu0 %v6010
          %9531 = vmatmul.mubr.bf16.gmra.mxu0 %v6009
          %v9532 = vpop.f32.mrf.mxu0
          %v9533 = vadd.f32 %v9492, %v9532
          %v9534 = vpop.f32.mrf.mxu0
          %v9535 = vadd.f32 %v9494, %v9534
          %v9536 = vpop.f32.mrf.mxu0
          %v9537 = vpop.f32.mrf.mxu0
          %9538 = vdwg.mxu0
          %9539 = vmatprep.subr.bf16.mxu0 %v8422
          %9540 = vmatpush1.bf16.msra.mxu0 %v8421
          %9541 = vmatprep.subr.bf16.mxu0 %v8414
          %9542 = vmatpush1.bf16.msra.mxu0 %v8413
          %9543 = vmatprep.subr.bf16.mxu0 %v8406
          %9544 = vmatpush1.bf16.msra.mxu0 %v8405
          %9545 = vmatprep.subr.bf16.mxu0 %v8398
          %9546 = vmatpush1.bf16.msra.mxu0 %v8397
          %9547 = vmatprep.subr.bf16.mxu0 %v8390
          %9548 = vmatpush1.bf16.msra.mxu0 %v8389
          %9549 = vmatprep.subr.bf16.mxu0 %v8382
          %9550 = vmatpush1.bf16.msra.mxu0 %v8381
          %9551 = vmatprep.subr.bf16.mxu0 %v8374
          %9552 = vmatpush1.bf16.msra.mxu0 %v8373
          %9553 = vmatprep.subr.bf16.mxu0 %v8366
          %9554 = vmatpush1.bf16.msra.mxu0 %v8365
          %9555 = vmatprep.subr.bf16.mxu0 %v8486
          %9556 = vmatpush2.bf16.msra.mxu0 %v8485
          %9557 = vmatprep.subr.bf16.mxu0 %v8478
          %9558 = vmatpush2.bf16.msra.mxu0 %v8477
          %9559 = vmatprep.subr.bf16.mxu0 %v8470
          %9560 = vmatpush2.bf16.msra.mxu0 %v8469
          %9561 = vmatprep.subr.bf16.mxu0 %v8462
          %9562 = vmatpush2.bf16.msra.mxu0 %v8461
          %9563 = vmatprep.subr.bf16.mxu0 %v8454
          %9564 = vmatpush2.bf16.msra.mxu0 %v8453
          %9565 = vmatprep.subr.bf16.mxu0 %v8446
          %9566 = vmatpush2.bf16.msra.mxu0 %v8445
          %9567 = vmatprep.subr.bf16.mxu0 %v8438
          %9568 = vmatpush2.bf16.msra.mxu0 %v8437
          %9569 = vmatprep.subr.bf16.mxu0 %v8430
          %9570 = vmatpush2.bf16.msra.mxu0 %v8429
          %9571 = vmatprep.mubr.bf16.mxu0 %v6012
          %9572 = vmatmul.mubr.bf16.gmra.mxu0 %v6011
          %v9573 = vpop.f32.mrf.mxu0
          %v9574 = vadd.f32 %v9533, %v9573
          %v9575 = vpop.f32.mrf.mxu0
          %v9576 = vadd.f32 %v9535, %v9575
          %v9577 = vpop.f32.mrf.mxu0
          %v9578 = vpop.f32.mrf.mxu0
          %9579 = vdwg.mxu0
          %9580 = vmatprep.subr.bf16.mxu0 %v8550
          %9581 = vmatpush1.bf16.msra.mxu0 %v8549
          %9582 = vmatprep.subr.bf16.mxu0 %v8542
          %9583 = vmatpush1.bf16.msra.mxu0 %v8541
          %9584 = vmatprep.subr.bf16.mxu0 %v8534
          %9585 = vmatpush1.bf16.msra.mxu0 %v8533
          %9586 = vmatprep.subr.bf16.mxu0 %v8526
          %9587 = vmatpush1.bf16.msra.mxu0 %v8525
          %9588 = vmatprep.subr.bf16.mxu0 %v8518
          %9589 = vmatpush1.bf16.msra.mxu0 %v8517
          %9590 = vmatprep.subr.bf16.mxu0 %v8510
          %9591 = vmatpush1.bf16.msra.mxu0 %v8509
          %9592 = vmatprep.subr.bf16.mxu0 %v8502
          %9593 = vmatpush1.bf16.msra.mxu0 %v8501
          %9594 = vmatprep.subr.bf16.mxu0 %v8494
          %9595 = vmatpush1.bf16.msra.mxu0 %v8493
          %9596 = vmatprep.subr.bf16.mxu0 %v8614
          %9597 = vmatpush2.bf16.msra.mxu0 %v8613
          %9598 = vmatprep.subr.bf16.mxu0 %v8606
          %9599 = vmatpush2.bf16.msra.mxu0 %v8605
          %9600 = vmatprep.subr.bf16.mxu0 %v8598
          %9601 = vmatpush2.bf16.msra.mxu0 %v8597
          %9602 = vmatprep.subr.bf16.mxu0 %v8590
          %9603 = vmatpush2.bf16.msra.mxu0 %v8589
          %9604 = vmatprep.subr.bf16.mxu0 %v8582
          %9605 = vmatpush2.bf16.msra.mxu0 %v8581
          %9606 = vmatprep.subr.bf16.mxu0 %v8574
          %9607 = vmatpush2.bf16.msra.mxu0 %v8573
          %9608 = vmatprep.subr.bf16.mxu0 %v8566
          %9609 = vmatpush2.bf16.msra.mxu0 %v8565
          %9610 = vmatprep.subr.bf16.mxu0 %v8558
          %9611 = vmatpush2.bf16.msra.mxu0 %v8557
          %9612 = vmatprep.mubr.bf16.mxu0 %v6014
          %9613 = vmatmul.mubr.bf16.gmra.mxu0 %v6013
          %v9614 = vpop.f32.mrf.mxu0
          %v9615 = vadd.f32 %v9574, %v9614
          %v9616 = vpop.f32.mrf.mxu0
          %v9617 = vadd.f32 %v9576, %v9616
          %v9618 = vpop.f32.mrf.mxu0
          %v9619 = vpop.f32.mrf.mxu0
          %9620 = vdwg.mxu0
          %9621 = vmatprep.subr.bf16.mxu0 %v8168
          %9622 = vmatpush1.bf16.msra.mxu0 %v8167
          %9623 = vmatprep.subr.bf16.mxu0 %v8160
          %9624 = vmatpush1.bf16.msra.mxu0 %v8159
          %9625 = vmatprep.subr.bf16.mxu0 %v8152
          %9626 = vmatpush1.bf16.msra.mxu0 %v8151
          %9627 = vmatprep.subr.bf16.mxu0 %v8144
          %9628 = vmatpush1.bf16.msra.mxu0 %v8143
          %9629 = vmatprep.subr.bf16.mxu0 %v8136
          %9630 = vmatpush1.bf16.msra.mxu0 %v8135
          %9631 = vmatprep.subr.bf16.mxu0 %v8128
          %9632 = vmatpush1.bf16.msra.mxu0 %v8127
          %9633 = vmatprep.subr.bf16.mxu0 %v8120
          %9634 = vmatpush1.bf16.msra.mxu0 %v8119
          %9635 = vmatprep.subr.bf16.mxu0 %v8112
          %9636 = vmatpush1.bf16.msra.mxu0 %v8111
          %9637 = vmatprep.subr.bf16.mxu0 %v8232
          %9638 = vmatpush2.bf16.msra.mxu0 %v8231
          %9639 = vmatprep.subr.bf16.mxu0 %v8224
          %9640 = vmatpush2.bf16.msra.mxu0 %v8223
          %9641 = vmatprep.subr.bf16.mxu0 %v8216
          %9642 = vmatpush2.bf16.msra.mxu0 %v8215
          %9643 = vmatprep.subr.bf16.mxu0 %v8208
          %9644 = vmatpush2.bf16.msra.mxu0 %v8207
          %9645 = vmatprep.subr.bf16.mxu0 %v8200
          %9646 = vmatpush2.bf16.msra.mxu0 %v8199
          %9647 = vmatprep.subr.bf16.mxu0 %v8192
          %9648 = vmatpush2.bf16.msra.mxu0 %v8191
          %9649 = vmatprep.subr.bf16.mxu0 %v8184
          %9650 = vmatpush2.bf16.msra.mxu0 %v8183
          %9651 = vmatprep.subr.bf16.mxu0 %v8176
          %9652 = vmatpush2.bf16.msra.mxu0 %v8175
          %9653 = vmatprep.mubr.bf16.mxu0 %v6008
          %9654 = vmatmul.mubr.bf16.gmra.mxu0 %v6007
          %v9655 = vpop.f32.mrf.mxu0
          %v9656 = vadd.f32 %v6556, %v9655
          %v9657 = vpop.f32.mrf.mxu0
          %v9658 = vadd.f32 %v6560, %v9657
          %v9659 = vpop.f32.mrf.mxu0
          %v9660 = vpop.f32.mrf.mxu0
          %9661 = vdwg.mxu0
          %9662 = vmatprep.subr.bf16.mxu0 %v8296
          %9663 = vmatpush1.bf16.msra.mxu0 %v8295
          %9664 = vmatprep.subr.bf16.mxu0 %v8288
          %9665 = vmatpush1.bf16.msra.mxu0 %v8287
          %9666 = vmatprep.subr.bf16.mxu0 %v8280
          %9667 = vmatpush1.bf16.msra.mxu0 %v8279
          %9668 = vmatprep.subr.bf16.mxu0 %v8272
          %9669 = vmatpush1.bf16.msra.mxu0 %v8271
          %9670 = vmatprep.subr.bf16.mxu0 %v8264
          %9671 = vmatpush1.bf16.msra.mxu0 %v8263
          %9672 = vmatprep.subr.bf16.mxu0 %v8256
          %9673 = vmatpush1.bf16.msra.mxu0 %v8255
          %9674 = vmatprep.subr.bf16.mxu0 %v8248
          %9675 = vmatpush1.bf16.msra.mxu0 %v8247
          %9676 = vmatprep.subr.bf16.mxu0 %v8240
          %9677 = vmatpush1.bf16.msra.mxu0 %v8239
          %9678 = vmatprep.subr.bf16.mxu0 %v8360
          %9679 = vmatpush2.bf16.msra.mxu0 %v8359
          %9680 = vmatprep.subr.bf16.mxu0 %v8352
          %9681 = vmatpush2.bf16.msra.mxu0 %v8351
          %9682 = vmatprep.subr.bf16.mxu0 %v8344
          %9683 = vmatpush2.bf16.msra.mxu0 %v8343
          %9684 = vmatprep.subr.bf16.mxu0 %v8336
          %9685 = vmatpush2.bf16.msra.mxu0 %v8335
          %9686 = vmatprep.subr.bf16.mxu0 %v8328
          %9687 = vmatpush2.bf16.msra.mxu0 %v8327
          %9688 = vmatprep.subr.bf16.mxu0 %v8320
          %9689 = vmatpush2.bf16.msra.mxu0 %v8319
          %9690 = vmatprep.subr.bf16.mxu0 %v8312
          %9691 = vmatpush2.bf16.msra.mxu0 %v8311
          %9692 = vmatprep.subr.bf16.mxu0 %v8304
          %9693 = vmatpush2.bf16.msra.mxu0 %v8303
          %9694 = vmatprep.mubr.bf16.mxu0 %v6010
          %9695 = vmatmul.mubr.bf16.gmra.mxu0 %v6009
          %v9696 = vpop.f32.mrf.mxu0
          %v9697 = vadd.f32 %v9656, %v9696
          %v9698 = vpop.f32.mrf.mxu0
          %v9699 = vadd.f32 %v9658, %v9698
          %v9700 = vpop.f32.mrf.mxu0
          %v9701 = vpop.f32.mrf.mxu0
          %9702 = vdwg.mxu0
          %9703 = vmatprep.subr.bf16.mxu0 %v8424
          %9704 = vmatpush1.bf16.msra.mxu0 %v8423
          %9705 = vmatprep.subr.bf16.mxu0 %v8416
          %9706 = vmatpush1.bf16.msra.mxu0 %v8415
          %9707 = vmatprep.subr.bf16.mxu0 %v8408
          %9708 = vmatpush1.bf16.msra.mxu0 %v8407
          %9709 = vmatprep.subr.bf16.mxu0 %v8400
          %9710 = vmatpush1.bf16.msra.mxu0 %v8399
          %9711 = vmatprep.subr.bf16.mxu0 %v8392
          %9712 = vmatpush1.bf16.msra.mxu0 %v8391
          %9713 = vmatprep.subr.bf16.mxu0 %v8384
          %9714 = vmatpush1.bf16.msra.mxu0 %v8383
          %9715 = vmatprep.subr.bf16.mxu0 %v8376
          %9716 = vmatpush1.bf16.msra.mxu0 %v8375
          %9717 = vmatprep.subr.bf16.mxu0 %v8368
          %9718 = vmatpush1.bf16.msra.mxu0 %v8367
          %9719 = vmatprep.subr.bf16.mxu0 %v8488
          %9720 = vmatpush2.bf16.msra.mxu0 %v8487
          %9721 = vmatprep.subr.bf16.mxu0 %v8480
          %9722 = vmatpush2.bf16.msra.mxu0 %v8479
          %9723 = vmatprep.subr.bf16.mxu0 %v8472
          %9724 = vmatpush2.bf16.msra.mxu0 %v8471
          %9725 = vmatprep.subr.bf16.mxu0 %v8464
          %9726 = vmatpush2.bf16.msra.mxu0 %v8463
          %9727 = vmatprep.subr.bf16.mxu0 %v8456
          %9728 = vmatpush2.bf16.msra.mxu0 %v8455
          %9729 = vmatprep.subr.bf16.mxu0 %v8448
          %9730 = vmatpush2.bf16.msra.mxu0 %v8447
          %9731 = vmatprep.subr.bf16.mxu0 %v8440
          %9732 = vmatpush2.bf16.msra.mxu0 %v8439
          %9733 = vmatprep.subr.bf16.mxu0 %v8432
          %9734 = vmatpush2.bf16.msra.mxu0 %v8431
          %9735 = vmatprep.mubr.bf16.mxu0 %v6012
          %9736 = vmatmul.mubr.bf16.gmra.mxu0 %v6011
          %v9737 = vpop.f32.mrf.mxu0
          %v9738 = vadd.f32 %v9697, %v9737
          %v9739 = vpop.f32.mrf.mxu0
          %v9740 = vadd.f32 %v9699, %v9739
          %v9741 = vpop.f32.mrf.mxu0
          %v9742 = vpop.f32.mrf.mxu0
          %9743 = vdwg.mxu0
          %9744 = vmatprep.subr.bf16.mxu0 %v8552
          %9745 = vmatpush1.bf16.msra.mxu0 %v8551
          %9746 = vmatprep.subr.bf16.mxu0 %v8544
          %9747 = vmatpush1.bf16.msra.mxu0 %v8543
          %9748 = vmatprep.subr.bf16.mxu0 %v8536
          %9749 = vmatpush1.bf16.msra.mxu0 %v8535
          %9750 = vmatprep.subr.bf16.mxu0 %v8528
          %9751 = vmatpush1.bf16.msra.mxu0 %v8527
          %9752 = vmatprep.subr.bf16.mxu0 %v8520
          %9753 = vmatpush1.bf16.msra.mxu0 %v8519
          %9754 = vmatprep.subr.bf16.mxu0 %v8512
          %9755 = vmatpush1.bf16.msra.mxu0 %v8511
          %9756 = vmatprep.subr.bf16.mxu0 %v8504
          %9757 = vmatpush1.bf16.msra.mxu0 %v8503
          %9758 = vmatprep.subr.bf16.mxu0 %v8496
          %9759 = vmatpush1.bf16.msra.mxu0 %v8495
          %9760 = vmatprep.subr.bf16.mxu0 %v8616
          %9761 = vmatpush2.bf16.msra.mxu0 %v8615
          %9762 = vmatprep.subr.bf16.mxu0 %v8608
          %9763 = vmatpush2.bf16.msra.mxu0 %v8607
          %9764 = vmatprep.subr.bf16.mxu0 %v8600
          %9765 = vmatpush2.bf16.msra.mxu0 %v8599
          %9766 = vmatprep.subr.bf16.mxu0 %v8592
          %9767 = vmatpush2.bf16.msra.mxu0 %v8591
          %9768 = vmatprep.subr.bf16.mxu0 %v8584
          %9769 = vmatpush2.bf16.msra.mxu0 %v8583
          %9770 = vmatprep.subr.bf16.mxu0 %v8576
          %9771 = vmatpush2.bf16.msra.mxu0 %v8575
          %9772 = vmatprep.subr.bf16.mxu0 %v8568
          %9773 = vmatpush2.bf16.msra.mxu0 %v8567
          %9774 = vmatprep.subr.bf16.mxu0 %v8560
          %9775 = vmatpush2.bf16.msra.mxu0 %v8559
          %9776 = vmatprep.mubr.bf16.mxu0 %v6014
          %9777 = vmatmul.mubr.bf16.gmra.mxu0 %v6013
          %v9778 = vpop.f32.mrf.mxu0
          %v9779 = vadd.f32 %v9738, %v9778
          %v9780 = vpop.f32.mrf.mxu0
          %v9781 = vadd.f32 %v9740, %v9780
          %v9782 = vpop.f32.mrf.mxu0
          %v9783 = vpop.f32.mrf.mxu0
          %9784 = vdwg.mxu0
          %v9785 = vmax.f32 %v9287, 0.0
          %v9786 = vmax.f32 %v9289, 0.0
          %v9787 = vmax.f32 %v9451, 0.0
          %v9788 = vmax.f32 %v9453, 0.0
          %v9789 = vmax.f32 %v9615, 0.0
          %v9790 = vmax.f32 %v9617, 0.0
          %v9791 = vmax.f32 %v9779, 0.0
          %v9792 = vmax.f32 %v9781, 0.0
          %v9793 = vld [vmem:[#allocation4] sm:$0xff]
          %v9794 = vld [vmem:[#allocation4 + $0x8] sm:$0xff]
          %v9795 = vld [vmem:[#allocation4 + $0x10] sm:$0xff]
          %v9796 = vld [vmem:[#allocation4 + $0x18] sm:$0xff]
          %v9797 = vld [vmem:[#allocation4 + $0x20] sm:$0xff]
          %v9798 = vld [vmem:[#allocation4 + $0x28] sm:$0xff]
          %v9799 = vld [vmem:[#allocation4 + $0x30] sm:$0xff]
          %v9800 = vld [vmem:[#allocation4 + $0x38] sm:$0xff]
          %v9801 = vld [vmem:[#allocation4 + $0x40] sm:$0xff]
          %v9802 = vld [vmem:[#allocation4 + $0x48] sm:$0xff]
          %v9803 = vld [vmem:[#allocation4 + $0x50] sm:$0xff]
          %v9804 = vld [vmem:[#allocation4 + $0x58] sm:$0xff]
          %v9805 = vld [vmem:[#allocation4 + $0x60] sm:$0xff]
          %v9806 = vld [vmem:[#allocation4 + $0x68] sm:$0xff]
          %v9807 = vld [vmem:[#allocation4 + $0x70] sm:$0xff]
          %v9808 = vld [vmem:[#allocation4 + $0x78] sm:$0xff]
          %v9809 = vld [vmem:[#allocation4 + $0x80] sm:$0xff]
          %v9810 = vld [vmem:[#allocation4 + $0x88] sm:$0xff]
          %v9811 = vld [vmem:[#allocation4 + $0x90] sm:$0xff]
          %v9812 = vld [vmem:[#allocation4 + $0x98] sm:$0xff]
          %v9813 = vld [vmem:[#allocation4 + $0xa0] sm:$0xff]
          %v9814 = vld [vmem:[#allocation4 + $0xa8] sm:$0xff]
          %v9815 = vld [vmem:[#allocation4 + $0xb0] sm:$0xff]
          %v9816 = vld [vmem:[#allocation4 + $0xb8] sm:$0xff]
          %v9817 = vld [vmem:[#allocation4 + $0xc0] sm:$0xff]
          %v9818 = vld [vmem:[#allocation4 + $0xc8] sm:$0xff]
          %v9819 = vld [vmem:[#allocation4 + $0xd0] sm:$0xff]
          %v9820 = vld [vmem:[#allocation4 + $0xd8] sm:$0xff]
          %v9821 = vld [vmem:[#allocation4 + $0xe0] sm:$0xff]
          %v9822 = vld [vmem:[#allocation4 + $0xe8] sm:$0xff]
          %v9823 = vld [vmem:[#allocation4 + $0xf0] sm:$0xff]
          %v9824 = vld [vmem:[#allocation4 + $0xf8] sm:$0xff]
          %v9825 = vld [vmem:[#allocation4 + $0x100] sm:$0xff]
          %v9826 = vld [vmem:[#allocation4 + $0x108] sm:$0xff]
          %v9827 = vld [vmem:[#allocation4 + $0x110] sm:$0xff]
          %v9828 = vld [vmem:[#allocation4 + $0x118] sm:$0xff]
          %v9829 = vld [vmem:[#allocation4 + $0x120] sm:$0xff]
          %v9830 = vld [vmem:[#allocation4 + $0x128] sm:$0xff]
          %v9831 = vld [vmem:[#allocation4 + $0x130] sm:$0xff]
          %v9832 = vld [vmem:[#allocation4 + $0x138] sm:$0xff]
          %v9833 = vld [vmem:[#allocation4 + $0x140] sm:$0xff]
          %v9834 = vld [vmem:[#allocation4 + $0x148] sm:$0xff]
          %v9835 = vld [vmem:[#allocation4 + $0x150] sm:$0xff]
          %v9836 = vld [vmem:[#allocation4 + $0x158] sm:$0xff]
          %v9837 = vld [vmem:[#allocation4 + $0x160] sm:$0xff]
          %v9838 = vld [vmem:[#allocation4 + $0x168] sm:$0xff]
          %v9839 = vld [vmem:[#allocation4 + $0x170] sm:$0xff]
          %v9840 = vld [vmem:[#allocation4 + $0x178] sm:$0xff]
          %v9841 = vld [vmem:[#allocation4 + $0x180] sm:$0xff]
          %v9842 = vld [vmem:[#allocation4 + $0x188] sm:$0xff]
          %v9843 = vld [vmem:[#allocation4 + $0x190] sm:$0xff]
          %v9844 = vld [vmem:[#allocation4 + $0x198] sm:$0xff]
          %v9845 = vld [vmem:[#allocation4 + $0x1a0] sm:$0xff]
          %v9846 = vld [vmem:[#allocation4 + $0x1a8] sm:$0xff]
          %v9847 = vld [vmem:[#allocation4 + $0x1b0] sm:$0xff]
          %v9848 = vld [vmem:[#allocation4 + $0x1b8] sm:$0xff]
          %v9849 = vld [vmem:[#allocation4 + $0x1c0] sm:$0xff]
          %v9850 = vld [vmem:[#allocation4 + $0x1c8] sm:$0xff]
          %v9851 = vld [vmem:[#allocation4 + $0x1d0] sm:$0xff]
          %v9852 = vld [vmem:[#allocation4 + $0x1d8] sm:$0xff]
          %v9853 = vld [vmem:[#allocation4 + $0x1e0] sm:$0xff]
          %v9854 = vld [vmem:[#allocation4 + $0x1e8] sm:$0xff]
          %v9855 = vld [vmem:[#allocation4 + $0x1f0] sm:$0xff]
          %v9856 = vld [vmem:[#allocation4 + $0x1f8] sm:$0xff]
          %v9857 = vld [vmem:[#allocation4 + $0x200] sm:$0xff]
          %v9858 = vld [vmem:[#allocation4 + $0x208] sm:$0xff]
          %v9859 = vld [vmem:[#allocation4 + $0x210] sm:$0xff]
          %v9860 = vld [vmem:[#allocation4 + $0x218] sm:$0xff]
          %v9861 = vld [vmem:[#allocation4 + $0x220] sm:$0xff]
          %v9862 = vld [vmem:[#allocation4 + $0x228] sm:$0xff]
          %v9863 = vld [vmem:[#allocation4 + $0x230] sm:$0xff]
          %v9864 = vld [vmem:[#allocation4 + $0x238] sm:$0xff]
          %v9865 = vld [vmem:[#allocation4 + $0x240] sm:$0xff]
          %v9866 = vld [vmem:[#allocation4 + $0x248] sm:$0xff]
          %v9867 = vld [vmem:[#allocation4 + $0x250] sm:$0xff]
          %v9868 = vld [vmem:[#allocation4 + $0x258] sm:$0xff]
          %v9869 = vld [vmem:[#allocation4 + $0x260] sm:$0xff]
          %v9870 = vld [vmem:[#allocation4 + $0x268] sm:$0xff]
          %v9871 = vld [vmem:[#allocation4 + $0x270] sm:$0xff]
          %v9872 = vld [vmem:[#allocation4 + $0x278] sm:$0xff]
          %v9873 = vld [vmem:[#allocation4 + $0x280] sm:$0xff]
          %v9874 = vld [vmem:[#allocation4 + $0x288] sm:$0xff]
          %v9875 = vld [vmem:[#allocation4 + $0x290] sm:$0xff]
          %v9876 = vld [vmem:[#allocation4 + $0x298] sm:$0xff]
          %v9877 = vld [vmem:[#allocation4 + $0x2a0] sm:$0xff]
          %v9878 = vld [vmem:[#allocation4 + $0x2a8] sm:$0xff]
          %v9879 = vld [vmem:[#allocation4 + $0x2b0] sm:$0xff]
          %v9880 = vld [vmem:[#allocation4 + $0x2b8] sm:$0xff]
          %v9881 = vld [vmem:[#allocation4 + $0x2c0] sm:$0xff]
          %v9882 = vld [vmem:[#allocation4 + $0x2c8] sm:$0xff]
          %v9883 = vld [vmem:[#allocation4 + $0x2d0] sm:$0xff]
          %v9884 = vld [vmem:[#allocation4 + $0x2d8] sm:$0xff]
          %v9885 = vld [vmem:[#allocation4 + $0x2e0] sm:$0xff]
          %v9886 = vld [vmem:[#allocation4 + $0x2e8] sm:$0xff]
          %v9887 = vld [vmem:[#allocation4 + $0x2f0] sm:$0xff]
          %v9888 = vld [vmem:[#allocation4 + $0x2f8] sm:$0xff]
          %v9889 = vld [vmem:[#allocation4 + $0x300] sm:$0xff]
          %v9890 = vld [vmem:[#allocation4 + $0x308] sm:$0xff]
          %v9891 = vld [vmem:[#allocation4 + $0x310] sm:$0xff]
          %v9892 = vld [vmem:[#allocation4 + $0x318] sm:$0xff]
          %v9893 = vld [vmem:[#allocation4 + $0x320] sm:$0xff]
          %v9894 = vld [vmem:[#allocation4 + $0x328] sm:$0xff]
          %v9895 = vld [vmem:[#allocation4 + $0x330] sm:$0xff]
          %v9896 = vld [vmem:[#allocation4 + $0x338] sm:$0xff]
          %v9897 = vld [vmem:[#allocation4 + $0x340] sm:$0xff]
          %v9898 = vld [vmem:[#allocation4 + $0x348] sm:$0xff]
          %v9899 = vld [vmem:[#allocation4 + $0x350] sm:$0xff]
          %v9900 = vld [vmem:[#allocation4 + $0x358] sm:$0xff]
          %v9901 = vld [vmem:[#allocation4 + $0x360] sm:$0xff]
          %v9902 = vld [vmem:[#allocation4 + $0x368] sm:$0xff]
          %v9903 = vld [vmem:[#allocation4 + $0x370] sm:$0xff]
          %v9904 = vld [vmem:[#allocation4 + $0x378] sm:$0xff]
          %v9905 = vld [vmem:[#allocation4 + $0x380] sm:$0xff]
          %v9906 = vld [vmem:[#allocation4 + $0x388] sm:$0xff]
          %v9907 = vld [vmem:[#allocation4 + $0x390] sm:$0xff]
          %v9908 = vld [vmem:[#allocation4 + $0x398] sm:$0xff]
          %v9909 = vld [vmem:[#allocation4 + $0x3a0] sm:$0xff]
          %v9910 = vld [vmem:[#allocation4 + $0x3a8] sm:$0xff]
          %v9911 = vld [vmem:[#allocation4 + $0x3b0] sm:$0xff]
          %v9912 = vld [vmem:[#allocation4 + $0x3b8] sm:$0xff]
          %v9913 = vld [vmem:[#allocation4 + $0x3c0] sm:$0xff]
          %v9914 = vld [vmem:[#allocation4 + $0x3c8] sm:$0xff]
          %v9915 = vld [vmem:[#allocation4 + $0x3d0] sm:$0xff]
          %v9916 = vld [vmem:[#allocation4 + $0x3d8] sm:$0xff]
          %v9917 = vld [vmem:[#allocation4 + $0x3e0] sm:$0xff]
          %v9918 = vld [vmem:[#allocation4 + $0x3e8] sm:$0xff]
          %v9919 = vld [vmem:[#allocation4 + $0x3f0] sm:$0xff]
          %v9920 = vld [vmem:[#allocation4 + $0x3f8] sm:$0xff]
          %v9921 = vld [vmem:[#allocation18] sm:$0x1]
          %v9923 = vlaneseq
          %v9924 = vshrl.u32 %v9923, 7
          %v9925 = vsub.s32 0, %v9924
          %v9926 = vrot.slane %v9921, %v9925
          %9928 = vmatprep.subr.mxu0 0.0
          %9929 = vmatpush1.msra.mxu0 %v9808
          %9930 = vmatprep.subr.mxu0 0.0
          %9931 = vmatpush1.msra.mxu0 %v9807
          %9932 = vmatprep.subr.mxu0 0.0
          %9933 = vmatpush1.msra.mxu0 %v9806
          %9934 = vmatprep.subr.mxu0 0.0
          %9935 = vmatpush1.msra.mxu0 %v9805
          %9936 = vmatprep.subr.mxu0 0.0
          %9937 = vmatpush1.msra.mxu0 %v9804
          %9938 = vmatprep.subr.mxu0 0.0
          %9939 = vmatpush1.msra.mxu0 %v9803
          %9940 = vmatprep.subr.mxu0 0.0
          %9941 = vmatpush1.msra.mxu0 %v9802
          %9942 = vmatprep.subr.mxu0 0.0
          %9943 = vmatpush1.msra.mxu0 %v9801
          %9944 = vmatprep.subr.mxu0 0.0
          %9945 = vmatpush1.msra.mxu0 %v9800
          %9946 = vmatprep.subr.mxu0 0.0
          %9947 = vmatpush1.msra.mxu0 %v9799
          %9948 = vmatprep.subr.mxu0 0.0
          %9949 = vmatpush1.msra.mxu0 %v9798
          %9950 = vmatprep.subr.mxu0 0.0
          %9951 = vmatpush1.msra.mxu0 %v9797
          %9952 = vmatprep.subr.mxu0 0.0
          %9953 = vmatpush1.msra.mxu0 %v9796
          %9954 = vmatprep.subr.mxu0 0.0
          %9955 = vmatpush1.msra.mxu0 %v9795
          %9956 = vmatprep.subr.mxu0 0.0
          %9957 = vmatpush1.msra.mxu0 %v9794
          %9958 = vmatprep.subr.mxu0 0.0
          %9959 = vmatpush1.msra.mxu0 %v9793
          %9960 = vmatprep.subr.mxu0 0.0
          %9961 = vmatpush2.msra.mxu0 %v9824
          %9962 = vmatprep.subr.mxu0 0.0
          %9963 = vmatpush2.msra.mxu0 %v9823
          %9964 = vmatprep.subr.mxu0 0.0
          %9965 = vmatpush2.msra.mxu0 %v9822
          %9966 = vmatprep.subr.mxu0 0.0
          %9967 = vmatpush2.msra.mxu0 %v9821
          %9968 = vmatprep.subr.mxu0 0.0
          %9969 = vmatpush2.msra.mxu0 %v9820
          %9970 = vmatprep.subr.mxu0 0.0
          %9971 = vmatpush2.msra.mxu0 %v9819
          %9972 = vmatprep.subr.mxu0 0.0
          %9973 = vmatpush2.msra.mxu0 %v9818
          %9974 = vmatprep.subr.mxu0 0.0
          %9975 = vmatpush2.msra.mxu0 %v9817
          %9976 = vmatprep.subr.mxu0 0.0
          %9977 = vmatpush2.msra.mxu0 %v9816
          %9978 = vmatprep.subr.mxu0 0.0
          %9979 = vmatpush2.msra.mxu0 %v9815
          %9980 = vmatprep.subr.mxu0 0.0
          %9981 = vmatpush2.msra.mxu0 %v9814
          %9982 = vmatprep.subr.mxu0 0.0
          %9983 = vmatpush2.msra.mxu0 %v9813
          %9984 = vmatprep.subr.mxu0 0.0
          %9985 = vmatpush2.msra.mxu0 %v9812
          %9986 = vmatprep.subr.mxu0 0.0
          %9987 = vmatpush2.msra.mxu0 %v9811
          %9988 = vmatprep.subr.mxu0 0.0
          %9989 = vmatpush2.msra.mxu0 %v9810
          %9990 = vmatprep.subr.mxu0 0.0
          %9991 = vmatpush2.msra.mxu0 %v9809
          %9992 = vmatprep.mubr.f32.mxu0 %v9786
          %9993 = vmatmul.mubr.f32.gmra.mxu0 %v9785
          %v9994 = vpop.f32.mrf.mxu0
          %v9995 = vadd.f32 %v9926, %v9994
          %v9996 = vpop.f32.mrf.mxu0
          %9997 = vdwg.mxu0
          %9998 = vmatprep.subr.mxu0 0.0
          %9999 = vmatpush1.msra.mxu0 %v9840
          %10000 = vmatprep.subr.mxu0 0.0
          %10001 = vmatpush1.msra.mxu0 %v9839
          %10002 = vmatprep.subr.mxu0 0.0
          %10003 = vmatpush1.msra.mxu0 %v9838
          %10004 = vmatprep.subr.mxu0 0.0
          %10005 = vmatpush1.msra.mxu0 %v9837
          %10006 = vmatprep.subr.mxu0 0.0
          %10007 = vmatpush1.msra.mxu0 %v9836
          %10008 = vmatprep.subr.mxu0 0.0
          %10009 = vmatpush1.msra.mxu0 %v9835
          %10010 = vmatprep.subr.mxu0 0.0
          %10011 = vmatpush1.msra.mxu0 %v9834
          %10012 = vmatprep.subr.mxu0 0.0
          %10013 = vmatpush1.msra.mxu0 %v9833
          %10014 = vmatprep.subr.mxu0 0.0
          %10015 = vmatpush1.msra.mxu0 %v9832
          %10016 = vmatprep.subr.mxu0 0.0
          %10017 = vmatpush1.msra.mxu0 %v9831
          %10018 = vmatprep.subr.mxu0 0.0
          %10019 = vmatpush1.msra.mxu0 %v9830
          %10020 = vmatprep.subr.mxu0 0.0
          %10021 = vmatpush1.msra.mxu0 %v9829
          %10022 = vmatprep.subr.mxu0 0.0
          %10023 = vmatpush1.msra.mxu0 %v9828
          %10024 = vmatprep.subr.mxu0 0.0
          %10025 = vmatpush1.msra.mxu0 %v9827
          %10026 = vmatprep.subr.mxu0 0.0
          %10027 = vmatpush1.msra.mxu0 %v9826
          %10028 = vmatprep.subr.mxu0 0.0
          %10029 = vmatpush1.msra.mxu0 %v9825
          %10030 = vmatprep.subr.mxu0 0.0
          %10031 = vmatpush2.msra.mxu0 %v9856
          %10032 = vmatprep.subr.mxu0 0.0
          %10033 = vmatpush2.msra.mxu0 %v9855
          %10034 = vmatprep.subr.mxu0 0.0
          %10035 = vmatpush2.msra.mxu0 %v9854
          %10036 = vmatprep.subr.mxu0 0.0
          %10037 = vmatpush2.msra.mxu0 %v9853
          %10038 = vmatprep.subr.mxu0 0.0
          %10039 = vmatpush2.msra.mxu0 %v9852
          %10040 = vmatprep.subr.mxu0 0.0
          %10041 = vmatpush2.msra.mxu0 %v9851
          %10042 = vmatprep.subr.mxu0 0.0
          %10043 = vmatpush2.msra.mxu0 %v9850
          %10044 = vmatprep.subr.mxu0 0.0
          %10045 = vmatpush2.msra.mxu0 %v9849
          %10046 = vmatprep.subr.mxu0 0.0
          %10047 = vmatpush2.msra.mxu0 %v9848
          %10048 = vmatprep.subr.mxu0 0.0
          %10049 = vmatpush2.msra.mxu0 %v9847
          %10050 = vmatprep.subr.mxu0 0.0
          %10051 = vmatpush2.msra.mxu0 %v9846
          %10052 = vmatprep.subr.mxu0 0.0
          %10053 = vmatpush2.msra.mxu0 %v9845
          %10054 = vmatprep.subr.mxu0 0.0
          %10055 = vmatpush2.msra.mxu0 %v9844
          %10056 = vmatprep.subr.mxu0 0.0
          %10057 = vmatpush2.msra.mxu0 %v9843
          %10058 = vmatprep.subr.mxu0 0.0
          %10059 = vmatpush2.msra.mxu0 %v9842
          %10060 = vmatprep.subr.mxu0 0.0
          %10061 = vmatpush2.msra.mxu0 %v9841
          %10062 = vmatprep.mubr.f32.mxu0 %v9788
          %10063 = vmatmul.mubr.f32.gmra.mxu0 %v9787
          %v10064 = vpop.f32.mrf.mxu0
          %v10065 = vadd.f32 %v9995, %v10064
          %v10066 = vpop.f32.mrf.mxu0
          %10067 = vdwg.mxu0
          %10068 = vmatprep.subr.mxu0 0.0
          %10069 = vmatpush1.msra.mxu0 %v9872
          %10070 = vmatprep.subr.mxu0 0.0
          %10071 = vmatpush1.msra.mxu0 %v9871
          %10072 = vmatprep.subr.mxu0 0.0
          %10073 = vmatpush1.msra.mxu0 %v9870
          %10074 = vmatprep.subr.mxu0 0.0
          %10075 = vmatpush1.msra.mxu0 %v9869
          %10076 = vmatprep.subr.mxu0 0.0
          %10077 = vmatpush1.msra.mxu0 %v9868
          %10078 = vmatprep.subr.mxu0 0.0
          %10079 = vmatpush1.msra.mxu0 %v9867
          %10080 = vmatprep.subr.mxu0 0.0
          %10081 = vmatpush1.msra.mxu0 %v9866
          %10082 = vmatprep.subr.mxu0 0.0
          %10083 = vmatpush1.msra.mxu0 %v9865
          %10084 = vmatprep.subr.mxu0 0.0
          %10085 = vmatpush1.msra.mxu0 %v9864
          %10086 = vmatprep.subr.mxu0 0.0
          %10087 = vmatpush1.msra.mxu0 %v9863
          %10088 = vmatprep.subr.mxu0 0.0
          %10089 = vmatpush1.msra.mxu0 %v9862
          %10090 = vmatprep.subr.mxu0 0.0
          %10091 = vmatpush1.msra.mxu0 %v9861
          %10092 = vmatprep.subr.mxu0 0.0
          %10093 = vmatpush1.msra.mxu0 %v9860
          %10094 = vmatprep.subr.mxu0 0.0
          %10095 = vmatpush1.msra.mxu0 %v9859
          %10096 = vmatprep.subr.mxu0 0.0
          %10097 = vmatpush1.msra.mxu0 %v9858
          %10098 = vmatprep.subr.mxu0 0.0
          %10099 = vmatpush1.msra.mxu0 %v9857
          %10100 = vmatprep.subr.mxu0 0.0
          %10101 = vmatpush2.msra.mxu0 %v9888
          %10102 = vmatprep.subr.mxu0 0.0
          %10103 = vmatpush2.msra.mxu0 %v9887
          %10104 = vmatprep.subr.mxu0 0.0
          %10105 = vmatpush2.msra.mxu0 %v9886
          %10106 = vmatprep.subr.mxu0 0.0
          %10107 = vmatpush2.msra.mxu0 %v9885
          %10108 = vmatprep.subr.mxu0 0.0
          %10109 = vmatpush2.msra.mxu0 %v9884
          %10110 = vmatprep.subr.mxu0 0.0
          %10111 = vmatpush2.msra.mxu0 %v9883
          %10112 = vmatprep.subr.mxu0 0.0
          %10113 = vmatpush2.msra.mxu0 %v9882
          %10114 = vmatprep.subr.mxu0 0.0
          %10115 = vmatpush2.msra.mxu0 %v9881
          %10116 = vmatprep.subr.mxu0 0.0
          %10117 = vmatpush2.msra.mxu0 %v9880
          %10118 = vmatprep.subr.mxu0 0.0
          %10119 = vmatpush2.msra.mxu0 %v9879
          %10120 = vmatprep.subr.mxu0 0.0
          %10121 = vmatpush2.msra.mxu0 %v9878
          %10122 = vmatprep.subr.mxu0 0.0
          %10123 = vmatpush2.msra.mxu0 %v9877
          %10124 = vmatprep.subr.mxu0 0.0
          %10125 = vmatpush2.msra.mxu0 %v9876
          %10126 = vmatprep.subr.mxu0 0.0
          %10127 = vmatpush2.msra.mxu0 %v9875
          %10128 = vmatprep.subr.mxu0 0.0
          %10129 = vmatpush2.msra.mxu0 %v9874
          %10130 = vmatprep.subr.mxu0 0.0
          %10131 = vmatpush2.msra.mxu0 %v9873
          %10132 = vmatprep.mubr.f32.mxu0 %v9790
          %10133 = vmatmul.mubr.f32.gmra.mxu0 %v9789
          %v10134 = vpop.f32.mrf.mxu0
          %v10135 = vadd.f32 %v10065, %v10134
          %v10136 = vpop.f32.mrf.mxu0
          %10137 = vdwg.mxu0
          %10138 = vmatprep.subr.mxu0 0.0
          %10139 = vmatpush1.msra.mxu0 %v9904
          %10140 = vmatprep.subr.mxu0 0.0
          %10141 = vmatpush1.msra.mxu0 %v9903
          %10142 = vmatprep.subr.mxu0 0.0
          %10143 = vmatpush1.msra.mxu0 %v9902
          %10144 = vmatprep.subr.mxu0 0.0
          %10145 = vmatpush1.msra.mxu0 %v9901
          %10146 = vmatprep.subr.mxu0 0.0
          %10147 = vmatpush1.msra.mxu0 %v9900
          %10148 = vmatprep.subr.mxu0 0.0
          %10149 = vmatpush1.msra.mxu0 %v9899
          %10150 = vmatprep.subr.mxu0 0.0
          %10151 = vmatpush1.msra.mxu0 %v9898
          %10152 = vmatprep.subr.mxu0 0.0
          %10153 = vmatpush1.msra.mxu0 %v9897
          %10154 = vmatprep.subr.mxu0 0.0
          %10155 = vmatpush1.msra.mxu0 %v9896
          %10156 = vmatprep.subr.mxu0 0.0
          %10157 = vmatpush1.msra.mxu0 %v9895
          %10158 = vmatprep.subr.mxu0 0.0
          %10159 = vmatpush1.msra.mxu0 %v9894
          %10160 = vmatprep.subr.mxu0 0.0
          %10161 = vmatpush1.msra.mxu0 %v9893
          %10162 = vmatprep.subr.mxu0 0.0
          %10163 = vmatpush1.msra.mxu0 %v9892
          %10164 = vmatprep.subr.mxu0 0.0
          %10165 = vmatpush1.msra.mxu0 %v9891
          %10166 = vmatprep.subr.mxu0 0.0
          %10167 = vmatpush1.msra.mxu0 %v9890
          %10168 = vmatprep.subr.mxu0 0.0
          %10169 = vmatpush1.msra.mxu0 %v9889
          %10170 = vmatprep.subr.mxu0 0.0
          %10171 = vmatpush2.msra.mxu0 %v9920
          %10172 = vmatprep.subr.mxu0 0.0
          %10173 = vmatpush2.msra.mxu0 %v9919
          %10174 = vmatprep.subr.mxu0 0.0
          %10175 = vmatpush2.msra.mxu0 %v9918
          %10176 = vmatprep.subr.mxu0 0.0
          %10177 = vmatpush2.msra.mxu0 %v9917
          %10178 = vmatprep.subr.mxu0 0.0
          %10179 = vmatpush2.msra.mxu0 %v9916
          %10180 = vmatprep.subr.mxu0 0.0
          %10181 = vmatpush2.msra.mxu0 %v9915
          %10182 = vmatprep.subr.mxu0 0.0
          %10183 = vmatpush2.msra.mxu0 %v9914
          %10184 = vmatprep.subr.mxu0 0.0
          %10185 = vmatpush2.msra.mxu0 %v9913
          %10186 = vmatprep.subr.mxu0 0.0
          %10187 = vmatpush2.msra.mxu0 %v9912
          %10188 = vmatprep.subr.mxu0 0.0
          %10189 = vmatpush2.msra.mxu0 %v9911
          %10190 = vmatprep.subr.mxu0 0.0
          %10191 = vmatpush2.msra.mxu0 %v9910
          %10192 = vmatprep.subr.mxu0 0.0
          %10193 = vmatpush2.msra.mxu0 %v9909
          %10194 = vmatprep.subr.mxu0 0.0
          %10195 = vmatpush2.msra.mxu0 %v9908
          %10196 = vmatprep.subr.mxu0 0.0
          %10197 = vmatpush2.msra.mxu0 %v9907
          %10198 = vmatprep.subr.mxu0 0.0
          %10199 = vmatpush2.msra.mxu0 %v9906
          %10200 = vmatprep.subr.mxu0 0.0
          %10201 = vmatpush2.msra.mxu0 %v9905
          %10202 = vmatprep.mubr.f32.mxu0 %v9792
          %10203 = vmatmul.mubr.f32.gmra.mxu0 %v9791
          %v10204 = vpop.f32.mrf.mxu0
          %v10205 = vadd.f32 %v10135, %v10204
          %v10206 = vpop.f32.mrf.mxu0
          %10207 = vdwg.mxu0
          %v10208 = vmax.f32 %v10205, 0.0
          %v10209 = vld [vmem:[%s12] sm:$0xff]
          %v10210 = vld [vmem:[%s12 + $0x8] sm:$0xff]
          %v10211 = vld [vmem:[%s12 + $0x10] sm:$0xff]
          %v10212 = vld [vmem:[%s12 + $0x18] sm:$0xff]
          %v10213 = vld [vmem:[%s12 + $0x20] sm:$0xff]
          %v10214 = vld [vmem:[%s12 + $0x28] sm:$0xff]
          %v10215 = vld [vmem:[%s12 + $0x30] sm:$0xff]
          %v10216 = vld [vmem:[%s12 + $0x38] sm:$0xff]
          %v10217 = vld [vmem:[%s12 + $0x40] sm:$0xff]
          %v10218 = vld [vmem:[%s12 + $0x48] sm:$0xff]
          %v10219 = vld [vmem:[%s12 + $0x50] sm:$0xff]
          %v10220 = vld [vmem:[%s12 + $0x58] sm:$0xff]
          %v10221 = vld [vmem:[%s12 + $0x60] sm:$0xff]
          %v10222 = vld [vmem:[%s12 + $0x68] sm:$0xff]
          %v10223 = vld [vmem:[%s12 + $0x70] sm:$0xff]
          %v10224 = vld [vmem:[%s12 + $0x78] sm:$0xff]
          %v10225 = vld [vmem:[#allocation6] sm:$0x1]
          %v10227 = vlaneseq
          %v10228 = vshrl.u32 %v10227, 7
          %v10229 = vsub.s32 0, %v10228
          %v10230 = vrot.slane %v10225, %v10229
          %10232 = vmatprep.subr.mxu0 0.0
          %10233 = vmatpush1.msra.mxu0 %v10224
          %10234 = vmatprep.subr.mxu0 0.0
          %10235 = vmatpush1.msra.mxu0 %v10223
          %10236 = vmatprep.subr.mxu0 0.0
          %10237 = vmatpush1.msra.mxu0 %v10222
          %10238 = vmatprep.subr.mxu0 0.0
          %10239 = vmatpush1.msra.mxu0 %v10221
          %10240 = vmatprep.subr.mxu0 0.0
          %10241 = vmatpush1.msra.mxu0 %v10220
          %10242 = vmatprep.subr.mxu0 0.0
          %10243 = vmatpush1.msra.mxu0 %v10219
          %10244 = vmatprep.subr.mxu0 0.0
          %10245 = vmatpush1.msra.mxu0 %v10218
          %10246 = vmatprep.subr.mxu0 0.0
          %10247 = vmatpush1.msra.mxu0 %v10217
          %10248 = vmatprep.subr.mxu0 0.0
          %10249 = vmatpush1.msra.mxu0 %v10216
          %10250 = vmatprep.subr.mxu0 0.0
          %10251 = vmatpush1.msra.mxu0 %v10215
          %10252 = vmatprep.subr.mxu0 0.0
          %10253 = vmatpush1.msra.mxu0 %v10214
          %10254 = vmatprep.subr.mxu0 0.0
          %10255 = vmatpush1.msra.mxu0 %v10213
          %10256 = vmatprep.subr.mxu0 0.0
          %10257 = vmatpush1.msra.mxu0 %v10212
          %10258 = vmatprep.subr.mxu0 0.0
          %10259 = vmatpush1.msra.mxu0 %v10211
          %10260 = vmatprep.subr.mxu0 0.0
          %10261 = vmatpush1.msra.mxu0 %v10210
          %10262 = vmatprep.subr.mxu0 0.0
          %10263 = vmatpush1.msra.mxu0 %v10209
          %10264 = vmatprep.subr.mxu0 0.0
          %10265 = vmatpush2.msra.mxu0 0.0
          %10266 = vmatprep.subr.mxu0 0.0
          %10267 = vmatpush2.msra.mxu0 0.0
          %10268 = vmatprep.subr.mxu0 0.0
          %10269 = vmatpush2.msra.mxu0 0.0
          %10270 = vmatprep.subr.mxu0 0.0
          %10271 = vmatpush2.msra.mxu0 0.0
          %10272 = vmatprep.subr.mxu0 0.0
          %10273 = vmatpush2.msra.mxu0 0.0
          %10274 = vmatprep.subr.mxu0 0.0
          %10275 = vmatpush2.msra.mxu0 0.0
          %10276 = vmatprep.subr.mxu0 0.0
          %10277 = vmatpush2.msra.mxu0 0.0
          %10278 = vmatprep.subr.mxu0 0.0
          %10279 = vmatpush2.msra.mxu0 0.0
          %10280 = vmatprep.subr.mxu0 0.0
          %10281 = vmatpush2.msra.mxu0 0.0
          %10282 = vmatprep.subr.mxu0 0.0
          %10283 = vmatpush2.msra.mxu0 0.0
          %10284 = vmatprep.subr.mxu0 0.0
          %10285 = vmatpush2.msra.mxu0 0.0
          %10286 = vmatprep.subr.mxu0 0.0
          %10287 = vmatpush2.msra.mxu0 0.0
          %10288 = vmatprep.subr.mxu0 0.0
          %10289 = vmatpush2.msra.mxu0 0.0
          %10290 = vmatprep.subr.mxu0 0.0
          %10291 = vmatpush2.msra.mxu0 0.0
          %10292 = vmatprep.subr.mxu0 0.0
          %10293 = vmatpush2.msra.mxu0 0.0
          %10294 = vmatprep.subr.mxu0 0.0
          %10295 = vmatpush2.msra.mxu0 0.0
          %10296 = vmatprep.mubr.f32.mxu0 0.0
          %10297 = vmatmul.mubr.f32.gmra.mxu0 %v10208
          %v10298 = vpop.f32.mrf.mxu0
          %v10299 = vadd.f32 %v10230, %v10298
          %v10300 = vpop.f32.mrf.mxu0
          %10301 = vdwg.mxu0
          %v10302 = vmax.f32 %v10299, 0.0
          %vm10303 = vcmask 1024
          %10304 = vst.msk [vmem:[%s14] sm:$0x3] %vm10303, %v10302
        $region116: #{decoder_forward.1} parent=67 // pred_fallthru
          _
        // Predicated region
        $region117: #{decoder_forward.1} parent=67 // pred_check
          %p10305 = pneg %p309
        $region118: #{decoder_forward.1} parent=67 // pred_check_branch
          %10307 = sbr.rel (%p10305) target = $region120
        $region119: #{decoder_forward.1} parent=67 // pred_region
          _
        $region120: #{decoder_forward.1} parent=67 // pred_fallthru
          _
        // Predicated region
        $region121: #{decoder_forward.1} parent=67 // pred_check
          %p10308 = pneg %p309
        $region122: #{decoder_forward.1} parent=67 // pred_check_branch
          %10310 = sbr.rel (%p10308) target = $region124
        $region123: #{decoder_forward.1} parent=67 // pred_region
          _
        $region124: #{decoder_forward.1} parent=67 // pred_fallthru
          _
      $region68: #{decoder_forward.1} parent=5 // pred_fallthru
        _
      %p10311 = scmp.le.s32.totalorder 2, %s29
      // Predicated region
      $region125: #{decoder_forward.1} parent=5 // pred_check
        %p10312 = pneg %p10311
      $region126: #{decoder_forward.1} parent=5 // pred_check_branch
        %10314 = sbr.rel (%p10312) target = $region128
      $region127: #{decoder_forward.1} parent=5 // pred_region
        %s10315 = ssub.s32 %s29, 2
      $region128: #{decoder_forward.1} parent=5 // pred_fallthru
        _
    $region6: #{decoder_forward.1} parent=1 // loop_footer
      %s33 = sadd.s32 1, %s29
    $region7: #{decoder_forward.1} parent=1 // loop_footer_branch
      %28 = sbr.rel target = $region3
    $region8: #{decoder_forward.1} parent=1 // loop_exit
      _
    %10316 = vsyncpa [#allocation8], 1
    %s10317 = scalar_lea.sflag [#allocation8], 1
    %10318 = vsyncpa %s10317, 1
    %10319 = vsyncpa [#allocation10], 1
    %10320 = vsyncpa [#allocation13], 1
    %s10321 = scalar_lea.sflag [#allocation13], 1
    %10322 = vsyncpa %s10321, 1
    %10323 = vsyncpa [#allocation16], 1
    %10324 = vsyncpa [#allocation19], 1
  %10325 = vsyncmov [#allocation5]
  %s10326 = vpop.sfrf %10325
  %p10327 = scmp.eq.s32.totalorder %s10326, 0
  %p10328 = pneg %p10327
  %10330 = shalt.err (%p10328)
  %s10331 = scalar_lea.sflag [#allocation5], 1
  %10332 = vsyncmov %s10331
  %s10333 = vpop.sfrf %10332
  %p10334 = scmp.eq.s32.totalorder %s10333, 0
  %p10335 = pneg %p10334
  %10337 = shalt.err (%p10335)

</llo_original>
